<compile_context>
chip_gen: v7x
topology: tpu7x:2x2x1
jax: 0.10.0
libtpu: 0.0.40
codegen_flags: <defaults>
</compile_context>

<pallas_src>
import jax
import jax.numpy as jnp
from jax.experimental import pallas as pl
from jax.experimental.pallas import tpu as pltpu

NUM_CLASSES = 10

_CP = pltpu.CompilerParams(
    dimension_semantics=("parallel",),
    vmem_limit_bytes=32 * 1024 * 1024,
)


def _round_up(x, m):
    return -(-x // m) * m


# ---------------------------------------------------------------------------
# Pallas kernels
# ---------------------------------------------------------------------------
def conv_relu_pool_kernel(cols_ref, w_ref, b_ref, o_ref):
    """One row-tile of im2col conv + 2x2 max-pool + bias + ReLU, lane-dense.

    Two consecutive pooled outputs are packed per 128-lane output row by using
    a block-diagonal weight, so the HBM store is a full-lane unmasked vst.

    cols_ref: (4, TH, 2K) bf16 -- leading 4 = 2x2 pool-window offsets; each row
              holds the im2col patches of two consecutive pooled outputs.
    w_ref:    (2K, 128) bf16   -- blkdiag(W, W) with W the (K, 64) conv matrix
    b_ref:    (1, 128)  f32    -- [bias | bias]
    o_ref:    (TH, 128) bf16   -- row r = [out(2r) | out(2r+1)]
    """
    cols = cols_ref[...]
    th, k2 = cols.shape[1], cols.shape[2]
    # One long MXU stream over all 4 pool offsets (TH is a multiple of 16, so
    # the leading-dim merge is a cheap re-tiling).
    y = jnp.dot(cols.reshape(4 * th, k2), w_ref[...],
                preferred_element_type=jnp.float32)            # (4*TH, 128) f32
    # 2x2 max-pool across the 4 offsets, then bias + ReLU once (hoisted:
    # max_k relu(y_k + b) == relu(max_k y_k + b)).
    pooled = jnp.maximum(jnp.maximum(y[0 * th:1 * th], y[1 * th:2 * th]),
                         jnp.maximum(y[2 * th:3 * th], y[3 * th:4 * th]))
    o_ref[...] = jnp.maximum(pooled + b_ref[...], 0.0).astype(o_ref.dtype)


def conv3_mlp_kernel(cols_ref, w3_ref, b3_ref, w1_ref, b1_ref, w2_ref, b2_ref,
                     o_ref):
    """Fused conv3 + 2x2 max-pool + ReLU + torch-flatten + fc1 + ReLU + fc2
    for one tile of TB samples.  The conv3 activation never leaves the core.

    cols_ref: (4, TB, 4*K3) bf16 -- each row: one sample's im2col patches for
              all 4 pooled positions (feature order (hw, tap)); leading 4 =
              pool-window offsets.
    w3_ref:   (4*K3, 512) bf16 -- blkdiag of 4 copies of the (K3, 128) conv3
              GEMM matrix (output feature order (hw, c)).
    b3_ref:   (1, 512) f32     -- conv3 bias tiled 4x.
    w1_ref:   (512, 256) bf16  -- fc1 weights permuted to (hw, c) feature order
              (this absorbs the torch NCHW flatten).
    b1_ref:   (1, 256) f32
    w2_ref:   (256, 128) bf16  -- fc2 weights zero-padded to 128 output lanes.
    b2_ref:   (1, 128) f32
    o_ref:    (TB, 128) f32    -- logits live in lanes [:NUM_CLASSES]
    """
    cols = cols_ref[...]
    tb, k4 = cols.shape[1], cols.shape[2]
    y = jnp.dot(cols.reshape(4 * tb, k4), w3_ref[...],
                preferred_element_type=jnp.float32)            # (4*TB, 512) f32
    pooled = jnp.maximum(jnp.maximum(y[0 * tb:1 * tb], y[1 * tb:2 * tb]),
                         jnp.maximum(y[2 * tb:3 * tb], y[3 * tb:4 * tb]))
    feat = jnp.maximum(pooled + b3_ref[...], 0.0).astype(jnp.bfloat16)  # (TB,512)
    h = jnp.dot(feat, w1_ref[...], preferred_element_type=jnp.float32) + b1_ref[...]
    h = jnp.maximum(h, 0.0).astype(jnp.bfloat16)
    out = jnp.dot(h, w2_ref[...], preferred_element_type=jnp.float32) + b2_ref[...]
    o_ref[...] = out.astype(o_ref.dtype)


# ---------------------------------------------------------------------------
# Glue: im2col ordered for fused pooling
# ---------------------------------------------------------------------------
def _im2col_pool_patches(x_nhwc):
    """x: (B, H, W, Cin) -> (4, B, Hp, Wp, 9*Cin) patches for a 3x3 VALID conv
    followed by a 2x2/2 max-pool (floor mode).  Leading axis = pool-window
    offset (a, c); patch-column order is (dh, dw, ci)."""
    B, H, W, Cin = x_nhwc.shape
    Hp, Wp = (H - 2) // 2, (W - 2) // 2
    groups = []
    for a in range(2):
        for c in range(2):
            groups.append(jnp.concatenate(
                [x_nhwc[:, a + dh:a + dh + 2 * Hp:2, c + dw:c + dw + 2 * Wp:2, :]
                 for dh in range(3) for dw in range(3)], axis=-1))
    return jnp.stack(groups, axis=0), (B, Hp, Wp)


def conv_relu_pool(x_nhwc, w_pack, b_pack, *, th_max=512):
    """3x3 VALID conv + ReLU + 2x2 max-pool as a tiled, pipelined im2col GEMM
    with a lane-dense (row-pair-packed) output."""
    two_k, cout2 = w_pack.shape                       # (2K, 128)
    cout = cout2 // 2
    patches, (B, Hp, Wp) = _im2col_pool_patches(x_nhwc)
    K = patches.shape[-1]
    M = B * Hp * Wp
    cols = patches.reshape(4, M, K).astype(jnp.bfloat16)

    # Pack 2 pooled rows per GEMM row.  th = packed-row tile (multiple of 16);
    # aim for >=2 grid steps (v7x megacore), cap at 512 (~1024 pooled outputs).
    mh_raw = -(-M // 2)
    th = min(th_max, max(16, _round_up(-(-mh_raw // 2), 16)))
    mh = _round_up(mh_raw, th)
    mp = 2 * mh
    if mp != M:
        cols = jnp.pad(cols, ((0, 0), (0, mp - M), (0, 0)))
    cols = cols.reshape(4, mh, 2 * K)                 # free view: row r = (2r, 2r+1)

    out = pl.pallas_call(
        conv_relu_pool_kernel,
        out_shape=jax.ShapeDtypeStruct((mh, cout2), jnp.bfloat16),
        grid=(mh // th,),
        in_specs=[
            pl.BlockSpec((4, th, 2 * K), lambda i: (0, i, 0)),
            pl.BlockSpec((two_k, cout2), lambda i: (0, 0)),
            pl.BlockSpec((1, cout2), lambda i: (0, 0)),
        ],
        out_specs=pl.BlockSpec((th, cout2), lambda i: (i, 0)),
        compiler_params=_CP,
    )(cols, w_pack, b_pack)
    # (mh, 128) -> (mp, 64) is a free HBM view; drop padding and restore NHWC.
    return out.reshape(mp, cout)[:M].reshape(B, Hp, Wp, cout)


def conv3_mlp(x_nhwc, kp):
    """Fused conv3 + pool + torch-flatten + fc1 + fc2, batch-tiled grid."""
    patches, (B, Hp, Wp) = _im2col_pool_patches(x_nhwc)      # Hp = Wp = 2
    K3 = patches.shape[-1]
    hw = Hp * Wp                                              # 4
    # One row per sample: features ordered (hw, tap).
    cols = patches.reshape(4, B, hw * K3).astype(jnp.bfloat16)

    bp = _round_up(B, 32)
    if bp > 256:
        bp = _round_up(B, 256)
        tb = 128
    else:
        tb = bp // 2                                          # >=16, 2 grid steps
    if bp != B:
        cols = jnp.pad(cols, ((0, 0), (0, bp - B), (0, 0)))

    c_pad = kp["fc2_w"].shape[1]                              # 128
    out = pl.pallas_call(
        conv3_mlp_kernel,
        out_shape=jax.ShapeDtypeStruct((bp, c_pad), jnp.float32),
        grid=(bp // tb,),
        in_specs=[
            pl.BlockSpec((4, tb, hw * K3), lambda i: (0, i, 0)),
            pl.BlockSpec(kp["conv3_w"].shape, lambda i: (0, 0)),
            pl.BlockSpec(kp["conv3_b"].shape, lambda i: (0, 0)),
            pl.BlockSpec(kp["fc1_w"].shape, lambda i: (0, 0)),
            pl.BlockSpec(kp["fc1_b"].shape, lambda i: (0, 0)),
            pl.BlockSpec(kp["fc2_w"].shape, lambda i: (0, 0)),
            pl.BlockSpec(kp["fc2_b"].shape, lambda i: (0, 0)),
        ],
        out_specs=pl.BlockSpec((tb, c_pad), lambda i: (i, 0)),
        compiler_params=_CP,
    )(cols, kp["conv3_w"], kp["conv3_b"], kp["fc1_w"], kp["fc1_b"],
      kp["fc2_w"], kp["fc2_b"])
    return out[:B, :NUM_CLASSES]


# ---------------------------------------------------------------------------
# Parameters
# ---------------------------------------------------------------------------
def init_params(key):
    ks = jax.random.split(key, 10)
    s = 0.05
    return dict(
        conv1_w=jax.random.normal(ks[0], (64, 3, 3, 3), jnp.float32) * s,
        conv1_b=jax.random.normal(ks[1], (64,), jnp.float32) * s,
        conv2_w=jax.random.normal(ks[2], (64, 64, 3, 3), jnp.float32) * s,
        conv2_b=jax.random.normal(ks[3], (64,), jnp.float32) * s,
        conv3_w=jax.random.normal(ks[4], (128, 64, 3, 3), jnp.float32) * s,
        conv3_b=jax.random.normal(ks[5], (128,), jnp.float32) * s,
        fc1_w=jax.random.normal(ks[6], (256, 512), jnp.float32) * s,
        fc1_b=jax.random.normal(ks[7], (256,), jnp.float32) * s,
        fc2_w=jax.random.normal(ks[8], (NUM_CLASSES, 256), jnp.float32) * s,
        fc2_b=jax.random.normal(ks[9], (NUM_CLASSES,), jnp.float32) * s,
    )


def prepare_params(p):
    """One-time repack of PyTorch-layout params into kernel-ready matrices."""
    def conv_gemm_mat(w):   # OIHW -> (9*Cin, Cout), rows ordered (dh, dw, ci)
        cout, cin = w.shape[0], w.shape[1]
        return jnp.transpose(w, (2, 3, 1, 0)).reshape(9 * cin, cout).astype(jnp.bfloat16)

    def blkdiag(wm, n):     # block-diagonal stack of n copies (lane-dense packing)
        return jnp.kron(jnp.eye(n, dtype=wm.dtype), wm)

    def tile_bias(b, n):    # [b | b | ...] as an f32 row vector
        return jnp.tile(b.reshape(1, -1), (1, n))

    w1m = conv_gemm_mat(p["conv1_w"])
    w2m = conv_gemm_mat(p["conv2_w"])
    w3m = conv_gemm_mat(p["conv3_w"])

    # fc1: torch flatten orders features (c, hw) with (C,H,W)=(128,2,2); the
    # fused kernel produces features ordered (hw, c) -> permute columns once.
    h1 = p["fc1_w"].shape[0]
    fc1 = p["fc1_w"].reshape(h1, 128, 2, 2)
    fc1 = jnp.transpose(fc1, (2, 3, 1, 0)).reshape(4 * 128, h1).astype(jnp.bfloat16)

    # fc2: zero-pad the 10 logits to 128 lanes so the final store is unmasked.
    w2 = jnp.transpose(p["fc2_w"]).astype(jnp.bfloat16)        # (256, 10)
    w2 = jnp.pad(w2, ((0, 0), (0, 128 - NUM_CLASSES)))
    b2 = jnp.pad(p["fc2_b"], (0, 128 - NUM_CLASSES)).reshape(1, 128)

    return dict(
        conv1_w=blkdiag(w1m, 2), conv1_b=tile_bias(p["conv1_b"], 2),
        conv2_w=blkdiag(w2m, 2), conv2_b=tile_bias(p["conv2_b"], 2),
        conv3_w=blkdiag(w3m, 4), conv3_b=tile_bias(p["conv3_b"], 4),
        fc1_w=fc1, fc1_b=p["fc1_b"].reshape(1, -1),
        fc2_w=w2, fc2_b=b2,
    )


def forward(x_nchw, kp):
    x = jnp.transpose(x_nchw, (0, 2, 3, 1)).astype(jnp.bfloat16)  # NCHW -> NHWC
    x = conv_relu_pool(x, kp["conv1_w"], kp["conv1_b"])           # (B,15,15,64)
    x = conv_relu_pool(x, kp["conv2_w"], kp["conv2_b"])           # (B, 6, 6,64)
    return conv3_mlp(x, kp)                                       # (B, 10)


# ---------------------------------------------------------------------------
# Pure-JAX reference (sanity check only)
# ---------------------------------------------------------------------------
def reference_forward(x_nchw, p):
    hi = jax.lax.Precision.HIGHEST

    def conv(x, w, b):
        y = jax.lax.conv_general_dilated(
            x, w, (1, 1), "VALID",
            dimension_numbers=("NCHW", "OIHW", "NCHW"), precision=hi)
        return y + b[None, :, None, None]

    def pool(x):
        return jax.lax.reduce_window(
            x, -jnp.inf, jax.lax.max, (1, 1, 2, 2), (1, 1, 2, 2), "VALID")

    x = pool(jax.nn.relu(conv(x_nchw, p["conv1_w"], p["conv1_b"])))
    x = pool(jax.nn.relu(conv(x, p["conv2_w"], p["conv2_b"])))
    x = pool(jax.nn.relu(conv(x, p["conv3_w"], p["conv3_b"])))
    x = x.reshape(x.shape[0], -1)
    x = jax.nn.relu(jnp.dot(x, p["fc1_w"].T, precision=hi) + p["fc1_b"])
    return jnp.dot(x, p["fc2_w"].T, precision=hi) + p["fc2_b"]


if __name__ == "__main__":
    key = jax.random.PRNGKey(0)
    x = jax.random.normal(key, (2, 3, 32, 32), jnp.float32)   # CIFAR-10 sized
    params = init_params(jax.random.PRNGKey(1))
    kparams = prepare_params(params)                          # one-time repack

    fwd = jax.jit(forward)
    out = jax.block_until_ready(fwd(x, kparams))
    assert out.shape == (2, NUM_CLASSES), out.shape

    ref = jax.block_until_ready(reference_forward(x, params))
    max_err = float(jnp.max(jnp.abs(out - ref)))
    assert max_err < 5e-2, f"mismatch vs reference: {max_err}"

    print("KERNEL_OK")
</pallas_src>

<mosaic_0001>
module attributes {stable_mosaic.version = 11 : i64} {
  func.func @conv_relu_pool_kernel(%arg0: i32, %arg1: memref<4x128x54xbf16, #tpu.memory_space<vmem>>, %arg2: memref<54x128xbf16, #tpu.memory_space<vmem>>, %arg3: memref<1x128xf32, #tpu.memory_space<vmem>>, %arg4: memref<128x128xbf16, #tpu.memory_space<vmem>>) attributes {dimension_semantics = [#tpu.dimension_semantics<parallel>], iteration_bounds = array<i64: 2>, scalar_prefetch = 0 : i64, scratch_operands = 0 : i64, tpu.core_type = #tpu.core_type<tc>, window_params = [{transform_indices = @transform_0, window_bounds = array<i64: 4, 128, 54>}, {pipeline_mode = #tpu.pipeline_mode<synchronous>, transform_indices = @transform_1, window_bounds = array<i64: 54, 128>}, {pipeline_mode = #tpu.pipeline_mode<synchronous>, transform_indices = @transform_2, window_bounds = array<i64: 1, 128>}, {transform_indices = @transform_3, window_bounds = array<i64: 128, 128>}]} {
    %c0 = arith.constant 0 : index
    %c0_0 = arith.constant 0 : index
    %c0_1 = arith.constant 0 : index
    %0 = vector.load %arg1[%c0, %c0_0, %c0_1] : memref<4x128x54xbf16, #tpu.memory_space<vmem>>, vector<4x128x54xbf16>
    %1 = vector.shape_cast %0 : vector<4x128x54xbf16> to vector<512x54xbf16>
    %c0_2 = arith.constant 0 : index
    %c0_3 = arith.constant 0 : index
    %2 = vector.load %arg2[%c0_2, %c0_3] : memref<54x128xbf16, #tpu.memory_space<vmem>>, vector<54x128xbf16>
    %cst = arith.constant dense<0.000000e+00> : vector<512x128xf32>
    %3 = tpu.matmul %1, %2, %cst {dimension_numbers = #tpu.dot_dimension_numbers<[1], [0], [0], [1], [0, 0, 1, 1], [], []>} : vector<512x54xbf16>, vector<54x128xbf16>, vector<512x128xf32> -> vector<512x128xf32>
    %4 = vector.extract_strided_slice %3 {offsets = [0, 0], sizes = [128, 128], strides = [1, 1]} : vector<512x128xf32> to vector<128x128xf32>
    %5 = vector.extract_strided_slice %3 {offsets = [128, 0], sizes = [128, 128], strides = [1, 1]} : vector<512x128xf32> to vector<128x128xf32>
    %6 = arith.maximumf %4, %5 : vector<128x128xf32>
    %7 = vector.extract_strided_slice %3 {offsets = [256, 0], sizes = [128, 128], strides = [1, 1]} : vector<512x128xf32> to vector<128x128xf32>
    %8 = vector.extract_strided_slice %3 {offsets = [384, 0], sizes = [128, 128], strides = [1, 1]} : vector<512x128xf32> to vector<128x128xf32>
    %9 = arith.maximumf %7, %8 : vector<128x128xf32>
    %10 = arith.maximumf %6, %9 : vector<128x128xf32>
    %c0_4 = arith.constant 0 : index
    %c0_5 = arith.constant 0 : index
    %11 = vector.load %arg3[%c0_4, %c0_5] : memref<1x128xf32, #tpu.memory_space<vmem>>, vector<1x128xf32>
    %12 = vector.broadcast %11 : vector<1x128xf32> to vector<128x128xf32>
    %13 = arith.addf %10, %12 : vector<128x128xf32>
    %cst_6 = arith.constant 0.000000e+00 : f32
    %14 = vector.broadcast %cst_6 : f32 to vector<128x128xf32>
    %15 = arith.maximumf %13, %14 : vector<128x128xf32>
    %16 = arith.truncf %15 : vector<128x128xf32> to vector<128x128xbf16>
    %c0_7 = arith.constant 0 : index
    %c0_8 = arith.constant 0 : index
    %17 = vector.load %arg4[%c0_7, %c0_8] : memref<128x128xbf16, #tpu.memory_space<vmem>>, vector<128x128xbf16>
    tpu.vector_store %arg4[%c0_7, %c0_8], %16 {strides = array<i32>} : memref<128x128xbf16, #tpu.memory_space<vmem>>, vector<128x128xbf16>,
    return
  }
  func.func @transform_0(%arg0: i32) -> (i32, i32, i32) {
    %c0_i32 = arith.constant 0 : i32
    %c0_i32_0 = arith.constant 0 : i32
    %c0_i32_1 = arith.constant 0 : i32
    return %c0_i32, %arg0, %c0_i32_0 : i32, i32, i32
  }
  func.func @transform_1(%arg0: i32) -> (i32, i32) {
    %c0_i32 = arith.constant 0 : i32
    %c0_i32_0 = arith.constant 0 : i32
    %c0_i32_1 = arith.constant 0 : i32
    return %c0_i32, %c0_i32_0 : i32, i32
  }
  func.func @transform_2(%arg0: i32) -> (i32, i32) {
    %c0_i32 = arith.constant 0 : i32
    %c0_i32_0 = arith.constant 0 : i32
    %c0_i32_1 = arith.constant 0 : i32
    return %c0_i32, %c0_i32_0 : i32, i32
  }
  func.func @transform_3(%arg0: i32) -> (i32, i32) {
    %c0_i32 = arith.constant 0 : i32
    %c0_i32_0 = arith.constant 0 : i32
    return %arg0, %c0_i32 : i32, i32
  }
}

module attributes {stable_mosaic.version = 11 : i64} {
  func.func @conv_relu_pool_kernel(%arg0: i32, %arg1: memref<4x32x1152xbf16, #tpu.memory_space<vmem>>, %arg2: memref<1152x128xbf16, #tpu.memory_space<vmem>>, %arg3: memref<1x128xf32, #tpu.memory_space<vmem>>, %arg4: memref<32x128xbf16, #tpu.memory_space<vmem>>) attributes {dimension_semantics = [#tpu.dimension_semantics<parallel>], iteration_bounds = array<i64: 2>, scalar_prefetch = 0 : i64, scratch_operands = 0 : i64, tpu.core_type = #tpu.core_type<tc>, window_params = [{transform_indices = @transform_0, window_bounds = array<i64: 4, 32, 1152>}, {pipeline_mode = #tpu.pipeline_mode<synchronous>, transform_indices = @transform_1, window_bounds = array<i64: 1152, 128>}, {pipeline_mode = #tpu.pipeline_mode<synchronous>, transform_indices = @transform_2, window_bounds = array<i64: 1, 128>}, {transform_indices = @transform_3, window_bounds = array<i64: 32, 128>}]} {
    %c0 = arith.constant 0 : index
    %c0_0 = arith.constant 0 : index
    %c0_1 = arith.constant 0 : index
    %0 = vector.load %arg1[%c0, %c0_0, %c0_1] : memref<4x32x1152xbf16, #tpu.memory_space<vmem>>, vector<4x32x1152xbf16>
    %1 = vector.shape_cast %0 : vector<4x32x1152xbf16> to vector<128x1152xbf16>
    %c0_2 = arith.constant 0 : index
    %c0_3 = arith.constant 0 : index
    %2 = vector.load %arg2[%c0_2, %c0_3] : memref<1152x128xbf16, #tpu.memory_space<vmem>>, vector<1152x128xbf16>
    %cst = arith.constant dense<0.000000e+00> : vector<128x128xf32>
    %3 = tpu.matmul %1, %2, %cst {dimension_numbers = #tpu.dot_dimension_numbers<[1], [0], [0], [1], [0, 0, 1, 1], [], []>} : vector<128x1152xbf16>, vector<1152x128xbf16>, vector<128x128xf32> -> vector<128x128xf32>
    %4 = vector.extract_strided_slice %3 {offsets = [0, 0], sizes = [32, 128], strides = [1, 1]} : vector<128x128xf32> to vector<32x128xf32>
    %5 = vector.extract_strided_slice %3 {offsets = [32, 0], sizes = [32, 128], strides = [1, 1]} : vector<128x128xf32> to vector<32x128xf32>
    %6 = arith.maximumf %4, %5 : vector<32x128xf32>
    %7 = vector.extract_strided_slice %3 {offsets = [64, 0], sizes = [32, 128], strides = [1, 1]} : vector<128x128xf32> to vector<32x128xf32>
    %8 = vector.extract_strided_slice %3 {offsets = [96, 0], sizes = [32, 128], strides = [1, 1]} : vector<128x128xf32> to vector<32x128xf32>
    %9 = arith.maximumf %7, %8 : vector<32x128xf32>
    %10 = arith.maximumf %6, %9 : vector<32x128xf32>
    %c0_4 = arith.constant 0 : index
    %c0_5 = arith.constant 0 : index
    %11 = vector.load %arg3[%c0_4, %c0_5] : memref<1x128xf32, #tpu.memory_space<vmem>>, vector<1x128xf32>
    %12 = vector.broadcast %11 : vector<1x128xf32> to vector<32x128xf32>
    %13 = arith.addf %10, %12 : vector<32x128xf32>
    %cst_6 = arith.constant 0.000000e+00 : f32
    %14 = vector.broadcast %cst_6 : f32 to vector<32x128xf32>
    %15 = arith.maximumf %13, %14 : vector<32x128xf32>
    %16 = arith.truncf %15 : vector<32x128xf32> to vector<32x128xbf16>
    %c0_7 = arith.constant 0 : index
    %c0_8 = arith.constant 0 : index
    %17 = vector.load %arg4[%c0_7, %c0_8] : memref<32x128xbf16, #tpu.memory_space<vmem>>, vector<32x128xbf16>
    tpu.vector_store %arg4[%c0_7, %c0_8], %16 {strides = array<i32>} : memref<32x128xbf16, #tpu.memory_space<vmem>>, vector<32x128xbf16>,
    return
  }
  func.func @transform_0(%arg0: i32) -> (i32, i32, i32) {
    %c0_i32 = arith.constant 0 : i32
    %c0_i32_0 = arith.constant 0 : i32
    %c0_i32_1 = arith.constant 0 : i32
    return %c0_i32, %arg0, %c0_i32_0 : i32, i32, i32
  }
  func.func @transform_1(%arg0: i32) -> (i32, i32) {
    %c0_i32 = arith.constant 0 : i32
    %c0_i32_0 = arith.constant 0 : i32
    %c0_i32_1 = arith.constant 0 : i32
    return %c0_i32, %c0_i32_0 : i32, i32
  }
  func.func @transform_2(%arg0: i32) -> (i32, i32) {
    %c0_i32 = arith.constant 0 : i32
    %c0_i32_0 = arith.constant 0 : i32
    %c0_i32_1 = arith.constant 0 : i32
    return %c0_i32, %c0_i32_0 : i32, i32
  }
  func.func @transform_3(%arg0: i32) -> (i32, i32) {
    %c0_i32 = arith.constant 0 : i32
    %c0_i32_0 = arith.constant 0 : i32
    return %arg0, %c0_i32 : i32, i32
  }
}

module attributes {stable_mosaic.version = 11 : i64} {
  func.func @conv3_mlp_kernel(%arg0: i32, %arg1: memref<4x16x2304xbf16, #tpu.memory_space<vmem>>, %arg2: memref<2304x512xbf16, #tpu.memory_space<vmem>>, %arg3: memref<1x512xf32, #tpu.memory_space<vmem>>, %arg4: memref<512x256xbf16, #tpu.memory_space<vmem>>, %arg5: memref<1x256xf32, #tpu.memory_space<vmem>>, %arg6: memref<256x128xbf16, #tpu.memory_space<vmem>>, %arg7: memref<1x128xf32, #tpu.memory_space<vmem>>, %arg8: memref<16x128xf32, #tpu.memory_space<vmem>>) attributes {dimension_semantics = [#tpu.dimension_semantics<parallel>], iteration_bounds = array<i64: 2>, scalar_prefetch = 0 : i64, scratch_operands = 0 : i64, tpu.core_type = #tpu.core_type<tc>, window_params = [{transform_indices = @transform_0, window_bounds = array<i64: 4, 16, 2304>}, {pipeline_mode = #tpu.pipeline_mode<synchronous>, transform_indices = @transform_1, window_bounds = array<i64: 2304, 512>}, {pipeline_mode = #tpu.pipeline_mode<synchronous>, transform_indices = @transform_2, window_bounds = array<i64: 1, 512>}, {pipeline_mode = #tpu.pipeline_mode<synchronous>, transform_indices = @transform_3, window_bounds = array<i64: 512, 256>}, {pipeline_mode = #tpu.pipeline_mode<synchronous>, transform_indices = @transform_4, window_bounds = array<i64: 1, 256>}, {pipeline_mode = #tpu.pipeline_mode<synchronous>, transform_indices = @transform_5, window_bounds = array<i64: 256, 128>}, {pipeline_mode = #tpu.pipeline_mode<synchronous>, transform_indices = @transform_6, window_bounds = array<i64: 1, 128>}, {transform_indices = @transform_7, window_bounds = array<i64: 16, 128>}]} {
    %c0 = arith.constant 0 : index
    %c0_0 = arith.constant 0 : index
    %c0_1 = arith.constant 0 : index
    %0 = vector.load %arg1[%c0, %c0_0, %c0_1] : memref<4x16x2304xbf16, #tpu.memory_space<vmem>>, vector<4x16x2304xbf16>
    %1 = vector.shape_cast %0 : vector<4x16x2304xbf16> to vector<64x2304xbf16>
    %c0_2 = arith.constant 0 : index
    %c0_3 = arith.constant 0 : index
    %2 = vector.load %arg2[%c0_2, %c0_3] : memref<2304x512xbf16, #tpu.memory_space<vmem>>, vector<2304x512xbf16>
    %cst = arith.constant dense<0.000000e+00> : vector<64x512xf32>
    %3 = tpu.matmul %1, %2, %cst {dimension_numbers = #tpu.dot_dimension_numbers<[1], [0], [0], [1], [0, 0, 1, 1], [], []>} : vector<64x2304xbf16>, vector<2304x512xbf16>, vector<64x512xf32> -> vector<64x512xf32>
    %4 = vector.extract_strided_slice %3 {offsets = [0, 0], sizes = [16, 512], strides = [1, 1]} : vector<64x512xf32> to vector<16x512xf32>
    %5 = vector.extract_strided_slice %3 {offsets = [16, 0], sizes = [16, 512], strides = [1, 1]} : vector<64x512xf32> to vector<16x512xf32>
    %6 = arith.maximumf %4, %5 : vector<16x512xf32>
    %7 = vector.extract_strided_slice %3 {offsets = [32, 0], sizes = [16, 512], strides = [1, 1]} : vector<64x512xf32> to vector<16x512xf32>
    %8 = vector.extract_strided_slice %3 {offsets = [48, 0], sizes = [16, 512], strides = [1, 1]} : vector<64x512xf32> to vector<16x512xf32>
    %9 = arith.maximumf %7, %8 : vector<16x512xf32>
    %10 = arith.maximumf %6, %9 : vector<16x512xf32>
    %c0_4 = arith.constant 0 : index
    %c0_5 = arith.constant 0 : index
    %11 = vector.load %arg3[%c0_4, %c0_5] : memref<1x512xf32, #tpu.memory_space<vmem>>, vector<1x512xf32>
    %12 = vector.broadcast %11 : vector<1x512xf32> to vector<16x512xf32>
    %13 = arith.addf %10, %12 : vector<16x512xf32>
    %cst_6 = arith.constant 0.000000e+00 : f32
    %14 = vector.broadcast %cst_6 : f32 to vector<16x512xf32>
    %15 = arith.maximumf %13, %14 : vector<16x512xf32>
    %16 = arith.truncf %15 : vector<16x512xf32> to vector<16x512xbf16>
    %c0_7 = arith.constant 0 : index
    %c0_8 = arith.constant 0 : index
    %17 = vector.load %arg4[%c0_7, %c0_8] : memref<512x256xbf16, #tpu.memory_space<vmem>>, vector<512x256xbf16>
    %cst_9 = arith.constant dense<0.000000e+00> : vector<16x256xf32>
    %18 = tpu.matmul %16, %17, %cst_9 {dimension_numbers = #tpu.dot_dimension_numbers<[1], [0], [0], [1], [0, 0, 1, 1], [], []>} : vector<16x512xbf16>, vector<512x256xbf16>, vector<16x256xf32> -> vector<16x256xf32>
    %c0_10 = arith.constant 0 : index
    %c0_11 = arith.constant 0 : index
    %19 = vector.load %arg5[%c0_10, %c0_11] : memref<1x256xf32, #tpu.memory_space<vmem>>, vector<1x256xf32>
    %20 = vector.broadcast %19 : vector<1x256xf32> to vector<16x256xf32>
    %21 = arith.addf %18, %20 : vector<16x256xf32>
    %cst_12 = arith.constant 0.000000e+00 : f32
    %22 = vector.broadcast %cst_12 : f32 to vector<16x256xf32>
    %23 = arith.maximumf %21, %22 : vector<16x256xf32>
    %24 = arith.truncf %23 : vector<16x256xf32> to vector<16x256xbf16>
    %c0_13 = arith.constant 0 : index
    %c0_14 = arith.constant 0 : index
    %25 = vector.load %arg6[%c0_13, %c0_14] : memref<256x128xbf16, #tpu.memory_space<vmem>>, vector<256x128xbf16>
    %cst_15 = arith.constant dense<0.000000e+00> : vector<16x128xf32>
    %26 = tpu.matmul %24, %25, %cst_15 {dimension_numbers = #tpu.dot_dimension_numbers<[1], [0], [0], [1], [0, 0, 1, 1], [], []>} : vector<16x256xbf16>, vector<256x128xbf16>, vector<16x128xf32> -> vector<16x128xf32>
    %c0_16 = arith.constant 0 : index
    %c0_17 = arith.constant 0 : index
    %27 = vector.load %arg7[%c0_16, %c0_17] : memref<1x128xf32, #tpu.memory_space<vmem>>, vector<1x128xf32>
    %28 = vector.broadcast %27 : vector<1x128xf32> to vector<16x128xf32>
    %29 = arith.addf %26, %28 : vector<16x128xf32>
    %c0_18 = arith.constant 0 : index
    %c0_19 = arith.constant 0 : index
    %30 = vector.load %arg8[%c0_18, %c0_19] : memref<16x128xf32, #tpu.memory_space<vmem>>, vector<16x128xf32>
    tpu.vector_store %arg8[%c0_18, %c0_19], %29 {strides = array<i32>} : memref<16x128xf32, #tpu.memory_space<vmem>>, vector<16x128xf32>,
    return
  }
  func.func @transform_0(%arg0: i32) -> (i32, i32, i32) {
    %c0_i32 = arith.constant 0 : i32
    %c0_i32_0 = arith.constant 0 : i32
    %c0_i32_1 = arith.constant 0 : i32
    return %c0_i32, %arg0, %c0_i32_0 : i32, i32, i32
  }
  func.func @transform_1(%arg0: i32) -> (i32, i32) {
    %c0_i32 = arith.constant 0 : i32
    %c0_i32_0 = arith.constant 0 : i32
    %c0_i32_1 = arith.constant 0 : i32
    return %c0_i32, %c0_i32_0 : i32, i32
  }
  func.func @transform_2(%arg0: i32) -> (i32, i32) {
    %c0_i32 = arith.constant 0 : i32
    %c0_i32_0 = arith.constant 0 : i32
    %c0_i32_1 = arith.constant 0 : i32
    return %c0_i32, %c0_i32_0 : i32, i32
  }
  func.func @transform_3(%arg0: i32) -> (i32, i32) {
    %c0_i32 = arith.constant 0 : i32
    %c0_i32_0 = arith.constant 0 : i32
    %c0_i32_1 = arith.constant 0 : i32
    return %c0_i32, %c0_i32_0 : i32, i32
  }
  func.func @transform_4(%arg0: i32) -> (i32, i32) {
    %c0_i32 = arith.constant 0 : i32
    %c0_i32_0 = arith.constant 0 : i32
    %c0_i32_1 = arith.constant 0 : i32
    return %c0_i32, %c0_i32_0 : i32, i32
  }
  func.func @transform_5(%arg0: i32) -> (i32, i32) {
    %c0_i32 = arith.constant 0 : i32
    %c0_i32_0 = arith.constant 0 : i32
    %c0_i32_1 = arith.constant 0 : i32
    return %c0_i32, %c0_i32_0 : i32, i32
  }
  func.func @transform_6(%arg0: i32) -> (i32, i32) {
    %c0_i32 = arith.constant 0 : i32
    %c0_i32_0 = arith.constant 0 : i32
    %c0_i32_1 = arith.constant 0 : i32
    return %c0_i32, %c0_i32_0 : i32, i32
  }
  func.func @transform_7(%arg0: i32) -> (i32, i32) {
    %c0_i32 = arith.constant 0 : i32
    %c0_i32_0 = arith.constant 0 : i32
    return %arg0, %c0_i32 : i32, i32
  }
}

</mosaic_0001>

<llo_original>
// kernel: forward.3
$region0: #{forward.3}
  #allocation0 [shape = 'u32[]', space=smem, size = 0x4, offset = 0x4, fixed_abs, tag = 'smem constant byte address 0x4 - core index']
  #allocation1 [shape = 'u32[144,128]{1,0:T(1,128)}', space=vmem, size = 0x12000, scoped, tag = 'internal scratch']
  %s0 = inlined_call_operand.vmem [shape: bf16[4,256,54], index: 0, kind: input, shape index: {}]
  %s1 = inlined_call_operand.vmem [shape: bf16[54,128], index: 1, kind: input, shape index: {}]
  %s2 = inlined_call_operand.vmem [shape: f32[1,128], index: 2, kind: input, shape index: {}]
  %s3 = inlined_call_operand.vmem [shape: bf16[256,128], index: 3, kind: output, shape index: {}]
  %s4 = sld [smem:[#allocation0]]
  $region86: #{forward.3} parent=0
    _
  %s6 = ssub.s32 1, %s4
  %s7 = scalar_select 0, %s6, %s4
  $region1: #{forward.3} parent=0
    #allocation2 [shape = 'u8[262144]{0}', space=vmem, size = 0x40000, scoped, tag = 'input window, operand 0']
    loop: start=0, step=1, limit=4
    $region2: #{forward.3} parent=1 // loop_pre_header
      _
    $region3: #{forward.3} parent=1 // loop_header
      %s9 = sphi 0, %s13
      %p10 = scmp.ge.s32.totalorder %s9, 4
      %s19 = sphi 0, %s21
      %s22 = sphi 0, %s19
      %s23 = sphi 0, %s22
      %s39 = sphi 0, %s23
      %s43 = sphi 0, %s43
      %s45 = sphi 0, %s43
      %s46 = sphi 0, %s45
      %s60 = sphi 0, %s46
      %s64 = sphi 0, %s64
      %s66 = sphi 0, %s64
      %s67 = sphi 0, %s66
      %s81 = sphi 0, %s67
      %s87 = sphi 0, %s89
      %s90 = sphi 0, %s87
      %s91 = sphi 0, %s90
      %s107 = sphi 0, %s91
    $region4: #{forward.3} parent=1 // loop_header_branch
      %12 = sbr.rel (%p10) target = $region8
    $region5: #{forward.3} parent=1 // loop_body
      %s14 = ssub.s32 %s9, 1
      %s15 = ssub.s32 %s9, 2
      %s16 = sadd.s32 %s9, 1
      %s17 = ssub.s32 %s9, %s16
      %p18 = scmp.eq.s32.totalorder %s17, 0
      %s20 = sadd.s32 %s19, 1
      %s21 = scalar_select %p18, %s19, %s20
      %p24 = pneg %p18
      %p25 = scmp.eq.s32.totalorder %s9, 1
      %p26 = por %p24, %p25
      %p27 = scmp.ne.s32.totalorder %s19, %s22
      %p28 = scmp.eq.s32.totalorder %s9, 0
      %p29 = por %p27, %p28
      %p30 = scmp.ne.s32.totalorder %s19, %s22
      %p31 = scmp.eq.s32.totalorder %s14, 1
      %p32 = por %p30, %p31
      %p33 = scmp.ne.s32.totalorder %s22, %s23
      %p34 = scmp.eq.s32.totalorder %s14, 0
      %p35 = por %p33, %p34
      %p36 = scmp.ne.s32.totalorder %s22, %s23
      %p37 = scmp.eq.s32.totalorder %s15, 1
      %p38 = por %p36, %p37
      %p40 = scmp.ne.s32.totalorder %s23, %s39
      %p41 = scmp.eq.s32.totalorder %s15, 0
      %p42 = por %p40, %p41
      %s44 = sadd.s32 %s43, 1
      %p47 = scmp.eq.s32.totalorder %s9, 1
      %p48 = scmp.ne.s32.totalorder %s43, %s45
      %p49 = scmp.eq.s32.totalorder %s9, 0
      %p50 = por %p48, %p49
      %p51 = scmp.ne.s32.totalorder %s43, %s45
      %p52 = scmp.eq.s32.totalorder %s14, 1
      %p53 = por %p51, %p52
      %p54 = scmp.ne.s32.totalorder %s45, %s46
      %p55 = scmp.eq.s32.totalorder %s14, 0
      %p56 = por %p54, %p55
      %p57 = scmp.ne.s32.totalorder %s45, %s46
      %p58 = scmp.eq.s32.totalorder %s15, 1
      %p59 = por %p57, %p58
      %p61 = scmp.ne.s32.totalorder %s46, %s60
      %p62 = scmp.eq.s32.totalorder %s15, 0
      %p63 = por %p61, %p62
      %s65 = sadd.s32 %s64, 1
      %p68 = scmp.eq.s32.totalorder %s9, 1
      %p69 = scmp.ne.s32.totalorder %s64, %s66
      %p70 = scmp.eq.s32.totalorder %s9, 0
      %p71 = por %p69, %p70
      %p72 = scmp.ne.s32.totalorder %s64, %s66
      %p73 = scmp.eq.s32.totalorder %s14, 1
      %p74 = por %p72, %p73
      %p75 = scmp.ne.s32.totalorder %s66, %s67
      %p76 = scmp.eq.s32.totalorder %s14, 0
      %p77 = por %p75, %p76
      %p78 = scmp.ne.s32.totalorder %s66, %s67
      %p79 = scmp.eq.s32.totalorder %s15, 1
      %p80 = por %p78, %p79
      %p82 = scmp.ne.s32.totalorder %s67, %s81
      %p83 = scmp.eq.s32.totalorder %s15, 0
      %p84 = por %p82, %p83
      %s85 = ssub.s32 %s9, %s16
      %p86 = scmp.eq.s32.totalorder %s85, 0
      %s88 = sadd.s32 %s87, 1
      %s89 = scalar_select %p86, %s87, %s88
      %p92 = pneg %p86
      %p93 = scmp.eq.s32.totalorder %s9, 1
      %p94 = por %p92, %p93
      %p95 = scmp.ne.s32.totalorder %s87, %s90
      %p96 = scmp.eq.s32.totalorder %s9, 0
      %p97 = por %p95, %p96
      %p98 = scmp.ne.s32.totalorder %s87, %s90
      %p99 = scmp.eq.s32.totalorder %s14, 1
      %p100 = por %p98, %p99
      %p101 = scmp.ne.s32.totalorder %s90, %s91
      %p102 = scmp.eq.s32.totalorder %s14, 0
      %p103 = por %p101, %p102
      %p104 = scmp.ne.s32.totalorder %s90, %s91
      %p105 = scmp.eq.s32.totalorder %s15, 1
      %p106 = por %p104, %p105
      %p108 = scmp.ne.s32.totalorder %s91, %s107
      %p109 = scmp.eq.s32.totalorder %s15, 0
      %p110 = por %p108, %p109
      %p111 = scmp.le.s32.totalorder 1, %s9
      %p112 = scmp.lt.s32.totalorder %s9, 3
      %p113 = pnand %p111, %p112
      %p114 = pneg %p113
      // Predicated region
      $region9: #{forward.3} parent=5 // pred_check
        _
      $region10: #{forward.3} parent=5 // pred_check_branch
        %116 = sbr.rel (%p113) target = $region12
      $region11: #{forward.3} parent=5 // pred_region
        %s117 = ssub.s32 %s9, 1
        // Predicated region
        $region13: #{forward.3} parent=11 // pred_check
          %p118 = pneg %p56
        $region14: #{forward.3} parent=11 // pred_check_branch
          %120 = sbr.rel (%p118) target = $region16
        $region15: #{forward.3} parent=11 // pred_region
          _
        $region16: #{forward.3} parent=11 // pred_fallthru
          _
        // Predicated region
        $region17: #{forward.3} parent=11 // pred_check
          %p121 = pneg %p77
        $region18: #{forward.3} parent=11 // pred_check_branch
          %123 = sbr.rel (%p121) target = $region20
        $region19: #{forward.3} parent=11 // pred_region
          _
        $region20: #{forward.3} parent=11 // pred_fallthru
          _
      $region12: #{forward.3} parent=5 // pred_fallthru
        _
      %p124 = scmp.lt.s32.totalorder %s9, 2
      // Predicated region
      $region21: #{forward.3} parent=5 // pred_check
        %p125 = pneg %p124
      $region22: #{forward.3} parent=5 // pred_check_branch
        %127 = sbr.rel (%p125) target = $region24
      $region23: #{forward.3} parent=5 // pred_region
        // Predicated region
        $region25: #{forward.3} parent=23 // pred_check
          %p128 = pneg %p29
        $region26: #{forward.3} parent=23 // pred_check_branch
          %130 = sbr.rel (%p128) target = $region28
        $region27: #{forward.3} parent=23 // pred_region
          %s131 = sand.u32 %s19, 1
          %s132 = sand.u32 %s19, 1
          %s133 = smul.addr %s132, 256
          %s134 = scalar_lea.vmem [#allocation2], %s133
          %s135 = smul.u32 16, %s9
          %s136 = smul.addr %s135, 4
          %s137 = scalar_lea.vmem %s0, %s136
          // Predicated region
          $region29: #{forward.3} parent=27 // pred_check
            _
          $region30: #{forward.3} parent=27 // pred_check_branch
            %139 = sbr.rel (0) target = $region32
          $region31: #{forward.3} parent=27 // pred_region
            // Predicated region
            $region33: #{forward.3} parent=31 // pred_check
              _
            $region34: #{forward.3} parent=31 // pred_check_branch
              %141 = sbr.rel target = $region36
            $region35: #{forward.3} parent=31 // pred_region
              // Predicated region
              $region48: #{forward.3} parent=35 // pred_check
                _
              $region49: #{forward.3} parent=35 // pred_check_branch
                %282 = sbr.rel (0) target = $region51
              $region50: #{forward.3} parent=35 // pred_region
                loop: start=0, step=1, limit=1
                $region52: #{forward.3} parent=50 // loop_pre_header
                  _
                $region53: #{forward.3} parent=50 // loop_header
                  %s284 = sphi 0, %s288
                  %p285 = scmp.ge.s32.totalorder %s284, 1
                  %s289 = sphi %s137, %s137
                  %s290 = sphi %s134, %s134
                $region54: #{forward.3} parent=50 // loop_header_branch
                  %287 = sbr.rel (%p285) target = $region58
                $region55: #{forward.3} parent=50 // loop_body
                  _
                $region56: #{forward.3} parent=50 // loop_footer
                  %s288 = sadd.s32 1, %s284
                $region57: #{forward.3} parent=50 // loop_footer_branch
                  %283 = sbr.rel target = $region53
                $region58: #{forward.3} parent=50 // loop_exit
                  _
                loop: start=0, step=1, limit=1
                $region59: #{forward.3} parent=50 // loop_pre_header
                  _
                $region60: #{forward.3} parent=50 // loop_header
                  %s293 = sphi 0, %s297
                  %p294 = scmp.ge.s32.totalorder %s293, 1
                  %s298 = sphi %s137, %s137
                  %s299 = sphi %s134, %s134
                $region61: #{forward.3} parent=50 // loop_header_branch
                  %296 = sbr.rel (%p294) target = $region65
                $region62: #{forward.3} parent=50 // loop_body
                  %v300 = vld [vmem:[%s298] sm:$0xf]
                  %301 = vst [vmem:[%s299] sm:$0xf] %v300
                  %v302 = vld [vmem:[%s298 + $0x4] sm:$0xf]
                  %303 = vst [vmem:[%s299 + $0x4] sm:$0xf] %v302
                  %v304 = vld [vmem:[%s298 + $0x8] sm:$0xf]
                  %305 = vst [vmem:[%s299 + $0x8] sm:$0xf] %v304
                  %v306 = vld [vmem:[%s298 + $0xc] sm:$0xf]
                  %307 = vst [vmem:[%s299 + $0xc] sm:$0xf] %v306
                  %v308 = vld [vmem:[%s298 + $0x10] sm:$0xf]
                  %309 = vst [vmem:[%s299 + $0x10] sm:$0xf] %v308
                  %v310 = vld [vmem:[%s298 + $0x14] sm:$0xf]
                  %311 = vst [vmem:[%s299 + $0x14] sm:$0xf] %v310
                  %v312 = vld [vmem:[%s298 + $0x18] sm:$0xf]
                  %313 = vst [vmem:[%s299 + $0x18] sm:$0xf] %v312
                  %v314 = vld [vmem:[%s298 + $0x1c] sm:$0xf]
                  %315 = vst [vmem:[%s299 + $0x1c] sm:$0xf] %v314
                  %v316 = vld [vmem:[%s298 + $0x20] sm:$0xf]
                  %317 = vst [vmem:[%s299 + $0x20] sm:$0xf] %v316
                  %v318 = vld [vmem:[%s298 + $0x24] sm:$0xf]
                  %319 = vst [vmem:[%s299 + $0x24] sm:$0xf] %v318
                  %v320 = vld [vmem:[%s298 + $0x28] sm:$0xf]
                  %321 = vst [vmem:[%s299 + $0x28] sm:$0xf] %v320
                  %v322 = vld [vmem:[%s298 + $0x2c] sm:$0xf]
                  %323 = vst [vmem:[%s299 + $0x2c] sm:$0xf] %v322
                  %v324 = vld [vmem:[%s298 + $0x30] sm:$0xf]
                  %325 = vst [vmem:[%s299 + $0x30] sm:$0xf] %v324
                  %v326 = vld [vmem:[%s298 + $0x34] sm:$0xf]
                  %327 = vst [vmem:[%s299 + $0x34] sm:$0xf] %v326
                  %v328 = vld [vmem:[%s298 + $0x38] sm:$0xf]
                  %329 = vst [vmem:[%s299 + $0x38] sm:$0xf] %v328
                  %v330 = vld [vmem:[%s298 + $0x3c] sm:$0xf]
                  %331 = vst [vmem:[%s299 + $0x3c] sm:$0xf] %v330
                  %v332 = vld [vmem:[%s298 + $0x80] sm:$0xf]
                  %333 = vst [vmem:[%s299 + $0x40] sm:$0xf] %v332
                  %v334 = vld [vmem:[%s298 + $0x84] sm:$0xf]
                  %335 = vst [vmem:[%s299 + $0x44] sm:$0xf] %v334
                  %v336 = vld [vmem:[%s298 + $0x88] sm:$0xf]
                  %337 = vst [vmem:[%s299 + $0x48] sm:$0xf] %v336
                  %v338 = vld [vmem:[%s298 + $0x8c] sm:$0xf]
                  %339 = vst [vmem:[%s299 + $0x4c] sm:$0xf] %v338
                  %v340 = vld [vmem:[%s298 + $0x90] sm:$0xf]
                  %341 = vst [vmem:[%s299 + $0x50] sm:$0xf] %v340
                  %v342 = vld [vmem:[%s298 + $0x94] sm:$0xf]
                  %343 = vst [vmem:[%s299 + $0x54] sm:$0xf] %v342
                  %v344 = vld [vmem:[%s298 + $0x98] sm:$0xf]
                  %345 = vst [vmem:[%s299 + $0x58] sm:$0xf] %v344
                  %v346 = vld [vmem:[%s298 + $0x9c] sm:$0xf]
                  %347 = vst [vmem:[%s299 + $0x5c] sm:$0xf] %v346
                  %v348 = vld [vmem:[%s298 + $0xa0] sm:$0xf]
                  %349 = vst [vmem:[%s299 + $0x60] sm:$0xf] %v348
                  %v350 = vld [vmem:[%s298 + $0xa4] sm:$0xf]
                  %351 = vst [vmem:[%s299 + $0x64] sm:$0xf] %v350
                  %v352 = vld [vmem:[%s298 + $0xa8] sm:$0xf]
                  %353 = vst [vmem:[%s299 + $0x68] sm:$0xf] %v352
                  %v354 = vld [vmem:[%s298 + $0xac] sm:$0xf]
                  %355 = vst [vmem:[%s299 + $0x6c] sm:$0xf] %v354
                  %v356 = vld [vmem:[%s298 + $0xb0] sm:$0xf]
                  %357 = vst [vmem:[%s299 + $0x70] sm:$0xf] %v356
                  %v358 = vld [vmem:[%s298 + $0xb4] sm:$0xf]
                  %359 = vst [vmem:[%s299 + $0x74] sm:$0xf] %v358
                  %v360 = vld [vmem:[%s298 + $0xb8] sm:$0xf]
                  %361 = vst [vmem:[%s299 + $0x78] sm:$0xf] %v360
                  %v362 = vld [vmem:[%s298 + $0xbc] sm:$0xf]
                  %363 = vst [vmem:[%s299 + $0x7c] sm:$0xf] %v362
                  %v364 = vld [vmem:[%s298 + $0x100] sm:$0xf]
                  %365 = vst [vmem:[%s299 + $0x80] sm:$0xf] %v364
                  %v366 = vld [vmem:[%s298 + $0x104] sm:$0xf]
                  %367 = vst [vmem:[%s299 + $0x84] sm:$0xf] %v366
                  %v368 = vld [vmem:[%s298 + $0x108] sm:$0xf]
                  %369 = vst [vmem:[%s299 + $0x88] sm:$0xf] %v368
                  %v370 = vld [vmem:[%s298 + $0x10c] sm:$0xf]
                  %371 = vst [vmem:[%s299 + $0x8c] sm:$0xf] %v370
                  %v372 = vld [vmem:[%s298 + $0x110] sm:$0xf]
                  %373 = vst [vmem:[%s299 + $0x90] sm:$0xf] %v372
                  %v374 = vld [vmem:[%s298 + $0x114] sm:$0xf]
                  %375 = vst [vmem:[%s299 + $0x94] sm:$0xf] %v374
                  %v376 = vld [vmem:[%s298 + $0x118] sm:$0xf]
                  %377 = vst [vmem:[%s299 + $0x98] sm:$0xf] %v376
                  %v378 = vld [vmem:[%s298 + $0x11c] sm:$0xf]
                  %379 = vst [vmem:[%s299 + $0x9c] sm:$0xf] %v378
                  %v380 = vld [vmem:[%s298 + $0x120] sm:$0xf]
                  %381 = vst [vmem:[%s299 + $0xa0] sm:$0xf] %v380
                  %v382 = vld [vmem:[%s298 + $0x124] sm:$0xf]
                  %383 = vst [vmem:[%s299 + $0xa4] sm:$0xf] %v382
                  %v384 = vld [vmem:[%s298 + $0x128] sm:$0xf]
                  %385 = vst [vmem:[%s299 + $0xa8] sm:$0xf] %v384
                  %v386 = vld [vmem:[%s298 + $0x12c] sm:$0xf]
                  %387 = vst [vmem:[%s299 + $0xac] sm:$0xf] %v386
                  %v388 = vld [vmem:[%s298 + $0x130] sm:$0xf]
                  %389 = vst [vmem:[%s299 + $0xb0] sm:$0xf] %v388
                  %v390 = vld [vmem:[%s298 + $0x134] sm:$0xf]
                  %391 = vst [vmem:[%s299 + $0xb4] sm:$0xf] %v390
                  %v392 = vld [vmem:[%s298 + $0x138] sm:$0xf]
                  %393 = vst [vmem:[%s299 + $0xb8] sm:$0xf] %v392
                  %v394 = vld [vmem:[%s298 + $0x13c] sm:$0xf]
                  %395 = vst [vmem:[%s299 + $0xbc] sm:$0xf] %v394
                  %v396 = vld [vmem:[%s298 + $0x180] sm:$0xf]
                  %397 = vst [vmem:[%s299 + $0xc0] sm:$0xf] %v396
                  %v398 = vld [vmem:[%s298 + $0x184] sm:$0xf]
                  %399 = vst [vmem:[%s299 + $0xc4] sm:$0xf] %v398
                  %v400 = vld [vmem:[%s298 + $0x188] sm:$0xf]
                  %401 = vst [vmem:[%s299 + $0xc8] sm:$0xf] %v400
                  %v402 = vld [vmem:[%s298 + $0x18c] sm:$0xf]
                  %403 = vst [vmem:[%s299 + $0xcc] sm:$0xf] %v402
                  %v404 = vld [vmem:[%s298 + $0x190] sm:$0xf]
                  %405 = vst [vmem:[%s299 + $0xd0] sm:$0xf] %v404
                  %v406 = vld [vmem:[%s298 + $0x194] sm:$0xf]
                  %407 = vst [vmem:[%s299 + $0xd4] sm:$0xf] %v406
                  %v408 = vld [vmem:[%s298 + $0x198] sm:$0xf]
                  %409 = vst [vmem:[%s299 + $0xd8] sm:$0xf] %v408
                  %v410 = vld [vmem:[%s298 + $0x19c] sm:$0xf]
                  %411 = vst [vmem:[%s299 + $0xdc] sm:$0xf] %v410
                  %v412 = vld [vmem:[%s298 + $0x1a0] sm:$0xf]
                  %413 = vst [vmem:[%s299 + $0xe0] sm:$0xf] %v412
                  %v414 = vld [vmem:[%s298 + $0x1a4] sm:$0xf]
                  %415 = vst [vmem:[%s299 + $0xe4] sm:$0xf] %v414
                  %v416 = vld [vmem:[%s298 + $0x1a8] sm:$0xf]
                  %417 = vst [vmem:[%s299 + $0xe8] sm:$0xf] %v416
                  %v418 = vld [vmem:[%s298 + $0x1ac] sm:$0xf]
                  %419 = vst [vmem:[%s299 + $0xec] sm:$0xf] %v418
                  %v420 = vld [vmem:[%s298 + $0x1b0] sm:$0xf]
                  %421 = vst [vmem:[%s299 + $0xf0] sm:$0xf] %v420
                  %v422 = vld [vmem:[%s298 + $0x1b4] sm:$0xf]
                  %423 = vst [vmem:[%s299 + $0xf4] sm:$0xf] %v422
                  %v424 = vld [vmem:[%s298 + $0x1b8] sm:$0xf]
                  %425 = vst [vmem:[%s299 + $0xf8] sm:$0xf] %v424
                  %v426 = vld [vmem:[%s298 + $0x1bc] sm:$0xf]
                  %427 = vst [vmem:[%s299 + $0xfc] sm:$0xf] %v426
                $region63: #{forward.3} parent=50 // loop_footer
                  %s297 = sadd.s32 1, %s293
                $region64: #{forward.3} parent=50 // loop_footer_branch
                  %292 = sbr.rel target = $region60
                $region65: #{forward.3} parent=50 // loop_exit
                  _
              $region51: #{forward.3} parent=35 // pred_fallthru
                _
            $region36: #{forward.3} parent=31 // pred_fallthru
              _
            // Predicated region
            $region37: #{forward.3} parent=31 // pred_check
              _
            $region38: #{forward.3} parent=31 // pred_check_branch
              %143 = sbr.rel (0) target = $region40
            $region39: #{forward.3} parent=31 // pred_region
              loop: start=0, step=1, limit=1
              $region41: #{forward.3} parent=39 // loop_pre_header
                _
              $region42: #{forward.3} parent=39 // loop_header
                %s146 = sphi 0, %s150
                %p147 = scmp.ge.s32.totalorder %s146, 1
                %s151 = sphi %s137, %s137
                %s152 = sphi %s134, %s134
              $region43: #{forward.3} parent=39 // loop_header_branch
                %149 = sbr.rel (%p147) target = $region47
              $region44: #{forward.3} parent=39 // loop_body
                %v153 = vld [vmem:[%s151] sm:$0xf]
                %154 = vst [vmem:[%s152] sm:$0xf] %v153
                %v155 = vld [vmem:[%s151 + $0x4] sm:$0xf]
                %156 = vst [vmem:[%s152 + $0x4] sm:$0xf] %v155
                %v157 = vld [vmem:[%s151 + $0x8] sm:$0xf]
                %158 = vst [vmem:[%s152 + $0x8] sm:$0xf] %v157
                %v159 = vld [vmem:[%s151 + $0xc] sm:$0xf]
                %160 = vst [vmem:[%s152 + $0xc] sm:$0xf] %v159
                %v161 = vld [vmem:[%s151 + $0x10] sm:$0xf]
                %162 = vst [vmem:[%s152 + $0x10] sm:$0xf] %v161
                %v163 = vld [vmem:[%s151 + $0x14] sm:$0xf]
                %164 = vst [vmem:[%s152 + $0x14] sm:$0xf] %v163
                %v165 = vld [vmem:[%s151 + $0x18] sm:$0xf]
                %166 = vst [vmem:[%s152 + $0x18] sm:$0xf] %v165
                %v167 = vld [vmem:[%s151 + $0x1c] sm:$0xf]
                %168 = vst [vmem:[%s152 + $0x1c] sm:$0xf] %v167
                %v169 = vld [vmem:[%s151 + $0x20] sm:$0xf]
                %170 = vst [vmem:[%s152 + $0x20] sm:$0xf] %v169
                %v171 = vld [vmem:[%s151 + $0x24] sm:$0xf]
                %172 = vst [vmem:[%s152 + $0x24] sm:$0xf] %v171
                %v173 = vld [vmem:[%s151 + $0x28] sm:$0xf]
                %174 = vst [vmem:[%s152 + $0x28] sm:$0xf] %v173
                %v175 = vld [vmem:[%s151 + $0x2c] sm:$0xf]
                %176 = vst [vmem:[%s152 + $0x2c] sm:$0xf] %v175
                %v177 = vld [vmem:[%s151 + $0x30] sm:$0xf]
                %178 = vst [vmem:[%s152 + $0x30] sm:$0xf] %v177
                %v179 = vld [vmem:[%s151 + $0x34] sm:$0xf]
                %180 = vst [vmem:[%s152 + $0x34] sm:$0xf] %v179
                %v181 = vld [vmem:[%s151 + $0x38] sm:$0xf]
                %182 = vst [vmem:[%s152 + $0x38] sm:$0xf] %v181
                %v183 = vld [vmem:[%s151 + $0x3c] sm:$0xf]
                %184 = vst [vmem:[%s152 + $0x3c] sm:$0xf] %v183
                %v185 = vld [vmem:[%s151 + $0x80] sm:$0xf]
                %186 = vst [vmem:[%s152 + $0x40] sm:$0xf] %v185
                %v187 = vld [vmem:[%s151 + $0x84] sm:$0xf]
                %188 = vst [vmem:[%s152 + $0x44] sm:$0xf] %v187
                %v189 = vld [vmem:[%s151 + $0x88] sm:$0xf]
                %190 = vst [vmem:[%s152 + $0x48] sm:$0xf] %v189
                %v191 = vld [vmem:[%s151 + $0x8c] sm:$0xf]
                %192 = vst [vmem:[%s152 + $0x4c] sm:$0xf] %v191
                %v193 = vld [vmem:[%s151 + $0x90] sm:$0xf]
                %194 = vst [vmem:[%s152 + $0x50] sm:$0xf] %v193
                %v195 = vld [vmem:[%s151 + $0x94] sm:$0xf]
                %196 = vst [vmem:[%s152 + $0x54] sm:$0xf] %v195
                %v197 = vld [vmem:[%s151 + $0x98] sm:$0xf]
                %198 = vst [vmem:[%s152 + $0x58] sm:$0xf] %v197
                %v199 = vld [vmem:[%s151 + $0x9c] sm:$0xf]
                %200 = vst [vmem:[%s152 + $0x5c] sm:$0xf] %v199
                %v201 = vld [vmem:[%s151 + $0xa0] sm:$0xf]
                %202 = vst [vmem:[%s152 + $0x60] sm:$0xf] %v201
                %v203 = vld [vmem:[%s151 + $0xa4] sm:$0xf]
                %204 = vst [vmem:[%s152 + $0x64] sm:$0xf] %v203
                %v205 = vld [vmem:[%s151 + $0xa8] sm:$0xf]
                %206 = vst [vmem:[%s152 + $0x68] sm:$0xf] %v205
                %v207 = vld [vmem:[%s151 + $0xac] sm:$0xf]
                %208 = vst [vmem:[%s152 + $0x6c] sm:$0xf] %v207
                %v209 = vld [vmem:[%s151 + $0xb0] sm:$0xf]
                %210 = vst [vmem:[%s152 + $0x70] sm:$0xf] %v209
                %v211 = vld [vmem:[%s151 + $0xb4] sm:$0xf]
                %212 = vst [vmem:[%s152 + $0x74] sm:$0xf] %v211
                %v213 = vld [vmem:[%s151 + $0xb8] sm:$0xf]
                %214 = vst [vmem:[%s152 + $0x78] sm:$0xf] %v213
                %v215 = vld [vmem:[%s151 + $0xbc] sm:$0xf]
                %216 = vst [vmem:[%s152 + $0x7c] sm:$0xf] %v215
                %v217 = vld [vmem:[%s151 + $0x100] sm:$0xf]
                %218 = vst [vmem:[%s152 + $0x80] sm:$0xf] %v217
                %v219 = vld [vmem:[%s151 + $0x104] sm:$0xf]
                %220 = vst [vmem:[%s152 + $0x84] sm:$0xf] %v219
                %v221 = vld [vmem:[%s151 + $0x108] sm:$0xf]
                %222 = vst [vmem:[%s152 + $0x88] sm:$0xf] %v221
                %v223 = vld [vmem:[%s151 + $0x10c] sm:$0xf]
                %224 = vst [vmem:[%s152 + $0x8c] sm:$0xf] %v223
                %v225 = vld [vmem:[%s151 + $0x110] sm:$0xf]
                %226 = vst [vmem:[%s152 + $0x90] sm:$0xf] %v225
                %v227 = vld [vmem:[%s151 + $0x114] sm:$0xf]
                %228 = vst [vmem:[%s152 + $0x94] sm:$0xf] %v227
                %v229 = vld [vmem:[%s151 + $0x118] sm:$0xf]
                %230 = vst [vmem:[%s152 + $0x98] sm:$0xf] %v229
                %v231 = vld [vmem:[%s151 + $0x11c] sm:$0xf]
                %232 = vst [vmem:[%s152 + $0x9c] sm:$0xf] %v231
                %v233 = vld [vmem:[%s151 + $0x120] sm:$0xf]
                %234 = vst [vmem:[%s152 + $0xa0] sm:$0xf] %v233
                %v235 = vld [vmem:[%s151 + $0x124] sm:$0xf]
                %236 = vst [vmem:[%s152 + $0xa4] sm:$0xf] %v235
                %v237 = vld [vmem:[%s151 + $0x128] sm:$0xf]
                %238 = vst [vmem:[%s152 + $0xa8] sm:$0xf] %v237
                %v239 = vld [vmem:[%s151 + $0x12c] sm:$0xf]
                %240 = vst [vmem:[%s152 + $0xac] sm:$0xf] %v239
                %v241 = vld [vmem:[%s151 + $0x130] sm:$0xf]
                %242 = vst [vmem:[%s152 + $0xb0] sm:$0xf] %v241
                %v243 = vld [vmem:[%s151 + $0x134] sm:$0xf]
                %244 = vst [vmem:[%s152 + $0xb4] sm:$0xf] %v243
                %v245 = vld [vmem:[%s151 + $0x138] sm:$0xf]
                %246 = vst [vmem:[%s152 + $0xb8] sm:$0xf] %v245
                %v247 = vld [vmem:[%s151 + $0x13c] sm:$0xf]
                %248 = vst [vmem:[%s152 + $0xbc] sm:$0xf] %v247
                %v249 = vld [vmem:[%s151 + $0x180] sm:$0xf]
                %250 = vst [vmem:[%s152 + $0xc0] sm:$0xf] %v249
                %v251 = vld [vmem:[%s151 + $0x184] sm:$0xf]
                %252 = vst [vmem:[%s152 + $0xc4] sm:$0xf] %v251
                %v253 = vld [vmem:[%s151 + $0x188] sm:$0xf]
                %254 = vst [vmem:[%s152 + $0xc8] sm:$0xf] %v253
                %v255 = vld [vmem:[%s151 + $0x18c] sm:$0xf]
                %256 = vst [vmem:[%s152 + $0xcc] sm:$0xf] %v255
                %v257 = vld [vmem:[%s151 + $0x190] sm:$0xf]
                %258 = vst [vmem:[%s152 + $0xd0] sm:$0xf] %v257
                %v259 = vld [vmem:[%s151 + $0x194] sm:$0xf]
                %260 = vst [vmem:[%s152 + $0xd4] sm:$0xf] %v259
                %v261 = vld [vmem:[%s151 + $0x198] sm:$0xf]
                %262 = vst [vmem:[%s152 + $0xd8] sm:$0xf] %v261
                %v263 = vld [vmem:[%s151 + $0x19c] sm:$0xf]
                %264 = vst [vmem:[%s152 + $0xdc] sm:$0xf] %v263
                %v265 = vld [vmem:[%s151 + $0x1a0] sm:$0xf]
                %266 = vst [vmem:[%s152 + $0xe0] sm:$0xf] %v265
                %v267 = vld [vmem:[%s151 + $0x1a4] sm:$0xf]
                %268 = vst [vmem:[%s152 + $0xe4] sm:$0xf] %v267
                %v269 = vld [vmem:[%s151 + $0x1a8] sm:$0xf]
                %270 = vst [vmem:[%s152 + $0xe8] sm:$0xf] %v269
                %v271 = vld [vmem:[%s151 + $0x1ac] sm:$0xf]
                %272 = vst [vmem:[%s152 + $0xec] sm:$0xf] %v271
                %v273 = vld [vmem:[%s151 + $0x1b0] sm:$0xf]
                %274 = vst [vmem:[%s152 + $0xf0] sm:$0xf] %v273
                %v275 = vld [vmem:[%s151 + $0x1b4] sm:$0xf]
                %276 = vst [vmem:[%s152 + $0xf4] sm:$0xf] %v275
                %v277 = vld [vmem:[%s151 + $0x1b8] sm:$0xf]
                %278 = vst [vmem:[%s152 + $0xf8] sm:$0xf] %v277
                %v279 = vld [vmem:[%s151 + $0x1bc] sm:$0xf]
                %280 = vst [vmem:[%s152 + $0xfc] sm:$0xf] %v279
              $region45: #{forward.3} parent=39 // loop_footer
                %s150 = sadd.s32 1, %s146
              $region46: #{forward.3} parent=39 // loop_footer_branch
                %145 = sbr.rel target = $region42
              $region47: #{forward.3} parent=39 // loop_exit
                _
            $region40: #{forward.3} parent=31 // pred_fallthru
              _
          $region32: #{forward.3} parent=27 // pred_fallthru
            _
          %428 = vnop
        $region28: #{forward.3} parent=23 // pred_fallthru
          _
      $region24: #{forward.3} parent=5 // pred_fallthru
        _
      %p429 = scmp.le.s32.totalorder 1, %s9
      %p430 = scmp.lt.s32.totalorder %s9, 3
      %p431 = pnand %p429, %p430
      %p432 = pneg %p431
      // Predicated region
      $region66: #{forward.3} parent=5 // pred_check
        _
      $region67: #{forward.3} parent=5 // pred_check_branch
        %434 = sbr.rel (%p431) target = $region69
      $region68: #{forward.3} parent=5 // pred_region
        %s435 = ssub.s32 %s9, 1
        %s436 = sand.u32 %s22, 1
        %s437 = sand.u32 %s22, 1
        %s438 = smul.addr %s437, 256
        %s439 = scalar_lea.vmem [#allocation2], %s438
        // Predicated region
        $region70: #{forward.3} parent=68 // pred_check
          %p440 = pneg %p35
        $region71: #{forward.3} parent=68 // pred_check_branch
          %442 = sbr.rel (%p440) target = $region73
        $region72: #{forward.3} parent=68 // pred_region
          _
        $region73: #{forward.3} parent=68 // pred_fallthru
          _
        %s443 = sand.u32 %s22, 1
        %s444 = sand.u32 %s22, 1
        %s445 = smul.addr %s444, 256
        %s446 = scalar_lea.vmem [#allocation2], %s445
        %p447 = pneg %p35
        %p448 = pneg %p32
        %p449 = pneg %p56
        %p450 = pneg %p53
        %p451 = pneg %p77
        %p452 = pneg %p74
        %p453 = pneg %p103
        %p454 = pneg %p100
        %s455 = smul.u32 16, %s14
        %p456 = scmp.lt.s32.totalorder %s455, 31
        %s457 = scalar_select %p456, %s455, 31
        %s458 = smul.addr %s457, 4
        %s459 = scalar_lea.vmem %s3, %s458
        %s460 = smul.u32 16, %s14
        %s461 = smul.u32 16, %s14
        %p462 = scmp.lt.s32.totalorder %s461, 31
        %s463 = scalar_select %p462, %s461, 31
        %s464 = smul.addr %s463, 4
        %s465 = scalar_lea.vmem %s3, %s464
        %s466 = smul.u32 16, %s14
        %v468 = vld [vmem:[%s439] sm:$0xf]
        %v469 = vld [vmem:[%s439 + $0x4] sm:$0xf]
        %v470 = vld [vmem:[%s439 + $0x8] sm:$0xf]
        %v471 = vld [vmem:[%s439 + $0xc] sm:$0xf]
        %v472 = vld [vmem:[%s439 + $0x10] sm:$0xf]
        %v473 = vld [vmem:[%s439 + $0x14] sm:$0xf]
        %v474 = vld [vmem:[%s439 + $0x18] sm:$0xf]
        %v475 = vld [vmem:[%s439 + $0x1c] sm:$0xf]
        %v476 = vld [vmem:[%s439 + $0x20] sm:$0xf]
        %v477 = vld [vmem:[%s439 + $0x24] sm:$0xf]
        %v478 = vld [vmem:[%s439 + $0x28] sm:$0xf]
        %v479 = vld [vmem:[%s439 + $0x2c] sm:$0xf]
        %v480 = vld [vmem:[%s439 + $0x30] sm:$0xf]
        %v481 = vld [vmem:[%s439 + $0x34] sm:$0xf]
        %v482 = vld [vmem:[%s439 + $0x38] sm:$0xf]
        %v483 = vld [vmem:[%s439 + $0x3c] sm:$0xf]
        %v484 = vld [vmem:[%s439 + $0x40] sm:$0xf]
        %v485 = vld [vmem:[%s439 + $0x44] sm:$0xf]
        %v486 = vld [vmem:[%s439 + $0x48] sm:$0xf]
        %v487 = vld [vmem:[%s439 + $0x4c] sm:$0xf]
        %v488 = vld [vmem:[%s439 + $0x50] sm:$0xf]
        %v489 = vld [vmem:[%s439 + $0x54] sm:$0xf]
        %v490 = vld [vmem:[%s439 + $0x58] sm:$0xf]
        %v491 = vld [vmem:[%s439 + $0x5c] sm:$0xf]
        %v492 = vld [vmem:[%s439 + $0x60] sm:$0xf]
        %v493 = vld [vmem:[%s439 + $0x64] sm:$0xf]
        %v494 = vld [vmem:[%s439 + $0x68] sm:$0xf]
        %v495 = vld [vmem:[%s439 + $0x6c] sm:$0xf]
        %v496 = vld [vmem:[%s439 + $0x70] sm:$0xf]
        %v497 = vld [vmem:[%s439 + $0x74] sm:$0xf]
        %v498 = vld [vmem:[%s439 + $0x78] sm:$0xf]
        %v499 = vld [vmem:[%s439 + $0x7c] sm:$0xf]
        %v500 = vld [vmem:[%s439 + $0x80] sm:$0xf]
        %v501 = vld [vmem:[%s439 + $0x84] sm:$0xf]
        %v502 = vld [vmem:[%s439 + $0x88] sm:$0xf]
        %v503 = vld [vmem:[%s439 + $0x8c] sm:$0xf]
        %v504 = vld [vmem:[%s439 + $0x90] sm:$0xf]
        %v505 = vld [vmem:[%s439 + $0x94] sm:$0xf]
        %v506 = vld [vmem:[%s439 + $0x98] sm:$0xf]
        %v507 = vld [vmem:[%s439 + $0x9c] sm:$0xf]
        %v508 = vld [vmem:[%s439 + $0xa0] sm:$0xf]
        %v509 = vld [vmem:[%s439 + $0xa4] sm:$0xf]
        %v510 = vld [vmem:[%s439 + $0xa8] sm:$0xf]
        %v511 = vld [vmem:[%s439 + $0xac] sm:$0xf]
        %v512 = vld [vmem:[%s439 + $0xb0] sm:$0xf]
        %v513 = vld [vmem:[%s439 + $0xb4] sm:$0xf]
        %v514 = vld [vmem:[%s439 + $0xb8] sm:$0xf]
        %v515 = vld [vmem:[%s439 + $0xbc] sm:$0xf]
        %v516 = vld [vmem:[%s439 + $0xc0] sm:$0xf]
        %v517 = vld [vmem:[%s439 + $0xc4] sm:$0xf]
        %v518 = vld [vmem:[%s439 + $0xc8] sm:$0xf]
        %v519 = vld [vmem:[%s439 + $0xcc] sm:$0xf]
        %v520 = vld [vmem:[%s439 + $0xd0] sm:$0xf]
        %v521 = vld [vmem:[%s439 + $0xd4] sm:$0xf]
        %v522 = vld [vmem:[%s439 + $0xd8] sm:$0xf]
        %v523 = vld [vmem:[%s439 + $0xdc] sm:$0xf]
        %v524 = vld [vmem:[%s439 + $0xe0] sm:$0xf]
        %v525 = vld [vmem:[%s439 + $0xe4] sm:$0xf]
        %v526 = vld [vmem:[%s439 + $0xe8] sm:$0xf]
        %v527 = vld [vmem:[%s439 + $0xec] sm:$0xf]
        %v528 = vld [vmem:[%s439 + $0xf0] sm:$0xf]
        %v529 = vld [vmem:[%s439 + $0xf4] sm:$0xf]
        %v530 = vld [vmem:[%s439 + $0xf8] sm:$0xf]
        %v531 = vld [vmem:[%s439 + $0xfc] sm:$0xf]
        %v532 = vld [vmem:[%s1] sm:$0xf]
        %v533 = vld [vmem:[%s1 + $0x4] sm:$0xf]
        %v534 = vld [vmem:[%s1 + $0x8] sm:$0xf]
        %v535 = vld [vmem:[%s1 + $0xc] sm:$0xf]
        %v536 = vld [vmem:[%s1 + $0x10] sm:$0xf]
        %v537 = vld [vmem:[%s1 + $0x14] sm:$0xf]
        %v538 = vld [vmem:[%s1 + $0x18] sm:$0x7]
        %v603 = vunpack.c.l.b16 %v468
        %v604 = vunpack.c.l.b16 %v469
        %v605 = vunpack.c.l.b16 %v470
        %v606 = vunpack.c.l.b16 %v471
        %v607 = vunpack.c.l.b16 %v472
        %v608 = vunpack.c.l.b16 %v473
        %v609 = vunpack.c.l.b16 %v474
        %v610 = vunpack.c.l.b16 %v475
        %v611 = vunpack.c.l.b16 %v476
        %v612 = vunpack.c.l.b16 %v477
        %v613 = vunpack.c.l.b16 %v478
        %v614 = vunpack.c.l.b16 %v479
        %v615 = vunpack.c.l.b16 %v480
        %v616 = vunpack.c.l.b16 %v481
        %v617 = vunpack.c.l.b16 %v482
        %v618 = vunpack.c.l.b16 %v483
        %v619 = vunpack.c.l.b16 %v484
        %v620 = vunpack.c.l.b16 %v485
        %v621 = vunpack.c.l.b16 %v486
        %v622 = vunpack.c.l.b16 %v487
        %v623 = vunpack.c.l.b16 %v488
        %v624 = vunpack.c.l.b16 %v489
        %v625 = vunpack.c.l.b16 %v490
        %v626 = vunpack.c.l.b16 %v491
        %v627 = vunpack.c.l.b16 %v492
        %v628 = vunpack.c.l.b16 %v493
        %v629 = vunpack.c.l.b16 %v494
        %v630 = vunpack.c.l.b16 %v495
        %v631 = vunpack.c.l.b16 %v496
        %v632 = vunpack.c.l.b16 %v497
        %v633 = vunpack.c.l.b16 %v498
        %v634 = vunpack.c.l.b16 %v499
        %v635 = vunpack.c.l.b16 %v500
        %v636 = vunpack.c.l.b16 %v501
        %v637 = vunpack.c.l.b16 %v502
        %v638 = vunpack.c.l.b16 %v503
        %v639 = vunpack.c.l.b16 %v504
        %v640 = vunpack.c.l.b16 %v505
        %v641 = vunpack.c.l.b16 %v506
        %v642 = vunpack.c.l.b16 %v507
        %v643 = vunpack.c.l.b16 %v508
        %v644 = vunpack.c.l.b16 %v509
        %v645 = vunpack.c.l.b16 %v510
        %v646 = vunpack.c.l.b16 %v511
        %v647 = vunpack.c.l.b16 %v512
        %v648 = vunpack.c.l.b16 %v513
        %v649 = vunpack.c.l.b16 %v514
        %v650 = vunpack.c.l.b16 %v515
        %v651 = vunpack.c.l.b16 %v516
        %v652 = vunpack.c.l.b16 %v517
        %v653 = vunpack.c.l.b16 %v518
        %v654 = vunpack.c.l.b16 %v519
        %v655 = vunpack.c.l.b16 %v520
        %v656 = vunpack.c.l.b16 %v521
        %v657 = vunpack.c.l.b16 %v522
        %v658 = vunpack.c.l.b16 %v523
        %v659 = vunpack.c.l.b16 %v524
        %v660 = vunpack.c.l.b16 %v525
        %v661 = vunpack.c.l.b16 %v526
        %v662 = vunpack.c.l.b16 %v527
        %v663 = vunpack.c.l.b16 %v528
        %v664 = vunpack.c.l.b16 %v529
        %v665 = vunpack.c.l.b16 %v530
        %v666 = vunpack.c.l.b16 %v531
        %v667 = vpack.c.b16 %v604, %v603
        %v668 = vpack.c.b16 %v606, %v605
        %v669 = vpack.c.b16 %v608, %v607
        %v670 = vpack.c.b16 %v610, %v609
        %v671 = vpack.c.b16 %v612, %v611
        %v672 = vpack.c.b16 %v614, %v613
        %v673 = vpack.c.b16 %v616, %v615
        %v674 = vpack.c.b16 %v618, %v617
        %v675 = vpack.c.b16 %v620, %v619
        %v676 = vpack.c.b16 %v622, %v621
        %v677 = vpack.c.b16 %v624, %v623
        %v678 = vpack.c.b16 %v626, %v625
        %v679 = vpack.c.b16 %v628, %v627
        %v680 = vpack.c.b16 %v630, %v629
        %v681 = vpack.c.b16 %v632, %v631
        %v682 = vpack.c.b16 %v634, %v633
        %v683 = vpack.c.b16 %v636, %v635
        %v684 = vpack.c.b16 %v638, %v637
        %v685 = vpack.c.b16 %v640, %v639
        %v686 = vpack.c.b16 %v642, %v641
        %v687 = vpack.c.b16 %v644, %v643
        %v688 = vpack.c.b16 %v646, %v645
        %v689 = vpack.c.b16 %v648, %v647
        %v690 = vpack.c.b16 %v650, %v649
        %v691 = vpack.c.b16 %v652, %v651
        %v692 = vpack.c.b16 %v654, %v653
        %v693 = vpack.c.b16 %v656, %v655
        %v694 = vpack.c.b16 %v658, %v657
        %v695 = vpack.c.b16 %v660, %v659
        %v696 = vpack.c.b16 %v662, %v661
        %v697 = vpack.c.b16 %v664, %v663
        %v698 = vpack.c.b16 %v666, %v665
        %v706 = vunpack.c.l.b16 %v532
        %v707 = vunpack.c.l.b16 %v533
        %v708 = vunpack.c.l.b16 %v534
        %v709 = vunpack.c.l.b16 %v535
        %v710 = vunpack.c.l.b16 %v536
        %v711 = vunpack.c.l.b16 %v537
        %v712 = vunpack.c.l.b16 %v538
        %v713 = vpack.c.b16 %v707, %v706
        %v714 = vpack.c.b16 %v709, %v708
        %v715 = vpack.c.b16 %v711, %v710
        %v716 = vpack.c.b16 %v712, %v712
        %vm720 = vcmask 441344
        %v722 = vsel %vm720, %v667, 0
        %v725 = vsel %vm720, %v668, 0
        %v728 = vsel %vm720, %v669, 0
        %v731 = vsel %vm720, %v670, 0
        %v734 = vsel %vm720, %v671, 0
        %v737 = vsel %vm720, %v672, 0
        %v740 = vsel %vm720, %v673, 0
        %v743 = vsel %vm720, %v674, 0
        %v746 = vsel %vm720, %v675, 0
        %v749 = vsel %vm720, %v676, 0
        %v752 = vsel %vm720, %v677, 0
        %v755 = vsel %vm720, %v678, 0
        %v758 = vsel %vm720, %v679, 0
        %v761 = vsel %vm720, %v680, 0
        %v764 = vsel %vm720, %v681, 0
        %v767 = vsel %vm720, %v682, 0
        %v770 = vsel %vm720, %v683, 0
        %v773 = vsel %vm720, %v684, 0
        %v776 = vsel %vm720, %v685, 0
        %v779 = vsel %vm720, %v686, 0
        %v782 = vsel %vm720, %v687, 0
        %v785 = vsel %vm720, %v688, 0
        %v788 = vsel %vm720, %v689, 0
        %v791 = vsel %vm720, %v690, 0
        %v794 = vsel %vm720, %v691, 0
        %v797 = vsel %vm720, %v692, 0
        %v800 = vsel %vm720, %v693, 0
        %v803 = vsel %vm720, %v694, 0
        %v806 = vsel %vm720, %v695, 0
        %v809 = vsel %vm720, %v696, 0
        %v812 = vsel %vm720, %v697, 0
        %v815 = vsel %vm720, %v698, 0
        %vm817 = vcmask 1042432
        %v819 = vsel %vm817, %v716, 0
        %821 = vmatprep.subr.bf16.mxu0 0
        %822 = vmatpush1.bf16.msra.mxu0 %v713
        %823 = vmatprep.subr.bf16.mxu0 0
        %824 = vmatpush1.bf16.msra.mxu0 %v714
        %825 = vmatprep.subr.bf16.mxu0 0
        %826 = vmatpush1.bf16.msra.mxu0 %v715
        %827 = vmatprep.subr.bf16.mxu0 0
        %828 = vmatpush1.bf16.msra.mxu0 %v819
        %829 = vmatprep.subr.bf16.mxu0 0
        %830 = vmatpush1.bf16.msra.mxu0 0
        %831 = vmatprep.subr.bf16.mxu0 0
        %832 = vmatpush1.bf16.msra.mxu0 0
        %833 = vmatprep.subr.bf16.mxu0 0
        %834 = vmatpush1.bf16.msra.mxu0 0
        %835 = vmatprep.subr.bf16.mxu0 0
        %836 = vmatpush1.bf16.msra.mxu0 0
        %837 = vmatprep.subr.bf16.mxu0 0
        %838 = vmatpush1.bf16.msra.mxu0 0
        %839 = vmatprep.subr.bf16.mxu0 0
        %840 = vmatpush1.bf16.msra.mxu0 0
        %841 = vmatprep.subr.bf16.mxu0 0
        %842 = vmatpush1.bf16.msra.mxu0 0
        %843 = vmatprep.subr.bf16.mxu0 0
        %844 = vmatpush1.bf16.msra.mxu0 0
        %845 = vmatprep.subr.bf16.mxu0 0
        %846 = vmatpush1.bf16.msra.mxu0 0
        %847 = vmatprep.subr.bf16.mxu0 0
        %848 = vmatpush1.bf16.msra.mxu0 0
        %849 = vmatprep.subr.bf16.mxu0 0
        %850 = vmatpush1.bf16.msra.mxu0 0
        %851 = vmatprep.subr.bf16.mxu0 0
        %852 = vmatpush1.bf16.msra.mxu0 0
        %853 = vmatprep.mubr.bf16.mxu0 0
        %854 = vmatmul.mubr.bf16.gmra.mrb[0].mxu0 %v722
        %v855 = vpop.f32.mrb[0].mxu0
        %v856 = vadd.f32 0.0, %v855
        %v857 = vpop.f32.mrb[0].mxu0
        %v858 = vpop.f32.mrb[0].mxu0
        %v859 = vadd.f32 0.0, %v858
        %v860 = vpop.f32.mrb[0].mxu0
        %861 = vmatprep.mubr.bf16.mxu0 0
        %862 = vmatmul.mubr.bf16.gmra.mrb[0].mxu0 %v725
        %v863 = vpop.f32.mrb[0].mxu0
        %v864 = vadd.f32 0.0, %v863
        %v865 = vpop.f32.mrb[0].mxu0
        %v866 = vpop.f32.mrb[0].mxu0
        %v867 = vadd.f32 0.0, %v866
        %v868 = vpop.f32.mrb[0].mxu0
        %869 = vmatprep.mubr.bf16.mxu0 0
        %870 = vmatmul.mubr.bf16.gmra.mrb[0].mxu0 %v728
        %v871 = vpop.f32.mrb[0].mxu0
        %v872 = vadd.f32 0.0, %v871
        %v873 = vpop.f32.mrb[0].mxu0
        %v874 = vpop.f32.mrb[0].mxu0
        %v875 = vadd.f32 0.0, %v874
        %v876 = vpop.f32.mrb[0].mxu0
        %877 = vmatprep.mubr.bf16.mxu0 0
        %878 = vmatmul.mubr.bf16.gmra.mrb[0].mxu0 %v731
        %v879 = vpop.f32.mrb[0].mxu0
        %v880 = vadd.f32 0.0, %v879
        %v881 = vpop.f32.mrb[0].mxu0
        %v882 = vpop.f32.mrb[0].mxu0
        %v883 = vadd.f32 0.0, %v882
        %v884 = vpop.f32.mrb[0].mxu0
        %885 = vmatprep.mubr.bf16.mxu0 0
        %886 = vmatmul.mubr.bf16.gmra.mrb[0].mxu0 %v734
        %v887 = vpop.f32.mrb[0].mxu0
        %v888 = vadd.f32 0.0, %v887
        %v889 = vpop.f32.mrb[0].mxu0
        %v890 = vpop.f32.mrb[0].mxu0
        %v891 = vadd.f32 0.0, %v890
        %v892 = vpop.f32.mrb[0].mxu0
        %893 = vmatprep.mubr.bf16.mxu0 0
        %894 = vmatmul.mubr.bf16.gmra.mrb[0].mxu0 %v737
        %v895 = vpop.f32.mrb[0].mxu0
        %v896 = vadd.f32 0.0, %v895
        %v897 = vpop.f32.mrb[0].mxu0
        %v898 = vpop.f32.mrb[0].mxu0
        %v899 = vadd.f32 0.0, %v898
        %v900 = vpop.f32.mrb[0].mxu0
        %901 = vmatprep.mubr.bf16.mxu0 0
        %902 = vmatmul.mubr.bf16.gmra.mrb[0].mxu0 %v740
        %v903 = vpop.f32.mrb[0].mxu0
        %v904 = vadd.f32 0.0, %v903
        %v905 = vpop.f32.mrb[0].mxu0
        %v906 = vpop.f32.mrb[0].mxu0
        %v907 = vadd.f32 0.0, %v906
        %v908 = vpop.f32.mrb[0].mxu0
        %909 = vmatprep.mubr.bf16.mxu0 0
        %910 = vmatmul.mubr.bf16.gmra.mrb[0].mxu0 %v743
        %v911 = vpop.f32.mrb[0].mxu0
        %v912 = vadd.f32 0.0, %v911
        %v913 = vpop.f32.mrb[0].mxu0
        %v914 = vpop.f32.mrb[0].mxu0
        %v915 = vadd.f32 0.0, %v914
        %v916 = vpop.f32.mrb[0].mxu0
        %917 = vmatprep.mubr.bf16.mxu0 0
        %918 = vmatmul.mubr.bf16.gmra.mrb[0].mxu0 %v746
        %v919 = vpop.f32.mrb[0].mxu0
        %v920 = vadd.f32 0.0, %v919
        %v921 = vpop.f32.mrb[0].mxu0
        %v922 = vpop.f32.mrb[0].mxu0
        %v923 = vadd.f32 0.0, %v922
        %v924 = vpop.f32.mrb[0].mxu0
        %925 = vmatprep.mubr.bf16.mxu0 0
        %926 = vmatmul.mubr.bf16.gmra.mrb[0].mxu0 %v749
        %v927 = vpop.f32.mrb[0].mxu0
        %v928 = vadd.f32 0.0, %v927
        %v929 = vpop.f32.mrb[0].mxu0
        %v930 = vpop.f32.mrb[0].mxu0
        %v931 = vadd.f32 0.0, %v930
        %v932 = vpop.f32.mrb[0].mxu0
        %933 = vmatprep.mubr.bf16.mxu0 0
        %934 = vmatmul.mubr.bf16.gmra.mrb[0].mxu0 %v752
        %v935 = vpop.f32.mrb[0].mxu0
        %v936 = vadd.f32 0.0, %v935
        %v937 = vpop.f32.mrb[0].mxu0
        %v938 = vpop.f32.mrb[0].mxu0
        %v939 = vadd.f32 0.0, %v938
        %v940 = vpop.f32.mrb[0].mxu0
        %941 = vmatprep.mubr.bf16.mxu0 0
        %942 = vmatmul.mubr.bf16.gmra.mrb[0].mxu0 %v755
        %v943 = vpop.f32.mrb[0].mxu0
        %v944 = vadd.f32 0.0, %v943
        %v945 = vpop.f32.mrb[0].mxu0
        %v946 = vpop.f32.mrb[0].mxu0
        %v947 = vadd.f32 0.0, %v946
        %v948 = vpop.f32.mrb[0].mxu0
        %949 = vmatprep.mubr.bf16.mxu0 0
        %950 = vmatmul.mubr.bf16.gmra.mrb[0].mxu0 %v758
        %v951 = vpop.f32.mrb[0].mxu0
        %v952 = vadd.f32 0.0, %v951
        %v953 = vpop.f32.mrb[0].mxu0
        %v954 = vpop.f32.mrb[0].mxu0
        %v955 = vadd.f32 0.0, %v954
        %v956 = vpop.f32.mrb[0].mxu0
        %957 = vmatprep.mubr.bf16.mxu0 0
        %958 = vmatmul.mubr.bf16.gmra.mrb[0].mxu0 %v761
        %v959 = vpop.f32.mrb[0].mxu0
        %v960 = vadd.f32 0.0, %v959
        %v961 = vpop.f32.mrb[0].mxu0
        %v962 = vpop.f32.mrb[0].mxu0
        %v963 = vadd.f32 0.0, %v962
        %v964 = vpop.f32.mrb[0].mxu0
        %965 = vmatprep.mubr.bf16.mxu0 0
        %966 = vmatmul.mubr.bf16.gmra.mrb[0].mxu0 %v764
        %v967 = vpop.f32.mrb[0].mxu0
        %v968 = vadd.f32 0.0, %v967
        %v969 = vpop.f32.mrb[0].mxu0
        %v970 = vpop.f32.mrb[0].mxu0
        %v971 = vadd.f32 0.0, %v970
        %v972 = vpop.f32.mrb[0].mxu0
        %973 = vmatprep.mubr.bf16.mxu0 0
        %974 = vmatmul.mubr.bf16.gmra.mrb[0].mxu0 %v767
        %v975 = vpop.f32.mrb[0].mxu0
        %v976 = vadd.f32 0.0, %v975
        %v977 = vpop.f32.mrb[0].mxu0
        %v978 = vpop.f32.mrb[0].mxu0
        %v979 = vadd.f32 0.0, %v978
        %v980 = vpop.f32.mrb[0].mxu0
        %981 = vmatprep.mubr.bf16.mxu0 0
        %982 = vmatmul.mubr.bf16.gmra.mrb[0].mxu0 %v770
        %v983 = vpop.f32.mrb[0].mxu0
        %v984 = vadd.f32 0.0, %v983
        %v985 = vpop.f32.mrb[0].mxu0
        %v986 = vpop.f32.mrb[0].mxu0
        %v987 = vadd.f32 0.0, %v986
        %v988 = vpop.f32.mrb[0].mxu0
        %989 = vmatprep.mubr.bf16.mxu0 0
        %990 = vmatmul.mubr.bf16.gmra.mrb[0].mxu0 %v773
        %v991 = vpop.f32.mrb[0].mxu0
        %v992 = vadd.f32 0.0, %v991
        %v993 = vpop.f32.mrb[0].mxu0
        %v994 = vpop.f32.mrb[0].mxu0
        %v995 = vadd.f32 0.0, %v994
        %v996 = vpop.f32.mrb[0].mxu0
        %997 = vmatprep.mubr.bf16.mxu0 0
        %998 = vmatmul.mubr.bf16.gmra.mrb[0].mxu0 %v776
        %v999 = vpop.f32.mrb[0].mxu0
        %v1000 = vadd.f32 0.0, %v999
        %v1001 = vpop.f32.mrb[0].mxu0
        %v1002 = vpop.f32.mrb[0].mxu0
        %v1003 = vadd.f32 0.0, %v1002
        %v1004 = vpop.f32.mrb[0].mxu0
        %1005 = vmatprep.mubr.bf16.mxu0 0
        %1006 = vmatmul.mubr.bf16.gmra.mrb[0].mxu0 %v779
        %v1007 = vpop.f32.mrb[0].mxu0
        %v1008 = vadd.f32 0.0, %v1007
        %v1009 = vpop.f32.mrb[0].mxu0
        %v1010 = vpop.f32.mrb[0].mxu0
        %v1011 = vadd.f32 0.0, %v1010
        %v1012 = vpop.f32.mrb[0].mxu0
        %1013 = vmatprep.mubr.bf16.mxu0 0
        %1014 = vmatmul.mubr.bf16.gmra.mrb[0].mxu0 %v782
        %v1015 = vpop.f32.mrb[0].mxu0
        %v1016 = vadd.f32 0.0, %v1015
        %v1017 = vpop.f32.mrb[0].mxu0
        %v1018 = vpop.f32.mrb[0].mxu0
        %v1019 = vadd.f32 0.0, %v1018
        %v1020 = vpop.f32.mrb[0].mxu0
        %1021 = vmatprep.mubr.bf16.mxu0 0
        %1022 = vmatmul.mubr.bf16.gmra.mrb[0].mxu0 %v785
        %v1023 = vpop.f32.mrb[0].mxu0
        %v1024 = vadd.f32 0.0, %v1023
        %v1025 = vpop.f32.mrb[0].mxu0
        %v1026 = vpop.f32.mrb[0].mxu0
        %v1027 = vadd.f32 0.0, %v1026
        %v1028 = vpop.f32.mrb[0].mxu0
        %1029 = vmatprep.mubr.bf16.mxu0 0
        %1030 = vmatmul.mubr.bf16.gmra.mrb[0].mxu0 %v788
        %v1031 = vpop.f32.mrb[0].mxu0
        %v1032 = vadd.f32 0.0, %v1031
        %v1033 = vpop.f32.mrb[0].mxu0
        %v1034 = vpop.f32.mrb[0].mxu0
        %v1035 = vadd.f32 0.0, %v1034
        %v1036 = vpop.f32.mrb[0].mxu0
        %1037 = vmatprep.mubr.bf16.mxu0 0
        %1038 = vmatmul.mubr.bf16.gmra.mrb[0].mxu0 %v791
        %v1039 = vpop.f32.mrb[0].mxu0
        %v1040 = vadd.f32 0.0, %v1039
        %v1041 = vpop.f32.mrb[0].mxu0
        %v1042 = vpop.f32.mrb[0].mxu0
        %v1043 = vadd.f32 0.0, %v1042
        %v1044 = vpop.f32.mrb[0].mxu0
        %1045 = vmatprep.mubr.bf16.mxu0 0
        %1046 = vmatmul.mubr.bf16.gmra.mrb[0].mxu0 %v794
        %v1047 = vpop.f32.mrb[0].mxu0
        %v1048 = vadd.f32 0.0, %v1047
        %v1049 = vpop.f32.mrb[0].mxu0
        %v1050 = vpop.f32.mrb[0].mxu0
        %v1051 = vadd.f32 0.0, %v1050
        %v1052 = vpop.f32.mrb[0].mxu0
        %1053 = vmatprep.mubr.bf16.mxu0 0
        %1054 = vmatmul.mubr.bf16.gmra.mrb[0].mxu0 %v797
        %v1055 = vpop.f32.mrb[0].mxu0
        %v1056 = vadd.f32 0.0, %v1055
        %v1057 = vpop.f32.mrb[0].mxu0
        %v1058 = vpop.f32.mrb[0].mxu0
        %v1059 = vadd.f32 0.0, %v1058
        %v1060 = vpop.f32.mrb[0].mxu0
        %1061 = vmatprep.mubr.bf16.mxu0 0
        %1062 = vmatmul.mubr.bf16.gmra.mrb[0].mxu0 %v800
        %v1063 = vpop.f32.mrb[0].mxu0
        %v1064 = vadd.f32 0.0, %v1063
        %v1065 = vpop.f32.mrb[0].mxu0
        %v1066 = vpop.f32.mrb[0].mxu0
        %v1067 = vadd.f32 0.0, %v1066
        %v1068 = vpop.f32.mrb[0].mxu0
        %1069 = vmatprep.mubr.bf16.mxu0 0
        %1070 = vmatmul.mubr.bf16.gmra.mrb[0].mxu0 %v803
        %v1071 = vpop.f32.mrb[0].mxu0
        %v1072 = vadd.f32 0.0, %v1071
        %v1073 = vpop.f32.mrb[0].mxu0
        %v1074 = vpop.f32.mrb[0].mxu0
        %v1075 = vadd.f32 0.0, %v1074
        %v1076 = vpop.f32.mrb[0].mxu0
        %1077 = vmatprep.mubr.bf16.mxu0 0
        %1078 = vmatmul.mubr.bf16.gmra.mrb[0].mxu0 %v806
        %v1079 = vpop.f32.mrb[0].mxu0
        %v1080 = vadd.f32 0.0, %v1079
        %v1081 = vpop.f32.mrb[0].mxu0
        %v1082 = vpop.f32.mrb[0].mxu0
        %v1083 = vadd.f32 0.0, %v1082
        %v1084 = vpop.f32.mrb[0].mxu0
        %1085 = vmatprep.mubr.bf16.mxu0 0
        %1086 = vmatmul.mubr.bf16.gmra.mrb[0].mxu0 %v809
        %v1087 = vpop.f32.mrb[0].mxu0
        %v1088 = vadd.f32 0.0, %v1087
        %v1089 = vpop.f32.mrb[0].mxu0
        %v1090 = vpop.f32.mrb[0].mxu0
        %v1091 = vadd.f32 0.0, %v1090
        %v1092 = vpop.f32.mrb[0].mxu0
        %1093 = vmatprep.mubr.bf16.mxu0 0
        %1094 = vmatmul.mubr.bf16.gmra.mrb[0].mxu0 %v812
        %v1095 = vpop.f32.mrb[0].mxu0
        %v1096 = vadd.f32 0.0, %v1095
        %v1097 = vpop.f32.mrb[0].mxu0
        %v1098 = vpop.f32.mrb[0].mxu0
        %v1099 = vadd.f32 0.0, %v1098
        %v1100 = vpop.f32.mrb[0].mxu0
        %1101 = vmatprep.mubr.bf16.mxu0 0
        %1102 = vmatmul.mubr.bf16.gmra.mrb[0].mxu0 %v815
        %v1103 = vpop.f32.mrb[0].mxu0
        %v1104 = vadd.f32 0.0, %v1103
        %v1105 = vpop.f32.mrb[0].mxu0
        %v1106 = vpop.f32.mrb[0].mxu0
        %v1107 = vadd.f32 0.0, %v1106
        %v1108 = vpop.f32.mrb[0].mxu0
        %1109 = vdwg.mxu0
        %v1110 = vmax.f32 %v856, %v920
        %v1111 = vmax.f32 %v859, %v923
        %v1112 = vmax.f32 %v864, %v928
        %v1113 = vmax.f32 %v867, %v931
        %v1114 = vmax.f32 %v872, %v936
        %v1115 = vmax.f32 %v875, %v939
        %v1116 = vmax.f32 %v880, %v944
        %v1117 = vmax.f32 %v883, %v947
        %v1118 = vmax.f32 %v888, %v952
        %v1119 = vmax.f32 %v891, %v955
        %v1120 = vmax.f32 %v896, %v960
        %v1121 = vmax.f32 %v899, %v963
        %v1122 = vmax.f32 %v904, %v968
        %v1123 = vmax.f32 %v907, %v971
        %v1124 = vmax.f32 %v912, %v976
        %v1125 = vmax.f32 %v915, %v979
        %v1126 = vmax.f32 %v984, %v1048
        %v1127 = vmax.f32 %v987, %v1051
        %v1128 = vmax.f32 %v992, %v1056
        %v1129 = vmax.f32 %v995, %v1059
        %v1130 = vmax.f32 %v1000, %v1064
        %v1131 = vmax.f32 %v1003, %v1067
        %v1132 = vmax.f32 %v1008, %v1072
        %v1133 = vmax.f32 %v1011, %v1075
        %v1134 = vmax.f32 %v1016, %v1080
        %v1135 = vmax.f32 %v1019, %v1083
        %v1136 = vmax.f32 %v1024, %v1088
        %v1137 = vmax.f32 %v1027, %v1091
        %v1138 = vmax.f32 %v1032, %v1096
        %v1139 = vmax.f32 %v1035, %v1099
        %v1140 = vmax.f32 %v1040, %v1104
        %v1141 = vmax.f32 %v1043, %v1107
        %v1142 = vmax.f32 %v1110, %v1126
        %v1143 = vmax.f32 %v1111, %v1127
        %v1144 = vmax.f32 %v1112, %v1128
        %v1145 = vmax.f32 %v1113, %v1129
        %v1146 = vmax.f32 %v1114, %v1130
        %v1147 = vmax.f32 %v1115, %v1131
        %v1148 = vmax.f32 %v1116, %v1132
        %v1149 = vmax.f32 %v1117, %v1133
        %v1150 = vmax.f32 %v1118, %v1134
        %v1151 = vmax.f32 %v1119, %v1135
        %v1152 = vmax.f32 %v1120, %v1136
        %v1153 = vmax.f32 %v1121, %v1137
        %v1154 = vmax.f32 %v1122, %v1138
        %v1155 = vmax.f32 %v1123, %v1139
        %v1156 = vmax.f32 %v1124, %v1140
        %v1157 = vmax.f32 %v1125, %v1141
        %v1158 = vld [vmem:[%s2] sm:$0x1]
        %v1160 = vlaneseq
        %v1161 = vshrl.u32 %v1160, 7
        %v1162 = vsub.s32 0, %v1161
        %v1163 = vrot.slane %v1158, %v1162
        %v1165 = vadd.f32 %v1142, %v1163
        %v1166 = vadd.f32 %v1143, %v1163
        %v1167 = vadd.f32 %v1144, %v1163
        %v1168 = vadd.f32 %v1145, %v1163
        %v1169 = vadd.f32 %v1146, %v1163
        %v1170 = vadd.f32 %v1147, %v1163
        %v1171 = vadd.f32 %v1148, %v1163
        %v1172 = vadd.f32 %v1149, %v1163
        %v1173 = vadd.f32 %v1150, %v1163
        %v1174 = vadd.f32 %v1151, %v1163
        %v1175 = vadd.f32 %v1152, %v1163
        %v1176 = vadd.f32 %v1153, %v1163
        %v1177 = vadd.f32 %v1154, %v1163
        %v1178 = vadd.f32 %v1155, %v1163
        %v1179 = vadd.f32 %v1156, %v1163
        %v1180 = vadd.f32 %v1157, %v1163
        %v1181 = vmax.f32 %v1165, 0.0
        %v1182 = vmax.f32 %v1166, 0.0
        %v1183 = vmax.f32 %v1167, 0.0
        %v1184 = vmax.f32 %v1168, 0.0
        %v1185 = vmax.f32 %v1169, 0.0
        %v1186 = vmax.f32 %v1170, 0.0
        %v1187 = vmax.f32 %v1171, 0.0
        %v1188 = vmax.f32 %v1172, 0.0
        %v1189 = vmax.f32 %v1173, 0.0
        %v1190 = vmax.f32 %v1174, 0.0
        %v1191 = vmax.f32 %v1175, 0.0
        %v1192 = vmax.f32 %v1176, 0.0
        %v1193 = vmax.f32 %v1177, 0.0
        %v1194 = vmax.f32 %v1178, 0.0
        %v1195 = vmax.f32 %v1179, 0.0
        %v1196 = vmax.f32 %v1180, 0.0
        %v1197 = vpack.c.bf16 %v1182, %v1181
        %v1198 = vpack.c.bf16 %v1184, %v1183
        %v1199 = vpack.c.bf16 %v1186, %v1185
        %v1200 = vpack.c.bf16 %v1188, %v1187
        %v1201 = vpack.c.bf16 %v1190, %v1189
        %v1202 = vpack.c.bf16 %v1192, %v1191
        %v1203 = vpack.c.bf16 %v1194, %v1193
        %v1204 = vpack.c.bf16 %v1196, %v1195
        %v1213 = vunpack.c.l.b16 %v1197
        %v1214 = vunpack.c.h.b16 %v1197
        %v1215 = vunpack.c.l.b16 %v1198
        %v1216 = vunpack.c.h.b16 %v1198
        %v1217 = vunpack.c.l.b16 %v1199
        %v1218 = vunpack.c.h.b16 %v1199
        %v1219 = vunpack.c.l.b16 %v1200
        %v1220 = vunpack.c.h.b16 %v1200
        %v1221 = vunpack.c.l.b16 %v1201
        %v1222 = vunpack.c.h.b16 %v1201
        %v1223 = vunpack.c.l.b16 %v1202
        %v1224 = vunpack.c.h.b16 %v1202
        %v1225 = vunpack.c.l.b16 %v1203
        %v1226 = vunpack.c.h.b16 %v1203
        %v1227 = vunpack.c.l.b16 %v1204
        %v1228 = vunpack.c.h.b16 %v1204
        %v1229 = vpack.c.b16 %v1213, %v1213
        %v1230 = vpack.c.b16 %v1214, %v1214
        %v1231 = vpack.c.b16 %v1215, %v1215
        %v1232 = vpack.c.b16 %v1216, %v1216
        %v1233 = vpack.c.b16 %v1217, %v1217
        %v1234 = vpack.c.b16 %v1218, %v1218
        %v1235 = vpack.c.b16 %v1219, %v1219
        %v1236 = vpack.c.b16 %v1220, %v1220
        %v1237 = vpack.c.b16 %v1221, %v1221
        %v1238 = vpack.c.b16 %v1222, %v1222
        %v1239 = vpack.c.b16 %v1223, %v1223
        %v1240 = vpack.c.b16 %v1224, %v1224
        %v1241 = vpack.c.b16 %v1225, %v1225
        %v1242 = vpack.c.b16 %v1226, %v1226
        %v1243 = vpack.c.b16 %v1227, %v1227
        %v1244 = vpack.c.b16 %v1228, %v1228
        %1261 = vst [vmem:[%s465] sm:$0xf] %v1229
        %1262 = vst [vmem:[%s465 + $0x4] sm:$0xf] %v1230
        %1263 = vst [vmem:[%s465 + $0x8] sm:$0xf] %v1231
        %1264 = vst [vmem:[%s465 + $0xc] sm:$0xf] %v1232
        %1265 = vst [vmem:[%s465 + $0x10] sm:$0xf] %v1233
        %1266 = vst [vmem:[%s465 + $0x14] sm:$0xf] %v1234
        %1267 = vst [vmem:[%s465 + $0x18] sm:$0xf] %v1235
        %1268 = vst [vmem:[%s465 + $0x1c] sm:$0xf] %v1236
        %1269 = vst [vmem:[%s465 + $0x20] sm:$0xf] %v1237
        %1270 = vst [vmem:[%s465 + $0x24] sm:$0xf] %v1238
        %1271 = vst [vmem:[%s465 + $0x28] sm:$0xf] %v1239
        %1272 = vst [vmem:[%s465 + $0x2c] sm:$0xf] %v1240
        %1273 = vst [vmem:[%s465 + $0x30] sm:$0xf] %v1241
        %1274 = vst [vmem:[%s465 + $0x34] sm:$0xf] %v1242
        %1275 = vst [vmem:[%s465 + $0x38] sm:$0xf] %v1243
        %1276 = vst [vmem:[%s465 + $0x3c] sm:$0xf] %v1244
        %s1277 = smul.u32 16, %s14
        %p1278 = scmp.lt.s32.totalorder %s1277, 31
        %s1279 = scalar_select %p1278, %s1277, 31
        %s1280 = smul.addr %s1279, 4
        %s1281 = scalar_lea.vmem %s3, %s1280
        // Predicated region
        $region74: #{forward.3} parent=68 // pred_check
          %p1282 = pneg %p100
        $region75: #{forward.3} parent=68 // pred_check_branch
          %1284 = sbr.rel (%p1282) target = $region77
        $region76: #{forward.3} parent=68 // pred_region
          %s1285 = smul.u32 16, %s14
        $region77: #{forward.3} parent=68 // pred_fallthru
          _
      $region69: #{forward.3} parent=5 // pred_fallthru
        _
      %p1286 = scmp.le.s32.totalorder 2, %s9
      // Predicated region
      $region78: #{forward.3} parent=5 // pred_check
        %p1287 = pneg %p1286
      $region79: #{forward.3} parent=5 // pred_check_branch
        %1289 = sbr.rel (%p1287) target = $region81
      $region80: #{forward.3} parent=5 // pred_region
        %s1290 = ssub.s32 %s9, 2
        // Predicated region
        $region82: #{forward.3} parent=80 // pred_check
          %p1291 = pneg %p106
        $region83: #{forward.3} parent=80 // pred_check_branch
          %1293 = sbr.rel (%p1291) target = $region85
        $region84: #{forward.3} parent=80 // pred_region
          %s1294 = smul.u32 16, %s15
          %p1295 = scmp.lt.s32.totalorder %s1294, 31
          %s1296 = scalar_select %p1295, %s1294, 31
          %s1297 = smul.addr %s1296, 4
          %s1298 = scalar_lea.vmem %s3, %s1297
        $region85: #{forward.3} parent=80 // pred_fallthru
          _
      $region81: #{forward.3} parent=5 // pred_fallthru
        _
    $region6: #{forward.3} parent=1 // loop_footer
      %s13 = sadd.s32 1, %s9
    $region7: #{forward.3} parent=1 // loop_footer_branch
      %8 = sbr.rel target = $region3
    $region8: #{forward.3} parent=1 // loop_exit
      _

// kernel: forward.4
$region0: #{forward.4}
  #allocation0 [shape = 'u32[]', space=smem, size = 0x4, offset = 0x4, fixed_abs, tag = 'smem constant byte address 0x4 - core index']
  #allocation1 [shape = 'u32[144,128]{1,0:T(1,128)}', space=vmem, size = 0x12000, scoped, tag = 'internal scratch']
  %s0 = inlined_call_operand.vmem [shape: bf16[4,64,1152], index: 0, kind: input, shape index: {}]
  %s1 = inlined_call_operand.vmem [shape: bf16[1152,128], index: 1, kind: input, shape index: {}]
  %s2 = inlined_call_operand.vmem [shape: f32[1,128], index: 2, kind: input, shape index: {}]
  %s3 = inlined_call_operand.vmem [shape: bf16[64,128], index: 3, kind: output, shape index: {}]
  %s4 = sld [smem:[#allocation0]]
  $region71: #{forward.4} parent=0
    _
  %s6 = ssub.s32 1, %s4
  %s7 = scalar_select 0, %s6, %s4
  $region1: #{forward.4} parent=0
    #allocation2 [shape = 'u8[589824]{0}', space=vmem, size = 0x90000, scoped, tag = 'input window, operand 0']
    loop: start=0, step=1, limit=4
    $region2: #{forward.4} parent=1 // loop_pre_header
      _
    $region3: #{forward.4} parent=1 // loop_header
      %s9 = sphi 0, %s13
      %p10 = scmp.ge.s32.totalorder %s9, 4
      %s19 = sphi 0, %s21
      %s22 = sphi 0, %s19
      %s23 = sphi 0, %s22
      %s39 = sphi 0, %s23
      %s43 = sphi 0, %s43
      %s45 = sphi 0, %s43
      %s46 = sphi 0, %s45
      %s60 = sphi 0, %s46
      %s64 = sphi 0, %s64
      %s66 = sphi 0, %s64
      %s67 = sphi 0, %s66
      %s81 = sphi 0, %s67
      %s87 = sphi 0, %s89
      %s90 = sphi 0, %s87
      %s91 = sphi 0, %s90
      %s107 = sphi 0, %s91
    $region4: #{forward.4} parent=1 // loop_header_branch
      %12 = sbr.rel (%p10) target = $region8
    $region5: #{forward.4} parent=1 // loop_body
      %s14 = ssub.s32 %s9, 1
      %s15 = ssub.s32 %s9, 2
      %s16 = sadd.s32 %s9, 1
      %s17 = ssub.s32 %s9, %s16
      %p18 = scmp.eq.s32.totalorder %s17, 0
      %s20 = sadd.s32 %s19, 1
      %s21 = scalar_select %p18, %s19, %s20
      %p24 = pneg %p18
      %p25 = scmp.eq.s32.totalorder %s9, 1
      %p26 = por %p24, %p25
      %p27 = scmp.ne.s32.totalorder %s19, %s22
      %p28 = scmp.eq.s32.totalorder %s9, 0
      %p29 = por %p27, %p28
      %p30 = scmp.ne.s32.totalorder %s19, %s22
      %p31 = scmp.eq.s32.totalorder %s14, 1
      %p32 = por %p30, %p31
      %p33 = scmp.ne.s32.totalorder %s22, %s23
      %p34 = scmp.eq.s32.totalorder %s14, 0
      %p35 = por %p33, %p34
      %p36 = scmp.ne.s32.totalorder %s22, %s23
      %p37 = scmp.eq.s32.totalorder %s15, 1
      %p38 = por %p36, %p37
      %p40 = scmp.ne.s32.totalorder %s23, %s39
      %p41 = scmp.eq.s32.totalorder %s15, 0
      %p42 = por %p40, %p41
      %s44 = sadd.s32 %s43, 1
      %p47 = scmp.eq.s32.totalorder %s9, 1
      %p48 = scmp.ne.s32.totalorder %s43, %s45
      %p49 = scmp.eq.s32.totalorder %s9, 0
      %p50 = por %p48, %p49
      %p51 = scmp.ne.s32.totalorder %s43, %s45
      %p52 = scmp.eq.s32.totalorder %s14, 1
      %p53 = por %p51, %p52
      %p54 = scmp.ne.s32.totalorder %s45, %s46
      %p55 = scmp.eq.s32.totalorder %s14, 0
      %p56 = por %p54, %p55
      %p57 = scmp.ne.s32.totalorder %s45, %s46
      %p58 = scmp.eq.s32.totalorder %s15, 1
      %p59 = por %p57, %p58
      %p61 = scmp.ne.s32.totalorder %s46, %s60
      %p62 = scmp.eq.s32.totalorder %s15, 0
      %p63 = por %p61, %p62
      %s65 = sadd.s32 %s64, 1
      %p68 = scmp.eq.s32.totalorder %s9, 1
      %p69 = scmp.ne.s32.totalorder %s64, %s66
      %p70 = scmp.eq.s32.totalorder %s9, 0
      %p71 = por %p69, %p70
      %p72 = scmp.ne.s32.totalorder %s64, %s66
      %p73 = scmp.eq.s32.totalorder %s14, 1
      %p74 = por %p72, %p73
      %p75 = scmp.ne.s32.totalorder %s66, %s67
      %p76 = scmp.eq.s32.totalorder %s14, 0
      %p77 = por %p75, %p76
      %p78 = scmp.ne.s32.totalorder %s66, %s67
      %p79 = scmp.eq.s32.totalorder %s15, 1
      %p80 = por %p78, %p79
      %p82 = scmp.ne.s32.totalorder %s67, %s81
      %p83 = scmp.eq.s32.totalorder %s15, 0
      %p84 = por %p82, %p83
      %s85 = ssub.s32 %s9, %s16
      %p86 = scmp.eq.s32.totalorder %s85, 0
      %s88 = sadd.s32 %s87, 1
      %s89 = scalar_select %p86, %s87, %s88
      %p92 = pneg %p86
      %p93 = scmp.eq.s32.totalorder %s9, 1
      %p94 = por %p92, %p93
      %p95 = scmp.ne.s32.totalorder %s87, %s90
      %p96 = scmp.eq.s32.totalorder %s9, 0
      %p97 = por %p95, %p96
      %p98 = scmp.ne.s32.totalorder %s87, %s90
      %p99 = scmp.eq.s32.totalorder %s14, 1
      %p100 = por %p98, %p99
      %p101 = scmp.ne.s32.totalorder %s90, %s91
      %p102 = scmp.eq.s32.totalorder %s14, 0
      %p103 = por %p101, %p102
      %p104 = scmp.ne.s32.totalorder %s90, %s91
      %p105 = scmp.eq.s32.totalorder %s15, 1
      %p106 = por %p104, %p105
      %p108 = scmp.ne.s32.totalorder %s91, %s107
      %p109 = scmp.eq.s32.totalorder %s15, 0
      %p110 = por %p108, %p109
      %p111 = scmp.le.s32.totalorder 1, %s9
      %p112 = scmp.lt.s32.totalorder %s9, 3
      %p113 = pnand %p111, %p112
      %p114 = pneg %p113
      // Predicated region
      $region9: #{forward.4} parent=5 // pred_check
        _
      $region10: #{forward.4} parent=5 // pred_check_branch
        %116 = sbr.rel (%p113) target = $region12
      $region11: #{forward.4} parent=5 // pred_region
        %s117 = ssub.s32 %s9, 1
        // Predicated region
        $region13: #{forward.4} parent=11 // pred_check
          %p118 = pneg %p56
        $region14: #{forward.4} parent=11 // pred_check_branch
          %120 = sbr.rel (%p118) target = $region16
        $region15: #{forward.4} parent=11 // pred_region
          _
        $region16: #{forward.4} parent=11 // pred_fallthru
          _
        // Predicated region
        $region17: #{forward.4} parent=11 // pred_check
          %p121 = pneg %p77
        $region18: #{forward.4} parent=11 // pred_check_branch
          %123 = sbr.rel (%p121) target = $region20
        $region19: #{forward.4} parent=11 // pred_region
          _
        $region20: #{forward.4} parent=11 // pred_fallthru
          _
      $region12: #{forward.4} parent=5 // pred_fallthru
        _
      %p124 = scmp.lt.s32.totalorder %s9, 2
      // Predicated region
      $region21: #{forward.4} parent=5 // pred_check
        %p125 = pneg %p124
      $region22: #{forward.4} parent=5 // pred_check_branch
        %127 = sbr.rel (%p125) target = $region24
      $region23: #{forward.4} parent=5 // pred_region
        // Predicated region
        $region25: #{forward.4} parent=23 // pred_check
          %p128 = pneg %p29
        $region26: #{forward.4} parent=23 // pred_check_branch
          %130 = sbr.rel (%p128) target = $region28
        $region27: #{forward.4} parent=23 // pred_region
          %s131 = sand.u32 %s19, 1
          %s132 = sand.u32 %s19, 1
          %s133 = smul.addr %s132, 576
          %s134 = scalar_lea.vmem [#allocation2], %s133
          %s135 = smul.u32 4, %s9
          %s136 = smul.addr %s135, 9
          %s137 = smul.addr %s136, 4
          %s138 = scalar_lea.vmem %s0, %s137
          // Predicated region
          $region29: #{forward.4} parent=27 // pred_check
            _
          $region30: #{forward.4} parent=27 // pred_check_branch
            %140 = sbr.rel (0) target = $region32
          $region31: #{forward.4} parent=27 // pred_region
            // Predicated region
            $region33: #{forward.4} parent=31 // pred_check
              _
            $region34: #{forward.4} parent=31 // pred_check_branch
              %142 = sbr.rel (0) target = $region36
            $region35: #{forward.4} parent=31 // pred_region
              %s143 = scalar_lea.vmem %s138, 32
              %s144 = scalar_lea.vmem %s134, 32 [#allocation2]
              loop: start=0, step=1, limit=1
              $region37: #{forward.4} parent=35 // loop_pre_header
                _
              $region38: #{forward.4} parent=35 // loop_header
                %s146 = sphi 0, %s150
                %p147 = scmp.ge.s32.totalorder %s146, 1
                %s151 = sphi %s138, %s138
                %s152 = sphi %s134, %s134
              $region39: #{forward.4} parent=35 // loop_header_branch
                %149 = sbr.rel (%p147) target = $region43
              $region40: #{forward.4} parent=35 // loop_body
                %v153 = vld [vmem:[%s151] sm:$0xff]
                %154 = vst [vmem:[%s152] sm:$0xff] %v153
                %v155 = vld [vmem:[%s151 + $0x8] sm:$0xff]
                %156 = vst [vmem:[%s152 + $0x8] sm:$0xff] %v155
                %v157 = vld [vmem:[%s151 + $0x10] sm:$0xff]
                %158 = vst [vmem:[%s152 + $0x10] sm:$0xff] %v157
                %v159 = vld [vmem:[%s151 + $0x18] sm:$0xff]
                %160 = vst [vmem:[%s152 + $0x18] sm:$0xff] %v159
                %v161 = vld [vmem:[%s151 + $0x24] sm:$0xff]
                %162 = vst [vmem:[%s152 + $0x24] sm:$0xff] %v161
                %v163 = vld [vmem:[%s151 + $0x2c] sm:$0xff]
                %164 = vst [vmem:[%s152 + $0x2c] sm:$0xff] %v163
                %v165 = vld [vmem:[%s151 + $0x34] sm:$0xff]
                %166 = vst [vmem:[%s152 + $0x34] sm:$0xff] %v165
                %v167 = vld [vmem:[%s151 + $0x3c] sm:$0xff]
                %168 = vst [vmem:[%s152 + $0x3c] sm:$0xff] %v167
                %v169 = vld [vmem:[%s151 + $0x48] sm:$0xff]
                %170 = vst [vmem:[%s152 + $0x48] sm:$0xff] %v169
                %v171 = vld [vmem:[%s151 + $0x50] sm:$0xff]
                %172 = vst [vmem:[%s152 + $0x50] sm:$0xff] %v171
                %v173 = vld [vmem:[%s151 + $0x58] sm:$0xff]
                %174 = vst [vmem:[%s152 + $0x58] sm:$0xff] %v173
                %v175 = vld [vmem:[%s151 + $0x60] sm:$0xff]
                %176 = vst [vmem:[%s152 + $0x60] sm:$0xff] %v175
                %v177 = vld [vmem:[%s151 + $0x6c] sm:$0xff]
                %178 = vst [vmem:[%s152 + $0x6c] sm:$0xff] %v177
                %v179 = vld [vmem:[%s151 + $0x74] sm:$0xff]
                %180 = vst [vmem:[%s152 + $0x74] sm:$0xff] %v179
                %v181 = vld [vmem:[%s151 + $0x7c] sm:$0xff]
                %182 = vst [vmem:[%s152 + $0x7c] sm:$0xff] %v181
                %v183 = vld [vmem:[%s151 + $0x84] sm:$0xff]
                %184 = vst [vmem:[%s152 + $0x84] sm:$0xff] %v183
                %v185 = vld [vmem:[%s151 + $0x120] sm:$0xff]
                %186 = vst [vmem:[%s152 + $0x90] sm:$0xff] %v185
                %v187 = vld [vmem:[%s151 + $0x128] sm:$0xff]
                %188 = vst [vmem:[%s152 + $0x98] sm:$0xff] %v187
                %v189 = vld [vmem:[%s151 + $0x130] sm:$0xff]
                %190 = vst [vmem:[%s152 + $0xa0] sm:$0xff] %v189
                %v191 = vld [vmem:[%s151 + $0x138] sm:$0xff]
                %192 = vst [vmem:[%s152 + $0xa8] sm:$0xff] %v191
                %v193 = vld [vmem:[%s151 + $0x144] sm:$0xff]
                %194 = vst [vmem:[%s152 + $0xb4] sm:$0xff] %v193
                %v195 = vld [vmem:[%s151 + $0x14c] sm:$0xff]
                %196 = vst [vmem:[%s152 + $0xbc] sm:$0xff] %v195
                %v197 = vld [vmem:[%s151 + $0x154] sm:$0xff]
                %198 = vst [vmem:[%s152 + $0xc4] sm:$0xff] %v197
                %v199 = vld [vmem:[%s151 + $0x15c] sm:$0xff]
                %200 = vst [vmem:[%s152 + $0xcc] sm:$0xff] %v199
                %v201 = vld [vmem:[%s151 + $0x168] sm:$0xff]
                %202 = vst [vmem:[%s152 + $0xd8] sm:$0xff] %v201
                %v203 = vld [vmem:[%s151 + $0x170] sm:$0xff]
                %204 = vst [vmem:[%s152 + $0xe0] sm:$0xff] %v203
                %v205 = vld [vmem:[%s151 + $0x178] sm:$0xff]
                %206 = vst [vmem:[%s152 + $0xe8] sm:$0xff] %v205
                %v207 = vld [vmem:[%s151 + $0x180] sm:$0xff]
                %208 = vst [vmem:[%s152 + $0xf0] sm:$0xff] %v207
                %v209 = vld [vmem:[%s151 + $0x18c] sm:$0xff]
                %210 = vst [vmem:[%s152 + $0xfc] sm:$0xff] %v209
                %v211 = vld [vmem:[%s151 + $0x194] sm:$0xff]
                %212 = vst [vmem:[%s152 + $0x104] sm:$0xff] %v211
                %v213 = vld [vmem:[%s151 + $0x19c] sm:$0xff]
                %214 = vst [vmem:[%s152 + $0x10c] sm:$0xff] %v213
                %v215 = vld [vmem:[%s151 + $0x1a4] sm:$0xff]
                %216 = vst [vmem:[%s152 + $0x114] sm:$0xff] %v215
                %v217 = vld [vmem:[%s151 + $0x240] sm:$0xff]
                %218 = vst [vmem:[%s152 + $0x120] sm:$0xff] %v217
                %v219 = vld [vmem:[%s151 + $0x248] sm:$0xff]
                %220 = vst [vmem:[%s152 + $0x128] sm:$0xff] %v219
                %v221 = vld [vmem:[%s151 + $0x250] sm:$0xff]
                %222 = vst [vmem:[%s152 + $0x130] sm:$0xff] %v221
                %v223 = vld [vmem:[%s151 + $0x258] sm:$0xff]
                %224 = vst [vmem:[%s152 + $0x138] sm:$0xff] %v223
                %v225 = vld [vmem:[%s151 + $0x264] sm:$0xff]
                %226 = vst [vmem:[%s152 + $0x144] sm:$0xff] %v225
                %v227 = vld [vmem:[%s151 + $0x26c] sm:$0xff]
                %228 = vst [vmem:[%s152 + $0x14c] sm:$0xff] %v227
                %v229 = vld [vmem:[%s151 + $0x274] sm:$0xff]
                %230 = vst [vmem:[%s152 + $0x154] sm:$0xff] %v229
                %v231 = vld [vmem:[%s151 + $0x27c] sm:$0xff]
                %232 = vst [vmem:[%s152 + $0x15c] sm:$0xff] %v231
                %v233 = vld [vmem:[%s151 + $0x288] sm:$0xff]
                %234 = vst [vmem:[%s152 + $0x168] sm:$0xff] %v233
                %v235 = vld [vmem:[%s151 + $0x290] sm:$0xff]
                %236 = vst [vmem:[%s152 + $0x170] sm:$0xff] %v235
                %v237 = vld [vmem:[%s151 + $0x298] sm:$0xff]
                %238 = vst [vmem:[%s152 + $0x178] sm:$0xff] %v237
                %v239 = vld [vmem:[%s151 + $0x2a0] sm:$0xff]
                %240 = vst [vmem:[%s152 + $0x180] sm:$0xff] %v239
                %v241 = vld [vmem:[%s151 + $0x2ac] sm:$0xff]
                %242 = vst [vmem:[%s152 + $0x18c] sm:$0xff] %v241
                %v243 = vld [vmem:[%s151 + $0x2b4] sm:$0xff]
                %244 = vst [vmem:[%s152 + $0x194] sm:$0xff] %v243
                %v245 = vld [vmem:[%s151 + $0x2bc] sm:$0xff]
                %246 = vst [vmem:[%s152 + $0x19c] sm:$0xff] %v245
                %v247 = vld [vmem:[%s151 + $0x2c4] sm:$0xff]
                %248 = vst [vmem:[%s152 + $0x1a4] sm:$0xff] %v247
                %v249 = vld [vmem:[%s151 + $0x360] sm:$0xff]
                %250 = vst [vmem:[%s152 + $0x1b0] sm:$0xff] %v249
                %v251 = vld [vmem:[%s151 + $0x368] sm:$0xff]
                %252 = vst [vmem:[%s152 + $0x1b8] sm:$0xff] %v251
                %v253 = vld [vmem:[%s151 + $0x370] sm:$0xff]
                %254 = vst [vmem:[%s152 + $0x1c0] sm:$0xff] %v253
                %v255 = vld [vmem:[%s151 + $0x378] sm:$0xff]
                %256 = vst [vmem:[%s152 + $0x1c8] sm:$0xff] %v255
                %v257 = vld [vmem:[%s151 + $0x384] sm:$0xff]
                %258 = vst [vmem:[%s152 + $0x1d4] sm:$0xff] %v257
                %v259 = vld [vmem:[%s151 + $0x38c] sm:$0xff]
                %260 = vst [vmem:[%s152 + $0x1dc] sm:$0xff] %v259
                %v261 = vld [vmem:[%s151 + $0x394] sm:$0xff]
                %262 = vst [vmem:[%s152 + $0x1e4] sm:$0xff] %v261
                %v263 = vld [vmem:[%s151 + $0x39c] sm:$0xff]
                %264 = vst [vmem:[%s152 + $0x1ec] sm:$0xff] %v263
                %v265 = vld [vmem:[%s151 + $0x3a8] sm:$0xff]
                %266 = vst [vmem:[%s152 + $0x1f8] sm:$0xff] %v265
                %v267 = vld [vmem:[%s151 + $0x3b0] sm:$0xff]
                %268 = vst [vmem:[%s152 + $0x200] sm:$0xff] %v267
                %v269 = vld [vmem:[%s151 + $0x3b8] sm:$0xff]
                %270 = vst [vmem:[%s152 + $0x208] sm:$0xff] %v269
                %v271 = vld [vmem:[%s151 + $0x3c0] sm:$0xff]
                %272 = vst [vmem:[%s152 + $0x210] sm:$0xff] %v271
                %v273 = vld [vmem:[%s151 + $0x3cc] sm:$0xff]
                %274 = vst [vmem:[%s152 + $0x21c] sm:$0xff] %v273
                %v275 = vld [vmem:[%s151 + $0x3d4] sm:$0xff]
                %276 = vst [vmem:[%s152 + $0x224] sm:$0xff] %v275
                %v277 = vld [vmem:[%s151 + $0x3dc] sm:$0xff]
                %278 = vst [vmem:[%s152 + $0x22c] sm:$0xff] %v277
                %v279 = vld [vmem:[%s151 + $0x3e4] sm:$0xff]
                %280 = vst [vmem:[%s152 + $0x234] sm:$0xff] %v279
              $region41: #{forward.4} parent=35 // loop_footer
                %s150 = sadd.s32 1, %s146
              $region42: #{forward.4} parent=35 // loop_footer_branch
                %145 = sbr.rel target = $region38
              $region43: #{forward.4} parent=35 // loop_exit
                _
              loop: start=0, step=1, limit=1
              $region44: #{forward.4} parent=35 // loop_pre_header
                _
              $region45: #{forward.4} parent=35 // loop_header
                %s283 = sphi 0, %s287
                %p284 = scmp.ge.s32.totalorder %s283, 1
                %s288 = sphi %s143, %s143
                %s289 = sphi %s144, %s144
              $region46: #{forward.4} parent=35 // loop_header_branch
                %286 = sbr.rel (%p284) target = $region50
              $region47: #{forward.4} parent=35 // loop_body
                %v290 = vld [vmem:[%s288] sm:$0xf]
                %291 = vst [vmem:[%s289] sm:$0xf] %v290
                %v292 = vld [vmem:[%s288 + $0x24] sm:$0xf]
                %293 = vst [vmem:[%s289 + $0x24] sm:$0xf] %v292
                %v294 = vld [vmem:[%s288 + $0x48] sm:$0xf]
                %295 = vst [vmem:[%s289 + $0x48] sm:$0xf] %v294
                %v296 = vld [vmem:[%s288 + $0x6c] sm:$0xf]
                %297 = vst [vmem:[%s289 + $0x6c] sm:$0xf] %v296
                %v298 = vld [vmem:[%s288 + $0x120] sm:$0xf]
                %299 = vst [vmem:[%s289 + $0x90] sm:$0xf] %v298
                %v300 = vld [vmem:[%s288 + $0x144] sm:$0xf]
                %301 = vst [vmem:[%s289 + $0xb4] sm:$0xf] %v300
                %v302 = vld [vmem:[%s288 + $0x168] sm:$0xf]
                %303 = vst [vmem:[%s289 + $0xd8] sm:$0xf] %v302
                %v304 = vld [vmem:[%s288 + $0x18c] sm:$0xf]
                %305 = vst [vmem:[%s289 + $0xfc] sm:$0xf] %v304
                %v306 = vld [vmem:[%s288 + $0x240] sm:$0xf]
                %307 = vst [vmem:[%s289 + $0x120] sm:$0xf] %v306
                %v308 = vld [vmem:[%s288 + $0x264] sm:$0xf]
                %309 = vst [vmem:[%s289 + $0x144] sm:$0xf] %v308
                %v310 = vld [vmem:[%s288 + $0x288] sm:$0xf]
                %311 = vst [vmem:[%s289 + $0x168] sm:$0xf] %v310
                %v312 = vld [vmem:[%s288 + $0x2ac] sm:$0xf]
                %313 = vst [vmem:[%s289 + $0x18c] sm:$0xf] %v312
                %v314 = vld [vmem:[%s288 + $0x360] sm:$0xf]
                %315 = vst [vmem:[%s289 + $0x1b0] sm:$0xf] %v314
                %v316 = vld [vmem:[%s288 + $0x384] sm:$0xf]
                %317 = vst [vmem:[%s289 + $0x1d4] sm:$0xf] %v316
                %v318 = vld [vmem:[%s288 + $0x3a8] sm:$0xf]
                %319 = vst [vmem:[%s289 + $0x1f8] sm:$0xf] %v318
                %v320 = vld [vmem:[%s288 + $0x3cc] sm:$0xf]
                %321 = vst [vmem:[%s289 + $0x21c] sm:$0xf] %v320
              $region48: #{forward.4} parent=35 // loop_footer
                %s287 = sadd.s32 1, %s283
              $region49: #{forward.4} parent=35 // loop_footer_branch
                %282 = sbr.rel target = $region45
              $region50: #{forward.4} parent=35 // loop_exit
                _
            $region36: #{forward.4} parent=31 // pred_fallthru
              _
          $region32: #{forward.4} parent=27 // pred_fallthru
            _
          %322 = vnop
        $region28: #{forward.4} parent=23 // pred_fallthru
          _
      $region24: #{forward.4} parent=5 // pred_fallthru
        _
      %p323 = scmp.le.s32.totalorder 1, %s9
      %p324 = scmp.lt.s32.totalorder %s9, 3
      %p325 = pnand %p323, %p324
      %p326 = pneg %p325
      // Predicated region
      $region51: #{forward.4} parent=5 // pred_check
        _
      $region52: #{forward.4} parent=5 // pred_check_branch
        %328 = sbr.rel (%p325) target = $region54
      $region53: #{forward.4} parent=5 // pred_region
        %s329 = ssub.s32 %s9, 1
        %s330 = sand.u32 %s22, 1
        %s331 = sand.u32 %s22, 1
        %s332 = smul.addr %s331, 576
        %s333 = scalar_lea.vmem [#allocation2], %s332
        // Predicated region
        $region55: #{forward.4} parent=53 // pred_check
          %p334 = pneg %p35
        $region56: #{forward.4} parent=53 // pred_check_branch
          %336 = sbr.rel (%p334) target = $region58
        $region57: #{forward.4} parent=53 // pred_region
          _
        $region58: #{forward.4} parent=53 // pred_fallthru
          _
        %s337 = sand.u32 %s22, 1
        %s338 = sand.u32 %s22, 1
        %s339 = smul.addr %s338, 576
        %s340 = scalar_lea.vmem [#allocation2], %s339
        %p341 = pneg %p35
        %p342 = pneg %p32
        %p343 = pneg %p56
        %p344 = pneg %p53
        %p345 = pneg %p77
        %p346 = pneg %p74
        %p347 = pneg %p103
        %p348 = pneg %p100
        %s349 = smul.u32 4, %s14
        %p350 = scmp.lt.s32.totalorder %s349, 7
        %s351 = scalar_select %p350, %s349, 7
        %s352 = smul.addr %s351, 4
        %s353 = scalar_lea.vmem %s3, %s352
        %s354 = smul.u32 4, %s14
        %s355 = smul.u32 4, %s14
        %p356 = scmp.lt.s32.totalorder %s355, 7
        %s357 = scalar_select %p356, %s355, 7
        %s358 = smul.addr %s357, 4
        %s359 = scalar_lea.vmem %s3, %s358
        %s360 = smul.u32 4, %s14
        %v362 = vld [vmem:[%s333] sm:$0xff]
        %v363 = vld [vmem:[%s333 + $0x8] sm:$0xff]
        %v364 = vld [vmem:[%s333 + $0x10] sm:$0xff]
        %v365 = vld [vmem:[%s333 + $0x18] sm:$0xff]
        %v366 = vld [vmem:[%s333 + $0x20] sm:$0xf]
        %v367 = vld [vmem:[%s333 + $0x24] sm:$0xff]
        %v368 = vld [vmem:[%s333 + $0x2c] sm:$0xff]
        %v369 = vld [vmem:[%s333 + $0x34] sm:$0xff]
        %v370 = vld [vmem:[%s333 + $0x3c] sm:$0xff]
        %v371 = vld [vmem:[%s333 + $0x44] sm:$0xf]
        %v372 = vld [vmem:[%s333 + $0x48] sm:$0xff]
        %v373 = vld [vmem:[%s333 + $0x50] sm:$0xff]
        %v374 = vld [vmem:[%s333 + $0x58] sm:$0xff]
        %v375 = vld [vmem:[%s333 + $0x60] sm:$0xff]
        %v376 = vld [vmem:[%s333 + $0x68] sm:$0xf]
        %v377 = vld [vmem:[%s333 + $0x6c] sm:$0xff]
        %v378 = vld [vmem:[%s333 + $0x74] sm:$0xff]
        %v379 = vld [vmem:[%s333 + $0x7c] sm:$0xff]
        %v380 = vld [vmem:[%s333 + $0x84] sm:$0xff]
        %v381 = vld [vmem:[%s333 + $0x8c] sm:$0xf]
        %v382 = vld [vmem:[%s333 + $0x90] sm:$0xff]
        %v383 = vld [vmem:[%s333 + $0x98] sm:$0xff]
        %v384 = vld [vmem:[%s333 + $0xa0] sm:$0xff]
        %v385 = vld [vmem:[%s333 + $0xa8] sm:$0xff]
        %v386 = vld [vmem:[%s333 + $0xb0] sm:$0xf]
        %v387 = vld [vmem:[%s333 + $0xb4] sm:$0xff]
        %v388 = vld [vmem:[%s333 + $0xbc] sm:$0xff]
        %v389 = vld [vmem:[%s333 + $0xc4] sm:$0xff]
        %v390 = vld [vmem:[%s333 + $0xcc] sm:$0xff]
        %v391 = vld [vmem:[%s333 + $0xd4] sm:$0xf]
        %v392 = vld [vmem:[%s333 + $0xd8] sm:$0xff]
        %v393 = vld [vmem:[%s333 + $0xe0] sm:$0xff]
        %v394 = vld [vmem:[%s333 + $0xe8] sm:$0xff]
        %v395 = vld [vmem:[%s333 + $0xf0] sm:$0xff]
        %v396 = vld [vmem:[%s333 + $0xf8] sm:$0xf]
        %v397 = vld [vmem:[%s333 + $0xfc] sm:$0xff]
        %v398 = vld [vmem:[%s333 + $0x104] sm:$0xff]
        %v399 = vld [vmem:[%s333 + $0x10c] sm:$0xff]
        %v400 = vld [vmem:[%s333 + $0x114] sm:$0xff]
        %v401 = vld [vmem:[%s333 + $0x11c] sm:$0xf]
        %v402 = vld [vmem:[%s333 + $0x120] sm:$0xff]
        %v403 = vld [vmem:[%s333 + $0x128] sm:$0xff]
        %v404 = vld [vmem:[%s333 + $0x130] sm:$0xff]
        %v405 = vld [vmem:[%s333 + $0x138] sm:$0xff]
        %v406 = vld [vmem:[%s333 + $0x140] sm:$0xf]
        %v407 = vld [vmem:[%s333 + $0x144] sm:$0xff]
        %v408 = vld [vmem:[%s333 + $0x14c] sm:$0xff]
        %v409 = vld [vmem:[%s333 + $0x154] sm:$0xff]
        %v410 = vld [vmem:[%s333 + $0x15c] sm:$0xff]
        %v411 = vld [vmem:[%s333 + $0x164] sm:$0xf]
        %v412 = vld [vmem:[%s333 + $0x168] sm:$0xff]
        %v413 = vld [vmem:[%s333 + $0x170] sm:$0xff]
        %v414 = vld [vmem:[%s333 + $0x178] sm:$0xff]
        %v415 = vld [vmem:[%s333 + $0x180] sm:$0xff]
        %v416 = vld [vmem:[%s333 + $0x188] sm:$0xf]
        %v417 = vld [vmem:[%s333 + $0x18c] sm:$0xff]
        %v418 = vld [vmem:[%s333 + $0x194] sm:$0xff]
        %v419 = vld [vmem:[%s333 + $0x19c] sm:$0xff]
        %v420 = vld [vmem:[%s333 + $0x1a4] sm:$0xff]
        %v421 = vld [vmem:[%s333 + $0x1ac] sm:$0xf]
        %v422 = vld [vmem:[%s333 + $0x1b0] sm:$0xff]
        %v423 = vld [vmem:[%s333 + $0x1b8] sm:$0xff]
        %v424 = vld [vmem:[%s333 + $0x1c0] sm:$0xff]
        %v425 = vld [vmem:[%s333 + $0x1c8] sm:$0xff]
        %v426 = vld [vmem:[%s333 + $0x1d0] sm:$0xf]
        %v427 = vld [vmem:[%s333 + $0x1d4] sm:$0xff]
        %v428 = vld [vmem:[%s333 + $0x1dc] sm:$0xff]
        %v429 = vld [vmem:[%s333 + $0x1e4] sm:$0xff]
        %v430 = vld [vmem:[%s333 + $0x1ec] sm:$0xff]
        %v431 = vld [vmem:[%s333 + $0x1f4] sm:$0xf]
        %v432 = vld [vmem:[%s333 + $0x1f8] sm:$0xff]
        %v433 = vld [vmem:[%s333 + $0x200] sm:$0xff]
        %v434 = vld [vmem:[%s333 + $0x208] sm:$0xff]
        %v435 = vld [vmem:[%s333 + $0x210] sm:$0xff]
        %v436 = vld [vmem:[%s333 + $0x218] sm:$0xf]
        %v437 = vld [vmem:[%s333 + $0x21c] sm:$0xff]
        %v438 = vld [vmem:[%s333 + $0x224] sm:$0xff]
        %v439 = vld [vmem:[%s333 + $0x22c] sm:$0xff]
        %v440 = vld [vmem:[%s333 + $0x234] sm:$0xff]
        %v441 = vld [vmem:[%s333 + $0x23c] sm:$0xf]
        %v442 = vld [vmem:[%s1] sm:$0xf]
        %v443 = vld [vmem:[%s1 + $0x4] sm:$0xf]
        %v444 = vld [vmem:[%s1 + $0x8] sm:$0xf]
        %v445 = vld [vmem:[%s1 + $0xc] sm:$0xf]
        %v446 = vld [vmem:[%s1 + $0x10] sm:$0xf]
        %v447 = vld [vmem:[%s1 + $0x14] sm:$0xf]
        %v448 = vld [vmem:[%s1 + $0x18] sm:$0xf]
        %v449 = vld [vmem:[%s1 + $0x1c] sm:$0xf]
        %v450 = vld [vmem:[%s1 + $0x20] sm:$0xf]
        %v451 = vld [vmem:[%s1 + $0x24] sm:$0xf]
        %v452 = vld [vmem:[%s1 + $0x28] sm:$0xf]
        %v453 = vld [vmem:[%s1 + $0x2c] sm:$0xf]
        %v454 = vld [vmem:[%s1 + $0x30] sm:$0xf]
        %v455 = vld [vmem:[%s1 + $0x34] sm:$0xf]
        %v456 = vld [vmem:[%s1 + $0x38] sm:$0xf]
        %v457 = vld [vmem:[%s1 + $0x3c] sm:$0xf]
        %v458 = vld [vmem:[%s1 + $0x40] sm:$0xf]
        %v459 = vld [vmem:[%s1 + $0x44] sm:$0xf]
        %v460 = vld [vmem:[%s1 + $0x48] sm:$0xf]
        %v461 = vld [vmem:[%s1 + $0x4c] sm:$0xf]
        %v462 = vld [vmem:[%s1 + $0x50] sm:$0xf]
        %v463 = vld [vmem:[%s1 + $0x54] sm:$0xf]
        %v464 = vld [vmem:[%s1 + $0x58] sm:$0xf]
        %v465 = vld [vmem:[%s1 + $0x5c] sm:$0xf]
        %v466 = vld [vmem:[%s1 + $0x60] sm:$0xf]
        %v467 = vld [vmem:[%s1 + $0x64] sm:$0xf]
        %v468 = vld [vmem:[%s1 + $0x68] sm:$0xf]
        %v469 = vld [vmem:[%s1 + $0x6c] sm:$0xf]
        %v470 = vld [vmem:[%s1 + $0x70] sm:$0xf]
        %v471 = vld [vmem:[%s1 + $0x74] sm:$0xf]
        %v472 = vld [vmem:[%s1 + $0x78] sm:$0xf]
        %v473 = vld [vmem:[%s1 + $0x7c] sm:$0xf]
        %v474 = vld [vmem:[%s1 + $0x80] sm:$0xf]
        %v475 = vld [vmem:[%s1 + $0x84] sm:$0xf]
        %v476 = vld [vmem:[%s1 + $0x88] sm:$0xf]
        %v477 = vld [vmem:[%s1 + $0x8c] sm:$0xf]
        %v478 = vld [vmem:[%s1 + $0x90] sm:$0xf]
        %v479 = vld [vmem:[%s1 + $0x94] sm:$0xf]
        %v480 = vld [vmem:[%s1 + $0x98] sm:$0xf]
        %v481 = vld [vmem:[%s1 + $0x9c] sm:$0xf]
        %v482 = vld [vmem:[%s1 + $0xa0] sm:$0xf]
        %v483 = vld [vmem:[%s1 + $0xa4] sm:$0xf]
        %v484 = vld [vmem:[%s1 + $0xa8] sm:$0xf]
        %v485 = vld [vmem:[%s1 + $0xac] sm:$0xf]
        %v486 = vld [vmem:[%s1 + $0xb0] sm:$0xf]
        %v487 = vld [vmem:[%s1 + $0xb4] sm:$0xf]
        %v488 = vld [vmem:[%s1 + $0xb8] sm:$0xf]
        %v489 = vld [vmem:[%s1 + $0xbc] sm:$0xf]
        %v490 = vld [vmem:[%s1 + $0xc0] sm:$0xf]
        %v491 = vld [vmem:[%s1 + $0xc4] sm:$0xf]
        %v492 = vld [vmem:[%s1 + $0xc8] sm:$0xf]
        %v493 = vld [vmem:[%s1 + $0xcc] sm:$0xf]
        %v494 = vld [vmem:[%s1 + $0xd0] sm:$0xf]
        %v495 = vld [vmem:[%s1 + $0xd4] sm:$0xf]
        %v496 = vld [vmem:[%s1 + $0xd8] sm:$0xf]
        %v497 = vld [vmem:[%s1 + $0xdc] sm:$0xf]
        %v498 = vld [vmem:[%s1 + $0xe0] sm:$0xf]
        %v499 = vld [vmem:[%s1 + $0xe4] sm:$0xf]
        %v500 = vld [vmem:[%s1 + $0xe8] sm:$0xf]
        %v501 = vld [vmem:[%s1 + $0xec] sm:$0xf]
        %v502 = vld [vmem:[%s1 + $0xf0] sm:$0xf]
        %v503 = vld [vmem:[%s1 + $0xf4] sm:$0xf]
        %v504 = vld [vmem:[%s1 + $0xf8] sm:$0xf]
        %v505 = vld [vmem:[%s1 + $0xfc] sm:$0xf]
        %v506 = vld [vmem:[%s1 + $0x100] sm:$0xf]
        %v507 = vld [vmem:[%s1 + $0x104] sm:$0xf]
        %v508 = vld [vmem:[%s1 + $0x108] sm:$0xf]
        %v509 = vld [vmem:[%s1 + $0x10c] sm:$0xf]
        %v510 = vld [vmem:[%s1 + $0x110] sm:$0xf]
        %v511 = vld [vmem:[%s1 + $0x114] sm:$0xf]
        %v512 = vld [vmem:[%s1 + $0x118] sm:$0xf]
        %v513 = vld [vmem:[%s1 + $0x11c] sm:$0xf]
        %v514 = vld [vmem:[%s1 + $0x120] sm:$0xf]
        %v515 = vld [vmem:[%s1 + $0x124] sm:$0xf]
        %v516 = vld [vmem:[%s1 + $0x128] sm:$0xf]
        %v517 = vld [vmem:[%s1 + $0x12c] sm:$0xf]
        %v518 = vld [vmem:[%s1 + $0x130] sm:$0xf]
        %v519 = vld [vmem:[%s1 + $0x134] sm:$0xf]
        %v520 = vld [vmem:[%s1 + $0x138] sm:$0xf]
        %v521 = vld [vmem:[%s1 + $0x13c] sm:$0xf]
        %v522 = vld [vmem:[%s1 + $0x140] sm:$0xf]
        %v523 = vld [vmem:[%s1 + $0x144] sm:$0xf]
        %v524 = vld [vmem:[%s1 + $0x148] sm:$0xf]
        %v525 = vld [vmem:[%s1 + $0x14c] sm:$0xf]
        %v526 = vld [vmem:[%s1 + $0x150] sm:$0xf]
        %v527 = vld [vmem:[%s1 + $0x154] sm:$0xf]
        %v528 = vld [vmem:[%s1 + $0x158] sm:$0xf]
        %v529 = vld [vmem:[%s1 + $0x15c] sm:$0xf]
        %v530 = vld [vmem:[%s1 + $0x160] sm:$0xf]
        %v531 = vld [vmem:[%s1 + $0x164] sm:$0xf]
        %v532 = vld [vmem:[%s1 + $0x168] sm:$0xf]
        %v533 = vld [vmem:[%s1 + $0x16c] sm:$0xf]
        %v534 = vld [vmem:[%s1 + $0x170] sm:$0xf]
        %v535 = vld [vmem:[%s1 + $0x174] sm:$0xf]
        %v536 = vld [vmem:[%s1 + $0x178] sm:$0xf]
        %v537 = vld [vmem:[%s1 + $0x17c] sm:$0xf]
        %v538 = vld [vmem:[%s1 + $0x180] sm:$0xf]
        %v539 = vld [vmem:[%s1 + $0x184] sm:$0xf]
        %v540 = vld [vmem:[%s1 + $0x188] sm:$0xf]
        %v541 = vld [vmem:[%s1 + $0x18c] sm:$0xf]
        %v542 = vld [vmem:[%s1 + $0x190] sm:$0xf]
        %v543 = vld [vmem:[%s1 + $0x194] sm:$0xf]
        %v544 = vld [vmem:[%s1 + $0x198] sm:$0xf]
        %v545 = vld [vmem:[%s1 + $0x19c] sm:$0xf]
        %v546 = vld [vmem:[%s1 + $0x1a0] sm:$0xf]
        %v547 = vld [vmem:[%s1 + $0x1a4] sm:$0xf]
        %v548 = vld [vmem:[%s1 + $0x1a8] sm:$0xf]
        %v549 = vld [vmem:[%s1 + $0x1ac] sm:$0xf]
        %v550 = vld [vmem:[%s1 + $0x1b0] sm:$0xf]
        %v551 = vld [vmem:[%s1 + $0x1b4] sm:$0xf]
        %v552 = vld [vmem:[%s1 + $0x1b8] sm:$0xf]
        %v553 = vld [vmem:[%s1 + $0x1bc] sm:$0xf]
        %v554 = vld [vmem:[%s1 + $0x1c0] sm:$0xf]
        %v555 = vld [vmem:[%s1 + $0x1c4] sm:$0xf]
        %v556 = vld [vmem:[%s1 + $0x1c8] sm:$0xf]
        %v557 = vld [vmem:[%s1 + $0x1cc] sm:$0xf]
        %v558 = vld [vmem:[%s1 + $0x1d0] sm:$0xf]
        %v559 = vld [vmem:[%s1 + $0x1d4] sm:$0xf]
        %v560 = vld [vmem:[%s1 + $0x1d8] sm:$0xf]
        %v561 = vld [vmem:[%s1 + $0x1dc] sm:$0xf]
        %v562 = vld [vmem:[%s1 + $0x1e0] sm:$0xf]
        %v563 = vld [vmem:[%s1 + $0x1e4] sm:$0xf]
        %v564 = vld [vmem:[%s1 + $0x1e8] sm:$0xf]
        %v565 = vld [vmem:[%s1 + $0x1ec] sm:$0xf]
        %v566 = vld [vmem:[%s1 + $0x1f0] sm:$0xf]
        %v567 = vld [vmem:[%s1 + $0x1f4] sm:$0xf]
        %v568 = vld [vmem:[%s1 + $0x1f8] sm:$0xf]
        %v569 = vld [vmem:[%s1 + $0x1fc] sm:$0xf]
        %v570 = vld [vmem:[%s1 + $0x200] sm:$0xf]
        %v571 = vld [vmem:[%s1 + $0x204] sm:$0xf]
        %v572 = vld [vmem:[%s1 + $0x208] sm:$0xf]
        %v573 = vld [vmem:[%s1 + $0x20c] sm:$0xf]
        %v574 = vld [vmem:[%s1 + $0x210] sm:$0xf]
        %v575 = vld [vmem:[%s1 + $0x214] sm:$0xf]
        %v576 = vld [vmem:[%s1 + $0x218] sm:$0xf]
        %v577 = vld [vmem:[%s1 + $0x21c] sm:$0xf]
        %v578 = vld [vmem:[%s1 + $0x220] sm:$0xf]
        %v579 = vld [vmem:[%s1 + $0x224] sm:$0xf]
        %v580 = vld [vmem:[%s1 + $0x228] sm:$0xf]
        %v581 = vld [vmem:[%s1 + $0x22c] sm:$0xf]
        %v582 = vld [vmem:[%s1 + $0x230] sm:$0xf]
        %v583 = vld [vmem:[%s1 + $0x234] sm:$0xf]
        %v584 = vld [vmem:[%s1 + $0x238] sm:$0xf]
        %v585 = vld [vmem:[%s1 + $0x23c] sm:$0xf]
        %v666 = vunpack.c.l.b16 %v362
        %v667 = vunpack.c.h.b16 %v362
        %v668 = vunpack.c.l.b16 %v363
        %v669 = vunpack.c.h.b16 %v363
        %v670 = vunpack.c.l.b16 %v364
        %v671 = vunpack.c.h.b16 %v364
        %v672 = vunpack.c.l.b16 %v365
        %v673 = vunpack.c.h.b16 %v365
        %v674 = vunpack.c.l.b16 %v366
        %v675 = vunpack.c.l.b16 %v367
        %v676 = vunpack.c.h.b16 %v367
        %v677 = vunpack.c.l.b16 %v368
        %v678 = vunpack.c.h.b16 %v368
        %v679 = vunpack.c.l.b16 %v369
        %v680 = vunpack.c.h.b16 %v369
        %v681 = vunpack.c.l.b16 %v370
        %v682 = vunpack.c.h.b16 %v370
        %v683 = vunpack.c.l.b16 %v371
        %v684 = vunpack.c.l.b16 %v372
        %v685 = vunpack.c.h.b16 %v372
        %v686 = vunpack.c.l.b16 %v373
        %v687 = vunpack.c.h.b16 %v373
        %v688 = vunpack.c.l.b16 %v374
        %v689 = vunpack.c.h.b16 %v374
        %v690 = vunpack.c.l.b16 %v375
        %v691 = vunpack.c.h.b16 %v375
        %v692 = vunpack.c.l.b16 %v376
        %v693 = vunpack.c.l.b16 %v377
        %v694 = vunpack.c.h.b16 %v377
        %v695 = vunpack.c.l.b16 %v378
        %v696 = vunpack.c.h.b16 %v378
        %v697 = vunpack.c.l.b16 %v379
        %v698 = vunpack.c.h.b16 %v379
        %v699 = vunpack.c.l.b16 %v380
        %v700 = vunpack.c.h.b16 %v380
        %v701 = vunpack.c.l.b16 %v381
        %v702 = vunpack.c.l.b16 %v382
        %v703 = vunpack.c.h.b16 %v382
        %v704 = vunpack.c.l.b16 %v383
        %v705 = vunpack.c.h.b16 %v383
        %v706 = vunpack.c.l.b16 %v384
        %v707 = vunpack.c.h.b16 %v384
        %v708 = vunpack.c.l.b16 %v385
        %v709 = vunpack.c.h.b16 %v385
        %v710 = vunpack.c.l.b16 %v386
        %v711 = vunpack.c.l.b16 %v387
        %v712 = vunpack.c.h.b16 %v387
        %v713 = vunpack.c.l.b16 %v388
        %v714 = vunpack.c.h.b16 %v388
        %v715 = vunpack.c.l.b16 %v389
        %v716 = vunpack.c.h.b16 %v389
        %v717 = vunpack.c.l.b16 %v390
        %v718 = vunpack.c.h.b16 %v390
        %v719 = vunpack.c.l.b16 %v391
        %v720 = vunpack.c.l.b16 %v392
        %v721 = vunpack.c.h.b16 %v392
        %v722 = vunpack.c.l.b16 %v393
        %v723 = vunpack.c.h.b16 %v393
        %v724 = vunpack.c.l.b16 %v394
        %v725 = vunpack.c.h.b16 %v394
        %v726 = vunpack.c.l.b16 %v395
        %v727 = vunpack.c.h.b16 %v395
        %v728 = vunpack.c.l.b16 %v396
        %v729 = vunpack.c.l.b16 %v397
        %v730 = vunpack.c.h.b16 %v397
        %v731 = vunpack.c.l.b16 %v398
        %v732 = vunpack.c.h.b16 %v398
        %v733 = vunpack.c.l.b16 %v399
        %v734 = vunpack.c.h.b16 %v399
        %v735 = vunpack.c.l.b16 %v400
        %v736 = vunpack.c.h.b16 %v400
        %v737 = vunpack.c.l.b16 %v401
        %v738 = vunpack.c.l.b16 %v402
        %v739 = vunpack.c.h.b16 %v402
        %v740 = vunpack.c.l.b16 %v403
        %v741 = vunpack.c.h.b16 %v403
        %v742 = vunpack.c.l.b16 %v404
        %v743 = vunpack.c.h.b16 %v404
        %v744 = vunpack.c.l.b16 %v405
        %v745 = vunpack.c.h.b16 %v405
        %v746 = vunpack.c.l.b16 %v406
        %v747 = vunpack.c.l.b16 %v407
        %v748 = vunpack.c.h.b16 %v407
        %v749 = vunpack.c.l.b16 %v408
        %v750 = vunpack.c.h.b16 %v408
        %v751 = vunpack.c.l.b16 %v409
        %v752 = vunpack.c.h.b16 %v409
        %v753 = vunpack.c.l.b16 %v410
        %v754 = vunpack.c.h.b16 %v410
        %v755 = vunpack.c.l.b16 %v411
        %v756 = vunpack.c.l.b16 %v412
        %v757 = vunpack.c.h.b16 %v412
        %v758 = vunpack.c.l.b16 %v413
        %v759 = vunpack.c.h.b16 %v413
        %v760 = vunpack.c.l.b16 %v414
        %v761 = vunpack.c.h.b16 %v414
        %v762 = vunpack.c.l.b16 %v415
        %v763 = vunpack.c.h.b16 %v415
        %v764 = vunpack.c.l.b16 %v416
        %v765 = vunpack.c.l.b16 %v417
        %v766 = vunpack.c.h.b16 %v417
        %v767 = vunpack.c.l.b16 %v418
        %v768 = vunpack.c.h.b16 %v418
        %v769 = vunpack.c.l.b16 %v419
        %v770 = vunpack.c.h.b16 %v419
        %v771 = vunpack.c.l.b16 %v420
        %v772 = vunpack.c.h.b16 %v420
        %v773 = vunpack.c.l.b16 %v421
        %v774 = vunpack.c.l.b16 %v422
        %v775 = vunpack.c.h.b16 %v422
        %v776 = vunpack.c.l.b16 %v423
        %v777 = vunpack.c.h.b16 %v423
        %v778 = vunpack.c.l.b16 %v424
        %v779 = vunpack.c.h.b16 %v424
        %v780 = vunpack.c.l.b16 %v425
        %v781 = vunpack.c.h.b16 %v425
        %v782 = vunpack.c.l.b16 %v426
        %v783 = vunpack.c.l.b16 %v427
        %v784 = vunpack.c.h.b16 %v427
        %v785 = vunpack.c.l.b16 %v428
        %v786 = vunpack.c.h.b16 %v428
        %v787 = vunpack.c.l.b16 %v429
        %v788 = vunpack.c.h.b16 %v429
        %v789 = vunpack.c.l.b16 %v430
        %v790 = vunpack.c.h.b16 %v430
        %v791 = vunpack.c.l.b16 %v431
        %v792 = vunpack.c.l.b16 %v432
        %v793 = vunpack.c.h.b16 %v432
        %v794 = vunpack.c.l.b16 %v433
        %v795 = vunpack.c.h.b16 %v433
        %v796 = vunpack.c.l.b16 %v434
        %v797 = vunpack.c.h.b16 %v434
        %v798 = vunpack.c.l.b16 %v435
        %v799 = vunpack.c.h.b16 %v435
        %v800 = vunpack.c.l.b16 %v436
        %v801 = vunpack.c.l.b16 %v437
        %v802 = vunpack.c.h.b16 %v437
        %v803 = vunpack.c.l.b16 %v438
        %v804 = vunpack.c.h.b16 %v438
        %v805 = vunpack.c.l.b16 %v439
        %v806 = vunpack.c.h.b16 %v439
        %v807 = vunpack.c.l.b16 %v440
        %v808 = vunpack.c.h.b16 %v440
        %v809 = vunpack.c.l.b16 %v441
        %v810 = vpack.c.b16 %v675, %v666
        %v811 = vpack.c.b16 %v676, %v667
        %v812 = vpack.c.b16 %v677, %v668
        %v813 = vpack.c.b16 %v678, %v669
        %v814 = vpack.c.b16 %v679, %v670
        %v815 = vpack.c.b16 %v680, %v671
        %v816 = vpack.c.b16 %v681, %v672
        %v817 = vpack.c.b16 %v682, %v673
        %v818 = vpack.c.b16 %v683, %v674
        %v819 = vpack.c.b16 %v693, %v684
        %v820 = vpack.c.b16 %v694, %v685
        %v821 = vpack.c.b16 %v695, %v686
        %v822 = vpack.c.b16 %v696, %v687
        %v823 = vpack.c.b16 %v697, %v688
        %v824 = vpack.c.b16 %v698, %v689
        %v825 = vpack.c.b16 %v699, %v690
        %v826 = vpack.c.b16 %v700, %v691
        %v827 = vpack.c.b16 %v701, %v692
        %v828 = vpack.c.b16 %v711, %v702
        %v829 = vpack.c.b16 %v712, %v703
        %v830 = vpack.c.b16 %v713, %v704
        %v831 = vpack.c.b16 %v714, %v705
        %v832 = vpack.c.b16 %v715, %v706
        %v833 = vpack.c.b16 %v716, %v707
        %v834 = vpack.c.b16 %v717, %v708
        %v835 = vpack.c.b16 %v718, %v709
        %v836 = vpack.c.b16 %v719, %v710
        %v837 = vpack.c.b16 %v729, %v720
        %v838 = vpack.c.b16 %v730, %v721
        %v839 = vpack.c.b16 %v731, %v722
        %v840 = vpack.c.b16 %v732, %v723
        %v841 = vpack.c.b16 %v733, %v724
        %v842 = vpack.c.b16 %v734, %v725
        %v843 = vpack.c.b16 %v735, %v726
        %v844 = vpack.c.b16 %v736, %v727
        %v845 = vpack.c.b16 %v737, %v728
        %v846 = vpack.c.b16 %v747, %v738
        %v847 = vpack.c.b16 %v748, %v739
        %v848 = vpack.c.b16 %v749, %v740
        %v849 = vpack.c.b16 %v750, %v741
        %v850 = vpack.c.b16 %v751, %v742
        %v851 = vpack.c.b16 %v752, %v743
        %v852 = vpack.c.b16 %v753, %v744
        %v853 = vpack.c.b16 %v754, %v745
        %v854 = vpack.c.b16 %v755, %v746
        %v855 = vpack.c.b16 %v765, %v756
        %v856 = vpack.c.b16 %v766, %v757
        %v857 = vpack.c.b16 %v767, %v758
        %v858 = vpack.c.b16 %v768, %v759
        %v859 = vpack.c.b16 %v769, %v760
        %v860 = vpack.c.b16 %v770, %v761
        %v861 = vpack.c.b16 %v771, %v762
        %v862 = vpack.c.b16 %v772, %v763
        %v863 = vpack.c.b16 %v773, %v764
        %v864 = vpack.c.b16 %v783, %v774
        %v865 = vpack.c.b16 %v784, %v775
        %v866 = vpack.c.b16 %v785, %v776
        %v867 = vpack.c.b16 %v786, %v777
        %v868 = vpack.c.b16 %v787, %v778
        %v869 = vpack.c.b16 %v788, %v779
        %v870 = vpack.c.b16 %v789, %v780
        %v871 = vpack.c.b16 %v790, %v781
        %v872 = vpack.c.b16 %v791, %v782
        %v873 = vpack.c.b16 %v801, %v792
        %v874 = vpack.c.b16 %v802, %v793
        %v875 = vpack.c.b16 %v803, %v794
        %v876 = vpack.c.b16 %v804, %v795
        %v877 = vpack.c.b16 %v805, %v796
        %v878 = vpack.c.b16 %v806, %v797
        %v879 = vpack.c.b16 %v807, %v798
        %v880 = vpack.c.b16 %v808, %v799
        %v881 = vpack.c.b16 %v809, %v800
        %v1098 = vunpack.c.l.b16 %v442
        %v1099 = vunpack.c.l.b16 %v443
        %v1100 = vunpack.c.l.b16 %v444
        %v1101 = vunpack.c.l.b16 %v445
        %v1102 = vunpack.c.l.b16 %v446
        %v1103 = vunpack.c.l.b16 %v447
        %v1104 = vunpack.c.l.b16 %v448
        %v1105 = vunpack.c.l.b16 %v449
        %v1106 = vunpack.c.l.b16 %v450
        %v1107 = vunpack.c.l.b16 %v451
        %v1108 = vunpack.c.l.b16 %v452
        %v1109 = vunpack.c.l.b16 %v453
        %v1110 = vunpack.c.l.b16 %v454
        %v1111 = vunpack.c.l.b16 %v455
        %v1112 = vunpack.c.l.b16 %v456
        %v1113 = vunpack.c.l.b16 %v457
        %v1114 = vunpack.c.l.b16 %v458
        %v1115 = vunpack.c.l.b16 %v459
        %v1116 = vunpack.c.l.b16 %v460
        %v1117 = vunpack.c.l.b16 %v461
        %v1118 = vunpack.c.l.b16 %v462
        %v1119 = vunpack.c.l.b16 %v463
        %v1120 = vunpack.c.l.b16 %v464
        %v1121 = vunpack.c.l.b16 %v465
        %v1122 = vunpack.c.l.b16 %v466
        %v1123 = vunpack.c.l.b16 %v467
        %v1124 = vunpack.c.l.b16 %v468
        %v1125 = vunpack.c.l.b16 %v469
        %v1126 = vunpack.c.l.b16 %v470
        %v1127 = vunpack.c.l.b16 %v471
        %v1128 = vunpack.c.l.b16 %v472
        %v1129 = vunpack.c.l.b16 %v473
        %v1130 = vunpack.c.l.b16 %v474
        %v1131 = vunpack.c.l.b16 %v475
        %v1132 = vunpack.c.l.b16 %v476
        %v1133 = vunpack.c.l.b16 %v477
        %v1134 = vunpack.c.l.b16 %v478
        %v1135 = vunpack.c.l.b16 %v479
        %v1136 = vunpack.c.l.b16 %v480
        %v1137 = vunpack.c.l.b16 %v481
        %v1138 = vunpack.c.l.b16 %v482
        %v1139 = vunpack.c.l.b16 %v483
        %v1140 = vunpack.c.l.b16 %v484
        %v1141 = vunpack.c.l.b16 %v485
        %v1142 = vunpack.c.l.b16 %v486
        %v1143 = vunpack.c.l.b16 %v487
        %v1144 = vunpack.c.l.b16 %v488
        %v1145 = vunpack.c.l.b16 %v489
        %v1146 = vunpack.c.l.b16 %v490
        %v1147 = vunpack.c.l.b16 %v491
        %v1148 = vunpack.c.l.b16 %v492
        %v1149 = vunpack.c.l.b16 %v493
        %v1150 = vunpack.c.l.b16 %v494
        %v1151 = vunpack.c.l.b16 %v495
        %v1152 = vunpack.c.l.b16 %v496
        %v1153 = vunpack.c.l.b16 %v497
        %v1154 = vunpack.c.l.b16 %v498
        %v1155 = vunpack.c.l.b16 %v499
        %v1156 = vunpack.c.l.b16 %v500
        %v1157 = vunpack.c.l.b16 %v501
        %v1158 = vunpack.c.l.b16 %v502
        %v1159 = vunpack.c.l.b16 %v503
        %v1160 = vunpack.c.l.b16 %v504
        %v1161 = vunpack.c.l.b16 %v505
        %v1162 = vunpack.c.l.b16 %v506
        %v1163 = vunpack.c.l.b16 %v507
        %v1164 = vunpack.c.l.b16 %v508
        %v1165 = vunpack.c.l.b16 %v509
        %v1166 = vunpack.c.l.b16 %v510
        %v1167 = vunpack.c.l.b16 %v511
        %v1168 = vunpack.c.l.b16 %v512
        %v1169 = vunpack.c.l.b16 %v513
        %v1170 = vunpack.c.l.b16 %v514
        %v1171 = vunpack.c.l.b16 %v515
        %v1172 = vunpack.c.l.b16 %v516
        %v1173 = vunpack.c.l.b16 %v517
        %v1174 = vunpack.c.l.b16 %v518
        %v1175 = vunpack.c.l.b16 %v519
        %v1176 = vunpack.c.l.b16 %v520
        %v1177 = vunpack.c.l.b16 %v521
        %v1178 = vunpack.c.l.b16 %v522
        %v1179 = vunpack.c.l.b16 %v523
        %v1180 = vunpack.c.l.b16 %v524
        %v1181 = vunpack.c.l.b16 %v525
        %v1182 = vunpack.c.l.b16 %v526
        %v1183 = vunpack.c.l.b16 %v527
        %v1184 = vunpack.c.l.b16 %v528
        %v1185 = vunpack.c.l.b16 %v529
        %v1186 = vunpack.c.l.b16 %v530
        %v1187 = vunpack.c.l.b16 %v531
        %v1188 = vunpack.c.l.b16 %v532
        %v1189 = vunpack.c.l.b16 %v533
        %v1190 = vunpack.c.l.b16 %v534
        %v1191 = vunpack.c.l.b16 %v535
        %v1192 = vunpack.c.l.b16 %v536
        %v1193 = vunpack.c.l.b16 %v537
        %v1194 = vunpack.c.l.b16 %v538
        %v1195 = vunpack.c.l.b16 %v539
        %v1196 = vunpack.c.l.b16 %v540
        %v1197 = vunpack.c.l.b16 %v541
        %v1198 = vunpack.c.l.b16 %v542
        %v1199 = vunpack.c.l.b16 %v543
        %v1200 = vunpack.c.l.b16 %v544
        %v1201 = vunpack.c.l.b16 %v545
        %v1202 = vunpack.c.l.b16 %v546
        %v1203 = vunpack.c.l.b16 %v547
        %v1204 = vunpack.c.l.b16 %v548
        %v1205 = vunpack.c.l.b16 %v549
        %v1206 = vunpack.c.l.b16 %v550
        %v1207 = vunpack.c.l.b16 %v551
        %v1208 = vunpack.c.l.b16 %v552
        %v1209 = vunpack.c.l.b16 %v553
        %v1210 = vunpack.c.l.b16 %v554
        %v1211 = vunpack.c.l.b16 %v555
        %v1212 = vunpack.c.l.b16 %v556
        %v1213 = vunpack.c.l.b16 %v557
        %v1214 = vunpack.c.l.b16 %v558
        %v1215 = vunpack.c.l.b16 %v559
        %v1216 = vunpack.c.l.b16 %v560
        %v1217 = vunpack.c.l.b16 %v561
        %v1218 = vunpack.c.l.b16 %v562
        %v1219 = vunpack.c.l.b16 %v563
        %v1220 = vunpack.c.l.b16 %v564
        %v1221 = vunpack.c.l.b16 %v565
        %v1222 = vunpack.c.l.b16 %v566
        %v1223 = vunpack.c.l.b16 %v567
        %v1224 = vunpack.c.l.b16 %v568
        %v1225 = vunpack.c.l.b16 %v569
        %v1226 = vunpack.c.l.b16 %v570
        %v1227 = vunpack.c.l.b16 %v571
        %v1228 = vunpack.c.l.b16 %v572
        %v1229 = vunpack.c.l.b16 %v573
        %v1230 = vunpack.c.l.b16 %v574
        %v1231 = vunpack.c.l.b16 %v575
        %v1232 = vunpack.c.l.b16 %v576
        %v1233 = vunpack.c.l.b16 %v577
        %v1234 = vunpack.c.l.b16 %v578
        %v1235 = vunpack.c.l.b16 %v579
        %v1236 = vunpack.c.l.b16 %v580
        %v1237 = vunpack.c.l.b16 %v581
        %v1238 = vunpack.c.l.b16 %v582
        %v1239 = vunpack.c.l.b16 %v583
        %v1240 = vunpack.c.l.b16 %v584
        %v1241 = vunpack.c.l.b16 %v585
        %v1242 = vpack.c.b16 %v1099, %v1098
        %v1243 = vpack.c.b16 %v1101, %v1100
        %v1244 = vpack.c.b16 %v1103, %v1102
        %v1245 = vpack.c.b16 %v1105, %v1104
        %v1246 = vpack.c.b16 %v1107, %v1106
        %v1247 = vpack.c.b16 %v1109, %v1108
        %v1248 = vpack.c.b16 %v1111, %v1110
        %v1249 = vpack.c.b16 %v1113, %v1112
        %v1250 = vpack.c.b16 %v1115, %v1114
        %v1251 = vpack.c.b16 %v1117, %v1116
        %v1252 = vpack.c.b16 %v1119, %v1118
        %v1253 = vpack.c.b16 %v1121, %v1120
        %v1254 = vpack.c.b16 %v1123, %v1122
        %v1255 = vpack.c.b16 %v1125, %v1124
        %v1256 = vpack.c.b16 %v1127, %v1126
        %v1257 = vpack.c.b16 %v1129, %v1128
        %v1258 = vpack.c.b16 %v1131, %v1130
        %v1259 = vpack.c.b16 %v1133, %v1132
        %v1260 = vpack.c.b16 %v1135, %v1134
        %v1261 = vpack.c.b16 %v1137, %v1136
        %v1262 = vpack.c.b16 %v1139, %v1138
        %v1263 = vpack.c.b16 %v1141, %v1140
        %v1264 = vpack.c.b16 %v1143, %v1142
        %v1265 = vpack.c.b16 %v1145, %v1144
        %v1266 = vpack.c.b16 %v1147, %v1146
        %v1267 = vpack.c.b16 %v1149, %v1148
        %v1268 = vpack.c.b16 %v1151, %v1150
        %v1269 = vpack.c.b16 %v1153, %v1152
        %v1270 = vpack.c.b16 %v1155, %v1154
        %v1271 = vpack.c.b16 %v1157, %v1156
        %v1272 = vpack.c.b16 %v1159, %v1158
        %v1273 = vpack.c.b16 %v1161, %v1160
        %v1274 = vpack.c.b16 %v1163, %v1162
        %v1275 = vpack.c.b16 %v1165, %v1164
        %v1276 = vpack.c.b16 %v1167, %v1166
        %v1277 = vpack.c.b16 %v1169, %v1168
        %v1278 = vpack.c.b16 %v1171, %v1170
        %v1279 = vpack.c.b16 %v1173, %v1172
        %v1280 = vpack.c.b16 %v1175, %v1174
        %v1281 = vpack.c.b16 %v1177, %v1176
        %v1282 = vpack.c.b16 %v1179, %v1178
        %v1283 = vpack.c.b16 %v1181, %v1180
        %v1284 = vpack.c.b16 %v1183, %v1182
        %v1285 = vpack.c.b16 %v1185, %v1184
        %v1286 = vpack.c.b16 %v1187, %v1186
        %v1287 = vpack.c.b16 %v1189, %v1188
        %v1288 = vpack.c.b16 %v1191, %v1190
        %v1289 = vpack.c.b16 %v1193, %v1192
        %v1290 = vpack.c.b16 %v1195, %v1194
        %v1291 = vpack.c.b16 %v1197, %v1196
        %v1292 = vpack.c.b16 %v1199, %v1198
        %v1293 = vpack.c.b16 %v1201, %v1200
        %v1294 = vpack.c.b16 %v1203, %v1202
        %v1295 = vpack.c.b16 %v1205, %v1204
        %v1296 = vpack.c.b16 %v1207, %v1206
        %v1297 = vpack.c.b16 %v1209, %v1208
        %v1298 = vpack.c.b16 %v1211, %v1210
        %v1299 = vpack.c.b16 %v1213, %v1212
        %v1300 = vpack.c.b16 %v1215, %v1214
        %v1301 = vpack.c.b16 %v1217, %v1216
        %v1302 = vpack.c.b16 %v1219, %v1218
        %v1303 = vpack.c.b16 %v1221, %v1220
        %v1304 = vpack.c.b16 %v1223, %v1222
        %v1305 = vpack.c.b16 %v1225, %v1224
        %v1306 = vpack.c.b16 %v1227, %v1226
        %v1307 = vpack.c.b16 %v1229, %v1228
        %v1308 = vpack.c.b16 %v1231, %v1230
        %v1309 = vpack.c.b16 %v1233, %v1232
        %v1310 = vpack.c.b16 %v1235, %v1234
        %v1311 = vpack.c.b16 %v1237, %v1236
        %v1312 = vpack.c.b16 %v1239, %v1238
        %v1313 = vpack.c.b16 %v1241, %v1240
        %1386 = vmatprep.subr.bf16.mxu0 0
        %1387 = vmatpush1.bf16.msra.mxu0 %v1242
        %1388 = vmatprep.subr.bf16.mxu0 0
        %1389 = vmatpush1.bf16.msra.mxu0 %v1243
        %1390 = vmatprep.subr.bf16.mxu0 0
        %1391 = vmatpush1.bf16.msra.mxu0 %v1244
        %1392 = vmatprep.subr.bf16.mxu0 0
        %1393 = vmatpush1.bf16.msra.mxu0 %v1245
        %1394 = vmatprep.subr.bf16.mxu0 0
        %1395 = vmatpush1.bf16.msra.mxu0 %v1246
        %1396 = vmatprep.subr.bf16.mxu0 0
        %1397 = vmatpush1.bf16.msra.mxu0 %v1247
        %1398 = vmatprep.subr.bf16.mxu0 0
        %1399 = vmatpush1.bf16.msra.mxu0 %v1248
        %1400 = vmatprep.subr.bf16.mxu0 0
        %1401 = vmatpush1.bf16.msra.mxu0 %v1249
        %1402 = vmatprep.subr.bf16.mxu0 0
        %1403 = vmatpush1.bf16.msra.mxu0 %v1250
        %1404 = vmatprep.subr.bf16.mxu0 0
        %1405 = vmatpush1.bf16.msra.mxu0 %v1251
        %1406 = vmatprep.subr.bf16.mxu0 0
        %1407 = vmatpush1.bf16.msra.mxu0 %v1252
        %1408 = vmatprep.subr.bf16.mxu0 0
        %1409 = vmatpush1.bf16.msra.mxu0 %v1253
        %1410 = vmatprep.subr.bf16.mxu0 0
        %1411 = vmatpush1.bf16.msra.mxu0 %v1254
        %1412 = vmatprep.subr.bf16.mxu0 0
        %1413 = vmatpush1.bf16.msra.mxu0 %v1255
        %1414 = vmatprep.subr.bf16.mxu0 0
        %1415 = vmatpush1.bf16.msra.mxu0 %v1256
        %1416 = vmatprep.subr.bf16.mxu0 0
        %1417 = vmatpush1.bf16.msra.mxu0 %v1257
        %1418 = vmatprep.mubr.bf16.mxu0 %v811
        %1419 = vmatmul.mubr.bf16.gmra.mrb[0].mxu0 %v810
        %v1420 = vpop.f32.mrb[0].mxu0
        %v1421 = vadd.f32 0.0, %v1420
        %v1422 = vpop.f32.mrb[0].mxu0
        %v1423 = vpop.f32.mrb[0].mxu0
        %v1424 = vadd.f32 0.0, %v1423
        %v1425 = vpop.f32.mrb[0].mxu0
        %1426 = vmatprep.mubr.bf16.mxu0 %v820
        %1427 = vmatmul.mubr.bf16.gmra.mrb[0].mxu0 %v819
        %v1428 = vpop.f32.mrb[0].mxu0
        %v1429 = vadd.f32 0.0, %v1428
        %v1430 = vpop.f32.mrb[0].mxu0
        %v1431 = vpop.f32.mrb[0].mxu0
        %v1432 = vadd.f32 0.0, %v1431
        %v1433 = vpop.f32.mrb[0].mxu0
        %1434 = vmatprep.mubr.bf16.mxu0 %v829
        %1435 = vmatmul.mubr.bf16.gmra.mrb[0].mxu0 %v828
        %v1436 = vpop.f32.mrb[0].mxu0
        %v1437 = vadd.f32 0.0, %v1436
        %v1438 = vpop.f32.mrb[0].mxu0
        %v1439 = vpop.f32.mrb[0].mxu0
        %v1440 = vadd.f32 0.0, %v1439
        %v1441 = vpop.f32.mrb[0].mxu0
        %1442 = vmatprep.mubr.bf16.mxu0 %v838
        %1443 = vmatmul.mubr.bf16.gmra.mrb[0].mxu0 %v837
        %v1444 = vpop.f32.mrb[0].mxu0
        %v1445 = vadd.f32 0.0, %v1444
        %v1446 = vpop.f32.mrb[0].mxu0
        %v1447 = vpop.f32.mrb[0].mxu0
        %v1448 = vadd.f32 0.0, %v1447
        %v1449 = vpop.f32.mrb[0].mxu0
        %1450 = vmatprep.mubr.bf16.mxu0 %v847
        %1451 = vmatmul.mubr.bf16.gmra.mrb[0].mxu0 %v846
        %v1452 = vpop.f32.mrb[0].mxu0
        %v1453 = vadd.f32 0.0, %v1452
        %v1454 = vpop.f32.mrb[0].mxu0
        %v1455 = vpop.f32.mrb[0].mxu0
        %v1456 = vadd.f32 0.0, %v1455
        %v1457 = vpop.f32.mrb[0].mxu0
        %1458 = vmatprep.mubr.bf16.mxu0 %v856
        %1459 = vmatmul.mubr.bf16.gmra.mrb[0].mxu0 %v855
        %v1460 = vpop.f32.mrb[0].mxu0
        %v1461 = vadd.f32 0.0, %v1460
        %v1462 = vpop.f32.mrb[0].mxu0
        %v1463 = vpop.f32.mrb[0].mxu0
        %v1464 = vadd.f32 0.0, %v1463
        %v1465 = vpop.f32.mrb[0].mxu0
        %1466 = vmatprep.mubr.bf16.mxu0 %v865
        %1467 = vmatmul.mubr.bf16.gmra.mrb[0].mxu0 %v864
        %v1468 = vpop.f32.mrb[0].mxu0
        %v1469 = vadd.f32 0.0, %v1468
        %v1470 = vpop.f32.mrb[0].mxu0
        %v1471 = vpop.f32.mrb[0].mxu0
        %v1472 = vadd.f32 0.0, %v1471
        %v1473 = vpop.f32.mrb[0].mxu0
        %1474 = vmatprep.mubr.bf16.mxu0 %v874
        %1475 = vmatmul.mubr.bf16.gmra.mrb[0].mxu0 %v873
        %v1476 = vpop.f32.mrb[0].mxu0
        %v1477 = vadd.f32 0.0, %v1476
        %v1478 = vpop.f32.mrb[0].mxu0
        %v1479 = vpop.f32.mrb[0].mxu0
        %v1480 = vadd.f32 0.0, %v1479
        %v1481 = vpop.f32.mrb[0].mxu0
        %1482 = vdwg.mxu0
        %1483 = vmatprep.subr.bf16.mxu0 0
        %1484 = vmatpush1.bf16.msra.mxu0 %v1258
        %1485 = vmatprep.subr.bf16.mxu0 0
        %1486 = vmatpush1.bf16.msra.mxu0 %v1259
        %1487 = vmatprep.subr.bf16.mxu0 0
        %1488 = vmatpush1.bf16.msra.mxu0 %v1260
        %1489 = vmatprep.subr.bf16.mxu0 0
        %1490 = vmatpush1.bf16.msra.mxu0 %v1261
        %1491 = vmatprep.subr.bf16.mxu0 0
        %1492 = vmatpush1.bf16.msra.mxu0 %v1262
        %1493 = vmatprep.subr.bf16.mxu0 0
        %1494 = vmatpush1.bf16.msra.mxu0 %v1263
        %1495 = vmatprep.subr.bf16.mxu0 0
        %1496 = vmatpush1.bf16.msra.mxu0 %v1264
        %1497 = vmatprep.subr.bf16.mxu0 0
        %1498 = vmatpush1.bf16.msra.mxu0 %v1265
        %1499 = vmatprep.subr.bf16.mxu0 0
        %1500 = vmatpush1.bf16.msra.mxu0 %v1266
        %1501 = vmatprep.subr.bf16.mxu0 0
        %1502 = vmatpush1.bf16.msra.mxu0 %v1267
        %1503 = vmatprep.subr.bf16.mxu0 0
        %1504 = vmatpush1.bf16.msra.mxu0 %v1268
        %1505 = vmatprep.subr.bf16.mxu0 0
        %1506 = vmatpush1.bf16.msra.mxu0 %v1269
        %1507 = vmatprep.subr.bf16.mxu0 0
        %1508 = vmatpush1.bf16.msra.mxu0 %v1270
        %1509 = vmatprep.subr.bf16.mxu0 0
        %1510 = vmatpush1.bf16.msra.mxu0 %v1271
        %1511 = vmatprep.subr.bf16.mxu0 0
        %1512 = vmatpush1.bf16.msra.mxu0 %v1272
        %1513 = vmatprep.subr.bf16.mxu0 0
        %1514 = vmatpush1.bf16.msra.mxu0 %v1273
        %1515 = vmatprep.mubr.bf16.mxu0 %v813
        %1516 = vmatmul.mubr.bf16.gmra.mrb[0].mxu0 %v812
        %v1517 = vpop.f32.mrb[0].mxu0
        %v1518 = vadd.f32 %v1421, %v1517
        %v1519 = vpop.f32.mrb[0].mxu0
        %v1520 = vpop.f32.mrb[0].mxu0
        %v1521 = vadd.f32 %v1424, %v1520
        %v1522 = vpop.f32.mrb[0].mxu0
        %1523 = vmatprep.mubr.bf16.mxu0 %v822
        %1524 = vmatmul.mubr.bf16.gmra.mrb[0].mxu0 %v821
        %v1525 = vpop.f32.mrb[0].mxu0
        %v1526 = vadd.f32 %v1429, %v1525
        %v1527 = vpop.f32.mrb[0].mxu0
        %v1528 = vpop.f32.mrb[0].mxu0
        %v1529 = vadd.f32 %v1432, %v1528
        %v1530 = vpop.f32.mrb[0].mxu0
        %1531 = vmatprep.mubr.bf16.mxu0 %v831
        %1532 = vmatmul.mubr.bf16.gmra.mrb[0].mxu0 %v830
        %v1533 = vpop.f32.mrb[0].mxu0
        %v1534 = vadd.f32 %v1437, %v1533
        %v1535 = vpop.f32.mrb[0].mxu0
        %v1536 = vpop.f32.mrb[0].mxu0
        %v1537 = vadd.f32 %v1440, %v1536
        %v1538 = vpop.f32.mrb[0].mxu0
        %1539 = vmatprep.mubr.bf16.mxu0 %v840
        %1540 = vmatmul.mubr.bf16.gmra.mrb[0].mxu0 %v839
        %v1541 = vpop.f32.mrb[0].mxu0
        %v1542 = vadd.f32 %v1445, %v1541
        %v1543 = vpop.f32.mrb[0].mxu0
        %v1544 = vpop.f32.mrb[0].mxu0
        %v1545 = vadd.f32 %v1448, %v1544
        %v1546 = vpop.f32.mrb[0].mxu0
        %1547 = vmatprep.mubr.bf16.mxu0 %v849
        %1548 = vmatmul.mubr.bf16.gmra.mrb[0].mxu0 %v848
        %v1549 = vpop.f32.mrb[0].mxu0
        %v1550 = vadd.f32 %v1453, %v1549
        %v1551 = vpop.f32.mrb[0].mxu0
        %v1552 = vpop.f32.mrb[0].mxu0
        %v1553 = vadd.f32 %v1456, %v1552
        %v1554 = vpop.f32.mrb[0].mxu0
        %1555 = vmatprep.mubr.bf16.mxu0 %v858
        %1556 = vmatmul.mubr.bf16.gmra.mrb[0].mxu0 %v857
        %v1557 = vpop.f32.mrb[0].mxu0
        %v1558 = vadd.f32 %v1461, %v1557
        %v1559 = vpop.f32.mrb[0].mxu0
        %v1560 = vpop.f32.mrb[0].mxu0
        %v1561 = vadd.f32 %v1464, %v1560
        %v1562 = vpop.f32.mrb[0].mxu0
        %1563 = vmatprep.mubr.bf16.mxu0 %v867
        %1564 = vmatmul.mubr.bf16.gmra.mrb[0].mxu0 %v866
        %v1565 = vpop.f32.mrb[0].mxu0
        %v1566 = vadd.f32 %v1469, %v1565
        %v1567 = vpop.f32.mrb[0].mxu0
        %v1568 = vpop.f32.mrb[0].mxu0
        %v1569 = vadd.f32 %v1472, %v1568
        %v1570 = vpop.f32.mrb[0].mxu0
        %1571 = vmatprep.mubr.bf16.mxu0 %v876
        %1572 = vmatmul.mubr.bf16.gmra.mrb[0].mxu0 %v875
        %v1573 = vpop.f32.mrb[0].mxu0
        %v1574 = vadd.f32 %v1477, %v1573
        %v1575 = vpop.f32.mrb[0].mxu0
        %v1576 = vpop.f32.mrb[0].mxu0
        %v1577 = vadd.f32 %v1480, %v1576
        %v1578 = vpop.f32.mrb[0].mxu0
        %1579 = vdwg.mxu0
        %1580 = vmatprep.subr.bf16.mxu0 0
        %1581 = vmatpush1.bf16.msra.mxu0 %v1274
        %1582 = vmatprep.subr.bf16.mxu0 0
        %1583 = vmatpush1.bf16.msra.mxu0 %v1275
        %1584 = vmatprep.subr.bf16.mxu0 0
        %1585 = vmatpush1.bf16.msra.mxu0 %v1276
        %1586 = vmatprep.subr.bf16.mxu0 0
        %1587 = vmatpush1.bf16.msra.mxu0 %v1277
        %1588 = vmatprep.subr.bf16.mxu0 0
        %1589 = vmatpush1.bf16.msra.mxu0 %v1278
        %1590 = vmatprep.subr.bf16.mxu0 0
        %1591 = vmatpush1.bf16.msra.mxu0 %v1279
        %1592 = vmatprep.subr.bf16.mxu0 0
        %1593 = vmatpush1.bf16.msra.mxu0 %v1280
        %1594 = vmatprep.subr.bf16.mxu0 0
        %1595 = vmatpush1.bf16.msra.mxu0 %v1281
        %1596 = vmatprep.subr.bf16.mxu0 0
        %1597 = vmatpush1.bf16.msra.mxu0 %v1282
        %1598 = vmatprep.subr.bf16.mxu0 0
        %1599 = vmatpush1.bf16.msra.mxu0 %v1283
        %1600 = vmatprep.subr.bf16.mxu0 0
        %1601 = vmatpush1.bf16.msra.mxu0 %v1284
        %1602 = vmatprep.subr.bf16.mxu0 0
        %1603 = vmatpush1.bf16.msra.mxu0 %v1285
        %1604 = vmatprep.subr.bf16.mxu0 0
        %1605 = vmatpush1.bf16.msra.mxu0 %v1286
        %1606 = vmatprep.subr.bf16.mxu0 0
        %1607 = vmatpush1.bf16.msra.mxu0 %v1287
        %1608 = vmatprep.subr.bf16.mxu0 0
        %1609 = vmatpush1.bf16.msra.mxu0 %v1288
        %1610 = vmatprep.subr.bf16.mxu0 0
        %1611 = vmatpush1.bf16.msra.mxu0 %v1289
        %1612 = vmatprep.mubr.bf16.mxu0 %v815
        %1613 = vmatmul.mubr.bf16.gmra.mrb[0].mxu0 %v814
        %v1614 = vpop.f32.mrb[0].mxu0
        %v1615 = vadd.f32 %v1518, %v1614
        %v1616 = vpop.f32.mrb[0].mxu0
        %v1617 = vpop.f32.mrb[0].mxu0
        %v1618 = vadd.f32 %v1521, %v1617
        %v1619 = vpop.f32.mrb[0].mxu0
        %1620 = vmatprep.mubr.bf16.mxu0 %v824
        %1621 = vmatmul.mubr.bf16.gmra.mrb[0].mxu0 %v823
        %v1622 = vpop.f32.mrb[0].mxu0
        %v1623 = vadd.f32 %v1526, %v1622
        %v1624 = vpop.f32.mrb[0].mxu0
        %v1625 = vpop.f32.mrb[0].mxu0
        %v1626 = vadd.f32 %v1529, %v1625
        %v1627 = vpop.f32.mrb[0].mxu0
        %1628 = vmatprep.mubr.bf16.mxu0 %v833
        %1629 = vmatmul.mubr.bf16.gmra.mrb[0].mxu0 %v832
        %v1630 = vpop.f32.mrb[0].mxu0
        %v1631 = vadd.f32 %v1534, %v1630
        %v1632 = vpop.f32.mrb[0].mxu0
        %v1633 = vpop.f32.mrb[0].mxu0
        %v1634 = vadd.f32 %v1537, %v1633
        %v1635 = vpop.f32.mrb[0].mxu0
        %1636 = vmatprep.mubr.bf16.mxu0 %v842
        %1637 = vmatmul.mubr.bf16.gmra.mrb[0].mxu0 %v841
        %v1638 = vpop.f32.mrb[0].mxu0
        %v1639 = vadd.f32 %v1542, %v1638
        %v1640 = vpop.f32.mrb[0].mxu0
        %v1641 = vpop.f32.mrb[0].mxu0
        %v1642 = vadd.f32 %v1545, %v1641
        %v1643 = vpop.f32.mrb[0].mxu0
        %1644 = vmatprep.mubr.bf16.mxu0 %v851
        %1645 = vmatmul.mubr.bf16.gmra.mrb[0].mxu0 %v850
        %v1646 = vpop.f32.mrb[0].mxu0
        %v1647 = vadd.f32 %v1550, %v1646
        %v1648 = vpop.f32.mrb[0].mxu0
        %v1649 = vpop.f32.mrb[0].mxu0
        %v1650 = vadd.f32 %v1553, %v1649
        %v1651 = vpop.f32.mrb[0].mxu0
        %1652 = vmatprep.mubr.bf16.mxu0 %v860
        %1653 = vmatmul.mubr.bf16.gmra.mrb[0].mxu0 %v859
        %v1654 = vpop.f32.mrb[0].mxu0
        %v1655 = vadd.f32 %v1558, %v1654
        %v1656 = vpop.f32.mrb[0].mxu0
        %v1657 = vpop.f32.mrb[0].mxu0
        %v1658 = vadd.f32 %v1561, %v1657
        %v1659 = vpop.f32.mrb[0].mxu0
        %1660 = vmatprep.mubr.bf16.mxu0 %v869
        %1661 = vmatmul.mubr.bf16.gmra.mrb[0].mxu0 %v868
        %v1662 = vpop.f32.mrb[0].mxu0
        %v1663 = vadd.f32 %v1566, %v1662
        %v1664 = vpop.f32.mrb[0].mxu0
        %v1665 = vpop.f32.mrb[0].mxu0
        %v1666 = vadd.f32 %v1569, %v1665
        %v1667 = vpop.f32.mrb[0].mxu0
        %1668 = vmatprep.mubr.bf16.mxu0 %v878
        %1669 = vmatmul.mubr.bf16.gmra.mrb[0].mxu0 %v877
        %v1670 = vpop.f32.mrb[0].mxu0
        %v1671 = vadd.f32 %v1574, %v1670
        %v1672 = vpop.f32.mrb[0].mxu0
        %v1673 = vpop.f32.mrb[0].mxu0
        %v1674 = vadd.f32 %v1577, %v1673
        %v1675 = vpop.f32.mrb[0].mxu0
        %1676 = vdwg.mxu0
        %1677 = vmatprep.subr.bf16.mxu0 0
        %1678 = vmatpush1.bf16.msra.mxu0 %v1290
        %1679 = vmatprep.subr.bf16.mxu0 0
        %1680 = vmatpush1.bf16.msra.mxu0 %v1291
        %1681 = vmatprep.subr.bf16.mxu0 0
        %1682 = vmatpush1.bf16.msra.mxu0 %v1292
        %1683 = vmatprep.subr.bf16.mxu0 0
        %1684 = vmatpush1.bf16.msra.mxu0 %v1293
        %1685 = vmatprep.subr.bf16.mxu0 0
        %1686 = vmatpush1.bf16.msra.mxu0 %v1294
        %1687 = vmatprep.subr.bf16.mxu0 0
        %1688 = vmatpush1.bf16.msra.mxu0 %v1295
        %1689 = vmatprep.subr.bf16.mxu0 0
        %1690 = vmatpush1.bf16.msra.mxu0 %v1296
        %1691 = vmatprep.subr.bf16.mxu0 0
        %1692 = vmatpush1.bf16.msra.mxu0 %v1297
        %1693 = vmatprep.subr.bf16.mxu0 0
        %1694 = vmatpush1.bf16.msra.mxu0 %v1298
        %1695 = vmatprep.subr.bf16.mxu0 0
        %1696 = vmatpush1.bf16.msra.mxu0 %v1299
        %1697 = vmatprep.subr.bf16.mxu0 0
        %1698 = vmatpush1.bf16.msra.mxu0 %v1300
        %1699 = vmatprep.subr.bf16.mxu0 0
        %1700 = vmatpush1.bf16.msra.mxu0 %v1301
        %1701 = vmatprep.subr.bf16.mxu0 0
        %1702 = vmatpush1.bf16.msra.mxu0 %v1302
        %1703 = vmatprep.subr.bf16.mxu0 0
        %1704 = vmatpush1.bf16.msra.mxu0 %v1303
        %1705 = vmatprep.subr.bf16.mxu0 0
        %1706 = vmatpush1.bf16.msra.mxu0 %v1304
        %1707 = vmatprep.subr.bf16.mxu0 0
        %1708 = vmatpush1.bf16.msra.mxu0 %v1305
        %1709 = vmatprep.mubr.bf16.mxu0 %v817
        %1710 = vmatmul.mubr.bf16.gmra.mrb[0].mxu0 %v816
        %v1711 = vpop.f32.mrb[0].mxu0
        %v1712 = vadd.f32 %v1615, %v1711
        %v1713 = vpop.f32.mrb[0].mxu0
        %v1714 = vpop.f32.mrb[0].mxu0
        %v1715 = vadd.f32 %v1618, %v1714
        %v1716 = vpop.f32.mrb[0].mxu0
        %1717 = vmatprep.mubr.bf16.mxu0 %v826
        %1718 = vmatmul.mubr.bf16.gmra.mrb[0].mxu0 %v825
        %v1719 = vpop.f32.mrb[0].mxu0
        %v1720 = vadd.f32 %v1623, %v1719
        %v1721 = vpop.f32.mrb[0].mxu0
        %v1722 = vpop.f32.mrb[0].mxu0
        %v1723 = vadd.f32 %v1626, %v1722
        %v1724 = vpop.f32.mrb[0].mxu0
        %1725 = vmatprep.mubr.bf16.mxu0 %v835
        %1726 = vmatmul.mubr.bf16.gmra.mrb[0].mxu0 %v834
        %v1727 = vpop.f32.mrb[0].mxu0
        %v1728 = vadd.f32 %v1631, %v1727
        %v1729 = vpop.f32.mrb[0].mxu0
        %v1730 = vpop.f32.mrb[0].mxu0
        %v1731 = vadd.f32 %v1634, %v1730
        %v1732 = vpop.f32.mrb[0].mxu0
        %1733 = vmatprep.mubr.bf16.mxu0 %v844
        %1734 = vmatmul.mubr.bf16.gmra.mrb[0].mxu0 %v843
        %v1735 = vpop.f32.mrb[0].mxu0
        %v1736 = vadd.f32 %v1639, %v1735
        %v1737 = vpop.f32.mrb[0].mxu0
        %v1738 = vpop.f32.mrb[0].mxu0
        %v1739 = vadd.f32 %v1642, %v1738
        %v1740 = vpop.f32.mrb[0].mxu0
        %1741 = vmatprep.mubr.bf16.mxu0 %v853
        %1742 = vmatmul.mubr.bf16.gmra.mrb[0].mxu0 %v852
        %v1743 = vpop.f32.mrb[0].mxu0
        %v1744 = vadd.f32 %v1647, %v1743
        %v1745 = vpop.f32.mrb[0].mxu0
        %v1746 = vpop.f32.mrb[0].mxu0
        %v1747 = vadd.f32 %v1650, %v1746
        %v1748 = vpop.f32.mrb[0].mxu0
        %1749 = vmatprep.mubr.bf16.mxu0 %v862
        %1750 = vmatmul.mubr.bf16.gmra.mrb[0].mxu0 %v861
        %v1751 = vpop.f32.mrb[0].mxu0
        %v1752 = vadd.f32 %v1655, %v1751
        %v1753 = vpop.f32.mrb[0].mxu0
        %v1754 = vpop.f32.mrb[0].mxu0
        %v1755 = vadd.f32 %v1658, %v1754
        %v1756 = vpop.f32.mrb[0].mxu0
        %1757 = vmatprep.mubr.bf16.mxu0 %v871
        %1758 = vmatmul.mubr.bf16.gmra.mrb[0].mxu0 %v870
        %v1759 = vpop.f32.mrb[0].mxu0
        %v1760 = vadd.f32 %v1663, %v1759
        %v1761 = vpop.f32.mrb[0].mxu0
        %v1762 = vpop.f32.mrb[0].mxu0
        %v1763 = vadd.f32 %v1666, %v1762
        %v1764 = vpop.f32.mrb[0].mxu0
        %1765 = vmatprep.mubr.bf16.mxu0 %v880
        %1766 = vmatmul.mubr.bf16.gmra.mrb[0].mxu0 %v879
        %v1767 = vpop.f32.mrb[0].mxu0
        %v1768 = vadd.f32 %v1671, %v1767
        %v1769 = vpop.f32.mrb[0].mxu0
        %v1770 = vpop.f32.mrb[0].mxu0
        %v1771 = vadd.f32 %v1674, %v1770
        %v1772 = vpop.f32.mrb[0].mxu0
        %1773 = vdwg.mxu0
        %1774 = vmatprep.subr.bf16.mxu0 0
        %1775 = vmatpush1.bf16.msra.mxu0 %v1306
        %1776 = vmatprep.subr.bf16.mxu0 0
        %1777 = vmatpush1.bf16.msra.mxu0 %v1307
        %1778 = vmatprep.subr.bf16.mxu0 0
        %1779 = vmatpush1.bf16.msra.mxu0 %v1308
        %1780 = vmatprep.subr.bf16.mxu0 0
        %1781 = vmatpush1.bf16.msra.mxu0 %v1309
        %1782 = vmatprep.subr.bf16.mxu0 0
        %1783 = vmatpush1.bf16.msra.mxu0 %v1310
        %1784 = vmatprep.subr.bf16.mxu0 0
        %1785 = vmatpush1.bf16.msra.mxu0 %v1311
        %1786 = vmatprep.subr.bf16.mxu0 0
        %1787 = vmatpush1.bf16.msra.mxu0 %v1312
        %1788 = vmatprep.subr.bf16.mxu0 0
        %1789 = vmatpush1.bf16.msra.mxu0 %v1313
        %1790 = vmatprep.subr.bf16.mxu0 0
        %1791 = vmatpush1.bf16.msra.mxu0 0
        %1792 = vmatprep.subr.bf16.mxu0 0
        %1793 = vmatpush1.bf16.msra.mxu0 0
        %1794 = vmatprep.subr.bf16.mxu0 0
        %1795 = vmatpush1.bf16.msra.mxu0 0
        %1796 = vmatprep.subr.bf16.mxu0 0
        %1797 = vmatpush1.bf16.msra.mxu0 0
        %1798 = vmatprep.subr.bf16.mxu0 0
        %1799 = vmatpush1.bf16.msra.mxu0 0
        %1800 = vmatprep.subr.bf16.mxu0 0
        %1801 = vmatpush1.bf16.msra.mxu0 0
        %1802 = vmatprep.subr.bf16.mxu0 0
        %1803 = vmatpush1.bf16.msra.mxu0 0
        %1804 = vmatprep.subr.bf16.mxu0 0
        %1805 = vmatpush1.bf16.msra.mxu0 0
        %1806 = vmatprep.mubr.bf16.mxu0 0
        %1807 = vmatmul.mubr.bf16.gmra.mrb[0].mxu0 %v818
        %v1808 = vpop.f32.mrb[0].mxu0
        %v1809 = vadd.f32 %v1712, %v1808
        %v1810 = vpop.f32.mrb[0].mxu0
        %v1811 = vpop.f32.mrb[0].mxu0
        %v1812 = vadd.f32 %v1715, %v1811
        %v1813 = vpop.f32.mrb[0].mxu0
        %1814 = vmatprep.mubr.bf16.mxu0 0
        %1815 = vmatmul.mubr.bf16.gmra.mrb[0].mxu0 %v827
        %v1816 = vpop.f32.mrb[0].mxu0
        %v1817 = vadd.f32 %v1720, %v1816
        %v1818 = vpop.f32.mrb[0].mxu0
        %v1819 = vpop.f32.mrb[0].mxu0
        %v1820 = vadd.f32 %v1723, %v1819
        %v1821 = vpop.f32.mrb[0].mxu0
        %1822 = vmatprep.mubr.bf16.mxu0 0
        %1823 = vmatmul.mubr.bf16.gmra.mrb[0].mxu0 %v836
        %v1824 = vpop.f32.mrb[0].mxu0
        %v1825 = vadd.f32 %v1728, %v1824
        %v1826 = vpop.f32.mrb[0].mxu0
        %v1827 = vpop.f32.mrb[0].mxu0
        %v1828 = vadd.f32 %v1731, %v1827
        %v1829 = vpop.f32.mrb[0].mxu0
        %1830 = vmatprep.mubr.bf16.mxu0 0
        %1831 = vmatmul.mubr.bf16.gmra.mrb[0].mxu0 %v845
        %v1832 = vpop.f32.mrb[0].mxu0
        %v1833 = vadd.f32 %v1736, %v1832
        %v1834 = vpop.f32.mrb[0].mxu0
        %v1835 = vpop.f32.mrb[0].mxu0
        %v1836 = vadd.f32 %v1739, %v1835
        %v1837 = vpop.f32.mrb[0].mxu0
        %1838 = vmatprep.mubr.bf16.mxu0 0
        %1839 = vmatmul.mubr.bf16.gmra.mrb[0].mxu0 %v854
        %v1840 = vpop.f32.mrb[0].mxu0
        %v1841 = vadd.f32 %v1744, %v1840
        %v1842 = vpop.f32.mrb[0].mxu0
        %v1843 = vpop.f32.mrb[0].mxu0
        %v1844 = vadd.f32 %v1747, %v1843
        %v1845 = vpop.f32.mrb[0].mxu0
        %1846 = vmatprep.mubr.bf16.mxu0 0
        %1847 = vmatmul.mubr.bf16.gmra.mrb[0].mxu0 %v863
        %v1848 = vpop.f32.mrb[0].mxu0
        %v1849 = vadd.f32 %v1752, %v1848
        %v1850 = vpop.f32.mrb[0].mxu0
        %v1851 = vpop.f32.mrb[0].mxu0
        %v1852 = vadd.f32 %v1755, %v1851
        %v1853 = vpop.f32.mrb[0].mxu0
        %1854 = vmatprep.mubr.bf16.mxu0 0
        %1855 = vmatmul.mubr.bf16.gmra.mrb[0].mxu0 %v872
        %v1856 = vpop.f32.mrb[0].mxu0
        %v1857 = vadd.f32 %v1760, %v1856
        %v1858 = vpop.f32.mrb[0].mxu0
        %v1859 = vpop.f32.mrb[0].mxu0
        %v1860 = vadd.f32 %v1763, %v1859
        %v1861 = vpop.f32.mrb[0].mxu0
        %1862 = vmatprep.mubr.bf16.mxu0 0
        %1863 = vmatmul.mubr.bf16.gmra.mrb[0].mxu0 %v881
        %v1864 = vpop.f32.mrb[0].mxu0
        %v1865 = vadd.f32 %v1768, %v1864
        %v1866 = vpop.f32.mrb[0].mxu0
        %v1867 = vpop.f32.mrb[0].mxu0
        %v1868 = vadd.f32 %v1771, %v1867
        %v1869 = vpop.f32.mrb[0].mxu0
        %1870 = vdwg.mxu0
        %v1871 = vmax.f32 %v1809, %v1825
        %v1872 = vmax.f32 %v1812, %v1828
        %v1873 = vmax.f32 %v1817, %v1833
        %v1874 = vmax.f32 %v1820, %v1836
        %v1875 = vmax.f32 %v1841, %v1857
        %v1876 = vmax.f32 %v1844, %v1860
        %v1877 = vmax.f32 %v1849, %v1865
        %v1878 = vmax.f32 %v1852, %v1868
        %v1879 = vmax.f32 %v1871, %v1875
        %v1880 = vmax.f32 %v1872, %v1876
        %v1881 = vmax.f32 %v1873, %v1877
        %v1882 = vmax.f32 %v1874, %v1878
        %v1883 = vld [vmem:[%s2] sm:$0x1]
        %v1885 = vlaneseq
        %v1886 = vshrl.u32 %v1885, 7
        %v1887 = vsub.s32 0, %v1886
        %v1888 = vrot.slane %v1883, %v1887
        %v1890 = vadd.f32 %v1879, %v1888
        %v1891 = vadd.f32 %v1880, %v1888
        %v1892 = vadd.f32 %v1881, %v1888
        %v1893 = vadd.f32 %v1882, %v1888
        %v1894 = vmax.f32 %v1890, 0.0
        %v1895 = vmax.f32 %v1891, 0.0
        %v1896 = vmax.f32 %v1892, 0.0
        %v1897 = vmax.f32 %v1893, 0.0
        %v1898 = vpack.c.bf16 %v1895, %v1894
        %v1899 = vpack.c.bf16 %v1897, %v1896
        %v1902 = vunpack.c.l.b16 %v1898
        %v1903 = vunpack.c.h.b16 %v1898
        %v1904 = vunpack.c.l.b16 %v1899
        %v1905 = vunpack.c.h.b16 %v1899
        %v1906 = vpack.c.b16 %v1902, %v1902
        %v1907 = vpack.c.b16 %v1903, %v1903
        %v1908 = vpack.c.b16 %v1904, %v1904
        %v1909 = vpack.c.b16 %v1905, %v1905
        %1914 = vst [vmem:[%s359] sm:$0xf] %v1906
        %1915 = vst [vmem:[%s359 + $0x4] sm:$0xf] %v1907
        %1916 = vst [vmem:[%s359 + $0x8] sm:$0xf] %v1908
        %1917 = vst [vmem:[%s359 + $0xc] sm:$0xf] %v1909
        %s1918 = smul.u32 4, %s14
        %p1919 = scmp.lt.s32.totalorder %s1918, 7
        %s1920 = scalar_select %p1919, %s1918, 7
        %s1921 = smul.addr %s1920, 4
        %s1922 = scalar_lea.vmem %s3, %s1921
        // Predicated region
        $region59: #{forward.4} parent=53 // pred_check
          %p1923 = pneg %p100
        $region60: #{forward.4} parent=53 // pred_check_branch
          %1925 = sbr.rel (%p1923) target = $region62
        $region61: #{forward.4} parent=53 // pred_region
          %s1926 = smul.u32 4, %s14
        $region62: #{forward.4} parent=53 // pred_fallthru
          _
      $region54: #{forward.4} parent=5 // pred_fallthru
        _
      %p1927 = scmp.le.s32.totalorder 2, %s9
      // Predicated region
      $region63: #{forward.4} parent=5 // pred_check
        %p1928 = pneg %p1927
      $region64: #{forward.4} parent=5 // pred_check_branch
        %1930 = sbr.rel (%p1928) target = $region66
      $region65: #{forward.4} parent=5 // pred_region
        %s1931 = ssub.s32 %s9, 2
        // Predicated region
        $region67: #{forward.4} parent=65 // pred_check
          %p1932 = pneg %p106
        $region68: #{forward.4} parent=65 // pred_check_branch
          %1934 = sbr.rel (%p1932) target = $region70
        $region69: #{forward.4} parent=65 // pred_region
          %s1935 = smul.u32 4, %s15
          %p1936 = scmp.lt.s32.totalorder %s1935, 7
          %s1937 = scalar_select %p1936, %s1935, 7
          %s1938 = smul.addr %s1937, 4
          %s1939 = scalar_lea.vmem %s3, %s1938
        $region70: #{forward.4} parent=65 // pred_fallthru
          _
      $region66: #{forward.4} parent=5 // pred_fallthru
        _
    $region6: #{forward.4} parent=1 // loop_footer
      %s13 = sadd.s32 1, %s9
    $region7: #{forward.4} parent=1 // loop_footer_branch
      %8 = sbr.rel target = $region3
    $region8: #{forward.4} parent=1 // loop_exit
      _

// kernel: forward.5
$region0: #{forward.5}
  #allocation0 [shape = 'u32[]', space=smem, size = 0x4, offset = 0x4, fixed_abs, tag = 'smem constant byte address 0x4 - core index']
  #allocation1 [shape = 'u32[144,128]{1,0:T(1,128)}', space=vmem, size = 0x12000, scoped, tag = 'internal scratch']
  %s0 = inlined_call_operand.vmem [shape: bf16[4,32,2304], index: 0, kind: input, shape index: {}]
  %s1 = inlined_call_operand.vmem [shape: bf16[2304,512], index: 1, kind: input, shape index: {}]
  %s2 = inlined_call_operand.vmem [shape: f32[1,512], index: 2, kind: input, shape index: {}]
  %s3 = inlined_call_operand.vmem [shape: bf16[512,256], index: 3, kind: input, shape index: {}]
  %s4 = inlined_call_operand.vmem [shape: f32[1,256], index: 4, kind: input, shape index: {}]
  %s5 = inlined_call_operand.vmem [shape: bf16[256,128], index: 5, kind: input, shape index: {}]
  %s6 = inlined_call_operand.vmem [shape: f32[1,128], index: 6, kind: input, shape index: {}]
  %s7 = inlined_call_operand.vmem [shape: f32[32,128], index: 7, kind: output, shape index: {}]
  %s8 = sld [smem:[#allocation0]]
  $region84: #{forward.5} parent=0
    _
  %s10 = ssub.s32 1, %s8
  %s11 = scalar_select 0, %s10, %s8
  $region1: #{forward.5} parent=0
    #allocation2 [shape = 'u8[589824]{0}', space=vmem, size = 0x90000, scoped, tag = 'input window, operand 0']
    loop: start=0, step=1, limit=4
    $region2: #{forward.5} parent=1 // loop_pre_header
      _
    $region3: #{forward.5} parent=1 // loop_header
      %s13 = sphi 0, %s17
      %p14 = scmp.ge.s32.totalorder %s13, 4
      %s23 = sphi 0, %s25
      %s26 = sphi 0, %s23
      %s27 = sphi 0, %s26
      %s43 = sphi 0, %s27
      %s47 = sphi 0, %s47
      %s49 = sphi 0, %s47
      %s50 = sphi 0, %s49
      %s64 = sphi 0, %s50
      %s68 = sphi 0, %s68
      %s70 = sphi 0, %s68
      %s71 = sphi 0, %s70
      %s85 = sphi 0, %s71
      %s89 = sphi 0, %s89
      %s91 = sphi 0, %s89
      %s92 = sphi 0, %s91
      %s106 = sphi 0, %s92
      %s110 = sphi 0, %s110
      %s112 = sphi 0, %s110
      %s113 = sphi 0, %s112
      %s127 = sphi 0, %s113
      %s131 = sphi 0, %s131
      %s133 = sphi 0, %s131
      %s134 = sphi 0, %s133
      %s148 = sphi 0, %s134
      %s152 = sphi 0, %s152
      %s154 = sphi 0, %s152
      %s155 = sphi 0, %s154
      %s169 = sphi 0, %s155
      %s175 = sphi 0, %s177
      %s178 = sphi 0, %s175
      %s179 = sphi 0, %s178
      %s195 = sphi 0, %s179
    $region4: #{forward.5} parent=1 // loop_header_branch
      %16 = sbr.rel (%p14) target = $region8
    $region5: #{forward.5} parent=1 // loop_body
      %s18 = ssub.s32 %s13, 1
      %s19 = ssub.s32 %s13, 2
      %s20 = sadd.s32 %s13, 1
      %s21 = ssub.s32 %s13, %s20
      %p22 = scmp.eq.s32.totalorder %s21, 0
      %s24 = sadd.s32 %s23, 1
      %s25 = scalar_select %p22, %s23, %s24
      %p28 = pneg %p22
      %p29 = scmp.eq.s32.totalorder %s13, 1
      %p30 = por %p28, %p29
      %p31 = scmp.ne.s32.totalorder %s23, %s26
      %p32 = scmp.eq.s32.totalorder %s13, 0
      %p33 = por %p31, %p32
      %p34 = scmp.ne.s32.totalorder %s23, %s26
      %p35 = scmp.eq.s32.totalorder %s18, 1
      %p36 = por %p34, %p35
      %p37 = scmp.ne.s32.totalorder %s26, %s27
      %p38 = scmp.eq.s32.totalorder %s18, 0
      %p39 = por %p37, %p38
      %p40 = scmp.ne.s32.totalorder %s26, %s27
      %p41 = scmp.eq.s32.totalorder %s19, 1
      %p42 = por %p40, %p41
      %p44 = scmp.ne.s32.totalorder %s27, %s43
      %p45 = scmp.eq.s32.totalorder %s19, 0
      %p46 = por %p44, %p45
      %s48 = sadd.s32 %s47, 1
      %p51 = scmp.eq.s32.totalorder %s13, 1
      %p52 = scmp.ne.s32.totalorder %s47, %s49
      %p53 = scmp.eq.s32.totalorder %s13, 0
      %p54 = por %p52, %p53
      %p55 = scmp.ne.s32.totalorder %s47, %s49
      %p56 = scmp.eq.s32.totalorder %s18, 1
      %p57 = por %p55, %p56
      %p58 = scmp.ne.s32.totalorder %s49, %s50
      %p59 = scmp.eq.s32.totalorder %s18, 0
      %p60 = por %p58, %p59
      %p61 = scmp.ne.s32.totalorder %s49, %s50
      %p62 = scmp.eq.s32.totalorder %s19, 1
      %p63 = por %p61, %p62
      %p65 = scmp.ne.s32.totalorder %s50, %s64
      %p66 = scmp.eq.s32.totalorder %s19, 0
      %p67 = por %p65, %p66
      %s69 = sadd.s32 %s68, 1
      %p72 = scmp.eq.s32.totalorder %s13, 1
      %p73 = scmp.ne.s32.totalorder %s68, %s70
      %p74 = scmp.eq.s32.totalorder %s13, 0
      %p75 = por %p73, %p74
      %p76 = scmp.ne.s32.totalorder %s68, %s70
      %p77 = scmp.eq.s32.totalorder %s18, 1
      %p78 = por %p76, %p77
      %p79 = scmp.ne.s32.totalorder %s70, %s71
      %p80 = scmp.eq.s32.totalorder %s18, 0
      %p81 = por %p79, %p80
      %p82 = scmp.ne.s32.totalorder %s70, %s71
      %p83 = scmp.eq.s32.totalorder %s19, 1
      %p84 = por %p82, %p83
      %p86 = scmp.ne.s32.totalorder %s71, %s85
      %p87 = scmp.eq.s32.totalorder %s19, 0
      %p88 = por %p86, %p87
      %s90 = sadd.s32 %s89, 1
      %p93 = scmp.eq.s32.totalorder %s13, 1
      %p94 = scmp.ne.s32.totalorder %s89, %s91
      %p95 = scmp.eq.s32.totalorder %s13, 0
      %p96 = por %p94, %p95
      %p97 = scmp.ne.s32.totalorder %s89, %s91
      %p98 = scmp.eq.s32.totalorder %s18, 1
      %p99 = por %p97, %p98
      %p100 = scmp.ne.s32.totalorder %s91, %s92
      %p101 = scmp.eq.s32.totalorder %s18, 0
      %p102 = por %p100, %p101
      %p103 = scmp.ne.s32.totalorder %s91, %s92
      %p104 = scmp.eq.s32.totalorder %s19, 1
      %p105 = por %p103, %p104
      %p107 = scmp.ne.s32.totalorder %s92, %s106
      %p108 = scmp.eq.s32.totalorder %s19, 0
      %p109 = por %p107, %p108
      %s111 = sadd.s32 %s110, 1
      %p114 = scmp.eq.s32.totalorder %s13, 1
      %p115 = scmp.ne.s32.totalorder %s110, %s112
      %p116 = scmp.eq.s32.totalorder %s13, 0
      %p117 = por %p115, %p116
      %p118 = scmp.ne.s32.totalorder %s110, %s112
      %p119 = scmp.eq.s32.totalorder %s18, 1
      %p120 = por %p118, %p119
      %p121 = scmp.ne.s32.totalorder %s112, %s113
      %p122 = scmp.eq.s32.totalorder %s18, 0
      %p123 = por %p121, %p122
      %p124 = scmp.ne.s32.totalorder %s112, %s113
      %p125 = scmp.eq.s32.totalorder %s19, 1
      %p126 = por %p124, %p125
      %p128 = scmp.ne.s32.totalorder %s113, %s127
      %p129 = scmp.eq.s32.totalorder %s19, 0
      %p130 = por %p128, %p129
      %s132 = sadd.s32 %s131, 1
      %p135 = scmp.eq.s32.totalorder %s13, 1
      %p136 = scmp.ne.s32.totalorder %s131, %s133
      %p137 = scmp.eq.s32.totalorder %s13, 0
      %p138 = por %p136, %p137
      %p139 = scmp.ne.s32.totalorder %s131, %s133
      %p140 = scmp.eq.s32.totalorder %s18, 1
      %p141 = por %p139, %p140
      %p142 = scmp.ne.s32.totalorder %s133, %s134
      %p143 = scmp.eq.s32.totalorder %s18, 0
      %p144 = por %p142, %p143
      %p145 = scmp.ne.s32.totalorder %s133, %s134
      %p146 = scmp.eq.s32.totalorder %s19, 1
      %p147 = por %p145, %p146
      %p149 = scmp.ne.s32.totalorder %s134, %s148
      %p150 = scmp.eq.s32.totalorder %s19, 0
      %p151 = por %p149, %p150
      %s153 = sadd.s32 %s152, 1
      %p156 = scmp.eq.s32.totalorder %s13, 1
      %p157 = scmp.ne.s32.totalorder %s152, %s154
      %p158 = scmp.eq.s32.totalorder %s13, 0
      %p159 = por %p157, %p158
      %p160 = scmp.ne.s32.totalorder %s152, %s154
      %p161 = scmp.eq.s32.totalorder %s18, 1
      %p162 = por %p160, %p161
      %p163 = scmp.ne.s32.totalorder %s154, %s155
      %p164 = scmp.eq.s32.totalorder %s18, 0
      %p165 = por %p163, %p164
      %p166 = scmp.ne.s32.totalorder %s154, %s155
      %p167 = scmp.eq.s32.totalorder %s19, 1
      %p168 = por %p166, %p167
      %p170 = scmp.ne.s32.totalorder %s155, %s169
      %p171 = scmp.eq.s32.totalorder %s19, 0
      %p172 = por %p170, %p171
      %s173 = ssub.s32 %s13, %s20
      %p174 = scmp.eq.s32.totalorder %s173, 0
      %s176 = sadd.s32 %s175, 1
      %s177 = scalar_select %p174, %s175, %s176
      %p180 = pneg %p174
      %p181 = scmp.eq.s32.totalorder %s13, 1
      %p182 = por %p180, %p181
      %p183 = scmp.ne.s32.totalorder %s175, %s178
      %p184 = scmp.eq.s32.totalorder %s13, 0
      %p185 = por %p183, %p184
      %p186 = scmp.ne.s32.totalorder %s175, %s178
      %p187 = scmp.eq.s32.totalorder %s18, 1
      %p188 = por %p186, %p187
      %p189 = scmp.ne.s32.totalorder %s178, %s179
      %p190 = scmp.eq.s32.totalorder %s18, 0
      %p191 = por %p189, %p190
      %p192 = scmp.ne.s32.totalorder %s178, %s179
      %p193 = scmp.eq.s32.totalorder %s19, 1
      %p194 = por %p192, %p193
      %p196 = scmp.ne.s32.totalorder %s179, %s195
      %p197 = scmp.eq.s32.totalorder %s19, 0
      %p198 = por %p196, %p197
      %p199 = scmp.le.s32.totalorder 1, %s13
      %p200 = scmp.lt.s32.totalorder %s13, 3
      %p201 = pnand %p199, %p200
      %p202 = pneg %p201
      // Predicated region
      $region9: #{forward.5} parent=5 // pred_check
        _
      $region10: #{forward.5} parent=5 // pred_check_branch
        %204 = sbr.rel (%p201) target = $region12
      $region11: #{forward.5} parent=5 // pred_region
        %s205 = ssub.s32 %s13, 1
        // Predicated region
        $region13: #{forward.5} parent=11 // pred_check
          %p206 = pneg %p60
        $region14: #{forward.5} parent=11 // pred_check_branch
          %208 = sbr.rel (%p206) target = $region16
        $region15: #{forward.5} parent=11 // pred_region
          _
        $region16: #{forward.5} parent=11 // pred_fallthru
          _
        // Predicated region
        $region17: #{forward.5} parent=11 // pred_check
          %p209 = pneg %p81
        $region18: #{forward.5} parent=11 // pred_check_branch
          %211 = sbr.rel (%p209) target = $region20
        $region19: #{forward.5} parent=11 // pred_region
          _
        $region20: #{forward.5} parent=11 // pred_fallthru
          _
        // Predicated region
        $region21: #{forward.5} parent=11 // pred_check
          %p212 = pneg %p102
        $region22: #{forward.5} parent=11 // pred_check_branch
          %214 = sbr.rel (%p212) target = $region24
        $region23: #{forward.5} parent=11 // pred_region
          _
        $region24: #{forward.5} parent=11 // pred_fallthru
          _
        // Predicated region
        $region25: #{forward.5} parent=11 // pred_check
          %p215 = pneg %p123
        $region26: #{forward.5} parent=11 // pred_check_branch
          %217 = sbr.rel (%p215) target = $region28
        $region27: #{forward.5} parent=11 // pred_region
          _
        $region28: #{forward.5} parent=11 // pred_fallthru
          _
        // Predicated region
        $region29: #{forward.5} parent=11 // pred_check
          %p218 = pneg %p144
        $region30: #{forward.5} parent=11 // pred_check_branch
          %220 = sbr.rel (%p218) target = $region32
        $region31: #{forward.5} parent=11 // pred_region
          _
        $region32: #{forward.5} parent=11 // pred_fallthru
          _
        // Predicated region
        $region33: #{forward.5} parent=11 // pred_check
          %p221 = pneg %p165
        $region34: #{forward.5} parent=11 // pred_check_branch
          %223 = sbr.rel (%p221) target = $region36
        $region35: #{forward.5} parent=11 // pred_region
          _
        $region36: #{forward.5} parent=11 // pred_fallthru
          _
      $region12: #{forward.5} parent=5 // pred_fallthru
        _
      %p224 = scmp.lt.s32.totalorder %s13, 2
      // Predicated region
      $region37: #{forward.5} parent=5 // pred_check
        %p225 = pneg %p224
      $region38: #{forward.5} parent=5 // pred_check_branch
        %227 = sbr.rel (%p225) target = $region40
      $region39: #{forward.5} parent=5 // pred_region
        // Predicated region
        $region41: #{forward.5} parent=39 // pred_check
          %p228 = pneg %p33
        $region42: #{forward.5} parent=39 // pred_check_branch
          %230 = sbr.rel (%p228) target = $region44
        $region43: #{forward.5} parent=39 // pred_region
          %s231 = sand.u32 %s23, 1
          %s232 = sand.u32 %s23, 1
          %s233 = smul.addr %s232, 576
          %s234 = scalar_lea.vmem [#allocation2], %s233
          %s235 = smul.u32 2, %s13
          %s236 = smul.addr %s235, 18
          %s237 = smul.addr %s236, 4
          %s238 = scalar_lea.vmem %s0, %s237
          // Predicated region
          $region45: #{forward.5} parent=43 // pred_check
            _
          $region46: #{forward.5} parent=43 // pred_check_branch
            %240 = sbr.rel (0) target = $region48
          $region47: #{forward.5} parent=43 // pred_region
            // Predicated region
            $region49: #{forward.5} parent=47 // pred_check
              _
            $region50: #{forward.5} parent=47 // pred_check_branch
              %242 = sbr.rel (0) target = $region52
            $region51: #{forward.5} parent=47 // pred_region
              loop: start=0, step=1, limit=1
              $region53: #{forward.5} parent=51 // loop_pre_header
                _
              $region54: #{forward.5} parent=51 // loop_header
                %s244 = sphi 0, %s248
                %p245 = scmp.ge.s32.totalorder %s244, 1
                %s249 = sphi %s238, %s238
                %s250 = sphi %s234, %s234
              $region55: #{forward.5} parent=51 // loop_header_branch
                %247 = sbr.rel (%p245) target = $region59
              $region56: #{forward.5} parent=51 // loop_body
                %v251 = vld [vmem:[%s249] sm:$0xff]
                %252 = vst [vmem:[%s250] sm:$0xff] %v251
                %v253 = vld [vmem:[%s249 + $0x8] sm:$0xff]
                %254 = vst [vmem:[%s250 + $0x8] sm:$0xff] %v253
                %v255 = vld [vmem:[%s249 + $0x10] sm:$0xff]
                %256 = vst [vmem:[%s250 + $0x10] sm:$0xff] %v255
                %v257 = vld [vmem:[%s249 + $0x18] sm:$0xff]
                %258 = vst [vmem:[%s250 + $0x18] sm:$0xff] %v257
                %v259 = vld [vmem:[%s249 + $0x20] sm:$0xff]
                %260 = vst [vmem:[%s250 + $0x20] sm:$0xff] %v259
                %v261 = vld [vmem:[%s249 + $0x28] sm:$0xff]
                %262 = vst [vmem:[%s250 + $0x28] sm:$0xff] %v261
                %v263 = vld [vmem:[%s249 + $0x30] sm:$0xff]
                %264 = vst [vmem:[%s250 + $0x30] sm:$0xff] %v263
                %v265 = vld [vmem:[%s249 + $0x38] sm:$0xff]
                %266 = vst [vmem:[%s250 + $0x38] sm:$0xff] %v265
                %v267 = vld [vmem:[%s249 + $0x40] sm:$0xff]
                %268 = vst [vmem:[%s250 + $0x40] sm:$0xff] %v267
                %v269 = vld [vmem:[%s249 + $0x48] sm:$0xff]
                %270 = vst [vmem:[%s250 + $0x48] sm:$0xff] %v269
                %v271 = vld [vmem:[%s249 + $0x50] sm:$0xff]
                %272 = vst [vmem:[%s250 + $0x50] sm:$0xff] %v271
                %v273 = vld [vmem:[%s249 + $0x58] sm:$0xff]
                %274 = vst [vmem:[%s250 + $0x58] sm:$0xff] %v273
                %v275 = vld [vmem:[%s249 + $0x60] sm:$0xff]
                %276 = vst [vmem:[%s250 + $0x60] sm:$0xff] %v275
                %v277 = vld [vmem:[%s249 + $0x68] sm:$0xff]
                %278 = vst [vmem:[%s250 + $0x68] sm:$0xff] %v277
                %v279 = vld [vmem:[%s249 + $0x70] sm:$0xff]
                %280 = vst [vmem:[%s250 + $0x70] sm:$0xff] %v279
                %v281 = vld [vmem:[%s249 + $0x78] sm:$0xff]
                %282 = vst [vmem:[%s250 + $0x78] sm:$0xff] %v281
                %v283 = vld [vmem:[%s249 + $0x80] sm:$0xff]
                %284 = vst [vmem:[%s250 + $0x80] sm:$0xff] %v283
                %v285 = vld [vmem:[%s249 + $0x88] sm:$0xff]
                %286 = vst [vmem:[%s250 + $0x88] sm:$0xff] %v285
                %v287 = vld [vmem:[%s249 + $0x120] sm:$0xff]
                %288 = vst [vmem:[%s250 + $0x90] sm:$0xff] %v287
                %v289 = vld [vmem:[%s249 + $0x128] sm:$0xff]
                %290 = vst [vmem:[%s250 + $0x98] sm:$0xff] %v289
                %v291 = vld [vmem:[%s249 + $0x130] sm:$0xff]
                %292 = vst [vmem:[%s250 + $0xa0] sm:$0xff] %v291
                %v293 = vld [vmem:[%s249 + $0x138] sm:$0xff]
                %294 = vst [vmem:[%s250 + $0xa8] sm:$0xff] %v293
                %v295 = vld [vmem:[%s249 + $0x140] sm:$0xff]
                %296 = vst [vmem:[%s250 + $0xb0] sm:$0xff] %v295
                %v297 = vld [vmem:[%s249 + $0x148] sm:$0xff]
                %298 = vst [vmem:[%s250 + $0xb8] sm:$0xff] %v297
                %v299 = vld [vmem:[%s249 + $0x150] sm:$0xff]
                %300 = vst [vmem:[%s250 + $0xc0] sm:$0xff] %v299
                %v301 = vld [vmem:[%s249 + $0x158] sm:$0xff]
                %302 = vst [vmem:[%s250 + $0xc8] sm:$0xff] %v301
                %v303 = vld [vmem:[%s249 + $0x160] sm:$0xff]
                %304 = vst [vmem:[%s250 + $0xd0] sm:$0xff] %v303
                %v305 = vld [vmem:[%s249 + $0x168] sm:$0xff]
                %306 = vst [vmem:[%s250 + $0xd8] sm:$0xff] %v305
                %v307 = vld [vmem:[%s249 + $0x170] sm:$0xff]
                %308 = vst [vmem:[%s250 + $0xe0] sm:$0xff] %v307
                %v309 = vld [vmem:[%s249 + $0x178] sm:$0xff]
                %310 = vst [vmem:[%s250 + $0xe8] sm:$0xff] %v309
                %v311 = vld [vmem:[%s249 + $0x180] sm:$0xff]
                %312 = vst [vmem:[%s250 + $0xf0] sm:$0xff] %v311
                %v313 = vld [vmem:[%s249 + $0x188] sm:$0xff]
                %314 = vst [vmem:[%s250 + $0xf8] sm:$0xff] %v313
                %v315 = vld [vmem:[%s249 + $0x190] sm:$0xff]
                %316 = vst [vmem:[%s250 + $0x100] sm:$0xff] %v315
                %v317 = vld [vmem:[%s249 + $0x198] sm:$0xff]
                %318 = vst [vmem:[%s250 + $0x108] sm:$0xff] %v317
                %v319 = vld [vmem:[%s249 + $0x1a0] sm:$0xff]
                %320 = vst [vmem:[%s250 + $0x110] sm:$0xff] %v319
                %v321 = vld [vmem:[%s249 + $0x1a8] sm:$0xff]
                %322 = vst [vmem:[%s250 + $0x118] sm:$0xff] %v321
                %v323 = vld [vmem:[%s249 + $0x240] sm:$0xff]
                %324 = vst [vmem:[%s250 + $0x120] sm:$0xff] %v323
                %v325 = vld [vmem:[%s249 + $0x248] sm:$0xff]
                %326 = vst [vmem:[%s250 + $0x128] sm:$0xff] %v325
                %v327 = vld [vmem:[%s249 + $0x250] sm:$0xff]
                %328 = vst [vmem:[%s250 + $0x130] sm:$0xff] %v327
                %v329 = vld [vmem:[%s249 + $0x258] sm:$0xff]
                %330 = vst [vmem:[%s250 + $0x138] sm:$0xff] %v329
                %v331 = vld [vmem:[%s249 + $0x260] sm:$0xff]
                %332 = vst [vmem:[%s250 + $0x140] sm:$0xff] %v331
                %v333 = vld [vmem:[%s249 + $0x268] sm:$0xff]
                %334 = vst [vmem:[%s250 + $0x148] sm:$0xff] %v333
                %v335 = vld [vmem:[%s249 + $0x270] sm:$0xff]
                %336 = vst [vmem:[%s250 + $0x150] sm:$0xff] %v335
                %v337 = vld [vmem:[%s249 + $0x278] sm:$0xff]
                %338 = vst [vmem:[%s250 + $0x158] sm:$0xff] %v337
                %v339 = vld [vmem:[%s249 + $0x280] sm:$0xff]
                %340 = vst [vmem:[%s250 + $0x160] sm:$0xff] %v339
                %v341 = vld [vmem:[%s249 + $0x288] sm:$0xff]
                %342 = vst [vmem:[%s250 + $0x168] sm:$0xff] %v341
                %v343 = vld [vmem:[%s249 + $0x290] sm:$0xff]
                %344 = vst [vmem:[%s250 + $0x170] sm:$0xff] %v343
                %v345 = vld [vmem:[%s249 + $0x298] sm:$0xff]
                %346 = vst [vmem:[%s250 + $0x178] sm:$0xff] %v345
                %v347 = vld [vmem:[%s249 + $0x2a0] sm:$0xff]
                %348 = vst [vmem:[%s250 + $0x180] sm:$0xff] %v347
                %v349 = vld [vmem:[%s249 + $0x2a8] sm:$0xff]
                %350 = vst [vmem:[%s250 + $0x188] sm:$0xff] %v349
                %v351 = vld [vmem:[%s249 + $0x2b0] sm:$0xff]
                %352 = vst [vmem:[%s250 + $0x190] sm:$0xff] %v351
                %v353 = vld [vmem:[%s249 + $0x2b8] sm:$0xff]
                %354 = vst [vmem:[%s250 + $0x198] sm:$0xff] %v353
                %v355 = vld [vmem:[%s249 + $0x2c0] sm:$0xff]
                %356 = vst [vmem:[%s250 + $0x1a0] sm:$0xff] %v355
                %v357 = vld [vmem:[%s249 + $0x2c8] sm:$0xff]
                %358 = vst [vmem:[%s250 + $0x1a8] sm:$0xff] %v357
                %v359 = vld [vmem:[%s249 + $0x360] sm:$0xff]
                %360 = vst [vmem:[%s250 + $0x1b0] sm:$0xff] %v359
                %v361 = vld [vmem:[%s249 + $0x368] sm:$0xff]
                %362 = vst [vmem:[%s250 + $0x1b8] sm:$0xff] %v361
                %v363 = vld [vmem:[%s249 + $0x370] sm:$0xff]
                %364 = vst [vmem:[%s250 + $0x1c0] sm:$0xff] %v363
                %v365 = vld [vmem:[%s249 + $0x378] sm:$0xff]
                %366 = vst [vmem:[%s250 + $0x1c8] sm:$0xff] %v365
                %v367 = vld [vmem:[%s249 + $0x380] sm:$0xff]
                %368 = vst [vmem:[%s250 + $0x1d0] sm:$0xff] %v367
                %v369 = vld [vmem:[%s249 + $0x388] sm:$0xff]
                %370 = vst [vmem:[%s250 + $0x1d8] sm:$0xff] %v369
                %v371 = vld [vmem:[%s249 + $0x390] sm:$0xff]
                %372 = vst [vmem:[%s250 + $0x1e0] sm:$0xff] %v371
                %v373 = vld [vmem:[%s249 + $0x398] sm:$0xff]
                %374 = vst [vmem:[%s250 + $0x1e8] sm:$0xff] %v373
                %v375 = vld [vmem:[%s249 + $0x3a0] sm:$0xff]
                %376 = vst [vmem:[%s250 + $0x1f0] sm:$0xff] %v375
                %v377 = vld [vmem:[%s249 + $0x3a8] sm:$0xff]
                %378 = vst [vmem:[%s250 + $0x1f8] sm:$0xff] %v377
                %v379 = vld [vmem:[%s249 + $0x3b0] sm:$0xff]
                %380 = vst [vmem:[%s250 + $0x200] sm:$0xff] %v379
                %v381 = vld [vmem:[%s249 + $0x3b8] sm:$0xff]
                %382 = vst [vmem:[%s250 + $0x208] sm:$0xff] %v381
                %v383 = vld [vmem:[%s249 + $0x3c0] sm:$0xff]
                %384 = vst [vmem:[%s250 + $0x210] sm:$0xff] %v383
                %v385 = vld [vmem:[%s249 + $0x3c8] sm:$0xff]
                %386 = vst [vmem:[%s250 + $0x218] sm:$0xff] %v385
                %v387 = vld [vmem:[%s249 + $0x3d0] sm:$0xff]
                %388 = vst [vmem:[%s250 + $0x220] sm:$0xff] %v387
                %v389 = vld [vmem:[%s249 + $0x3d8] sm:$0xff]
                %390 = vst [vmem:[%s250 + $0x228] sm:$0xff] %v389
                %v391 = vld [vmem:[%s249 + $0x3e0] sm:$0xff]
                %392 = vst [vmem:[%s250 + $0x230] sm:$0xff] %v391
                %v393 = vld [vmem:[%s249 + $0x3e8] sm:$0xff]
                %394 = vst [vmem:[%s250 + $0x238] sm:$0xff] %v393
              $region57: #{forward.5} parent=51 // loop_footer
                %s248 = sadd.s32 1, %s244
              $region58: #{forward.5} parent=51 // loop_footer_branch
                %243 = sbr.rel target = $region54
              $region59: #{forward.5} parent=51 // loop_exit
                _
            $region52: #{forward.5} parent=47 // pred_fallthru
              _
            // Predicated region
            $region60: #{forward.5} parent=47 // pred_check
              _
            $region61: #{forward.5} parent=47 // pred_check_branch
              %396 = sbr.rel target = $region63
            $region62: #{forward.5} parent=47 // pred_region
              _
            $region63: #{forward.5} parent=47 // pred_fallthru
              _
          $region48: #{forward.5} parent=43 // pred_fallthru
            _
          %397 = vnop
        $region44: #{forward.5} parent=39 // pred_fallthru
          _
      $region40: #{forward.5} parent=5 // pred_fallthru
        _
      %p398 = scmp.le.s32.totalorder 1, %s13
      %p399 = scmp.lt.s32.totalorder %s13, 3
      %p400 = pnand %p398, %p399
      %p401 = pneg %p400
      // Predicated region
      $region64: #{forward.5} parent=5 // pred_check
        _
      $region65: #{forward.5} parent=5 // pred_check_branch
        %403 = sbr.rel (%p400) target = $region67
      $region66: #{forward.5} parent=5 // pred_region
        %s404 = ssub.s32 %s13, 1
        %s405 = sand.u32 %s26, 1
        %s406 = sand.u32 %s26, 1
        %s407 = smul.addr %s406, 576
        %s408 = scalar_lea.vmem [#allocation2], %s407
        // Predicated region
        $region68: #{forward.5} parent=66 // pred_check
          %p409 = pneg %p39
        $region69: #{forward.5} parent=66 // pred_check_branch
          %411 = sbr.rel (%p409) target = $region71
        $region70: #{forward.5} parent=66 // pred_region
          _
        $region71: #{forward.5} parent=66 // pred_fallthru
          _
        %s412 = sand.u32 %s26, 1
        %s413 = sand.u32 %s26, 1
        %s414 = smul.addr %s413, 576
        %s415 = scalar_lea.vmem [#allocation2], %s414
        %p416 = pneg %p39
        %p417 = pneg %p36
        %p418 = pneg %p60
        %p419 = pneg %p57
        %p420 = pneg %p81
        %p421 = pneg %p78
        %p422 = pneg %p102
        %p423 = pneg %p99
        %p424 = pneg %p123
        %p425 = pneg %p120
        %p426 = pneg %p144
        %p427 = pneg %p141
        %p428 = pneg %p165
        %p429 = pneg %p162
        %p430 = pneg %p191
        %p431 = pneg %p188
        %s432 = smul.u32 2, %s18
        %p433 = scmp.lt.s32.totalorder %s432, 3
        %s434 = scalar_select %p433, %s432, 3
        %s435 = smul.addr %s434, 8
        %s436 = scalar_lea.vmem %s7, %s435
        %s437 = smul.u32 2, %s18
        %s438 = smul.u32 2, %s18
        %p439 = scmp.lt.s32.totalorder %s438, 3
        %s440 = scalar_select %p439, %s438, 3
        %s441 = smul.addr %s440, 8
        %s442 = scalar_lea.vmem %s7, %s441
        %s443 = smul.u32 2, %s18
        %v445 = vld [vmem:[%s408] sm:$0xff]
        %v446 = vld [vmem:[%s408 + $0x8] sm:$0xff]
        %v447 = vld [vmem:[%s408 + $0x10] sm:$0xff]
        %v448 = vld [vmem:[%s408 + $0x18] sm:$0xff]
        %v449 = vld [vmem:[%s408 + $0x20] sm:$0xff]
        %v450 = vld [vmem:[%s408 + $0x28] sm:$0xff]
        %v451 = vld [vmem:[%s408 + $0x30] sm:$0xff]
        %v452 = vld [vmem:[%s408 + $0x38] sm:$0xff]
        %v453 = vld [vmem:[%s408 + $0x40] sm:$0xff]
        %v454 = vld [vmem:[%s408 + $0x48] sm:$0xff]
        %v455 = vld [vmem:[%s408 + $0x50] sm:$0xff]
        %v456 = vld [vmem:[%s408 + $0x58] sm:$0xff]
        %v457 = vld [vmem:[%s408 + $0x60] sm:$0xff]
        %v458 = vld [vmem:[%s408 + $0x68] sm:$0xff]
        %v459 = vld [vmem:[%s408 + $0x70] sm:$0xff]
        %v460 = vld [vmem:[%s408 + $0x78] sm:$0xff]
        %v461 = vld [vmem:[%s408 + $0x80] sm:$0xff]
        %v462 = vld [vmem:[%s408 + $0x88] sm:$0xff]
        %v463 = vld [vmem:[%s408 + $0x90] sm:$0xff]
        %v464 = vld [vmem:[%s408 + $0x98] sm:$0xff]
        %v465 = vld [vmem:[%s408 + $0xa0] sm:$0xff]
        %v466 = vld [vmem:[%s408 + $0xa8] sm:$0xff]
        %v467 = vld [vmem:[%s408 + $0xb0] sm:$0xff]
        %v468 = vld [vmem:[%s408 + $0xb8] sm:$0xff]
        %v469 = vld [vmem:[%s408 + $0xc0] sm:$0xff]
        %v470 = vld [vmem:[%s408 + $0xc8] sm:$0xff]
        %v471 = vld [vmem:[%s408 + $0xd0] sm:$0xff]
        %v472 = vld [vmem:[%s408 + $0xd8] sm:$0xff]
        %v473 = vld [vmem:[%s408 + $0xe0] sm:$0xff]
        %v474 = vld [vmem:[%s408 + $0xe8] sm:$0xff]
        %v475 = vld [vmem:[%s408 + $0xf0] sm:$0xff]
        %v476 = vld [vmem:[%s408 + $0xf8] sm:$0xff]
        %v477 = vld [vmem:[%s408 + $0x100] sm:$0xff]
        %v478 = vld [vmem:[%s408 + $0x108] sm:$0xff]
        %v479 = vld [vmem:[%s408 + $0x110] sm:$0xff]
        %v480 = vld [vmem:[%s408 + $0x118] sm:$0xff]
        %v481 = vld [vmem:[%s408 + $0x120] sm:$0xff]
        %v482 = vld [vmem:[%s408 + $0x128] sm:$0xff]
        %v483 = vld [vmem:[%s408 + $0x130] sm:$0xff]
        %v484 = vld [vmem:[%s408 + $0x138] sm:$0xff]
        %v485 = vld [vmem:[%s408 + $0x140] sm:$0xff]
        %v486 = vld [vmem:[%s408 + $0x148] sm:$0xff]
        %v487 = vld [vmem:[%s408 + $0x150] sm:$0xff]
        %v488 = vld [vmem:[%s408 + $0x158] sm:$0xff]
        %v489 = vld [vmem:[%s408 + $0x160] sm:$0xff]
        %v490 = vld [vmem:[%s408 + $0x168] sm:$0xff]
        %v491 = vld [vmem:[%s408 + $0x170] sm:$0xff]
        %v492 = vld [vmem:[%s408 + $0x178] sm:$0xff]
        %v493 = vld [vmem:[%s408 + $0x180] sm:$0xff]
        %v494 = vld [vmem:[%s408 + $0x188] sm:$0xff]
        %v495 = vld [vmem:[%s408 + $0x190] sm:$0xff]
        %v496 = vld [vmem:[%s408 + $0x198] sm:$0xff]
        %v497 = vld [vmem:[%s408 + $0x1a0] sm:$0xff]
        %v498 = vld [vmem:[%s408 + $0x1a8] sm:$0xff]
        %v499 = vld [vmem:[%s408 + $0x1b0] sm:$0xff]
        %v500 = vld [vmem:[%s408 + $0x1b8] sm:$0xff]
        %v501 = vld [vmem:[%s408 + $0x1c0] sm:$0xff]
        %v502 = vld [vmem:[%s408 + $0x1c8] sm:$0xff]
        %v503 = vld [vmem:[%s408 + $0x1d0] sm:$0xff]
        %v504 = vld [vmem:[%s408 + $0x1d8] sm:$0xff]
        %v505 = vld [vmem:[%s408 + $0x1e0] sm:$0xff]
        %v506 = vld [vmem:[%s408 + $0x1e8] sm:$0xff]
        %v507 = vld [vmem:[%s408 + $0x1f0] sm:$0xff]
        %v508 = vld [vmem:[%s408 + $0x1f8] sm:$0xff]
        %v509 = vld [vmem:[%s408 + $0x200] sm:$0xff]
        %v510 = vld [vmem:[%s408 + $0x208] sm:$0xff]
        %v511 = vld [vmem:[%s408 + $0x210] sm:$0xff]
        %v512 = vld [vmem:[%s408 + $0x218] sm:$0xff]
        %v513 = vld [vmem:[%s408 + $0x220] sm:$0xff]
        %v514 = vld [vmem:[%s408 + $0x228] sm:$0xff]
        %v515 = vld [vmem:[%s408 + $0x230] sm:$0xff]
        %v516 = vld [vmem:[%s408 + $0x238] sm:$0xff]
        %v517 = vld [vmem:[%s1] sm:$0xff]
        %v518 = vld [vmem:[%s1 + $0x8] sm:$0xff]
        %v519 = vld [vmem:[%s1 + $0x10] sm:$0xff]
        %v520 = vld [vmem:[%s1 + $0x18] sm:$0xff]
        %v521 = vld [vmem:[%s1 + $0x20] sm:$0xff]
        %v522 = vld [vmem:[%s1 + $0x28] sm:$0xff]
        %v523 = vld [vmem:[%s1 + $0x30] sm:$0xff]
        %v524 = vld [vmem:[%s1 + $0x38] sm:$0xff]
        %v525 = vld [vmem:[%s1 + $0x40] sm:$0xff]
        %v526 = vld [vmem:[%s1 + $0x48] sm:$0xff]
        %v527 = vld [vmem:[%s1 + $0x50] sm:$0xff]
        %v528 = vld [vmem:[%s1 + $0x58] sm:$0xff]
        %v529 = vld [vmem:[%s1 + $0x60] sm:$0xff]
        %v530 = vld [vmem:[%s1 + $0x68] sm:$0xff]
        %v531 = vld [vmem:[%s1 + $0x70] sm:$0xff]
        %v532 = vld [vmem:[%s1 + $0x78] sm:$0xff]
        %v533 = vld [vmem:[%s1 + $0x80] sm:$0xff]
        %v534 = vld [vmem:[%s1 + $0x88] sm:$0xff]
        %v535 = vld [vmem:[%s1 + $0x90] sm:$0xff]
        %v536 = vld [vmem:[%s1 + $0x98] sm:$0xff]
        %v537 = vld [vmem:[%s1 + $0xa0] sm:$0xff]
        %v538 = vld [vmem:[%s1 + $0xa8] sm:$0xff]
        %v539 = vld [vmem:[%s1 + $0xb0] sm:$0xff]
        %v540 = vld [vmem:[%s1 + $0xb8] sm:$0xff]
        %v541 = vld [vmem:[%s1 + $0xc0] sm:$0xff]
        %v542 = vld [vmem:[%s1 + $0xc8] sm:$0xff]
        %v543 = vld [vmem:[%s1 + $0xd0] sm:$0xff]
        %v544 = vld [vmem:[%s1 + $0xd8] sm:$0xff]
        %v545 = vld [vmem:[%s1 + $0xe0] sm:$0xff]
        %v546 = vld [vmem:[%s1 + $0xe8] sm:$0xff]
        %v547 = vld [vmem:[%s1 + $0xf0] sm:$0xff]
        %v548 = vld [vmem:[%s1 + $0xf8] sm:$0xff]
        %v549 = vld [vmem:[%s1 + $0x100] sm:$0xff]
        %v550 = vld [vmem:[%s1 + $0x108] sm:$0xff]
        %v551 = vld [vmem:[%s1 + $0x110] sm:$0xff]
        %v552 = vld [vmem:[%s1 + $0x118] sm:$0xff]
        %v553 = vld [vmem:[%s1 + $0x120] sm:$0xff]
        %v554 = vld [vmem:[%s1 + $0x128] sm:$0xff]
        %v555 = vld [vmem:[%s1 + $0x130] sm:$0xff]
        %v556 = vld [vmem:[%s1 + $0x138] sm:$0xff]
        %v557 = vld [vmem:[%s1 + $0x140] sm:$0xff]
        %v558 = vld [vmem:[%s1 + $0x148] sm:$0xff]
        %v559 = vld [vmem:[%s1 + $0x150] sm:$0xff]
        %v560 = vld [vmem:[%s1 + $0x158] sm:$0xff]
        %v561 = vld [vmem:[%s1 + $0x160] sm:$0xff]
        %v562 = vld [vmem:[%s1 + $0x168] sm:$0xff]
        %v563 = vld [vmem:[%s1 + $0x170] sm:$0xff]
        %v564 = vld [vmem:[%s1 + $0x178] sm:$0xff]
        %v565 = vld [vmem:[%s1 + $0x180] sm:$0xff]
        %v566 = vld [vmem:[%s1 + $0x188] sm:$0xff]
        %v567 = vld [vmem:[%s1 + $0x190] sm:$0xff]
        %v568 = vld [vmem:[%s1 + $0x198] sm:$0xff]
        %v569 = vld [vmem:[%s1 + $0x1a0] sm:$0xff]
        %v570 = vld [vmem:[%s1 + $0x1a8] sm:$0xff]
        %v571 = vld [vmem:[%s1 + $0x1b0] sm:$0xff]
        %v572 = vld [vmem:[%s1 + $0x1b8] sm:$0xff]
        %v573 = vld [vmem:[%s1 + $0x1c0] sm:$0xff]
        %v574 = vld [vmem:[%s1 + $0x1c8] sm:$0xff]
        %v575 = vld [vmem:[%s1 + $0x1d0] sm:$0xff]
        %v576 = vld [vmem:[%s1 + $0x1d8] sm:$0xff]
        %v577 = vld [vmem:[%s1 + $0x1e0] sm:$0xff]
        %v578 = vld [vmem:[%s1 + $0x1e8] sm:$0xff]
        %v579 = vld [vmem:[%s1 + $0x1f0] sm:$0xff]
        %v580 = vld [vmem:[%s1 + $0x1f8] sm:$0xff]
        %v581 = vld [vmem:[%s1 + $0x200] sm:$0xff]
        %v582 = vld [vmem:[%s1 + $0x208] sm:$0xff]
        %v583 = vld [vmem:[%s1 + $0x210] sm:$0xff]
        %v584 = vld [vmem:[%s1 + $0x218] sm:$0xff]
        %v585 = vld [vmem:[%s1 + $0x220] sm:$0xff]
        %v586 = vld [vmem:[%s1 + $0x228] sm:$0xff]
        %v587 = vld [vmem:[%s1 + $0x230] sm:$0xff]
        %v588 = vld [vmem:[%s1 + $0x238] sm:$0xff]
        %v589 = vld [vmem:[%s1 + $0x240] sm:$0xff]
        %v590 = vld [vmem:[%s1 + $0x248] sm:$0xff]
        %v591 = vld [vmem:[%s1 + $0x250] sm:$0xff]
        %v592 = vld [vmem:[%s1 + $0x258] sm:$0xff]
        %v593 = vld [vmem:[%s1 + $0x260] sm:$0xff]
        %v594 = vld [vmem:[%s1 + $0x268] sm:$0xff]
        %v595 = vld [vmem:[%s1 + $0x270] sm:$0xff]
        %v596 = vld [vmem:[%s1 + $0x278] sm:$0xff]
        %v597 = vld [vmem:[%s1 + $0x280] sm:$0xff]
        %v598 = vld [vmem:[%s1 + $0x288] sm:$0xff]
        %v599 = vld [vmem:[%s1 + $0x290] sm:$0xff]
        %v600 = vld [vmem:[%s1 + $0x298] sm:$0xff]
        %v601 = vld [vmem:[%s1 + $0x2a0] sm:$0xff]
        %v602 = vld [vmem:[%s1 + $0x2a8] sm:$0xff]
        %v603 = vld [vmem:[%s1 + $0x2b0] sm:$0xff]
        %v604 = vld [vmem:[%s1 + $0x2b8] sm:$0xff]
        %v605 = vld [vmem:[%s1 + $0x2c0] sm:$0xff]
        %v606 = vld [vmem:[%s1 + $0x2c8] sm:$0xff]
        %v607 = vld [vmem:[%s1 + $0x2d0] sm:$0xff]
        %v608 = vld [vmem:[%s1 + $0x2d8] sm:$0xff]
        %v609 = vld [vmem:[%s1 + $0x2e0] sm:$0xff]
        %v610 = vld [vmem:[%s1 + $0x2e8] sm:$0xff]
        %v611 = vld [vmem:[%s1 + $0x2f0] sm:$0xff]
        %v612 = vld [vmem:[%s1 + $0x2f8] sm:$0xff]
        %v613 = vld [vmem:[%s1 + $0x300] sm:$0xff]
        %v614 = vld [vmem:[%s1 + $0x308] sm:$0xff]
        %v615 = vld [vmem:[%s1 + $0x310] sm:$0xff]
        %v616 = vld [vmem:[%s1 + $0x318] sm:$0xff]
        %v617 = vld [vmem:[%s1 + $0x320] sm:$0xff]
        %v618 = vld [vmem:[%s1 + $0x328] sm:$0xff]
        %v619 = vld [vmem:[%s1 + $0x330] sm:$0xff]
        %v620 = vld [vmem:[%s1 + $0x338] sm:$0xff]
        %v621 = vld [vmem:[%s1 + $0x340] sm:$0xff]
        %v622 = vld [vmem:[%s1 + $0x348] sm:$0xff]
        %v623 = vld [vmem:[%s1 + $0x350] sm:$0xff]
        %v624 = vld [vmem:[%s1 + $0x358] sm:$0xff]
        %v625 = vld [vmem:[%s1 + $0x360] sm:$0xff]
        %v626 = vld [vmem:[%s1 + $0x368] sm:$0xff]
        %v627 = vld [vmem:[%s1 + $0x370] sm:$0xff]
        %v628 = vld [vmem:[%s1 + $0x378] sm:$0xff]
        %v629 = vld [vmem:[%s1 + $0x380] sm:$0xff]
        %v630 = vld [vmem:[%s1 + $0x388] sm:$0xff]
        %v631 = vld [vmem:[%s1 + $0x390] sm:$0xff]
        %v632 = vld [vmem:[%s1 + $0x398] sm:$0xff]
        %v633 = vld [vmem:[%s1 + $0x3a0] sm:$0xff]
        %v634 = vld [vmem:[%s1 + $0x3a8] sm:$0xff]
        %v635 = vld [vmem:[%s1 + $0x3b0] sm:$0xff]
        %v636 = vld [vmem:[%s1 + $0x3b8] sm:$0xff]
        %v637 = vld [vmem:[%s1 + $0x3c0] sm:$0xff]
        %v638 = vld [vmem:[%s1 + $0x3c8] sm:$0xff]
        %v639 = vld [vmem:[%s1 + $0x3d0] sm:$0xff]
        %v640 = vld [vmem:[%s1 + $0x3d8] sm:$0xff]
        %v641 = vld [vmem:[%s1 + $0x3e0] sm:$0xff]
        %v642 = vld [vmem:[%s1 + $0x3e8] sm:$0xff]
        %v643 = vld [vmem:[%s1 + $0x3f0] sm:$0xff]
        %v644 = vld [vmem:[%s1 + $0x3f8] sm:$0xff]
        %v645 = vld [vmem:[%s1 + $0x400] sm:$0xff]
        %v646 = vld [vmem:[%s1 + $0x408] sm:$0xff]
        %v647 = vld [vmem:[%s1 + $0x410] sm:$0xff]
        %v648 = vld [vmem:[%s1 + $0x418] sm:$0xff]
        %v649 = vld [vmem:[%s1 + $0x420] sm:$0xff]
        %v650 = vld [vmem:[%s1 + $0x428] sm:$0xff]
        %v651 = vld [vmem:[%s1 + $0x430] sm:$0xff]
        %v652 = vld [vmem:[%s1 + $0x438] sm:$0xff]
        %v653 = vld [vmem:[%s1 + $0x440] sm:$0xff]
        %v654 = vld [vmem:[%s1 + $0x448] sm:$0xff]
        %v655 = vld [vmem:[%s1 + $0x450] sm:$0xff]
        %v656 = vld [vmem:[%s1 + $0x458] sm:$0xff]
        %v657 = vld [vmem:[%s1 + $0x460] sm:$0xff]
        %v658 = vld [vmem:[%s1 + $0x468] sm:$0xff]
        %v659 = vld [vmem:[%s1 + $0x470] sm:$0xff]
        %v660 = vld [vmem:[%s1 + $0x478] sm:$0xff]
        %v661 = vld [vmem:[%s1 + $0x480] sm:$0xff]
        %v662 = vld [vmem:[%s1 + $0x488] sm:$0xff]
        %v663 = vld [vmem:[%s1 + $0x490] sm:$0xff]
        %v664 = vld [vmem:[%s1 + $0x498] sm:$0xff]
        %v665 = vld [vmem:[%s1 + $0x4a0] sm:$0xff]
        %v666 = vld [vmem:[%s1 + $0x4a8] sm:$0xff]
        %v667 = vld [vmem:[%s1 + $0x4b0] sm:$0xff]
        %v668 = vld [vmem:[%s1 + $0x4b8] sm:$0xff]
        %v669 = vld [vmem:[%s1 + $0x4c0] sm:$0xff]
        %v670 = vld [vmem:[%s1 + $0x4c8] sm:$0xff]
        %v671 = vld [vmem:[%s1 + $0x4d0] sm:$0xff]
        %v672 = vld [vmem:[%s1 + $0x4d8] sm:$0xff]
        %v673 = vld [vmem:[%s1 + $0x4e0] sm:$0xff]
        %v674 = vld [vmem:[%s1 + $0x4e8] sm:$0xff]
        %v675 = vld [vmem:[%s1 + $0x4f0] sm:$0xff]
        %v676 = vld [vmem:[%s1 + $0x4f8] sm:$0xff]
        %v677 = vld [vmem:[%s1 + $0x500] sm:$0xff]
        %v678 = vld [vmem:[%s1 + $0x508] sm:$0xff]
        %v679 = vld [vmem:[%s1 + $0x510] sm:$0xff]
        %v680 = vld [vmem:[%s1 + $0x518] sm:$0xff]
        %v681 = vld [vmem:[%s1 + $0x520] sm:$0xff]
        %v682 = vld [vmem:[%s1 + $0x528] sm:$0xff]
        %v683 = vld [vmem:[%s1 + $0x530] sm:$0xff]
        %v684 = vld [vmem:[%s1 + $0x538] sm:$0xff]
        %v685 = vld [vmem:[%s1 + $0x540] sm:$0xff]
        %v686 = vld [vmem:[%s1 + $0x548] sm:$0xff]
        %v687 = vld [vmem:[%s1 + $0x550] sm:$0xff]
        %v688 = vld [vmem:[%s1 + $0x558] sm:$0xff]
        %v689 = vld [vmem:[%s1 + $0x560] sm:$0xff]
        %v690 = vld [vmem:[%s1 + $0x568] sm:$0xff]
        %v691 = vld [vmem:[%s1 + $0x570] sm:$0xff]
        %v692 = vld [vmem:[%s1 + $0x578] sm:$0xff]
        %v693 = vld [vmem:[%s1 + $0x580] sm:$0xff]
        %v694 = vld [vmem:[%s1 + $0x588] sm:$0xff]
        %v695 = vld [vmem:[%s1 + $0x590] sm:$0xff]
        %v696 = vld [vmem:[%s1 + $0x598] sm:$0xff]
        %v697 = vld [vmem:[%s1 + $0x5a0] sm:$0xff]
        %v698 = vld [vmem:[%s1 + $0x5a8] sm:$0xff]
        %v699 = vld [vmem:[%s1 + $0x5b0] sm:$0xff]
        %v700 = vld [vmem:[%s1 + $0x5b8] sm:$0xff]
        %v701 = vld [vmem:[%s1 + $0x5c0] sm:$0xff]
        %v702 = vld [vmem:[%s1 + $0x5c8] sm:$0xff]
        %v703 = vld [vmem:[%s1 + $0x5d0] sm:$0xff]
        %v704 = vld [vmem:[%s1 + $0x5d8] sm:$0xff]
        %v705 = vld [vmem:[%s1 + $0x5e0] sm:$0xff]
        %v706 = vld [vmem:[%s1 + $0x5e8] sm:$0xff]
        %v707 = vld [vmem:[%s1 + $0x5f0] sm:$0xff]
        %v708 = vld [vmem:[%s1 + $0x5f8] sm:$0xff]
        %v709 = vld [vmem:[%s1 + $0x600] sm:$0xff]
        %v710 = vld [vmem:[%s1 + $0x608] sm:$0xff]
        %v711 = vld [vmem:[%s1 + $0x610] sm:$0xff]
        %v712 = vld [vmem:[%s1 + $0x618] sm:$0xff]
        %v713 = vld [vmem:[%s1 + $0x620] sm:$0xff]
        %v714 = vld [vmem:[%s1 + $0x628] sm:$0xff]
        %v715 = vld [vmem:[%s1 + $0x630] sm:$0xff]
        %v716 = vld [vmem:[%s1 + $0x638] sm:$0xff]
        %v717 = vld [vmem:[%s1 + $0x640] sm:$0xff]
        %v718 = vld [vmem:[%s1 + $0x648] sm:$0xff]
        %v719 = vld [vmem:[%s1 + $0x650] sm:$0xff]
        %v720 = vld [vmem:[%s1 + $0x658] sm:$0xff]
        %v721 = vld [vmem:[%s1 + $0x660] sm:$0xff]
        %v722 = vld [vmem:[%s1 + $0x668] sm:$0xff]
        %v723 = vld [vmem:[%s1 + $0x670] sm:$0xff]
        %v724 = vld [vmem:[%s1 + $0x678] sm:$0xff]
        %v725 = vld [vmem:[%s1 + $0x680] sm:$0xff]
        %v726 = vld [vmem:[%s1 + $0x688] sm:$0xff]
        %v727 = vld [vmem:[%s1 + $0x690] sm:$0xff]
        %v728 = vld [vmem:[%s1 + $0x698] sm:$0xff]
        %v729 = vld [vmem:[%s1 + $0x6a0] sm:$0xff]
        %v730 = vld [vmem:[%s1 + $0x6a8] sm:$0xff]
        %v731 = vld [vmem:[%s1 + $0x6b0] sm:$0xff]
        %v732 = vld [vmem:[%s1 + $0x6b8] sm:$0xff]
        %v733 = vld [vmem:[%s1 + $0x6c0] sm:$0xff]
        %v734 = vld [vmem:[%s1 + $0x6c8] sm:$0xff]
        %v735 = vld [vmem:[%s1 + $0x6d0] sm:$0xff]
        %v736 = vld [vmem:[%s1 + $0x6d8] sm:$0xff]
        %v737 = vld [vmem:[%s1 + $0x6e0] sm:$0xff]
        %v738 = vld [vmem:[%s1 + $0x6e8] sm:$0xff]
        %v739 = vld [vmem:[%s1 + $0x6f0] sm:$0xff]
        %v740 = vld [vmem:[%s1 + $0x6f8] sm:$0xff]
        %v741 = vld [vmem:[%s1 + $0x700] sm:$0xff]
        %v742 = vld [vmem:[%s1 + $0x708] sm:$0xff]
        %v743 = vld [vmem:[%s1 + $0x710] sm:$0xff]
        %v744 = vld [vmem:[%s1 + $0x718] sm:$0xff]
        %v745 = vld [vmem:[%s1 + $0x720] sm:$0xff]
        %v746 = vld [vmem:[%s1 + $0x728] sm:$0xff]
        %v747 = vld [vmem:[%s1 + $0x730] sm:$0xff]
        %v748 = vld [vmem:[%s1 + $0x738] sm:$0xff]
        %v749 = vld [vmem:[%s1 + $0x740] sm:$0xff]
        %v750 = vld [vmem:[%s1 + $0x748] sm:$0xff]
        %v751 = vld [vmem:[%s1 + $0x750] sm:$0xff]
        %v752 = vld [vmem:[%s1 + $0x758] sm:$0xff]
        %v753 = vld [vmem:[%s1 + $0x760] sm:$0xff]
        %v754 = vld [vmem:[%s1 + $0x768] sm:$0xff]
        %v755 = vld [vmem:[%s1 + $0x770] sm:$0xff]
        %v756 = vld [vmem:[%s1 + $0x778] sm:$0xff]
        %v757 = vld [vmem:[%s1 + $0x780] sm:$0xff]
        %v758 = vld [vmem:[%s1 + $0x788] sm:$0xff]
        %v759 = vld [vmem:[%s1 + $0x790] sm:$0xff]
        %v760 = vld [vmem:[%s1 + $0x798] sm:$0xff]
        %v761 = vld [vmem:[%s1 + $0x7a0] sm:$0xff]
        %v762 = vld [vmem:[%s1 + $0x7a8] sm:$0xff]
        %v763 = vld [vmem:[%s1 + $0x7b0] sm:$0xff]
        %v764 = vld [vmem:[%s1 + $0x7b8] sm:$0xff]
        %v765 = vld [vmem:[%s1 + $0x7c0] sm:$0xff]
        %v766 = vld [vmem:[%s1 + $0x7c8] sm:$0xff]
        %v767 = vld [vmem:[%s1 + $0x7d0] sm:$0xff]
        %v768 = vld [vmem:[%s1 + $0x7d8] sm:$0xff]
        %v769 = vld [vmem:[%s1 + $0x7e0] sm:$0xff]
        %v770 = vld [vmem:[%s1 + $0x7e8] sm:$0xff]
        %v771 = vld [vmem:[%s1 + $0x7f0] sm:$0xff]
        %v772 = vld [vmem:[%s1 + $0x7f8] sm:$0xff]
        %v773 = vld [vmem:[%s1 + $0x800] sm:$0xff]
        %v774 = vld [vmem:[%s1 + $0x808] sm:$0xff]
        %v775 = vld [vmem:[%s1 + $0x810] sm:$0xff]
        %v776 = vld [vmem:[%s1 + $0x818] sm:$0xff]
        %v777 = vld [vmem:[%s1 + $0x820] sm:$0xff]
        %v778 = vld [vmem:[%s1 + $0x828] sm:$0xff]
        %v779 = vld [vmem:[%s1 + $0x830] sm:$0xff]
        %v780 = vld [vmem:[%s1 + $0x838] sm:$0xff]
        %v781 = vld [vmem:[%s1 + $0x840] sm:$0xff]
        %v782 = vld [vmem:[%s1 + $0x848] sm:$0xff]
        %v783 = vld [vmem:[%s1 + $0x850] sm:$0xff]
        %v784 = vld [vmem:[%s1 + $0x858] sm:$0xff]
        %v785 = vld [vmem:[%s1 + $0x860] sm:$0xff]
        %v786 = vld [vmem:[%s1 + $0x868] sm:$0xff]
        %v787 = vld [vmem:[%s1 + $0x870] sm:$0xff]
        %v788 = vld [vmem:[%s1 + $0x878] sm:$0xff]
        %v789 = vld [vmem:[%s1 + $0x880] sm:$0xff]
        %v790 = vld [vmem:[%s1 + $0x888] sm:$0xff]
        %v791 = vld [vmem:[%s1 + $0x890] sm:$0xff]
        %v792 = vld [vmem:[%s1 + $0x898] sm:$0xff]
        %v793 = vld [vmem:[%s1 + $0x8a0] sm:$0xff]
        %v794 = vld [vmem:[%s1 + $0x8a8] sm:$0xff]
        %v795 = vld [vmem:[%s1 + $0x8b0] sm:$0xff]
        %v796 = vld [vmem:[%s1 + $0x8b8] sm:$0xff]
        %v797 = vld [vmem:[%s1 + $0x8c0] sm:$0xff]
        %v798 = vld [vmem:[%s1 + $0x8c8] sm:$0xff]
        %v799 = vld [vmem:[%s1 + $0x8d0] sm:$0xff]
        %v800 = vld [vmem:[%s1 + $0x8d8] sm:$0xff]
        %v801 = vld [vmem:[%s1 + $0x8e0] sm:$0xff]
        %v802 = vld [vmem:[%s1 + $0x8e8] sm:$0xff]
        %v803 = vld [vmem:[%s1 + $0x8f0] sm:$0xff]
        %v804 = vld [vmem:[%s1 + $0x8f8] sm:$0xff]
        %v805 = vld [vmem:[%s1 + $0x900] sm:$0xff]
        %v806 = vld [vmem:[%s1 + $0x908] sm:$0xff]
        %v807 = vld [vmem:[%s1 + $0x910] sm:$0xff]
        %v808 = vld [vmem:[%s1 + $0x918] sm:$0xff]
        %v809 = vld [vmem:[%s1 + $0x920] sm:$0xff]
        %v810 = vld [vmem:[%s1 + $0x928] sm:$0xff]
        %v811 = vld [vmem:[%s1 + $0x930] sm:$0xff]
        %v812 = vld [vmem:[%s1 + $0x938] sm:$0xff]
        %v813 = vld [vmem:[%s1 + $0x940] sm:$0xff]
        %v814 = vld [vmem:[%s1 + $0x948] sm:$0xff]
        %v815 = vld [vmem:[%s1 + $0x950] sm:$0xff]
        %v816 = vld [vmem:[%s1 + $0x958] sm:$0xff]
        %v817 = vld [vmem:[%s1 + $0x960] sm:$0xff]
        %v818 = vld [vmem:[%s1 + $0x968] sm:$0xff]
        %v819 = vld [vmem:[%s1 + $0x970] sm:$0xff]
        %v820 = vld [vmem:[%s1 + $0x978] sm:$0xff]
        %v821 = vld [vmem:[%s1 + $0x980] sm:$0xff]
        %v822 = vld [vmem:[%s1 + $0x988] sm:$0xff]
        %v823 = vld [vmem:[%s1 + $0x990] sm:$0xff]
        %v824 = vld [vmem:[%s1 + $0x998] sm:$0xff]
        %v825 = vld [vmem:[%s1 + $0x9a0] sm:$0xff]
        %v826 = vld [vmem:[%s1 + $0x9a8] sm:$0xff]
        %v827 = vld [vmem:[%s1 + $0x9b0] sm:$0xff]
        %v828 = vld [vmem:[%s1 + $0x9b8] sm:$0xff]
        %v829 = vld [vmem:[%s1 + $0x9c0] sm:$0xff]
        %v830 = vld [vmem:[%s1 + $0x9c8] sm:$0xff]
        %v831 = vld [vmem:[%s1 + $0x9d0] sm:$0xff]
        %v832 = vld [vmem:[%s1 + $0x9d8] sm:$0xff]
        %v833 = vld [vmem:[%s1 + $0x9e0] sm:$0xff]
        %v834 = vld [vmem:[%s1 + $0x9e8] sm:$0xff]
        %v835 = vld [vmem:[%s1 + $0x9f0] sm:$0xff]
        %v836 = vld [vmem:[%s1 + $0x9f8] sm:$0xff]
        %v837 = vld [vmem:[%s1 + $0xa00] sm:$0xff]
        %v838 = vld [vmem:[%s1 + $0xa08] sm:$0xff]
        %v839 = vld [vmem:[%s1 + $0xa10] sm:$0xff]
        %v840 = vld [vmem:[%s1 + $0xa18] sm:$0xff]
        %v841 = vld [vmem:[%s1 + $0xa20] sm:$0xff]
        %v842 = vld [vmem:[%s1 + $0xa28] sm:$0xff]
        %v843 = vld [vmem:[%s1 + $0xa30] sm:$0xff]
        %v844 = vld [vmem:[%s1 + $0xa38] sm:$0xff]
        %v845 = vld [vmem:[%s1 + $0xa40] sm:$0xff]
        %v846 = vld [vmem:[%s1 + $0xa48] sm:$0xff]
        %v847 = vld [vmem:[%s1 + $0xa50] sm:$0xff]
        %v848 = vld [vmem:[%s1 + $0xa58] sm:$0xff]
        %v849 = vld [vmem:[%s1 + $0xa60] sm:$0xff]
        %v850 = vld [vmem:[%s1 + $0xa68] sm:$0xff]
        %v851 = vld [vmem:[%s1 + $0xa70] sm:$0xff]
        %v852 = vld [vmem:[%s1 + $0xa78] sm:$0xff]
        %v853 = vld [vmem:[%s1 + $0xa80] sm:$0xff]
        %v854 = vld [vmem:[%s1 + $0xa88] sm:$0xff]
        %v855 = vld [vmem:[%s1 + $0xa90] sm:$0xff]
        %v856 = vld [vmem:[%s1 + $0xa98] sm:$0xff]
        %v857 = vld [vmem:[%s1 + $0xaa0] sm:$0xff]
        %v858 = vld [vmem:[%s1 + $0xaa8] sm:$0xff]
        %v859 = vld [vmem:[%s1 + $0xab0] sm:$0xff]
        %v860 = vld [vmem:[%s1 + $0xab8] sm:$0xff]
        %v861 = vld [vmem:[%s1 + $0xac0] sm:$0xff]
        %v862 = vld [vmem:[%s1 + $0xac8] sm:$0xff]
        %v863 = vld [vmem:[%s1 + $0xad0] sm:$0xff]
        %v864 = vld [vmem:[%s1 + $0xad8] sm:$0xff]
        %v865 = vld [vmem:[%s1 + $0xae0] sm:$0xff]
        %v866 = vld [vmem:[%s1 + $0xae8] sm:$0xff]
        %v867 = vld [vmem:[%s1 + $0xaf0] sm:$0xff]
        %v868 = vld [vmem:[%s1 + $0xaf8] sm:$0xff]
        %v869 = vld [vmem:[%s1 + $0xb00] sm:$0xff]
        %v870 = vld [vmem:[%s1 + $0xb08] sm:$0xff]
        %v871 = vld [vmem:[%s1 + $0xb10] sm:$0xff]
        %v872 = vld [vmem:[%s1 + $0xb18] sm:$0xff]
        %v873 = vld [vmem:[%s1 + $0xb20] sm:$0xff]
        %v874 = vld [vmem:[%s1 + $0xb28] sm:$0xff]
        %v875 = vld [vmem:[%s1 + $0xb30] sm:$0xff]
        %v876 = vld [vmem:[%s1 + $0xb38] sm:$0xff]
        %v877 = vld [vmem:[%s1 + $0xb40] sm:$0xff]
        %v878 = vld [vmem:[%s1 + $0xb48] sm:$0xff]
        %v879 = vld [vmem:[%s1 + $0xb50] sm:$0xff]
        %v880 = vld [vmem:[%s1 + $0xb58] sm:$0xff]
        %v881 = vld [vmem:[%s1 + $0xb60] sm:$0xff]
        %v882 = vld [vmem:[%s1 + $0xb68] sm:$0xff]
        %v883 = vld [vmem:[%s1 + $0xb70] sm:$0xff]
        %v884 = vld [vmem:[%s1 + $0xb78] sm:$0xff]
        %v885 = vld [vmem:[%s1 + $0xb80] sm:$0xff]
        %v886 = vld [vmem:[%s1 + $0xb88] sm:$0xff]
        %v887 = vld [vmem:[%s1 + $0xb90] sm:$0xff]
        %v888 = vld [vmem:[%s1 + $0xb98] sm:$0xff]
        %v889 = vld [vmem:[%s1 + $0xba0] sm:$0xff]
        %v890 = vld [vmem:[%s1 + $0xba8] sm:$0xff]
        %v891 = vld [vmem:[%s1 + $0xbb0] sm:$0xff]
        %v892 = vld [vmem:[%s1 + $0xbb8] sm:$0xff]
        %v893 = vld [vmem:[%s1 + $0xbc0] sm:$0xff]
        %v894 = vld [vmem:[%s1 + $0xbc8] sm:$0xff]
        %v895 = vld [vmem:[%s1 + $0xbd0] sm:$0xff]
        %v896 = vld [vmem:[%s1 + $0xbd8] sm:$0xff]
        %v897 = vld [vmem:[%s1 + $0xbe0] sm:$0xff]
        %v898 = vld [vmem:[%s1 + $0xbe8] sm:$0xff]
        %v899 = vld [vmem:[%s1 + $0xbf0] sm:$0xff]
        %v900 = vld [vmem:[%s1 + $0xbf8] sm:$0xff]
        %v901 = vld [vmem:[%s1 + $0xc00] sm:$0xff]
        %v902 = vld [vmem:[%s1 + $0xc08] sm:$0xff]
        %v903 = vld [vmem:[%s1 + $0xc10] sm:$0xff]
        %v904 = vld [vmem:[%s1 + $0xc18] sm:$0xff]
        %v905 = vld [vmem:[%s1 + $0xc20] sm:$0xff]
        %v906 = vld [vmem:[%s1 + $0xc28] sm:$0xff]
        %v907 = vld [vmem:[%s1 + $0xc30] sm:$0xff]
        %v908 = vld [vmem:[%s1 + $0xc38] sm:$0xff]
        %v909 = vld [vmem:[%s1 + $0xc40] sm:$0xff]
        %v910 = vld [vmem:[%s1 + $0xc48] sm:$0xff]
        %v911 = vld [vmem:[%s1 + $0xc50] sm:$0xff]
        %v912 = vld [vmem:[%s1 + $0xc58] sm:$0xff]
        %v913 = vld [vmem:[%s1 + $0xc60] sm:$0xff]
        %v914 = vld [vmem:[%s1 + $0xc68] sm:$0xff]
        %v915 = vld [vmem:[%s1 + $0xc70] sm:$0xff]
        %v916 = vld [vmem:[%s1 + $0xc78] sm:$0xff]
        %v917 = vld [vmem:[%s1 + $0xc80] sm:$0xff]
        %v918 = vld [vmem:[%s1 + $0xc88] sm:$0xff]
        %v919 = vld [vmem:[%s1 + $0xc90] sm:$0xff]
        %v920 = vld [vmem:[%s1 + $0xc98] sm:$0xff]
        %v921 = vld [vmem:[%s1 + $0xca0] sm:$0xff]
        %v922 = vld [vmem:[%s1 + $0xca8] sm:$0xff]
        %v923 = vld [vmem:[%s1 + $0xcb0] sm:$0xff]
        %v924 = vld [vmem:[%s1 + $0xcb8] sm:$0xff]
        %v925 = vld [vmem:[%s1 + $0xcc0] sm:$0xff]
        %v926 = vld [vmem:[%s1 + $0xcc8] sm:$0xff]
        %v927 = vld [vmem:[%s1 + $0xcd0] sm:$0xff]
        %v928 = vld [vmem:[%s1 + $0xcd8] sm:$0xff]
        %v929 = vld [vmem:[%s1 + $0xce0] sm:$0xff]
        %v930 = vld [vmem:[%s1 + $0xce8] sm:$0xff]
        %v931 = vld [vmem:[%s1 + $0xcf0] sm:$0xff]
        %v932 = vld [vmem:[%s1 + $0xcf8] sm:$0xff]
        %v933 = vld [vmem:[%s1 + $0xd00] sm:$0xff]
        %v934 = vld [vmem:[%s1 + $0xd08] sm:$0xff]
        %v935 = vld [vmem:[%s1 + $0xd10] sm:$0xff]
        %v936 = vld [vmem:[%s1 + $0xd18] sm:$0xff]
        %v937 = vld [vmem:[%s1 + $0xd20] sm:$0xff]
        %v938 = vld [vmem:[%s1 + $0xd28] sm:$0xff]
        %v939 = vld [vmem:[%s1 + $0xd30] sm:$0xff]
        %v940 = vld [vmem:[%s1 + $0xd38] sm:$0xff]
        %v941 = vld [vmem:[%s1 + $0xd40] sm:$0xff]
        %v942 = vld [vmem:[%s1 + $0xd48] sm:$0xff]
        %v943 = vld [vmem:[%s1 + $0xd50] sm:$0xff]
        %v944 = vld [vmem:[%s1 + $0xd58] sm:$0xff]
        %v945 = vld [vmem:[%s1 + $0xd60] sm:$0xff]
        %v946 = vld [vmem:[%s1 + $0xd68] sm:$0xff]
        %v947 = vld [vmem:[%s1 + $0xd70] sm:$0xff]
        %v948 = vld [vmem:[%s1 + $0xd78] sm:$0xff]
        %v949 = vld [vmem:[%s1 + $0xd80] sm:$0xff]
        %v950 = vld [vmem:[%s1 + $0xd88] sm:$0xff]
        %v951 = vld [vmem:[%s1 + $0xd90] sm:$0xff]
        %v952 = vld [vmem:[%s1 + $0xd98] sm:$0xff]
        %v953 = vld [vmem:[%s1 + $0xda0] sm:$0xff]
        %v954 = vld [vmem:[%s1 + $0xda8] sm:$0xff]
        %v955 = vld [vmem:[%s1 + $0xdb0] sm:$0xff]
        %v956 = vld [vmem:[%s1 + $0xdb8] sm:$0xff]
        %v957 = vld [vmem:[%s1 + $0xdc0] sm:$0xff]
        %v958 = vld [vmem:[%s1 + $0xdc8] sm:$0xff]
        %v959 = vld [vmem:[%s1 + $0xdd0] sm:$0xff]
        %v960 = vld [vmem:[%s1 + $0xdd8] sm:$0xff]
        %v961 = vld [vmem:[%s1 + $0xde0] sm:$0xff]
        %v962 = vld [vmem:[%s1 + $0xde8] sm:$0xff]
        %v963 = vld [vmem:[%s1 + $0xdf0] sm:$0xff]
        %v964 = vld [vmem:[%s1 + $0xdf8] sm:$0xff]
        %v965 = vld [vmem:[%s1 + $0xe00] sm:$0xff]
        %v966 = vld [vmem:[%s1 + $0xe08] sm:$0xff]
        %v967 = vld [vmem:[%s1 + $0xe10] sm:$0xff]
        %v968 = vld [vmem:[%s1 + $0xe18] sm:$0xff]
        %v969 = vld [vmem:[%s1 + $0xe20] sm:$0xff]
        %v970 = vld [vmem:[%s1 + $0xe28] sm:$0xff]
        %v971 = vld [vmem:[%s1 + $0xe30] sm:$0xff]
        %v972 = vld [vmem:[%s1 + $0xe38] sm:$0xff]
        %v973 = vld [vmem:[%s1 + $0xe40] sm:$0xff]
        %v974 = vld [vmem:[%s1 + $0xe48] sm:$0xff]
        %v975 = vld [vmem:[%s1 + $0xe50] sm:$0xff]
        %v976 = vld [vmem:[%s1 + $0xe58] sm:$0xff]
        %v977 = vld [vmem:[%s1 + $0xe60] sm:$0xff]
        %v978 = vld [vmem:[%s1 + $0xe68] sm:$0xff]
        %v979 = vld [vmem:[%s1 + $0xe70] sm:$0xff]
        %v980 = vld [vmem:[%s1 + $0xe78] sm:$0xff]
        %v981 = vld [vmem:[%s1 + $0xe80] sm:$0xff]
        %v982 = vld [vmem:[%s1 + $0xe88] sm:$0xff]
        %v983 = vld [vmem:[%s1 + $0xe90] sm:$0xff]
        %v984 = vld [vmem:[%s1 + $0xe98] sm:$0xff]
        %v985 = vld [vmem:[%s1 + $0xea0] sm:$0xff]
        %v986 = vld [vmem:[%s1 + $0xea8] sm:$0xff]
        %v987 = vld [vmem:[%s1 + $0xeb0] sm:$0xff]
        %v988 = vld [vmem:[%s1 + $0xeb8] sm:$0xff]
        %v989 = vld [vmem:[%s1 + $0xec0] sm:$0xff]
        %v990 = vld [vmem:[%s1 + $0xec8] sm:$0xff]
        %v991 = vld [vmem:[%s1 + $0xed0] sm:$0xff]
        %v992 = vld [vmem:[%s1 + $0xed8] sm:$0xff]
        %v993 = vld [vmem:[%s1 + $0xee0] sm:$0xff]
        %v994 = vld [vmem:[%s1 + $0xee8] sm:$0xff]
        %v995 = vld [vmem:[%s1 + $0xef0] sm:$0xff]
        %v996 = vld [vmem:[%s1 + $0xef8] sm:$0xff]
        %v997 = vld [vmem:[%s1 + $0xf00] sm:$0xff]
        %v998 = vld [vmem:[%s1 + $0xf08] sm:$0xff]
        %v999 = vld [vmem:[%s1 + $0xf10] sm:$0xff]
        %v1000 = vld [vmem:[%s1 + $0xf18] sm:$0xff]
        %v1001 = vld [vmem:[%s1 + $0xf20] sm:$0xff]
        %v1002 = vld [vmem:[%s1 + $0xf28] sm:$0xff]
        %v1003 = vld [vmem:[%s1 + $0xf30] sm:$0xff]
        %v1004 = vld [vmem:[%s1 + $0xf38] sm:$0xff]
        %v1005 = vld [vmem:[%s1 + $0xf40] sm:$0xff]
        %v1006 = vld [vmem:[%s1 + $0xf48] sm:$0xff]
        %v1007 = vld [vmem:[%s1 + $0xf50] sm:$0xff]
        %v1008 = vld [vmem:[%s1 + $0xf58] sm:$0xff]
        %v1009 = vld [vmem:[%s1 + $0xf60] sm:$0xff]
        %v1010 = vld [vmem:[%s1 + $0xf68] sm:$0xff]
        %v1011 = vld [vmem:[%s1 + $0xf70] sm:$0xff]
        %v1012 = vld [vmem:[%s1 + $0xf78] sm:$0xff]
        %v1013 = vld [vmem:[%s1 + $0xf80] sm:$0xff]
        %v1014 = vld [vmem:[%s1 + $0xf88] sm:$0xff]
        %v1015 = vld [vmem:[%s1 + $0xf90] sm:$0xff]
        %v1016 = vld [vmem:[%s1 + $0xf98] sm:$0xff]
        %v1017 = vld [vmem:[%s1 + $0xfa0] sm:$0xff]
        %v1018 = vld [vmem:[%s1 + $0xfa8] sm:$0xff]
        %v1019 = vld [vmem:[%s1 + $0xfb0] sm:$0xff]
        %v1020 = vld [vmem:[%s1 + $0xfb8] sm:$0xff]
        %v1021 = vld [vmem:[%s1 + $0xfc0] sm:$0xff]
        %v1022 = vld [vmem:[%s1 + $0xfc8] sm:$0xff]
        %v1023 = vld [vmem:[%s1 + $0xfd0] sm:$0xff]
        %v1024 = vld [vmem:[%s1 + $0xfd8] sm:$0xff]
        %v1025 = vld [vmem:[%s1 + $0xfe0] sm:$0xff]
        %v1026 = vld [vmem:[%s1 + $0xfe8] sm:$0xff]
        %v1027 = vld [vmem:[%s1 + $0xff0] sm:$0xff]
        %v1028 = vld [vmem:[%s1 + $0xff8] sm:$0xff]
        %v1029 = vld [vmem:[%s1 + $0x1000] sm:$0xff]
        %v1030 = vld [vmem:[%s1 + $0x1008] sm:$0xff]
        %v1031 = vld [vmem:[%s1 + $0x1010] sm:$0xff]
        %v1032 = vld [vmem:[%s1 + $0x1018] sm:$0xff]
        %v1033 = vld [vmem:[%s1 + $0x1020] sm:$0xff]
        %v1034 = vld [vmem:[%s1 + $0x1028] sm:$0xff]
        %v1035 = vld [vmem:[%s1 + $0x1030] sm:$0xff]
        %v1036 = vld [vmem:[%s1 + $0x1038] sm:$0xff]
        %v1037 = vld [vmem:[%s1 + $0x1040] sm:$0xff]
        %v1038 = vld [vmem:[%s1 + $0x1048] sm:$0xff]
        %v1039 = vld [vmem:[%s1 + $0x1050] sm:$0xff]
        %v1040 = vld [vmem:[%s1 + $0x1058] sm:$0xff]
        %v1041 = vld [vmem:[%s1 + $0x1060] sm:$0xff]
        %v1042 = vld [vmem:[%s1 + $0x1068] sm:$0xff]
        %v1043 = vld [vmem:[%s1 + $0x1070] sm:$0xff]
        %v1044 = vld [vmem:[%s1 + $0x1078] sm:$0xff]
        %v1045 = vld [vmem:[%s1 + $0x1080] sm:$0xff]
        %v1046 = vld [vmem:[%s1 + $0x1088] sm:$0xff]
        %v1047 = vld [vmem:[%s1 + $0x1090] sm:$0xff]
        %v1048 = vld [vmem:[%s1 + $0x1098] sm:$0xff]
        %v1049 = vld [vmem:[%s1 + $0x10a0] sm:$0xff]
        %v1050 = vld [vmem:[%s1 + $0x10a8] sm:$0xff]
        %v1051 = vld [vmem:[%s1 + $0x10b0] sm:$0xff]
        %v1052 = vld [vmem:[%s1 + $0x10b8] sm:$0xff]
        %v1053 = vld [vmem:[%s1 + $0x10c0] sm:$0xff]
        %v1054 = vld [vmem:[%s1 + $0x10c8] sm:$0xff]
        %v1055 = vld [vmem:[%s1 + $0x10d0] sm:$0xff]
        %v1056 = vld [vmem:[%s1 + $0x10d8] sm:$0xff]
        %v1057 = vld [vmem:[%s1 + $0x10e0] sm:$0xff]
        %v1058 = vld [vmem:[%s1 + $0x10e8] sm:$0xff]
        %v1059 = vld [vmem:[%s1 + $0x10f0] sm:$0xff]
        %v1060 = vld [vmem:[%s1 + $0x10f8] sm:$0xff]
        %v1061 = vld [vmem:[%s1 + $0x1100] sm:$0xff]
        %v1062 = vld [vmem:[%s1 + $0x1108] sm:$0xff]
        %v1063 = vld [vmem:[%s1 + $0x1110] sm:$0xff]
        %v1064 = vld [vmem:[%s1 + $0x1118] sm:$0xff]
        %v1065 = vld [vmem:[%s1 + $0x1120] sm:$0xff]
        %v1066 = vld [vmem:[%s1 + $0x1128] sm:$0xff]
        %v1067 = vld [vmem:[%s1 + $0x1130] sm:$0xff]
        %v1068 = vld [vmem:[%s1 + $0x1138] sm:$0xff]
        %v1069 = vld [vmem:[%s1 + $0x1140] sm:$0xff]
        %v1070 = vld [vmem:[%s1 + $0x1148] sm:$0xff]
        %v1071 = vld [vmem:[%s1 + $0x1150] sm:$0xff]
        %v1072 = vld [vmem:[%s1 + $0x1158] sm:$0xff]
        %v1073 = vld [vmem:[%s1 + $0x1160] sm:$0xff]
        %v1074 = vld [vmem:[%s1 + $0x1168] sm:$0xff]
        %v1075 = vld [vmem:[%s1 + $0x1170] sm:$0xff]
        %v1076 = vld [vmem:[%s1 + $0x1178] sm:$0xff]
        %v1077 = vld [vmem:[%s1 + $0x1180] sm:$0xff]
        %v1078 = vld [vmem:[%s1 + $0x1188] sm:$0xff]
        %v1079 = vld [vmem:[%s1 + $0x1190] sm:$0xff]
        %v1080 = vld [vmem:[%s1 + $0x1198] sm:$0xff]
        %v1081 = vld [vmem:[%s1 + $0x11a0] sm:$0xff]
        %v1082 = vld [vmem:[%s1 + $0x11a8] sm:$0xff]
        %v1083 = vld [vmem:[%s1 + $0x11b0] sm:$0xff]
        %v1084 = vld [vmem:[%s1 + $0x11b8] sm:$0xff]
        %v1085 = vld [vmem:[%s1 + $0x11c0] sm:$0xff]
        %v1086 = vld [vmem:[%s1 + $0x11c8] sm:$0xff]
        %v1087 = vld [vmem:[%s1 + $0x11d0] sm:$0xff]
        %v1088 = vld [vmem:[%s1 + $0x11d8] sm:$0xff]
        %v1089 = vld [vmem:[%s1 + $0x11e0] sm:$0xff]
        %v1090 = vld [vmem:[%s1 + $0x11e8] sm:$0xff]
        %v1091 = vld [vmem:[%s1 + $0x11f0] sm:$0xff]
        %v1092 = vld [vmem:[%s1 + $0x11f8] sm:$0xff]
        %v1165 = vunpack.c.l.b16 %v445
        %v1166 = vunpack.c.h.b16 %v445
        %v1167 = vunpack.c.l.b16 %v446
        %v1168 = vunpack.c.h.b16 %v446
        %v1169 = vunpack.c.l.b16 %v447
        %v1170 = vunpack.c.h.b16 %v447
        %v1171 = vunpack.c.l.b16 %v448
        %v1172 = vunpack.c.h.b16 %v448
        %v1173 = vunpack.c.l.b16 %v449
        %v1174 = vunpack.c.h.b16 %v449
        %v1175 = vunpack.c.l.b16 %v450
        %v1176 = vunpack.c.h.b16 %v450
        %v1177 = vunpack.c.l.b16 %v451
        %v1178 = vunpack.c.h.b16 %v451
        %v1179 = vunpack.c.l.b16 %v452
        %v1180 = vunpack.c.h.b16 %v452
        %v1181 = vunpack.c.l.b16 %v453
        %v1182 = vunpack.c.h.b16 %v453
        %v1183 = vunpack.c.l.b16 %v454
        %v1184 = vunpack.c.h.b16 %v454
        %v1185 = vunpack.c.l.b16 %v455
        %v1186 = vunpack.c.h.b16 %v455
        %v1187 = vunpack.c.l.b16 %v456
        %v1188 = vunpack.c.h.b16 %v456
        %v1189 = vunpack.c.l.b16 %v457
        %v1190 = vunpack.c.h.b16 %v457
        %v1191 = vunpack.c.l.b16 %v458
        %v1192 = vunpack.c.h.b16 %v458
        %v1193 = vunpack.c.l.b16 %v459
        %v1194 = vunpack.c.h.b16 %v459
        %v1195 = vunpack.c.l.b16 %v460
        %v1196 = vunpack.c.h.b16 %v460
        %v1197 = vunpack.c.l.b16 %v461
        %v1198 = vunpack.c.h.b16 %v461
        %v1199 = vunpack.c.l.b16 %v462
        %v1200 = vunpack.c.h.b16 %v462
        %v1201 = vunpack.c.l.b16 %v463
        %v1202 = vunpack.c.h.b16 %v463
        %v1203 = vunpack.c.l.b16 %v464
        %v1204 = vunpack.c.h.b16 %v464
        %v1205 = vunpack.c.l.b16 %v465
        %v1206 = vunpack.c.h.b16 %v465
        %v1207 = vunpack.c.l.b16 %v466
        %v1208 = vunpack.c.h.b16 %v466
        %v1209 = vunpack.c.l.b16 %v467
        %v1210 = vunpack.c.h.b16 %v467
        %v1211 = vunpack.c.l.b16 %v468
        %v1212 = vunpack.c.h.b16 %v468
        %v1213 = vunpack.c.l.b16 %v469
        %v1214 = vunpack.c.h.b16 %v469
        %v1215 = vunpack.c.l.b16 %v470
        %v1216 = vunpack.c.h.b16 %v470
        %v1217 = vunpack.c.l.b16 %v471
        %v1218 = vunpack.c.h.b16 %v471
        %v1219 = vunpack.c.l.b16 %v472
        %v1220 = vunpack.c.h.b16 %v472
        %v1221 = vunpack.c.l.b16 %v473
        %v1222 = vunpack.c.h.b16 %v473
        %v1223 = vunpack.c.l.b16 %v474
        %v1224 = vunpack.c.h.b16 %v474
        %v1225 = vunpack.c.l.b16 %v475
        %v1226 = vunpack.c.h.b16 %v475
        %v1227 = vunpack.c.l.b16 %v476
        %v1228 = vunpack.c.h.b16 %v476
        %v1229 = vunpack.c.l.b16 %v477
        %v1230 = vunpack.c.h.b16 %v477
        %v1231 = vunpack.c.l.b16 %v478
        %v1232 = vunpack.c.h.b16 %v478
        %v1233 = vunpack.c.l.b16 %v479
        %v1234 = vunpack.c.h.b16 %v479
        %v1235 = vunpack.c.l.b16 %v480
        %v1236 = vunpack.c.h.b16 %v480
        %v1237 = vunpack.c.l.b16 %v481
        %v1238 = vunpack.c.h.b16 %v481
        %v1239 = vunpack.c.l.b16 %v482
        %v1240 = vunpack.c.h.b16 %v482
        %v1241 = vunpack.c.l.b16 %v483
        %v1242 = vunpack.c.h.b16 %v483
        %v1243 = vunpack.c.l.b16 %v484
        %v1244 = vunpack.c.h.b16 %v484
        %v1245 = vunpack.c.l.b16 %v485
        %v1246 = vunpack.c.h.b16 %v485
        %v1247 = vunpack.c.l.b16 %v486
        %v1248 = vunpack.c.h.b16 %v486
        %v1249 = vunpack.c.l.b16 %v487
        %v1250 = vunpack.c.h.b16 %v487
        %v1251 = vunpack.c.l.b16 %v488
        %v1252 = vunpack.c.h.b16 %v488
        %v1253 = vunpack.c.l.b16 %v489
        %v1254 = vunpack.c.h.b16 %v489
        %v1255 = vunpack.c.l.b16 %v490
        %v1256 = vunpack.c.h.b16 %v490
        %v1257 = vunpack.c.l.b16 %v491
        %v1258 = vunpack.c.h.b16 %v491
        %v1259 = vunpack.c.l.b16 %v492
        %v1260 = vunpack.c.h.b16 %v492
        %v1261 = vunpack.c.l.b16 %v493
        %v1262 = vunpack.c.h.b16 %v493
        %v1263 = vunpack.c.l.b16 %v494
        %v1264 = vunpack.c.h.b16 %v494
        %v1265 = vunpack.c.l.b16 %v495
        %v1266 = vunpack.c.h.b16 %v495
        %v1267 = vunpack.c.l.b16 %v496
        %v1268 = vunpack.c.h.b16 %v496
        %v1269 = vunpack.c.l.b16 %v497
        %v1270 = vunpack.c.h.b16 %v497
        %v1271 = vunpack.c.l.b16 %v498
        %v1272 = vunpack.c.h.b16 %v498
        %v1273 = vunpack.c.l.b16 %v499
        %v1274 = vunpack.c.h.b16 %v499
        %v1275 = vunpack.c.l.b16 %v500
        %v1276 = vunpack.c.h.b16 %v500
        %v1277 = vunpack.c.l.b16 %v501
        %v1278 = vunpack.c.h.b16 %v501
        %v1279 = vunpack.c.l.b16 %v502
        %v1280 = vunpack.c.h.b16 %v502
        %v1281 = vunpack.c.l.b16 %v503
        %v1282 = vunpack.c.h.b16 %v503
        %v1283 = vunpack.c.l.b16 %v504
        %v1284 = vunpack.c.h.b16 %v504
        %v1285 = vunpack.c.l.b16 %v505
        %v1286 = vunpack.c.h.b16 %v505
        %v1287 = vunpack.c.l.b16 %v506
        %v1288 = vunpack.c.h.b16 %v506
        %v1289 = vunpack.c.l.b16 %v507
        %v1290 = vunpack.c.h.b16 %v507
        %v1291 = vunpack.c.l.b16 %v508
        %v1292 = vunpack.c.h.b16 %v508
        %v1293 = vunpack.c.l.b16 %v509
        %v1294 = vunpack.c.h.b16 %v509
        %v1295 = vunpack.c.l.b16 %v510
        %v1296 = vunpack.c.h.b16 %v510
        %v1297 = vunpack.c.l.b16 %v511
        %v1298 = vunpack.c.h.b16 %v511
        %v1299 = vunpack.c.l.b16 %v512
        %v1300 = vunpack.c.h.b16 %v512
        %v1301 = vunpack.c.l.b16 %v513
        %v1302 = vunpack.c.h.b16 %v513
        %v1303 = vunpack.c.l.b16 %v514
        %v1304 = vunpack.c.h.b16 %v514
        %v1305 = vunpack.c.l.b16 %v515
        %v1306 = vunpack.c.h.b16 %v515
        %v1307 = vunpack.c.l.b16 %v516
        %v1308 = vunpack.c.h.b16 %v516
        %v1309 = vpack.c.b16 %v1183, %v1165
        %v1310 = vpack.c.b16 %v1184, %v1166
        %v1311 = vpack.c.b16 %v1185, %v1167
        %v1312 = vpack.c.b16 %v1186, %v1168
        %v1313 = vpack.c.b16 %v1187, %v1169
        %v1314 = vpack.c.b16 %v1188, %v1170
        %v1315 = vpack.c.b16 %v1189, %v1171
        %v1316 = vpack.c.b16 %v1190, %v1172
        %v1317 = vpack.c.b16 %v1191, %v1173
        %v1318 = vpack.c.b16 %v1192, %v1174
        %v1319 = vpack.c.b16 %v1193, %v1175
        %v1320 = vpack.c.b16 %v1194, %v1176
        %v1321 = vpack.c.b16 %v1195, %v1177
        %v1322 = vpack.c.b16 %v1196, %v1178
        %v1323 = vpack.c.b16 %v1197, %v1179
        %v1324 = vpack.c.b16 %v1198, %v1180
        %v1325 = vpack.c.b16 %v1199, %v1181
        %v1326 = vpack.c.b16 %v1200, %v1182
        %v1327 = vpack.c.b16 %v1219, %v1201
        %v1328 = vpack.c.b16 %v1220, %v1202
        %v1329 = vpack.c.b16 %v1221, %v1203
        %v1330 = vpack.c.b16 %v1222, %v1204
        %v1331 = vpack.c.b16 %v1223, %v1205
        %v1332 = vpack.c.b16 %v1224, %v1206
        %v1333 = vpack.c.b16 %v1225, %v1207
        %v1334 = vpack.c.b16 %v1226, %v1208
        %v1335 = vpack.c.b16 %v1227, %v1209
        %v1336 = vpack.c.b16 %v1228, %v1210
        %v1337 = vpack.c.b16 %v1229, %v1211
        %v1338 = vpack.c.b16 %v1230, %v1212
        %v1339 = vpack.c.b16 %v1231, %v1213
        %v1340 = vpack.c.b16 %v1232, %v1214
        %v1341 = vpack.c.b16 %v1233, %v1215
        %v1342 = vpack.c.b16 %v1234, %v1216
        %v1343 = vpack.c.b16 %v1235, %v1217
        %v1344 = vpack.c.b16 %v1236, %v1218
        %v1345 = vpack.c.b16 %v1255, %v1237
        %v1346 = vpack.c.b16 %v1256, %v1238
        %v1347 = vpack.c.b16 %v1257, %v1239
        %v1348 = vpack.c.b16 %v1258, %v1240
        %v1349 = vpack.c.b16 %v1259, %v1241
        %v1350 = vpack.c.b16 %v1260, %v1242
        %v1351 = vpack.c.b16 %v1261, %v1243
        %v1352 = vpack.c.b16 %v1262, %v1244
        %v1353 = vpack.c.b16 %v1263, %v1245
        %v1354 = vpack.c.b16 %v1264, %v1246
        %v1355 = vpack.c.b16 %v1265, %v1247
        %v1356 = vpack.c.b16 %v1266, %v1248
        %v1357 = vpack.c.b16 %v1267, %v1249
        %v1358 = vpack.c.b16 %v1268, %v1250
        %v1359 = vpack.c.b16 %v1269, %v1251
        %v1360 = vpack.c.b16 %v1270, %v1252
        %v1361 = vpack.c.b16 %v1271, %v1253
        %v1362 = vpack.c.b16 %v1272, %v1254
        %v1363 = vpack.c.b16 %v1291, %v1273
        %v1364 = vpack.c.b16 %v1292, %v1274
        %v1365 = vpack.c.b16 %v1293, %v1275
        %v1366 = vpack.c.b16 %v1294, %v1276
        %v1367 = vpack.c.b16 %v1295, %v1277
        %v1368 = vpack.c.b16 %v1296, %v1278
        %v1369 = vpack.c.b16 %v1297, %v1279
        %v1370 = vpack.c.b16 %v1298, %v1280
        %v1371 = vpack.c.b16 %v1299, %v1281
        %v1372 = vpack.c.b16 %v1300, %v1282
        %v1373 = vpack.c.b16 %v1301, %v1283
        %v1374 = vpack.c.b16 %v1302, %v1284
        %v1375 = vpack.c.b16 %v1303, %v1285
        %v1376 = vpack.c.b16 %v1304, %v1286
        %v1377 = vpack.c.b16 %v1305, %v1287
        %v1378 = vpack.c.b16 %v1306, %v1288
        %v1379 = vpack.c.b16 %v1307, %v1289
        %v1380 = vpack.c.b16 %v1308, %v1290
        %v2029 = vunpack.c.l.b16 %v517
        %v2030 = vunpack.c.h.b16 %v517
        %v2031 = vunpack.c.l.b16 %v518
        %v2032 = vunpack.c.h.b16 %v518
        %v2033 = vunpack.c.l.b16 %v519
        %v2034 = vunpack.c.h.b16 %v519
        %v2035 = vunpack.c.l.b16 %v520
        %v2036 = vunpack.c.h.b16 %v520
        %v2037 = vunpack.c.l.b16 %v521
        %v2038 = vunpack.c.h.b16 %v521
        %v2039 = vunpack.c.l.b16 %v522
        %v2040 = vunpack.c.h.b16 %v522
        %v2041 = vunpack.c.l.b16 %v523
        %v2042 = vunpack.c.h.b16 %v523
        %v2043 = vunpack.c.l.b16 %v524
        %v2044 = vunpack.c.h.b16 %v524
        %v2045 = vunpack.c.l.b16 %v525
        %v2046 = vunpack.c.h.b16 %v525
        %v2047 = vunpack.c.l.b16 %v526
        %v2048 = vunpack.c.h.b16 %v526
        %v2049 = vunpack.c.l.b16 %v527
        %v2050 = vunpack.c.h.b16 %v527
        %v2051 = vunpack.c.l.b16 %v528
        %v2052 = vunpack.c.h.b16 %v528
        %v2053 = vunpack.c.l.b16 %v529
        %v2054 = vunpack.c.h.b16 %v529
        %v2055 = vunpack.c.l.b16 %v530
        %v2056 = vunpack.c.h.b16 %v530
        %v2057 = vunpack.c.l.b16 %v531
        %v2058 = vunpack.c.h.b16 %v531
        %v2059 = vunpack.c.l.b16 %v532
        %v2060 = vunpack.c.h.b16 %v532
        %v2061 = vunpack.c.l.b16 %v533
        %v2062 = vunpack.c.h.b16 %v533
        %v2063 = vunpack.c.l.b16 %v534
        %v2064 = vunpack.c.h.b16 %v534
        %v2065 = vunpack.c.l.b16 %v535
        %v2066 = vunpack.c.h.b16 %v535
        %v2067 = vunpack.c.l.b16 %v536
        %v2068 = vunpack.c.h.b16 %v536
        %v2069 = vunpack.c.l.b16 %v537
        %v2070 = vunpack.c.h.b16 %v537
        %v2071 = vunpack.c.l.b16 %v538
        %v2072 = vunpack.c.h.b16 %v538
        %v2073 = vunpack.c.l.b16 %v539
        %v2074 = vunpack.c.h.b16 %v539
        %v2075 = vunpack.c.l.b16 %v540
        %v2076 = vunpack.c.h.b16 %v540
        %v2077 = vunpack.c.l.b16 %v541
        %v2078 = vunpack.c.h.b16 %v541
        %v2079 = vunpack.c.l.b16 %v542
        %v2080 = vunpack.c.h.b16 %v542
        %v2081 = vunpack.c.l.b16 %v543
        %v2082 = vunpack.c.h.b16 %v543
        %v2083 = vunpack.c.l.b16 %v544
        %v2084 = vunpack.c.h.b16 %v544
        %v2085 = vunpack.c.l.b16 %v545
        %v2086 = vunpack.c.h.b16 %v545
        %v2087 = vunpack.c.l.b16 %v546
        %v2088 = vunpack.c.h.b16 %v546
        %v2089 = vunpack.c.l.b16 %v547
        %v2090 = vunpack.c.h.b16 %v547
        %v2091 = vunpack.c.l.b16 %v548
        %v2092 = vunpack.c.h.b16 %v548
        %v2093 = vunpack.c.l.b16 %v549
        %v2094 = vunpack.c.h.b16 %v549
        %v2095 = vunpack.c.l.b16 %v550
        %v2096 = vunpack.c.h.b16 %v550
        %v2097 = vunpack.c.l.b16 %v551
        %v2098 = vunpack.c.h.b16 %v551
        %v2099 = vunpack.c.l.b16 %v552
        %v2100 = vunpack.c.h.b16 %v552
        %v2101 = vunpack.c.l.b16 %v553
        %v2102 = vunpack.c.h.b16 %v553
        %v2103 = vunpack.c.l.b16 %v554
        %v2104 = vunpack.c.h.b16 %v554
        %v2105 = vunpack.c.l.b16 %v555
        %v2106 = vunpack.c.h.b16 %v555
        %v2107 = vunpack.c.l.b16 %v556
        %v2108 = vunpack.c.h.b16 %v556
        %v2109 = vunpack.c.l.b16 %v557
        %v2110 = vunpack.c.h.b16 %v557
        %v2111 = vunpack.c.l.b16 %v558
        %v2112 = vunpack.c.h.b16 %v558
        %v2113 = vunpack.c.l.b16 %v559
        %v2114 = vunpack.c.h.b16 %v559
        %v2115 = vunpack.c.l.b16 %v560
        %v2116 = vunpack.c.h.b16 %v560
        %v2117 = vunpack.c.l.b16 %v561
        %v2118 = vunpack.c.h.b16 %v561
        %v2119 = vunpack.c.l.b16 %v562
        %v2120 = vunpack.c.h.b16 %v562
        %v2121 = vunpack.c.l.b16 %v563
        %v2122 = vunpack.c.h.b16 %v563
        %v2123 = vunpack.c.l.b16 %v564
        %v2124 = vunpack.c.h.b16 %v564
        %v2125 = vunpack.c.l.b16 %v565
        %v2126 = vunpack.c.h.b16 %v565
        %v2127 = vunpack.c.l.b16 %v566
        %v2128 = vunpack.c.h.b16 %v566
        %v2129 = vunpack.c.l.b16 %v567
        %v2130 = vunpack.c.h.b16 %v567
        %v2131 = vunpack.c.l.b16 %v568
        %v2132 = vunpack.c.h.b16 %v568
        %v2133 = vunpack.c.l.b16 %v569
        %v2134 = vunpack.c.h.b16 %v569
        %v2135 = vunpack.c.l.b16 %v570
        %v2136 = vunpack.c.h.b16 %v570
        %v2137 = vunpack.c.l.b16 %v571
        %v2138 = vunpack.c.h.b16 %v571
        %v2139 = vunpack.c.l.b16 %v572
        %v2140 = vunpack.c.h.b16 %v572
        %v2141 = vunpack.c.l.b16 %v573
        %v2142 = vunpack.c.h.b16 %v573
        %v2143 = vunpack.c.l.b16 %v574
        %v2144 = vunpack.c.h.b16 %v574
        %v2145 = vunpack.c.l.b16 %v575
        %v2146 = vunpack.c.h.b16 %v575
        %v2147 = vunpack.c.l.b16 %v576
        %v2148 = vunpack.c.h.b16 %v576
        %v2149 = vunpack.c.l.b16 %v577
        %v2150 = vunpack.c.h.b16 %v577
        %v2151 = vunpack.c.l.b16 %v578
        %v2152 = vunpack.c.h.b16 %v578
        %v2153 = vunpack.c.l.b16 %v579
        %v2154 = vunpack.c.h.b16 %v579
        %v2155 = vunpack.c.l.b16 %v580
        %v2156 = vunpack.c.h.b16 %v580
        %v2157 = vunpack.c.l.b16 %v581
        %v2158 = vunpack.c.h.b16 %v581
        %v2159 = vunpack.c.l.b16 %v582
        %v2160 = vunpack.c.h.b16 %v582
        %v2161 = vunpack.c.l.b16 %v583
        %v2162 = vunpack.c.h.b16 %v583
        %v2163 = vunpack.c.l.b16 %v584
        %v2164 = vunpack.c.h.b16 %v584
        %v2165 = vunpack.c.l.b16 %v585
        %v2166 = vunpack.c.h.b16 %v585
        %v2167 = vunpack.c.l.b16 %v586
        %v2168 = vunpack.c.h.b16 %v586
        %v2169 = vunpack.c.l.b16 %v587
        %v2170 = vunpack.c.h.b16 %v587
        %v2171 = vunpack.c.l.b16 %v588
        %v2172 = vunpack.c.h.b16 %v588
        %v2173 = vunpack.c.l.b16 %v589
        %v2174 = vunpack.c.h.b16 %v589
        %v2175 = vunpack.c.l.b16 %v590
        %v2176 = vunpack.c.h.b16 %v590
        %v2177 = vunpack.c.l.b16 %v591
        %v2178 = vunpack.c.h.b16 %v591
        %v2179 = vunpack.c.l.b16 %v592
        %v2180 = vunpack.c.h.b16 %v592
        %v2181 = vunpack.c.l.b16 %v593
        %v2182 = vunpack.c.h.b16 %v593
        %v2183 = vunpack.c.l.b16 %v594
        %v2184 = vunpack.c.h.b16 %v594
        %v2185 = vunpack.c.l.b16 %v595
        %v2186 = vunpack.c.h.b16 %v595
        %v2187 = vunpack.c.l.b16 %v596
        %v2188 = vunpack.c.h.b16 %v596
        %v2189 = vunpack.c.l.b16 %v597
        %v2190 = vunpack.c.h.b16 %v597
        %v2191 = vunpack.c.l.b16 %v598
        %v2192 = vunpack.c.h.b16 %v598
        %v2193 = vunpack.c.l.b16 %v599
        %v2194 = vunpack.c.h.b16 %v599
        %v2195 = vunpack.c.l.b16 %v600
        %v2196 = vunpack.c.h.b16 %v600
        %v2197 = vunpack.c.l.b16 %v601
        %v2198 = vunpack.c.h.b16 %v601
        %v2199 = vunpack.c.l.b16 %v602
        %v2200 = vunpack.c.h.b16 %v602
        %v2201 = vunpack.c.l.b16 %v603
        %v2202 = vunpack.c.h.b16 %v603
        %v2203 = vunpack.c.l.b16 %v604
        %v2204 = vunpack.c.h.b16 %v604
        %v2205 = vunpack.c.l.b16 %v605
        %v2206 = vunpack.c.h.b16 %v605
        %v2207 = vunpack.c.l.b16 %v606
        %v2208 = vunpack.c.h.b16 %v606
        %v2209 = vunpack.c.l.b16 %v607
        %v2210 = vunpack.c.h.b16 %v607
        %v2211 = vunpack.c.l.b16 %v608
        %v2212 = vunpack.c.h.b16 %v608
        %v2213 = vunpack.c.l.b16 %v609
        %v2214 = vunpack.c.h.b16 %v609
        %v2215 = vunpack.c.l.b16 %v610
        %v2216 = vunpack.c.h.b16 %v610
        %v2217 = vunpack.c.l.b16 %v611
        %v2218 = vunpack.c.h.b16 %v611
        %v2219 = vunpack.c.l.b16 %v612
        %v2220 = vunpack.c.h.b16 %v612
        %v2221 = vunpack.c.l.b16 %v613
        %v2222 = vunpack.c.h.b16 %v613
        %v2223 = vunpack.c.l.b16 %v614
        %v2224 = vunpack.c.h.b16 %v614
        %v2225 = vunpack.c.l.b16 %v615
        %v2226 = vunpack.c.h.b16 %v615
        %v2227 = vunpack.c.l.b16 %v616
        %v2228 = vunpack.c.h.b16 %v616
        %v2229 = vunpack.c.l.b16 %v617
        %v2230 = vunpack.c.h.b16 %v617
        %v2231 = vunpack.c.l.b16 %v618
        %v2232 = vunpack.c.h.b16 %v618
        %v2233 = vunpack.c.l.b16 %v619
        %v2234 = vunpack.c.h.b16 %v619
        %v2235 = vunpack.c.l.b16 %v620
        %v2236 = vunpack.c.h.b16 %v620
        %v2237 = vunpack.c.l.b16 %v621
        %v2238 = vunpack.c.h.b16 %v621
        %v2239 = vunpack.c.l.b16 %v622
        %v2240 = vunpack.c.h.b16 %v622
        %v2241 = vunpack.c.l.b16 %v623
        %v2242 = vunpack.c.h.b16 %v623
        %v2243 = vunpack.c.l.b16 %v624
        %v2244 = vunpack.c.h.b16 %v624
        %v2245 = vunpack.c.l.b16 %v625
        %v2246 = vunpack.c.h.b16 %v625
        %v2247 = vunpack.c.l.b16 %v626
        %v2248 = vunpack.c.h.b16 %v626
        %v2249 = vunpack.c.l.b16 %v627
        %v2250 = vunpack.c.h.b16 %v627
        %v2251 = vunpack.c.l.b16 %v628
        %v2252 = vunpack.c.h.b16 %v628
        %v2253 = vunpack.c.l.b16 %v629
        %v2254 = vunpack.c.h.b16 %v629
        %v2255 = vunpack.c.l.b16 %v630
        %v2256 = vunpack.c.h.b16 %v630
        %v2257 = vunpack.c.l.b16 %v631
        %v2258 = vunpack.c.h.b16 %v631
        %v2259 = vunpack.c.l.b16 %v632
        %v2260 = vunpack.c.h.b16 %v632
        %v2261 = vunpack.c.l.b16 %v633
        %v2262 = vunpack.c.h.b16 %v633
        %v2263 = vunpack.c.l.b16 %v634
        %v2264 = vunpack.c.h.b16 %v634
        %v2265 = vunpack.c.l.b16 %v635
        %v2266 = vunpack.c.h.b16 %v635
        %v2267 = vunpack.c.l.b16 %v636
        %v2268 = vunpack.c.h.b16 %v636
        %v2269 = vunpack.c.l.b16 %v637
        %v2270 = vunpack.c.h.b16 %v637
        %v2271 = vunpack.c.l.b16 %v638
        %v2272 = vunpack.c.h.b16 %v638
        %v2273 = vunpack.c.l.b16 %v639
        %v2274 = vunpack.c.h.b16 %v639
        %v2275 = vunpack.c.l.b16 %v640
        %v2276 = vunpack.c.h.b16 %v640
        %v2277 = vunpack.c.l.b16 %v641
        %v2278 = vunpack.c.h.b16 %v641
        %v2279 = vunpack.c.l.b16 %v642
        %v2280 = vunpack.c.h.b16 %v642
        %v2281 = vunpack.c.l.b16 %v643
        %v2282 = vunpack.c.h.b16 %v643
        %v2283 = vunpack.c.l.b16 %v644
        %v2284 = vunpack.c.h.b16 %v644
        %v2285 = vunpack.c.l.b16 %v645
        %v2286 = vunpack.c.h.b16 %v645
        %v2287 = vunpack.c.l.b16 %v646
        %v2288 = vunpack.c.h.b16 %v646
        %v2289 = vunpack.c.l.b16 %v647
        %v2290 = vunpack.c.h.b16 %v647
        %v2291 = vunpack.c.l.b16 %v648
        %v2292 = vunpack.c.h.b16 %v648
        %v2293 = vunpack.c.l.b16 %v649
        %v2294 = vunpack.c.h.b16 %v649
        %v2295 = vunpack.c.l.b16 %v650
        %v2296 = vunpack.c.h.b16 %v650
        %v2297 = vunpack.c.l.b16 %v651
        %v2298 = vunpack.c.h.b16 %v651
        %v2299 = vunpack.c.l.b16 %v652
        %v2300 = vunpack.c.h.b16 %v652
        %v2301 = vunpack.c.l.b16 %v653
        %v2302 = vunpack.c.h.b16 %v653
        %v2303 = vunpack.c.l.b16 %v654
        %v2304 = vunpack.c.h.b16 %v654
        %v2305 = vunpack.c.l.b16 %v655
        %v2306 = vunpack.c.h.b16 %v655
        %v2307 = vunpack.c.l.b16 %v656
        %v2308 = vunpack.c.h.b16 %v656
        %v2309 = vunpack.c.l.b16 %v657
        %v2310 = vunpack.c.h.b16 %v657
        %v2311 = vunpack.c.l.b16 %v658
        %v2312 = vunpack.c.h.b16 %v658
        %v2313 = vunpack.c.l.b16 %v659
        %v2314 = vunpack.c.h.b16 %v659
        %v2315 = vunpack.c.l.b16 %v660
        %v2316 = vunpack.c.h.b16 %v660
        %v2317 = vunpack.c.l.b16 %v661
        %v2318 = vunpack.c.h.b16 %v661
        %v2319 = vunpack.c.l.b16 %v662
        %v2320 = vunpack.c.h.b16 %v662
        %v2321 = vunpack.c.l.b16 %v663
        %v2322 = vunpack.c.h.b16 %v663
        %v2323 = vunpack.c.l.b16 %v664
        %v2324 = vunpack.c.h.b16 %v664
        %v2325 = vunpack.c.l.b16 %v665
        %v2326 = vunpack.c.h.b16 %v665
        %v2327 = vunpack.c.l.b16 %v666
        %v2328 = vunpack.c.h.b16 %v666
        %v2329 = vunpack.c.l.b16 %v667
        %v2330 = vunpack.c.h.b16 %v667
        %v2331 = vunpack.c.l.b16 %v668
        %v2332 = vunpack.c.h.b16 %v668
        %v2333 = vunpack.c.l.b16 %v669
        %v2334 = vunpack.c.h.b16 %v669
        %v2335 = vunpack.c.l.b16 %v670
        %v2336 = vunpack.c.h.b16 %v670
        %v2337 = vunpack.c.l.b16 %v671
        %v2338 = vunpack.c.h.b16 %v671
        %v2339 = vunpack.c.l.b16 %v672
        %v2340 = vunpack.c.h.b16 %v672
        %v2341 = vunpack.c.l.b16 %v673
        %v2342 = vunpack.c.h.b16 %v673
        %v2343 = vunpack.c.l.b16 %v674
        %v2344 = vunpack.c.h.b16 %v674
        %v2345 = vunpack.c.l.b16 %v675
        %v2346 = vunpack.c.h.b16 %v675
        %v2347 = vunpack.c.l.b16 %v676
        %v2348 = vunpack.c.h.b16 %v676
        %v2349 = vunpack.c.l.b16 %v677
        %v2350 = vunpack.c.h.b16 %v677
        %v2351 = vunpack.c.l.b16 %v678
        %v2352 = vunpack.c.h.b16 %v678
        %v2353 = vunpack.c.l.b16 %v679
        %v2354 = vunpack.c.h.b16 %v679
        %v2355 = vunpack.c.l.b16 %v680
        %v2356 = vunpack.c.h.b16 %v680
        %v2357 = vunpack.c.l.b16 %v681
        %v2358 = vunpack.c.h.b16 %v681
        %v2359 = vunpack.c.l.b16 %v682
        %v2360 = vunpack.c.h.b16 %v682
        %v2361 = vunpack.c.l.b16 %v683
        %v2362 = vunpack.c.h.b16 %v683
        %v2363 = vunpack.c.l.b16 %v684
        %v2364 = vunpack.c.h.b16 %v684
        %v2365 = vunpack.c.l.b16 %v685
        %v2366 = vunpack.c.h.b16 %v685
        %v2367 = vunpack.c.l.b16 %v686
        %v2368 = vunpack.c.h.b16 %v686
        %v2369 = vunpack.c.l.b16 %v687
        %v2370 = vunpack.c.h.b16 %v687
        %v2371 = vunpack.c.l.b16 %v688
        %v2372 = vunpack.c.h.b16 %v688
        %v2373 = vunpack.c.l.b16 %v689
        %v2374 = vunpack.c.h.b16 %v689
        %v2375 = vunpack.c.l.b16 %v690
        %v2376 = vunpack.c.h.b16 %v690
        %v2377 = vunpack.c.l.b16 %v691
        %v2378 = vunpack.c.h.b16 %v691
        %v2379 = vunpack.c.l.b16 %v692
        %v2380 = vunpack.c.h.b16 %v692
        %v2381 = vunpack.c.l.b16 %v693
        %v2382 = vunpack.c.h.b16 %v693
        %v2383 = vunpack.c.l.b16 %v694
        %v2384 = vunpack.c.h.b16 %v694
        %v2385 = vunpack.c.l.b16 %v695
        %v2386 = vunpack.c.h.b16 %v695
        %v2387 = vunpack.c.l.b16 %v696
        %v2388 = vunpack.c.h.b16 %v696
        %v2389 = vunpack.c.l.b16 %v697
        %v2390 = vunpack.c.h.b16 %v697
        %v2391 = vunpack.c.l.b16 %v698
        %v2392 = vunpack.c.h.b16 %v698
        %v2393 = vunpack.c.l.b16 %v699
        %v2394 = vunpack.c.h.b16 %v699
        %v2395 = vunpack.c.l.b16 %v700
        %v2396 = vunpack.c.h.b16 %v700
        %v2397 = vunpack.c.l.b16 %v701
        %v2398 = vunpack.c.h.b16 %v701
        %v2399 = vunpack.c.l.b16 %v702
        %v2400 = vunpack.c.h.b16 %v702
        %v2401 = vunpack.c.l.b16 %v703
        %v2402 = vunpack.c.h.b16 %v703
        %v2403 = vunpack.c.l.b16 %v704
        %v2404 = vunpack.c.h.b16 %v704
        %v2405 = vunpack.c.l.b16 %v705
        %v2406 = vunpack.c.h.b16 %v705
        %v2407 = vunpack.c.l.b16 %v706
        %v2408 = vunpack.c.h.b16 %v706
        %v2409 = vunpack.c.l.b16 %v707
        %v2410 = vunpack.c.h.b16 %v707
        %v2411 = vunpack.c.l.b16 %v708
        %v2412 = vunpack.c.h.b16 %v708
        %v2413 = vunpack.c.l.b16 %v709
        %v2414 = vunpack.c.h.b16 %v709
        %v2415 = vunpack.c.l.b16 %v710
        %v2416 = vunpack.c.h.b16 %v710
        %v2417 = vunpack.c.l.b16 %v711
        %v2418 = vunpack.c.h.b16 %v711
        %v2419 = vunpack.c.l.b16 %v712
        %v2420 = vunpack.c.h.b16 %v712
        %v2421 = vunpack.c.l.b16 %v713
        %v2422 = vunpack.c.h.b16 %v713
        %v2423 = vunpack.c.l.b16 %v714
        %v2424 = vunpack.c.h.b16 %v714
        %v2425 = vunpack.c.l.b16 %v715
        %v2426 = vunpack.c.h.b16 %v715
        %v2427 = vunpack.c.l.b16 %v716
        %v2428 = vunpack.c.h.b16 %v716
        %v2429 = vunpack.c.l.b16 %v717
        %v2430 = vunpack.c.h.b16 %v717
        %v2431 = vunpack.c.l.b16 %v718
        %v2432 = vunpack.c.h.b16 %v718
        %v2433 = vunpack.c.l.b16 %v719
        %v2434 = vunpack.c.h.b16 %v719
        %v2435 = vunpack.c.l.b16 %v720
        %v2436 = vunpack.c.h.b16 %v720
        %v2437 = vunpack.c.l.b16 %v721
        %v2438 = vunpack.c.h.b16 %v721
        %v2439 = vunpack.c.l.b16 %v722
        %v2440 = vunpack.c.h.b16 %v722
        %v2441 = vunpack.c.l.b16 %v723
        %v2442 = vunpack.c.h.b16 %v723
        %v2443 = vunpack.c.l.b16 %v724
        %v2444 = vunpack.c.h.b16 %v724
        %v2445 = vunpack.c.l.b16 %v725
        %v2446 = vunpack.c.h.b16 %v725
        %v2447 = vunpack.c.l.b16 %v726
        %v2448 = vunpack.c.h.b16 %v726
        %v2449 = vunpack.c.l.b16 %v727
        %v2450 = vunpack.c.h.b16 %v727
        %v2451 = vunpack.c.l.b16 %v728
        %v2452 = vunpack.c.h.b16 %v728
        %v2453 = vunpack.c.l.b16 %v729
        %v2454 = vunpack.c.h.b16 %v729
        %v2455 = vunpack.c.l.b16 %v730
        %v2456 = vunpack.c.h.b16 %v730
        %v2457 = vunpack.c.l.b16 %v731
        %v2458 = vunpack.c.h.b16 %v731
        %v2459 = vunpack.c.l.b16 %v732
        %v2460 = vunpack.c.h.b16 %v732
        %v2461 = vunpack.c.l.b16 %v733
        %v2462 = vunpack.c.h.b16 %v733
        %v2463 = vunpack.c.l.b16 %v734
        %v2464 = vunpack.c.h.b16 %v734
        %v2465 = vunpack.c.l.b16 %v735
        %v2466 = vunpack.c.h.b16 %v735
        %v2467 = vunpack.c.l.b16 %v736
        %v2468 = vunpack.c.h.b16 %v736
        %v2469 = vunpack.c.l.b16 %v737
        %v2470 = vunpack.c.h.b16 %v737
        %v2471 = vunpack.c.l.b16 %v738
        %v2472 = vunpack.c.h.b16 %v738
        %v2473 = vunpack.c.l.b16 %v739
        %v2474 = vunpack.c.h.b16 %v739
        %v2475 = vunpack.c.l.b16 %v740
        %v2476 = vunpack.c.h.b16 %v740
        %v2477 = vunpack.c.l.b16 %v741
        %v2478 = vunpack.c.h.b16 %v741
        %v2479 = vunpack.c.l.b16 %v742
        %v2480 = vunpack.c.h.b16 %v742
        %v2481 = vunpack.c.l.b16 %v743
        %v2482 = vunpack.c.h.b16 %v743
        %v2483 = vunpack.c.l.b16 %v744
        %v2484 = vunpack.c.h.b16 %v744
        %v2485 = vunpack.c.l.b16 %v745
        %v2486 = vunpack.c.h.b16 %v745
        %v2487 = vunpack.c.l.b16 %v746
        %v2488 = vunpack.c.h.b16 %v746
        %v2489 = vunpack.c.l.b16 %v747
        %v2490 = vunpack.c.h.b16 %v747
        %v2491 = vunpack.c.l.b16 %v748
        %v2492 = vunpack.c.h.b16 %v748
        %v2493 = vunpack.c.l.b16 %v749
        %v2494 = vunpack.c.h.b16 %v749
        %v2495 = vunpack.c.l.b16 %v750
        %v2496 = vunpack.c.h.b16 %v750
        %v2497 = vunpack.c.l.b16 %v751
        %v2498 = vunpack.c.h.b16 %v751
        %v2499 = vunpack.c.l.b16 %v752
        %v2500 = vunpack.c.h.b16 %v752
        %v2501 = vunpack.c.l.b16 %v753
        %v2502 = vunpack.c.h.b16 %v753
        %v2503 = vunpack.c.l.b16 %v754
        %v2504 = vunpack.c.h.b16 %v754
        %v2505 = vunpack.c.l.b16 %v755
        %v2506 = vunpack.c.h.b16 %v755
        %v2507 = vunpack.c.l.b16 %v756
        %v2508 = vunpack.c.h.b16 %v756
        %v2509 = vunpack.c.l.b16 %v757
        %v2510 = vunpack.c.h.b16 %v757
        %v2511 = vunpack.c.l.b16 %v758
        %v2512 = vunpack.c.h.b16 %v758
        %v2513 = vunpack.c.l.b16 %v759
        %v2514 = vunpack.c.h.b16 %v759
        %v2515 = vunpack.c.l.b16 %v760
        %v2516 = vunpack.c.h.b16 %v760
        %v2517 = vunpack.c.l.b16 %v761
        %v2518 = vunpack.c.h.b16 %v761
        %v2519 = vunpack.c.l.b16 %v762
        %v2520 = vunpack.c.h.b16 %v762
        %v2521 = vunpack.c.l.b16 %v763
        %v2522 = vunpack.c.h.b16 %v763
        %v2523 = vunpack.c.l.b16 %v764
        %v2524 = vunpack.c.h.b16 %v764
        %v2525 = vunpack.c.l.b16 %v765
        %v2526 = vunpack.c.h.b16 %v765
        %v2527 = vunpack.c.l.b16 %v766
        %v2528 = vunpack.c.h.b16 %v766
        %v2529 = vunpack.c.l.b16 %v767
        %v2530 = vunpack.c.h.b16 %v767
        %v2531 = vunpack.c.l.b16 %v768
        %v2532 = vunpack.c.h.b16 %v768
        %v2533 = vunpack.c.l.b16 %v769
        %v2534 = vunpack.c.h.b16 %v769
        %v2535 = vunpack.c.l.b16 %v770
        %v2536 = vunpack.c.h.b16 %v770
        %v2537 = vunpack.c.l.b16 %v771
        %v2538 = vunpack.c.h.b16 %v771
        %v2539 = vunpack.c.l.b16 %v772
        %v2540 = vunpack.c.h.b16 %v772
        %v2541 = vunpack.c.l.b16 %v773
        %v2542 = vunpack.c.h.b16 %v773
        %v2543 = vunpack.c.l.b16 %v774
        %v2544 = vunpack.c.h.b16 %v774
        %v2545 = vunpack.c.l.b16 %v775
        %v2546 = vunpack.c.h.b16 %v775
        %v2547 = vunpack.c.l.b16 %v776
        %v2548 = vunpack.c.h.b16 %v776
        %v2549 = vunpack.c.l.b16 %v777
        %v2550 = vunpack.c.h.b16 %v777
        %v2551 = vunpack.c.l.b16 %v778
        %v2552 = vunpack.c.h.b16 %v778
        %v2553 = vunpack.c.l.b16 %v779
        %v2554 = vunpack.c.h.b16 %v779
        %v2555 = vunpack.c.l.b16 %v780
        %v2556 = vunpack.c.h.b16 %v780
        %v2557 = vunpack.c.l.b16 %v781
        %v2558 = vunpack.c.h.b16 %v781
        %v2559 = vunpack.c.l.b16 %v782
        %v2560 = vunpack.c.h.b16 %v782
        %v2561 = vunpack.c.l.b16 %v783
        %v2562 = vunpack.c.h.b16 %v783
        %v2563 = vunpack.c.l.b16 %v784
        %v2564 = vunpack.c.h.b16 %v784
        %v2565 = vunpack.c.l.b16 %v785
        %v2566 = vunpack.c.h.b16 %v785
        %v2567 = vunpack.c.l.b16 %v786
        %v2568 = vunpack.c.h.b16 %v786
        %v2569 = vunpack.c.l.b16 %v787
        %v2570 = vunpack.c.h.b16 %v787
        %v2571 = vunpack.c.l.b16 %v788
        %v2572 = vunpack.c.h.b16 %v788
        %v2573 = vunpack.c.l.b16 %v789
        %v2574 = vunpack.c.h.b16 %v789
        %v2575 = vunpack.c.l.b16 %v790
        %v2576 = vunpack.c.h.b16 %v790
        %v2577 = vunpack.c.l.b16 %v791
        %v2578 = vunpack.c.h.b16 %v791
        %v2579 = vunpack.c.l.b16 %v792
        %v2580 = vunpack.c.h.b16 %v792
        %v2581 = vunpack.c.l.b16 %v793
        %v2582 = vunpack.c.h.b16 %v793
        %v2583 = vunpack.c.l.b16 %v794
        %v2584 = vunpack.c.h.b16 %v794
        %v2585 = vunpack.c.l.b16 %v795
        %v2586 = vunpack.c.h.b16 %v795
        %v2587 = vunpack.c.l.b16 %v796
        %v2588 = vunpack.c.h.b16 %v796
        %v2589 = vunpack.c.l.b16 %v797
        %v2590 = vunpack.c.h.b16 %v797
        %v2591 = vunpack.c.l.b16 %v798
        %v2592 = vunpack.c.h.b16 %v798
        %v2593 = vunpack.c.l.b16 %v799
        %v2594 = vunpack.c.h.b16 %v799
        %v2595 = vunpack.c.l.b16 %v800
        %v2596 = vunpack.c.h.b16 %v800
        %v2597 = vunpack.c.l.b16 %v801
        %v2598 = vunpack.c.h.b16 %v801
        %v2599 = vunpack.c.l.b16 %v802
        %v2600 = vunpack.c.h.b16 %v802
        %v2601 = vunpack.c.l.b16 %v803
        %v2602 = vunpack.c.h.b16 %v803
        %v2603 = vunpack.c.l.b16 %v804
        %v2604 = vunpack.c.h.b16 %v804
        %v2605 = vunpack.c.l.b16 %v805
        %v2606 = vunpack.c.h.b16 %v805
        %v2607 = vunpack.c.l.b16 %v806
        %v2608 = vunpack.c.h.b16 %v806
        %v2609 = vunpack.c.l.b16 %v807
        %v2610 = vunpack.c.h.b16 %v807
        %v2611 = vunpack.c.l.b16 %v808
        %v2612 = vunpack.c.h.b16 %v808
        %v2613 = vunpack.c.l.b16 %v809
        %v2614 = vunpack.c.h.b16 %v809
        %v2615 = vunpack.c.l.b16 %v810
        %v2616 = vunpack.c.h.b16 %v810
        %v2617 = vunpack.c.l.b16 %v811
        %v2618 = vunpack.c.h.b16 %v811
        %v2619 = vunpack.c.l.b16 %v812
        %v2620 = vunpack.c.h.b16 %v812
        %v2621 = vunpack.c.l.b16 %v813
        %v2622 = vunpack.c.h.b16 %v813
        %v2623 = vunpack.c.l.b16 %v814
        %v2624 = vunpack.c.h.b16 %v814
        %v2625 = vunpack.c.l.b16 %v815
        %v2626 = vunpack.c.h.b16 %v815
        %v2627 = vunpack.c.l.b16 %v816
        %v2628 = vunpack.c.h.b16 %v816
        %v2629 = vunpack.c.l.b16 %v817
        %v2630 = vunpack.c.h.b16 %v817
        %v2631 = vunpack.c.l.b16 %v818
        %v2632 = vunpack.c.h.b16 %v818
        %v2633 = vunpack.c.l.b16 %v819
        %v2634 = vunpack.c.h.b16 %v819
        %v2635 = vunpack.c.l.b16 %v820
        %v2636 = vunpack.c.h.b16 %v820
        %v2637 = vunpack.c.l.b16 %v821
        %v2638 = vunpack.c.h.b16 %v821
        %v2639 = vunpack.c.l.b16 %v822
        %v2640 = vunpack.c.h.b16 %v822
        %v2641 = vunpack.c.l.b16 %v823
        %v2642 = vunpack.c.h.b16 %v823
        %v2643 = vunpack.c.l.b16 %v824
        %v2644 = vunpack.c.h.b16 %v824
        %v2645 = vunpack.c.l.b16 %v825
        %v2646 = vunpack.c.h.b16 %v825
        %v2647 = vunpack.c.l.b16 %v826
        %v2648 = vunpack.c.h.b16 %v826
        %v2649 = vunpack.c.l.b16 %v827
        %v2650 = vunpack.c.h.b16 %v827
        %v2651 = vunpack.c.l.b16 %v828
        %v2652 = vunpack.c.h.b16 %v828
        %v2653 = vunpack.c.l.b16 %v829
        %v2654 = vunpack.c.h.b16 %v829
        %v2655 = vunpack.c.l.b16 %v830
        %v2656 = vunpack.c.h.b16 %v830
        %v2657 = vunpack.c.l.b16 %v831
        %v2658 = vunpack.c.h.b16 %v831
        %v2659 = vunpack.c.l.b16 %v832
        %v2660 = vunpack.c.h.b16 %v832
        %v2661 = vunpack.c.l.b16 %v833
        %v2662 = vunpack.c.h.b16 %v833
        %v2663 = vunpack.c.l.b16 %v834
        %v2664 = vunpack.c.h.b16 %v834
        %v2665 = vunpack.c.l.b16 %v835
        %v2666 = vunpack.c.h.b16 %v835
        %v2667 = vunpack.c.l.b16 %v836
        %v2668 = vunpack.c.h.b16 %v836
        %v2669 = vunpack.c.l.b16 %v837
        %v2670 = vunpack.c.h.b16 %v837
        %v2671 = vunpack.c.l.b16 %v838
        %v2672 = vunpack.c.h.b16 %v838
        %v2673 = vunpack.c.l.b16 %v839
        %v2674 = vunpack.c.h.b16 %v839
        %v2675 = vunpack.c.l.b16 %v840
        %v2676 = vunpack.c.h.b16 %v840
        %v2677 = vunpack.c.l.b16 %v841
        %v2678 = vunpack.c.h.b16 %v841
        %v2679 = vunpack.c.l.b16 %v842
        %v2680 = vunpack.c.h.b16 %v842
        %v2681 = vunpack.c.l.b16 %v843
        %v2682 = vunpack.c.h.b16 %v843
        %v2683 = vunpack.c.l.b16 %v844
        %v2684 = vunpack.c.h.b16 %v844
        %v2685 = vunpack.c.l.b16 %v845
        %v2686 = vunpack.c.h.b16 %v845
        %v2687 = vunpack.c.l.b16 %v846
        %v2688 = vunpack.c.h.b16 %v846
        %v2689 = vunpack.c.l.b16 %v847
        %v2690 = vunpack.c.h.b16 %v847
        %v2691 = vunpack.c.l.b16 %v848
        %v2692 = vunpack.c.h.b16 %v848
        %v2693 = vunpack.c.l.b16 %v849
        %v2694 = vunpack.c.h.b16 %v849
        %v2695 = vunpack.c.l.b16 %v850
        %v2696 = vunpack.c.h.b16 %v850
        %v2697 = vunpack.c.l.b16 %v851
        %v2698 = vunpack.c.h.b16 %v851
        %v2699 = vunpack.c.l.b16 %v852
        %v2700 = vunpack.c.h.b16 %v852
        %v2701 = vunpack.c.l.b16 %v853
        %v2702 = vunpack.c.h.b16 %v853
        %v2703 = vunpack.c.l.b16 %v854
        %v2704 = vunpack.c.h.b16 %v854
        %v2705 = vunpack.c.l.b16 %v855
        %v2706 = vunpack.c.h.b16 %v855
        %v2707 = vunpack.c.l.b16 %v856
        %v2708 = vunpack.c.h.b16 %v856
        %v2709 = vunpack.c.l.b16 %v857
        %v2710 = vunpack.c.h.b16 %v857
        %v2711 = vunpack.c.l.b16 %v858
        %v2712 = vunpack.c.h.b16 %v858
        %v2713 = vunpack.c.l.b16 %v859
        %v2714 = vunpack.c.h.b16 %v859
        %v2715 = vunpack.c.l.b16 %v860
        %v2716 = vunpack.c.h.b16 %v860
        %v2717 = vunpack.c.l.b16 %v861
        %v2718 = vunpack.c.h.b16 %v861
        %v2719 = vunpack.c.l.b16 %v862
        %v2720 = vunpack.c.h.b16 %v862
        %v2721 = vunpack.c.l.b16 %v863
        %v2722 = vunpack.c.h.b16 %v863
        %v2723 = vunpack.c.l.b16 %v864
        %v2724 = vunpack.c.h.b16 %v864
        %v2725 = vunpack.c.l.b16 %v865
        %v2726 = vunpack.c.h.b16 %v865
        %v2727 = vunpack.c.l.b16 %v866
        %v2728 = vunpack.c.h.b16 %v866
        %v2729 = vunpack.c.l.b16 %v867
        %v2730 = vunpack.c.h.b16 %v867
        %v2731 = vunpack.c.l.b16 %v868
        %v2732 = vunpack.c.h.b16 %v868
        %v2733 = vunpack.c.l.b16 %v869
        %v2734 = vunpack.c.h.b16 %v869
        %v2735 = vunpack.c.l.b16 %v870
        %v2736 = vunpack.c.h.b16 %v870
        %v2737 = vunpack.c.l.b16 %v871
        %v2738 = vunpack.c.h.b16 %v871
        %v2739 = vunpack.c.l.b16 %v872
        %v2740 = vunpack.c.h.b16 %v872
        %v2741 = vunpack.c.l.b16 %v873
        %v2742 = vunpack.c.h.b16 %v873
        %v2743 = vunpack.c.l.b16 %v874
        %v2744 = vunpack.c.h.b16 %v874
        %v2745 = vunpack.c.l.b16 %v875
        %v2746 = vunpack.c.h.b16 %v875
        %v2747 = vunpack.c.l.b16 %v876
        %v2748 = vunpack.c.h.b16 %v876
        %v2749 = vunpack.c.l.b16 %v877
        %v2750 = vunpack.c.h.b16 %v877
        %v2751 = vunpack.c.l.b16 %v878
        %v2752 = vunpack.c.h.b16 %v878
        %v2753 = vunpack.c.l.b16 %v879
        %v2754 = vunpack.c.h.b16 %v879
        %v2755 = vunpack.c.l.b16 %v880
        %v2756 = vunpack.c.h.b16 %v880
        %v2757 = vunpack.c.l.b16 %v881
        %v2758 = vunpack.c.h.b16 %v881
        %v2759 = vunpack.c.l.b16 %v882
        %v2760 = vunpack.c.h.b16 %v882
        %v2761 = vunpack.c.l.b16 %v883
        %v2762 = vunpack.c.h.b16 %v883
        %v2763 = vunpack.c.l.b16 %v884
        %v2764 = vunpack.c.h.b16 %v884
        %v2765 = vunpack.c.l.b16 %v885
        %v2766 = vunpack.c.h.b16 %v885
        %v2767 = vunpack.c.l.b16 %v886
        %v2768 = vunpack.c.h.b16 %v886
        %v2769 = vunpack.c.l.b16 %v887
        %v2770 = vunpack.c.h.b16 %v887
        %v2771 = vunpack.c.l.b16 %v888
        %v2772 = vunpack.c.h.b16 %v888
        %v2773 = vunpack.c.l.b16 %v889
        %v2774 = vunpack.c.h.b16 %v889
        %v2775 = vunpack.c.l.b16 %v890
        %v2776 = vunpack.c.h.b16 %v890
        %v2777 = vunpack.c.l.b16 %v891
        %v2778 = vunpack.c.h.b16 %v891
        %v2779 = vunpack.c.l.b16 %v892
        %v2780 = vunpack.c.h.b16 %v892
        %v2781 = vunpack.c.l.b16 %v893
        %v2782 = vunpack.c.h.b16 %v893
        %v2783 = vunpack.c.l.b16 %v894
        %v2784 = vunpack.c.h.b16 %v894
        %v2785 = vunpack.c.l.b16 %v895
        %v2786 = vunpack.c.h.b16 %v895
        %v2787 = vunpack.c.l.b16 %v896
        %v2788 = vunpack.c.h.b16 %v896
        %v2789 = vunpack.c.l.b16 %v897
        %v2790 = vunpack.c.h.b16 %v897
        %v2791 = vunpack.c.l.b16 %v898
        %v2792 = vunpack.c.h.b16 %v898
        %v2793 = vunpack.c.l.b16 %v899
        %v2794 = vunpack.c.h.b16 %v899
        %v2795 = vunpack.c.l.b16 %v900
        %v2796 = vunpack.c.h.b16 %v900
        %v2797 = vunpack.c.l.b16 %v901
        %v2798 = vunpack.c.h.b16 %v901
        %v2799 = vunpack.c.l.b16 %v902
        %v2800 = vunpack.c.h.b16 %v902
        %v2801 = vunpack.c.l.b16 %v903
        %v2802 = vunpack.c.h.b16 %v903
        %v2803 = vunpack.c.l.b16 %v904
        %v2804 = vunpack.c.h.b16 %v904
        %v2805 = vunpack.c.l.b16 %v905
        %v2806 = vunpack.c.h.b16 %v905
        %v2807 = vunpack.c.l.b16 %v906
        %v2808 = vunpack.c.h.b16 %v906
        %v2809 = vunpack.c.l.b16 %v907
        %v2810 = vunpack.c.h.b16 %v907
        %v2811 = vunpack.c.l.b16 %v908
        %v2812 = vunpack.c.h.b16 %v908
        %v2813 = vunpack.c.l.b16 %v909
        %v2814 = vunpack.c.h.b16 %v909
        %v2815 = vunpack.c.l.b16 %v910
        %v2816 = vunpack.c.h.b16 %v910
        %v2817 = vunpack.c.l.b16 %v911
        %v2818 = vunpack.c.h.b16 %v911
        %v2819 = vunpack.c.l.b16 %v912
        %v2820 = vunpack.c.h.b16 %v912
        %v2821 = vunpack.c.l.b16 %v913
        %v2822 = vunpack.c.h.b16 %v913
        %v2823 = vunpack.c.l.b16 %v914
        %v2824 = vunpack.c.h.b16 %v914
        %v2825 = vunpack.c.l.b16 %v915
        %v2826 = vunpack.c.h.b16 %v915
        %v2827 = vunpack.c.l.b16 %v916
        %v2828 = vunpack.c.h.b16 %v916
        %v2829 = vunpack.c.l.b16 %v917
        %v2830 = vunpack.c.h.b16 %v917
        %v2831 = vunpack.c.l.b16 %v918
        %v2832 = vunpack.c.h.b16 %v918
        %v2833 = vunpack.c.l.b16 %v919
        %v2834 = vunpack.c.h.b16 %v919
        %v2835 = vunpack.c.l.b16 %v920
        %v2836 = vunpack.c.h.b16 %v920
        %v2837 = vunpack.c.l.b16 %v921
        %v2838 = vunpack.c.h.b16 %v921
        %v2839 = vunpack.c.l.b16 %v922
        %v2840 = vunpack.c.h.b16 %v922
        %v2841 = vunpack.c.l.b16 %v923
        %v2842 = vunpack.c.h.b16 %v923
        %v2843 = vunpack.c.l.b16 %v924
        %v2844 = vunpack.c.h.b16 %v924
        %v2845 = vunpack.c.l.b16 %v925
        %v2846 = vunpack.c.h.b16 %v925
        %v2847 = vunpack.c.l.b16 %v926
        %v2848 = vunpack.c.h.b16 %v926
        %v2849 = vunpack.c.l.b16 %v927
        %v2850 = vunpack.c.h.b16 %v927
        %v2851 = vunpack.c.l.b16 %v928
        %v2852 = vunpack.c.h.b16 %v928
        %v2853 = vunpack.c.l.b16 %v929
        %v2854 = vunpack.c.h.b16 %v929
        %v2855 = vunpack.c.l.b16 %v930
        %v2856 = vunpack.c.h.b16 %v930
        %v2857 = vunpack.c.l.b16 %v931
        %v2858 = vunpack.c.h.b16 %v931
        %v2859 = vunpack.c.l.b16 %v932
        %v2860 = vunpack.c.h.b16 %v932
        %v2861 = vunpack.c.l.b16 %v933
        %v2862 = vunpack.c.h.b16 %v933
        %v2863 = vunpack.c.l.b16 %v934
        %v2864 = vunpack.c.h.b16 %v934
        %v2865 = vunpack.c.l.b16 %v935
        %v2866 = vunpack.c.h.b16 %v935
        %v2867 = vunpack.c.l.b16 %v936
        %v2868 = vunpack.c.h.b16 %v936
        %v2869 = vunpack.c.l.b16 %v937
        %v2870 = vunpack.c.h.b16 %v937
        %v2871 = vunpack.c.l.b16 %v938
        %v2872 = vunpack.c.h.b16 %v938
        %v2873 = vunpack.c.l.b16 %v939
        %v2874 = vunpack.c.h.b16 %v939
        %v2875 = vunpack.c.l.b16 %v940
        %v2876 = vunpack.c.h.b16 %v940
        %v2877 = vunpack.c.l.b16 %v941
        %v2878 = vunpack.c.h.b16 %v941
        %v2879 = vunpack.c.l.b16 %v942
        %v2880 = vunpack.c.h.b16 %v942
        %v2881 = vunpack.c.l.b16 %v943
        %v2882 = vunpack.c.h.b16 %v943
        %v2883 = vunpack.c.l.b16 %v944
        %v2884 = vunpack.c.h.b16 %v944
        %v2885 = vunpack.c.l.b16 %v945
        %v2886 = vunpack.c.h.b16 %v945
        %v2887 = vunpack.c.l.b16 %v946
        %v2888 = vunpack.c.h.b16 %v946
        %v2889 = vunpack.c.l.b16 %v947
        %v2890 = vunpack.c.h.b16 %v947
        %v2891 = vunpack.c.l.b16 %v948
        %v2892 = vunpack.c.h.b16 %v948
        %v2893 = vunpack.c.l.b16 %v949
        %v2894 = vunpack.c.h.b16 %v949
        %v2895 = vunpack.c.l.b16 %v950
        %v2896 = vunpack.c.h.b16 %v950
        %v2897 = vunpack.c.l.b16 %v951
        %v2898 = vunpack.c.h.b16 %v951
        %v2899 = vunpack.c.l.b16 %v952
        %v2900 = vunpack.c.h.b16 %v952
        %v2901 = vunpack.c.l.b16 %v953
        %v2902 = vunpack.c.h.b16 %v953
        %v2903 = vunpack.c.l.b16 %v954
        %v2904 = vunpack.c.h.b16 %v954
        %v2905 = vunpack.c.l.b16 %v955
        %v2906 = vunpack.c.h.b16 %v955
        %v2907 = vunpack.c.l.b16 %v956
        %v2908 = vunpack.c.h.b16 %v956
        %v2909 = vunpack.c.l.b16 %v957
        %v2910 = vunpack.c.h.b16 %v957
        %v2911 = vunpack.c.l.b16 %v958
        %v2912 = vunpack.c.h.b16 %v958
        %v2913 = vunpack.c.l.b16 %v959
        %v2914 = vunpack.c.h.b16 %v959
        %v2915 = vunpack.c.l.b16 %v960
        %v2916 = vunpack.c.h.b16 %v960
        %v2917 = vunpack.c.l.b16 %v961
        %v2918 = vunpack.c.h.b16 %v961
        %v2919 = vunpack.c.l.b16 %v962
        %v2920 = vunpack.c.h.b16 %v962
        %v2921 = vunpack.c.l.b16 %v963
        %v2922 = vunpack.c.h.b16 %v963
        %v2923 = vunpack.c.l.b16 %v964
        %v2924 = vunpack.c.h.b16 %v964
        %v2925 = vunpack.c.l.b16 %v965
        %v2926 = vunpack.c.h.b16 %v965
        %v2927 = vunpack.c.l.b16 %v966
        %v2928 = vunpack.c.h.b16 %v966
        %v2929 = vunpack.c.l.b16 %v967
        %v2930 = vunpack.c.h.b16 %v967
        %v2931 = vunpack.c.l.b16 %v968
        %v2932 = vunpack.c.h.b16 %v968
        %v2933 = vunpack.c.l.b16 %v969
        %v2934 = vunpack.c.h.b16 %v969
        %v2935 = vunpack.c.l.b16 %v970
        %v2936 = vunpack.c.h.b16 %v970
        %v2937 = vunpack.c.l.b16 %v971
        %v2938 = vunpack.c.h.b16 %v971
        %v2939 = vunpack.c.l.b16 %v972
        %v2940 = vunpack.c.h.b16 %v972
        %v2941 = vunpack.c.l.b16 %v973
        %v2942 = vunpack.c.h.b16 %v973
        %v2943 = vunpack.c.l.b16 %v974
        %v2944 = vunpack.c.h.b16 %v974
        %v2945 = vunpack.c.l.b16 %v975
        %v2946 = vunpack.c.h.b16 %v975
        %v2947 = vunpack.c.l.b16 %v976
        %v2948 = vunpack.c.h.b16 %v976
        %v2949 = vunpack.c.l.b16 %v977
        %v2950 = vunpack.c.h.b16 %v977
        %v2951 = vunpack.c.l.b16 %v978
        %v2952 = vunpack.c.h.b16 %v978
        %v2953 = vunpack.c.l.b16 %v979
        %v2954 = vunpack.c.h.b16 %v979
        %v2955 = vunpack.c.l.b16 %v980
        %v2956 = vunpack.c.h.b16 %v980
        %v2957 = vunpack.c.l.b16 %v981
        %v2958 = vunpack.c.h.b16 %v981
        %v2959 = vunpack.c.l.b16 %v982
        %v2960 = vunpack.c.h.b16 %v982
        %v2961 = vunpack.c.l.b16 %v983
        %v2962 = vunpack.c.h.b16 %v983
        %v2963 = vunpack.c.l.b16 %v984
        %v2964 = vunpack.c.h.b16 %v984
        %v2965 = vunpack.c.l.b16 %v985
        %v2966 = vunpack.c.h.b16 %v985
        %v2967 = vunpack.c.l.b16 %v986
        %v2968 = vunpack.c.h.b16 %v986
        %v2969 = vunpack.c.l.b16 %v987
        %v2970 = vunpack.c.h.b16 %v987
        %v2971 = vunpack.c.l.b16 %v988
        %v2972 = vunpack.c.h.b16 %v988
        %v2973 = vunpack.c.l.b16 %v989
        %v2974 = vunpack.c.h.b16 %v989
        %v2975 = vunpack.c.l.b16 %v990
        %v2976 = vunpack.c.h.b16 %v990
        %v2977 = vunpack.c.l.b16 %v991
        %v2978 = vunpack.c.h.b16 %v991
        %v2979 = vunpack.c.l.b16 %v992
        %v2980 = vunpack.c.h.b16 %v992
        %v2981 = vunpack.c.l.b16 %v993
        %v2982 = vunpack.c.h.b16 %v993
        %v2983 = vunpack.c.l.b16 %v994
        %v2984 = vunpack.c.h.b16 %v994
        %v2985 = vunpack.c.l.b16 %v995
        %v2986 = vunpack.c.h.b16 %v995
        %v2987 = vunpack.c.l.b16 %v996
        %v2988 = vunpack.c.h.b16 %v996
        %v2989 = vunpack.c.l.b16 %v997
        %v2990 = vunpack.c.h.b16 %v997
        %v2991 = vunpack.c.l.b16 %v998
        %v2992 = vunpack.c.h.b16 %v998
        %v2993 = vunpack.c.l.b16 %v999
        %v2994 = vunpack.c.h.b16 %v999
        %v2995 = vunpack.c.l.b16 %v1000
        %v2996 = vunpack.c.h.b16 %v1000
        %v2997 = vunpack.c.l.b16 %v1001
        %v2998 = vunpack.c.h.b16 %v1001
        %v2999 = vunpack.c.l.b16 %v1002
        %v3000 = vunpack.c.h.b16 %v1002
        %v3001 = vunpack.c.l.b16 %v1003
        %v3002 = vunpack.c.h.b16 %v1003
        %v3003 = vunpack.c.l.b16 %v1004
        %v3004 = vunpack.c.h.b16 %v1004
        %v3005 = vunpack.c.l.b16 %v1005
        %v3006 = vunpack.c.h.b16 %v1005
        %v3007 = vunpack.c.l.b16 %v1006
        %v3008 = vunpack.c.h.b16 %v1006
        %v3009 = vunpack.c.l.b16 %v1007
        %v3010 = vunpack.c.h.b16 %v1007
        %v3011 = vunpack.c.l.b16 %v1008
        %v3012 = vunpack.c.h.b16 %v1008
        %v3013 = vunpack.c.l.b16 %v1009
        %v3014 = vunpack.c.h.b16 %v1009
        %v3015 = vunpack.c.l.b16 %v1010
        %v3016 = vunpack.c.h.b16 %v1010
        %v3017 = vunpack.c.l.b16 %v1011
        %v3018 = vunpack.c.h.b16 %v1011
        %v3019 = vunpack.c.l.b16 %v1012
        %v3020 = vunpack.c.h.b16 %v1012
        %v3021 = vunpack.c.l.b16 %v1013
        %v3022 = vunpack.c.h.b16 %v1013
        %v3023 = vunpack.c.l.b16 %v1014
        %v3024 = vunpack.c.h.b16 %v1014
        %v3025 = vunpack.c.l.b16 %v1015
        %v3026 = vunpack.c.h.b16 %v1015
        %v3027 = vunpack.c.l.b16 %v1016
        %v3028 = vunpack.c.h.b16 %v1016
        %v3029 = vunpack.c.l.b16 %v1017
        %v3030 = vunpack.c.h.b16 %v1017
        %v3031 = vunpack.c.l.b16 %v1018
        %v3032 = vunpack.c.h.b16 %v1018
        %v3033 = vunpack.c.l.b16 %v1019
        %v3034 = vunpack.c.h.b16 %v1019
        %v3035 = vunpack.c.l.b16 %v1020
        %v3036 = vunpack.c.h.b16 %v1020
        %v3037 = vunpack.c.l.b16 %v1021
        %v3038 = vunpack.c.h.b16 %v1021
        %v3039 = vunpack.c.l.b16 %v1022
        %v3040 = vunpack.c.h.b16 %v1022
        %v3041 = vunpack.c.l.b16 %v1023
        %v3042 = vunpack.c.h.b16 %v1023
        %v3043 = vunpack.c.l.b16 %v1024
        %v3044 = vunpack.c.h.b16 %v1024
        %v3045 = vunpack.c.l.b16 %v1025
        %v3046 = vunpack.c.h.b16 %v1025
        %v3047 = vunpack.c.l.b16 %v1026
        %v3048 = vunpack.c.h.b16 %v1026
        %v3049 = vunpack.c.l.b16 %v1027
        %v3050 = vunpack.c.h.b16 %v1027
        %v3051 = vunpack.c.l.b16 %v1028
        %v3052 = vunpack.c.h.b16 %v1028
        %v3053 = vunpack.c.l.b16 %v1029
        %v3054 = vunpack.c.h.b16 %v1029
        %v3055 = vunpack.c.l.b16 %v1030
        %v3056 = vunpack.c.h.b16 %v1030
        %v3057 = vunpack.c.l.b16 %v1031
        %v3058 = vunpack.c.h.b16 %v1031
        %v3059 = vunpack.c.l.b16 %v1032
        %v3060 = vunpack.c.h.b16 %v1032
        %v3061 = vunpack.c.l.b16 %v1033
        %v3062 = vunpack.c.h.b16 %v1033
        %v3063 = vunpack.c.l.b16 %v1034
        %v3064 = vunpack.c.h.b16 %v1034
        %v3065 = vunpack.c.l.b16 %v1035
        %v3066 = vunpack.c.h.b16 %v1035
        %v3067 = vunpack.c.l.b16 %v1036
        %v3068 = vunpack.c.h.b16 %v1036
        %v3069 = vunpack.c.l.b16 %v1037
        %v3070 = vunpack.c.h.b16 %v1037
        %v3071 = vunpack.c.l.b16 %v1038
        %v3072 = vunpack.c.h.b16 %v1038
        %v3073 = vunpack.c.l.b16 %v1039
        %v3074 = vunpack.c.h.b16 %v1039
        %v3075 = vunpack.c.l.b16 %v1040
        %v3076 = vunpack.c.h.b16 %v1040
        %v3077 = vunpack.c.l.b16 %v1041
        %v3078 = vunpack.c.h.b16 %v1041
        %v3079 = vunpack.c.l.b16 %v1042
        %v3080 = vunpack.c.h.b16 %v1042
        %v3081 = vunpack.c.l.b16 %v1043
        %v3082 = vunpack.c.h.b16 %v1043
        %v3083 = vunpack.c.l.b16 %v1044
        %v3084 = vunpack.c.h.b16 %v1044
        %v3085 = vunpack.c.l.b16 %v1045
        %v3086 = vunpack.c.h.b16 %v1045
        %v3087 = vunpack.c.l.b16 %v1046
        %v3088 = vunpack.c.h.b16 %v1046
        %v3089 = vunpack.c.l.b16 %v1047
        %v3090 = vunpack.c.h.b16 %v1047
        %v3091 = vunpack.c.l.b16 %v1048
        %v3092 = vunpack.c.h.b16 %v1048
        %v3093 = vunpack.c.l.b16 %v1049
        %v3094 = vunpack.c.h.b16 %v1049
        %v3095 = vunpack.c.l.b16 %v1050
        %v3096 = vunpack.c.h.b16 %v1050
        %v3097 = vunpack.c.l.b16 %v1051
        %v3098 = vunpack.c.h.b16 %v1051
        %v3099 = vunpack.c.l.b16 %v1052
        %v3100 = vunpack.c.h.b16 %v1052
        %v3101 = vunpack.c.l.b16 %v1053
        %v3102 = vunpack.c.h.b16 %v1053
        %v3103 = vunpack.c.l.b16 %v1054
        %v3104 = vunpack.c.h.b16 %v1054
        %v3105 = vunpack.c.l.b16 %v1055
        %v3106 = vunpack.c.h.b16 %v1055
        %v3107 = vunpack.c.l.b16 %v1056
        %v3108 = vunpack.c.h.b16 %v1056
        %v3109 = vunpack.c.l.b16 %v1057
        %v3110 = vunpack.c.h.b16 %v1057
        %v3111 = vunpack.c.l.b16 %v1058
        %v3112 = vunpack.c.h.b16 %v1058
        %v3113 = vunpack.c.l.b16 %v1059
        %v3114 = vunpack.c.h.b16 %v1059
        %v3115 = vunpack.c.l.b16 %v1060
        %v3116 = vunpack.c.h.b16 %v1060
        %v3117 = vunpack.c.l.b16 %v1061
        %v3118 = vunpack.c.h.b16 %v1061
        %v3119 = vunpack.c.l.b16 %v1062
        %v3120 = vunpack.c.h.b16 %v1062
        %v3121 = vunpack.c.l.b16 %v1063
        %v3122 = vunpack.c.h.b16 %v1063
        %v3123 = vunpack.c.l.b16 %v1064
        %v3124 = vunpack.c.h.b16 %v1064
        %v3125 = vunpack.c.l.b16 %v1065
        %v3126 = vunpack.c.h.b16 %v1065
        %v3127 = vunpack.c.l.b16 %v1066
        %v3128 = vunpack.c.h.b16 %v1066
        %v3129 = vunpack.c.l.b16 %v1067
        %v3130 = vunpack.c.h.b16 %v1067
        %v3131 = vunpack.c.l.b16 %v1068
        %v3132 = vunpack.c.h.b16 %v1068
        %v3133 = vunpack.c.l.b16 %v1069
        %v3134 = vunpack.c.h.b16 %v1069
        %v3135 = vunpack.c.l.b16 %v1070
        %v3136 = vunpack.c.h.b16 %v1070
        %v3137 = vunpack.c.l.b16 %v1071
        %v3138 = vunpack.c.h.b16 %v1071
        %v3139 = vunpack.c.l.b16 %v1072
        %v3140 = vunpack.c.h.b16 %v1072
        %v3141 = vunpack.c.l.b16 %v1073
        %v3142 = vunpack.c.h.b16 %v1073
        %v3143 = vunpack.c.l.b16 %v1074
        %v3144 = vunpack.c.h.b16 %v1074
        %v3145 = vunpack.c.l.b16 %v1075
        %v3146 = vunpack.c.h.b16 %v1075
        %v3147 = vunpack.c.l.b16 %v1076
        %v3148 = vunpack.c.h.b16 %v1076
        %v3149 = vunpack.c.l.b16 %v1077
        %v3150 = vunpack.c.h.b16 %v1077
        %v3151 = vunpack.c.l.b16 %v1078
        %v3152 = vunpack.c.h.b16 %v1078
        %v3153 = vunpack.c.l.b16 %v1079
        %v3154 = vunpack.c.h.b16 %v1079
        %v3155 = vunpack.c.l.b16 %v1080
        %v3156 = vunpack.c.h.b16 %v1080
        %v3157 = vunpack.c.l.b16 %v1081
        %v3158 = vunpack.c.h.b16 %v1081
        %v3159 = vunpack.c.l.b16 %v1082
        %v3160 = vunpack.c.h.b16 %v1082
        %v3161 = vunpack.c.l.b16 %v1083
        %v3162 = vunpack.c.h.b16 %v1083
        %v3163 = vunpack.c.l.b16 %v1084
        %v3164 = vunpack.c.h.b16 %v1084
        %v3165 = vunpack.c.l.b16 %v1085
        %v3166 = vunpack.c.h.b16 %v1085
        %v3167 = vunpack.c.l.b16 %v1086
        %v3168 = vunpack.c.h.b16 %v1086
        %v3169 = vunpack.c.l.b16 %v1087
        %v3170 = vunpack.c.h.b16 %v1087
        %v3171 = vunpack.c.l.b16 %v1088
        %v3172 = vunpack.c.h.b16 %v1088
        %v3173 = vunpack.c.l.b16 %v1089
        %v3174 = vunpack.c.h.b16 %v1089
        %v3175 = vunpack.c.l.b16 %v1090
        %v3176 = vunpack.c.h.b16 %v1090
        %v3177 = vunpack.c.l.b16 %v1091
        %v3178 = vunpack.c.h.b16 %v1091
        %v3179 = vunpack.c.l.b16 %v1092
        %v3180 = vunpack.c.h.b16 %v1092
        %v3181 = vpack.c.b16 %v2033, %v2029
        %v3182 = vpack.c.b16 %v2034, %v2030
        %v3183 = vpack.c.b16 %v2035, %v2031
        %v3184 = vpack.c.b16 %v2036, %v2032
        %v3185 = vpack.c.b16 %v2041, %v2037
        %v3186 = vpack.c.b16 %v2042, %v2038
        %v3187 = vpack.c.b16 %v2043, %v2039
        %v3188 = vpack.c.b16 %v2044, %v2040
        %v3189 = vpack.c.b16 %v2049, %v2045
        %v3190 = vpack.c.b16 %v2050, %v2046
        %v3191 = vpack.c.b16 %v2051, %v2047
        %v3192 = vpack.c.b16 %v2052, %v2048
        %v3193 = vpack.c.b16 %v2057, %v2053
        %v3194 = vpack.c.b16 %v2058, %v2054
        %v3195 = vpack.c.b16 %v2059, %v2055
        %v3196 = vpack.c.b16 %v2060, %v2056
        %v3197 = vpack.c.b16 %v2065, %v2061
        %v3198 = vpack.c.b16 %v2066, %v2062
        %v3199 = vpack.c.b16 %v2067, %v2063
        %v3200 = vpack.c.b16 %v2068, %v2064
        %v3201 = vpack.c.b16 %v2073, %v2069
        %v3202 = vpack.c.b16 %v2074, %v2070
        %v3203 = vpack.c.b16 %v2075, %v2071
        %v3204 = vpack.c.b16 %v2076, %v2072
        %v3205 = vpack.c.b16 %v2081, %v2077
        %v3206 = vpack.c.b16 %v2082, %v2078
        %v3207 = vpack.c.b16 %v2083, %v2079
        %v3208 = vpack.c.b16 %v2084, %v2080
        %v3209 = vpack.c.b16 %v2089, %v2085
        %v3210 = vpack.c.b16 %v2090, %v2086
        %v3211 = vpack.c.b16 %v2091, %v2087
        %v3212 = vpack.c.b16 %v2092, %v2088
        %v3213 = vpack.c.b16 %v2097, %v2093
        %v3214 = vpack.c.b16 %v2098, %v2094
        %v3215 = vpack.c.b16 %v2099, %v2095
        %v3216 = vpack.c.b16 %v2100, %v2096
        %v3217 = vpack.c.b16 %v2105, %v2101
        %v3218 = vpack.c.b16 %v2106, %v2102
        %v3219 = vpack.c.b16 %v2107, %v2103
        %v3220 = vpack.c.b16 %v2108, %v2104
        %v3221 = vpack.c.b16 %v2113, %v2109
        %v3222 = vpack.c.b16 %v2114, %v2110
        %v3223 = vpack.c.b16 %v2115, %v2111
        %v3224 = vpack.c.b16 %v2116, %v2112
        %v3225 = vpack.c.b16 %v2121, %v2117
        %v3226 = vpack.c.b16 %v2122, %v2118
        %v3227 = vpack.c.b16 %v2123, %v2119
        %v3228 = vpack.c.b16 %v2124, %v2120
        %v3229 = vpack.c.b16 %v2129, %v2125
        %v3230 = vpack.c.b16 %v2130, %v2126
        %v3231 = vpack.c.b16 %v2131, %v2127
        %v3232 = vpack.c.b16 %v2132, %v2128
        %v3233 = vpack.c.b16 %v2137, %v2133
        %v3234 = vpack.c.b16 %v2138, %v2134
        %v3235 = vpack.c.b16 %v2139, %v2135
        %v3236 = vpack.c.b16 %v2140, %v2136
        %v3237 = vpack.c.b16 %v2145, %v2141
        %v3238 = vpack.c.b16 %v2146, %v2142
        %v3239 = vpack.c.b16 %v2147, %v2143
        %v3240 = vpack.c.b16 %v2148, %v2144
        %v3241 = vpack.c.b16 %v2153, %v2149
        %v3242 = vpack.c.b16 %v2154, %v2150
        %v3243 = vpack.c.b16 %v2155, %v2151
        %v3244 = vpack.c.b16 %v2156, %v2152
        %v3245 = vpack.c.b16 %v2161, %v2157
        %v3246 = vpack.c.b16 %v2162, %v2158
        %v3247 = vpack.c.b16 %v2163, %v2159
        %v3248 = vpack.c.b16 %v2164, %v2160
        %v3249 = vpack.c.b16 %v2169, %v2165
        %v3250 = vpack.c.b16 %v2170, %v2166
        %v3251 = vpack.c.b16 %v2171, %v2167
        %v3252 = vpack.c.b16 %v2172, %v2168
        %v3253 = vpack.c.b16 %v2177, %v2173
        %v3254 = vpack.c.b16 %v2178, %v2174
        %v3255 = vpack.c.b16 %v2179, %v2175
        %v3256 = vpack.c.b16 %v2180, %v2176
        %v3257 = vpack.c.b16 %v2185, %v2181
        %v3258 = vpack.c.b16 %v2186, %v2182
        %v3259 = vpack.c.b16 %v2187, %v2183
        %v3260 = vpack.c.b16 %v2188, %v2184
        %v3261 = vpack.c.b16 %v2193, %v2189
        %v3262 = vpack.c.b16 %v2194, %v2190
        %v3263 = vpack.c.b16 %v2195, %v2191
        %v3264 = vpack.c.b16 %v2196, %v2192
        %v3265 = vpack.c.b16 %v2201, %v2197
        %v3266 = vpack.c.b16 %v2202, %v2198
        %v3267 = vpack.c.b16 %v2203, %v2199
        %v3268 = vpack.c.b16 %v2204, %v2200
        %v3269 = vpack.c.b16 %v2209, %v2205
        %v3270 = vpack.c.b16 %v2210, %v2206
        %v3271 = vpack.c.b16 %v2211, %v2207
        %v3272 = vpack.c.b16 %v2212, %v2208
        %v3273 = vpack.c.b16 %v2217, %v2213
        %v3274 = vpack.c.b16 %v2218, %v2214
        %v3275 = vpack.c.b16 %v2219, %v2215
        %v3276 = vpack.c.b16 %v2220, %v2216
        %v3277 = vpack.c.b16 %v2225, %v2221
        %v3278 = vpack.c.b16 %v2226, %v2222
        %v3279 = vpack.c.b16 %v2227, %v2223
        %v3280 = vpack.c.b16 %v2228, %v2224
        %v3281 = vpack.c.b16 %v2233, %v2229
        %v3282 = vpack.c.b16 %v2234, %v2230
        %v3283 = vpack.c.b16 %v2235, %v2231
        %v3284 = vpack.c.b16 %v2236, %v2232
        %v3285 = vpack.c.b16 %v2241, %v2237
        %v3286 = vpack.c.b16 %v2242, %v2238
        %v3287 = vpack.c.b16 %v2243, %v2239
        %v3288 = vpack.c.b16 %v2244, %v2240
        %v3289 = vpack.c.b16 %v2249, %v2245
        %v3290 = vpack.c.b16 %v2250, %v2246
        %v3291 = vpack.c.b16 %v2251, %v2247
        %v3292 = vpack.c.b16 %v2252, %v2248
        %v3293 = vpack.c.b16 %v2257, %v2253
        %v3294 = vpack.c.b16 %v2258, %v2254
        %v3295 = vpack.c.b16 %v2259, %v2255
        %v3296 = vpack.c.b16 %v2260, %v2256
        %v3297 = vpack.c.b16 %v2265, %v2261
        %v3298 = vpack.c.b16 %v2266, %v2262
        %v3299 = vpack.c.b16 %v2267, %v2263
        %v3300 = vpack.c.b16 %v2268, %v2264
        %v3301 = vpack.c.b16 %v2273, %v2269
        %v3302 = vpack.c.b16 %v2274, %v2270
        %v3303 = vpack.c.b16 %v2275, %v2271
        %v3304 = vpack.c.b16 %v2276, %v2272
        %v3305 = vpack.c.b16 %v2281, %v2277
        %v3306 = vpack.c.b16 %v2282, %v2278
        %v3307 = vpack.c.b16 %v2283, %v2279
        %v3308 = vpack.c.b16 %v2284, %v2280
        %v3309 = vpack.c.b16 %v2289, %v2285
        %v3310 = vpack.c.b16 %v2290, %v2286
        %v3311 = vpack.c.b16 %v2291, %v2287
        %v3312 = vpack.c.b16 %v2292, %v2288
        %v3313 = vpack.c.b16 %v2297, %v2293
        %v3314 = vpack.c.b16 %v2298, %v2294
        %v3315 = vpack.c.b16 %v2299, %v2295
        %v3316 = vpack.c.b16 %v2300, %v2296
        %v3317 = vpack.c.b16 %v2305, %v2301
        %v3318 = vpack.c.b16 %v2306, %v2302
        %v3319 = vpack.c.b16 %v2307, %v2303
        %v3320 = vpack.c.b16 %v2308, %v2304
        %v3321 = vpack.c.b16 %v2313, %v2309
        %v3322 = vpack.c.b16 %v2314, %v2310
        %v3323 = vpack.c.b16 %v2315, %v2311
        %v3324 = vpack.c.b16 %v2316, %v2312
        %v3325 = vpack.c.b16 %v2321, %v2317
        %v3326 = vpack.c.b16 %v2322, %v2318
        %v3327 = vpack.c.b16 %v2323, %v2319
        %v3328 = vpack.c.b16 %v2324, %v2320
        %v3329 = vpack.c.b16 %v2329, %v2325
        %v3330 = vpack.c.b16 %v2330, %v2326
        %v3331 = vpack.c.b16 %v2331, %v2327
        %v3332 = vpack.c.b16 %v2332, %v2328
        %v3333 = vpack.c.b16 %v2337, %v2333
        %v3334 = vpack.c.b16 %v2338, %v2334
        %v3335 = vpack.c.b16 %v2339, %v2335
        %v3336 = vpack.c.b16 %v2340, %v2336
        %v3337 = vpack.c.b16 %v2345, %v2341
        %v3338 = vpack.c.b16 %v2346, %v2342
        %v3339 = vpack.c.b16 %v2347, %v2343
        %v3340 = vpack.c.b16 %v2348, %v2344
        %v3341 = vpack.c.b16 %v2353, %v2349
        %v3342 = vpack.c.b16 %v2354, %v2350
        %v3343 = vpack.c.b16 %v2355, %v2351
        %v3344 = vpack.c.b16 %v2356, %v2352
        %v3345 = vpack.c.b16 %v2361, %v2357
        %v3346 = vpack.c.b16 %v2362, %v2358
        %v3347 = vpack.c.b16 %v2363, %v2359
        %v3348 = vpack.c.b16 %v2364, %v2360
        %v3349 = vpack.c.b16 %v2369, %v2365
        %v3350 = vpack.c.b16 %v2370, %v2366
        %v3351 = vpack.c.b16 %v2371, %v2367
        %v3352 = vpack.c.b16 %v2372, %v2368
        %v3353 = vpack.c.b16 %v2377, %v2373
        %v3354 = vpack.c.b16 %v2378, %v2374
        %v3355 = vpack.c.b16 %v2379, %v2375
        %v3356 = vpack.c.b16 %v2380, %v2376
        %v3357 = vpack.c.b16 %v2385, %v2381
        %v3358 = vpack.c.b16 %v2386, %v2382
        %v3359 = vpack.c.b16 %v2387, %v2383
        %v3360 = vpack.c.b16 %v2388, %v2384
        %v3361 = vpack.c.b16 %v2393, %v2389
        %v3362 = vpack.c.b16 %v2394, %v2390
        %v3363 = vpack.c.b16 %v2395, %v2391
        %v3364 = vpack.c.b16 %v2396, %v2392
        %v3365 = vpack.c.b16 %v2401, %v2397
        %v3366 = vpack.c.b16 %v2402, %v2398
        %v3367 = vpack.c.b16 %v2403, %v2399
        %v3368 = vpack.c.b16 %v2404, %v2400
        %v3369 = vpack.c.b16 %v2409, %v2405
        %v3370 = vpack.c.b16 %v2410, %v2406
        %v3371 = vpack.c.b16 %v2411, %v2407
        %v3372 = vpack.c.b16 %v2412, %v2408
        %v3373 = vpack.c.b16 %v2417, %v2413
        %v3374 = vpack.c.b16 %v2418, %v2414
        %v3375 = vpack.c.b16 %v2419, %v2415
        %v3376 = vpack.c.b16 %v2420, %v2416
        %v3377 = vpack.c.b16 %v2425, %v2421
        %v3378 = vpack.c.b16 %v2426, %v2422
        %v3379 = vpack.c.b16 %v2427, %v2423
        %v3380 = vpack.c.b16 %v2428, %v2424
        %v3381 = vpack.c.b16 %v2433, %v2429
        %v3382 = vpack.c.b16 %v2434, %v2430
        %v3383 = vpack.c.b16 %v2435, %v2431
        %v3384 = vpack.c.b16 %v2436, %v2432
        %v3385 = vpack.c.b16 %v2441, %v2437
        %v3386 = vpack.c.b16 %v2442, %v2438
        %v3387 = vpack.c.b16 %v2443, %v2439
        %v3388 = vpack.c.b16 %v2444, %v2440
        %v3389 = vpack.c.b16 %v2449, %v2445
        %v3390 = vpack.c.b16 %v2450, %v2446
        %v3391 = vpack.c.b16 %v2451, %v2447
        %v3392 = vpack.c.b16 %v2452, %v2448
        %v3393 = vpack.c.b16 %v2457, %v2453
        %v3394 = vpack.c.b16 %v2458, %v2454
        %v3395 = vpack.c.b16 %v2459, %v2455
        %v3396 = vpack.c.b16 %v2460, %v2456
        %v3397 = vpack.c.b16 %v2465, %v2461
        %v3398 = vpack.c.b16 %v2466, %v2462
        %v3399 = vpack.c.b16 %v2467, %v2463
        %v3400 = vpack.c.b16 %v2468, %v2464
        %v3401 = vpack.c.b16 %v2473, %v2469
        %v3402 = vpack.c.b16 %v2474, %v2470
        %v3403 = vpack.c.b16 %v2475, %v2471
        %v3404 = vpack.c.b16 %v2476, %v2472
        %v3405 = vpack.c.b16 %v2481, %v2477
        %v3406 = vpack.c.b16 %v2482, %v2478
        %v3407 = vpack.c.b16 %v2483, %v2479
        %v3408 = vpack.c.b16 %v2484, %v2480
        %v3409 = vpack.c.b16 %v2489, %v2485
        %v3410 = vpack.c.b16 %v2490, %v2486
        %v3411 = vpack.c.b16 %v2491, %v2487
        %v3412 = vpack.c.b16 %v2492, %v2488
        %v3413 = vpack.c.b16 %v2497, %v2493
        %v3414 = vpack.c.b16 %v2498, %v2494
        %v3415 = vpack.c.b16 %v2499, %v2495
        %v3416 = vpack.c.b16 %v2500, %v2496
        %v3417 = vpack.c.b16 %v2505, %v2501
        %v3418 = vpack.c.b16 %v2506, %v2502
        %v3419 = vpack.c.b16 %v2507, %v2503
        %v3420 = vpack.c.b16 %v2508, %v2504
        %v3421 = vpack.c.b16 %v2513, %v2509
        %v3422 = vpack.c.b16 %v2514, %v2510
        %v3423 = vpack.c.b16 %v2515, %v2511
        %v3424 = vpack.c.b16 %v2516, %v2512
        %v3425 = vpack.c.b16 %v2521, %v2517
        %v3426 = vpack.c.b16 %v2522, %v2518
        %v3427 = vpack.c.b16 %v2523, %v2519
        %v3428 = vpack.c.b16 %v2524, %v2520
        %v3429 = vpack.c.b16 %v2529, %v2525
        %v3430 = vpack.c.b16 %v2530, %v2526
        %v3431 = vpack.c.b16 %v2531, %v2527
        %v3432 = vpack.c.b16 %v2532, %v2528
        %v3433 = vpack.c.b16 %v2537, %v2533
        %v3434 = vpack.c.b16 %v2538, %v2534
        %v3435 = vpack.c.b16 %v2539, %v2535
        %v3436 = vpack.c.b16 %v2540, %v2536
        %v3437 = vpack.c.b16 %v2545, %v2541
        %v3438 = vpack.c.b16 %v2546, %v2542
        %v3439 = vpack.c.b16 %v2547, %v2543
        %v3440 = vpack.c.b16 %v2548, %v2544
        %v3441 = vpack.c.b16 %v2553, %v2549
        %v3442 = vpack.c.b16 %v2554, %v2550
        %v3443 = vpack.c.b16 %v2555, %v2551
        %v3444 = vpack.c.b16 %v2556, %v2552
        %v3445 = vpack.c.b16 %v2561, %v2557
        %v3446 = vpack.c.b16 %v2562, %v2558
        %v3447 = vpack.c.b16 %v2563, %v2559
        %v3448 = vpack.c.b16 %v2564, %v2560
        %v3449 = vpack.c.b16 %v2569, %v2565
        %v3450 = vpack.c.b16 %v2570, %v2566
        %v3451 = vpack.c.b16 %v2571, %v2567
        %v3452 = vpack.c.b16 %v2572, %v2568
        %v3453 = vpack.c.b16 %v2577, %v2573
        %v3454 = vpack.c.b16 %v2578, %v2574
        %v3455 = vpack.c.b16 %v2579, %v2575
        %v3456 = vpack.c.b16 %v2580, %v2576
        %v3457 = vpack.c.b16 %v2585, %v2581
        %v3458 = vpack.c.b16 %v2586, %v2582
        %v3459 = vpack.c.b16 %v2587, %v2583
        %v3460 = vpack.c.b16 %v2588, %v2584
        %v3461 = vpack.c.b16 %v2593, %v2589
        %v3462 = vpack.c.b16 %v2594, %v2590
        %v3463 = vpack.c.b16 %v2595, %v2591
        %v3464 = vpack.c.b16 %v2596, %v2592
        %v3465 = vpack.c.b16 %v2601, %v2597
        %v3466 = vpack.c.b16 %v2602, %v2598
        %v3467 = vpack.c.b16 %v2603, %v2599
        %v3468 = vpack.c.b16 %v2604, %v2600
        %v3469 = vpack.c.b16 %v2609, %v2605
        %v3470 = vpack.c.b16 %v2610, %v2606
        %v3471 = vpack.c.b16 %v2611, %v2607
        %v3472 = vpack.c.b16 %v2612, %v2608
        %v3473 = vpack.c.b16 %v2617, %v2613
        %v3474 = vpack.c.b16 %v2618, %v2614
        %v3475 = vpack.c.b16 %v2619, %v2615
        %v3476 = vpack.c.b16 %v2620, %v2616
        %v3477 = vpack.c.b16 %v2625, %v2621
        %v3478 = vpack.c.b16 %v2626, %v2622
        %v3479 = vpack.c.b16 %v2627, %v2623
        %v3480 = vpack.c.b16 %v2628, %v2624
        %v3481 = vpack.c.b16 %v2633, %v2629
        %v3482 = vpack.c.b16 %v2634, %v2630
        %v3483 = vpack.c.b16 %v2635, %v2631
        %v3484 = vpack.c.b16 %v2636, %v2632
        %v3485 = vpack.c.b16 %v2641, %v2637
        %v3486 = vpack.c.b16 %v2642, %v2638
        %v3487 = vpack.c.b16 %v2643, %v2639
        %v3488 = vpack.c.b16 %v2644, %v2640
        %v3489 = vpack.c.b16 %v2649, %v2645
        %v3490 = vpack.c.b16 %v2650, %v2646
        %v3491 = vpack.c.b16 %v2651, %v2647
        %v3492 = vpack.c.b16 %v2652, %v2648
        %v3493 = vpack.c.b16 %v2657, %v2653
        %v3494 = vpack.c.b16 %v2658, %v2654
        %v3495 = vpack.c.b16 %v2659, %v2655
        %v3496 = vpack.c.b16 %v2660, %v2656
        %v3497 = vpack.c.b16 %v2665, %v2661
        %v3498 = vpack.c.b16 %v2666, %v2662
        %v3499 = vpack.c.b16 %v2667, %v2663
        %v3500 = vpack.c.b16 %v2668, %v2664
        %v3501 = vpack.c.b16 %v2673, %v2669
        %v3502 = vpack.c.b16 %v2674, %v2670
        %v3503 = vpack.c.b16 %v2675, %v2671
        %v3504 = vpack.c.b16 %v2676, %v2672
        %v3505 = vpack.c.b16 %v2681, %v2677
        %v3506 = vpack.c.b16 %v2682, %v2678
        %v3507 = vpack.c.b16 %v2683, %v2679
        %v3508 = vpack.c.b16 %v2684, %v2680
        %v3509 = vpack.c.b16 %v2689, %v2685
        %v3510 = vpack.c.b16 %v2690, %v2686
        %v3511 = vpack.c.b16 %v2691, %v2687
        %v3512 = vpack.c.b16 %v2692, %v2688
        %v3513 = vpack.c.b16 %v2697, %v2693
        %v3514 = vpack.c.b16 %v2698, %v2694
        %v3515 = vpack.c.b16 %v2699, %v2695
        %v3516 = vpack.c.b16 %v2700, %v2696
        %v3517 = vpack.c.b16 %v2705, %v2701
        %v3518 = vpack.c.b16 %v2706, %v2702
        %v3519 = vpack.c.b16 %v2707, %v2703
        %v3520 = vpack.c.b16 %v2708, %v2704
        %v3521 = vpack.c.b16 %v2713, %v2709
        %v3522 = vpack.c.b16 %v2714, %v2710
        %v3523 = vpack.c.b16 %v2715, %v2711
        %v3524 = vpack.c.b16 %v2716, %v2712
        %v3525 = vpack.c.b16 %v2721, %v2717
        %v3526 = vpack.c.b16 %v2722, %v2718
        %v3527 = vpack.c.b16 %v2723, %v2719
        %v3528 = vpack.c.b16 %v2724, %v2720
        %v3529 = vpack.c.b16 %v2729, %v2725
        %v3530 = vpack.c.b16 %v2730, %v2726
        %v3531 = vpack.c.b16 %v2731, %v2727
        %v3532 = vpack.c.b16 %v2732, %v2728
        %v3533 = vpack.c.b16 %v2737, %v2733
        %v3534 = vpack.c.b16 %v2738, %v2734
        %v3535 = vpack.c.b16 %v2739, %v2735
        %v3536 = vpack.c.b16 %v2740, %v2736
        %v3537 = vpack.c.b16 %v2745, %v2741
        %v3538 = vpack.c.b16 %v2746, %v2742
        %v3539 = vpack.c.b16 %v2747, %v2743
        %v3540 = vpack.c.b16 %v2748, %v2744
        %v3541 = vpack.c.b16 %v2753, %v2749
        %v3542 = vpack.c.b16 %v2754, %v2750
        %v3543 = vpack.c.b16 %v2755, %v2751
        %v3544 = vpack.c.b16 %v2756, %v2752
        %v3545 = vpack.c.b16 %v2761, %v2757
        %v3546 = vpack.c.b16 %v2762, %v2758
        %v3547 = vpack.c.b16 %v2763, %v2759
        %v3548 = vpack.c.b16 %v2764, %v2760
        %v3549 = vpack.c.b16 %v2769, %v2765
        %v3550 = vpack.c.b16 %v2770, %v2766
        %v3551 = vpack.c.b16 %v2771, %v2767
        %v3552 = vpack.c.b16 %v2772, %v2768
        %v3553 = vpack.c.b16 %v2777, %v2773
        %v3554 = vpack.c.b16 %v2778, %v2774
        %v3555 = vpack.c.b16 %v2779, %v2775
        %v3556 = vpack.c.b16 %v2780, %v2776
        %v3557 = vpack.c.b16 %v2785, %v2781
        %v3558 = vpack.c.b16 %v2786, %v2782
        %v3559 = vpack.c.b16 %v2787, %v2783
        %v3560 = vpack.c.b16 %v2788, %v2784
        %v3561 = vpack.c.b16 %v2793, %v2789
        %v3562 = vpack.c.b16 %v2794, %v2790
        %v3563 = vpack.c.b16 %v2795, %v2791
        %v3564 = vpack.c.b16 %v2796, %v2792
        %v3565 = vpack.c.b16 %v2801, %v2797
        %v3566 = vpack.c.b16 %v2802, %v2798
        %v3567 = vpack.c.b16 %v2803, %v2799
        %v3568 = vpack.c.b16 %v2804, %v2800
        %v3569 = vpack.c.b16 %v2809, %v2805
        %v3570 = vpack.c.b16 %v2810, %v2806
        %v3571 = vpack.c.b16 %v2811, %v2807
        %v3572 = vpack.c.b16 %v2812, %v2808
        %v3573 = vpack.c.b16 %v2817, %v2813
        %v3574 = vpack.c.b16 %v2818, %v2814
        %v3575 = vpack.c.b16 %v2819, %v2815
        %v3576 = vpack.c.b16 %v2820, %v2816
        %v3577 = vpack.c.b16 %v2825, %v2821
        %v3578 = vpack.c.b16 %v2826, %v2822
        %v3579 = vpack.c.b16 %v2827, %v2823
        %v3580 = vpack.c.b16 %v2828, %v2824
        %v3581 = vpack.c.b16 %v2833, %v2829
        %v3582 = vpack.c.b16 %v2834, %v2830
        %v3583 = vpack.c.b16 %v2835, %v2831
        %v3584 = vpack.c.b16 %v2836, %v2832
        %v3585 = vpack.c.b16 %v2841, %v2837
        %v3586 = vpack.c.b16 %v2842, %v2838
        %v3587 = vpack.c.b16 %v2843, %v2839
        %v3588 = vpack.c.b16 %v2844, %v2840
        %v3589 = vpack.c.b16 %v2849, %v2845
        %v3590 = vpack.c.b16 %v2850, %v2846
        %v3591 = vpack.c.b16 %v2851, %v2847
        %v3592 = vpack.c.b16 %v2852, %v2848
        %v3593 = vpack.c.b16 %v2857, %v2853
        %v3594 = vpack.c.b16 %v2858, %v2854
        %v3595 = vpack.c.b16 %v2859, %v2855
        %v3596 = vpack.c.b16 %v2860, %v2856
        %v3597 = vpack.c.b16 %v2865, %v2861
        %v3598 = vpack.c.b16 %v2866, %v2862
        %v3599 = vpack.c.b16 %v2867, %v2863
        %v3600 = vpack.c.b16 %v2868, %v2864
        %v3601 = vpack.c.b16 %v2873, %v2869
        %v3602 = vpack.c.b16 %v2874, %v2870
        %v3603 = vpack.c.b16 %v2875, %v2871
        %v3604 = vpack.c.b16 %v2876, %v2872
        %v3605 = vpack.c.b16 %v2881, %v2877
        %v3606 = vpack.c.b16 %v2882, %v2878
        %v3607 = vpack.c.b16 %v2883, %v2879
        %v3608 = vpack.c.b16 %v2884, %v2880
        %v3609 = vpack.c.b16 %v2889, %v2885
        %v3610 = vpack.c.b16 %v2890, %v2886
        %v3611 = vpack.c.b16 %v2891, %v2887
        %v3612 = vpack.c.b16 %v2892, %v2888
        %v3613 = vpack.c.b16 %v2897, %v2893
        %v3614 = vpack.c.b16 %v2898, %v2894
        %v3615 = vpack.c.b16 %v2899, %v2895
        %v3616 = vpack.c.b16 %v2900, %v2896
        %v3617 = vpack.c.b16 %v2905, %v2901
        %v3618 = vpack.c.b16 %v2906, %v2902
        %v3619 = vpack.c.b16 %v2907, %v2903
        %v3620 = vpack.c.b16 %v2908, %v2904
        %v3621 = vpack.c.b16 %v2913, %v2909
        %v3622 = vpack.c.b16 %v2914, %v2910
        %v3623 = vpack.c.b16 %v2915, %v2911
        %v3624 = vpack.c.b16 %v2916, %v2912
        %v3625 = vpack.c.b16 %v2921, %v2917
        %v3626 = vpack.c.b16 %v2922, %v2918
        %v3627 = vpack.c.b16 %v2923, %v2919
        %v3628 = vpack.c.b16 %v2924, %v2920
        %v3629 = vpack.c.b16 %v2929, %v2925
        %v3630 = vpack.c.b16 %v2930, %v2926
        %v3631 = vpack.c.b16 %v2931, %v2927
        %v3632 = vpack.c.b16 %v2932, %v2928
        %v3633 = vpack.c.b16 %v2937, %v2933
        %v3634 = vpack.c.b16 %v2938, %v2934
        %v3635 = vpack.c.b16 %v2939, %v2935
        %v3636 = vpack.c.b16 %v2940, %v2936
        %v3637 = vpack.c.b16 %v2945, %v2941
        %v3638 = vpack.c.b16 %v2946, %v2942
        %v3639 = vpack.c.b16 %v2947, %v2943
        %v3640 = vpack.c.b16 %v2948, %v2944
        %v3641 = vpack.c.b16 %v2953, %v2949
        %v3642 = vpack.c.b16 %v2954, %v2950
        %v3643 = vpack.c.b16 %v2955, %v2951
        %v3644 = vpack.c.b16 %v2956, %v2952
        %v3645 = vpack.c.b16 %v2961, %v2957
        %v3646 = vpack.c.b16 %v2962, %v2958
        %v3647 = vpack.c.b16 %v2963, %v2959
        %v3648 = vpack.c.b16 %v2964, %v2960
        %v3649 = vpack.c.b16 %v2969, %v2965
        %v3650 = vpack.c.b16 %v2970, %v2966
        %v3651 = vpack.c.b16 %v2971, %v2967
        %v3652 = vpack.c.b16 %v2972, %v2968
        %v3653 = vpack.c.b16 %v2977, %v2973
        %v3654 = vpack.c.b16 %v2978, %v2974
        %v3655 = vpack.c.b16 %v2979, %v2975
        %v3656 = vpack.c.b16 %v2980, %v2976
        %v3657 = vpack.c.b16 %v2985, %v2981
        %v3658 = vpack.c.b16 %v2986, %v2982
        %v3659 = vpack.c.b16 %v2987, %v2983
        %v3660 = vpack.c.b16 %v2988, %v2984
        %v3661 = vpack.c.b16 %v2993, %v2989
        %v3662 = vpack.c.b16 %v2994, %v2990
        %v3663 = vpack.c.b16 %v2995, %v2991
        %v3664 = vpack.c.b16 %v2996, %v2992
        %v3665 = vpack.c.b16 %v3001, %v2997
        %v3666 = vpack.c.b16 %v3002, %v2998
        %v3667 = vpack.c.b16 %v3003, %v2999
        %v3668 = vpack.c.b16 %v3004, %v3000
        %v3669 = vpack.c.b16 %v3009, %v3005
        %v3670 = vpack.c.b16 %v3010, %v3006
        %v3671 = vpack.c.b16 %v3011, %v3007
        %v3672 = vpack.c.b16 %v3012, %v3008
        %v3673 = vpack.c.b16 %v3017, %v3013
        %v3674 = vpack.c.b16 %v3018, %v3014
        %v3675 = vpack.c.b16 %v3019, %v3015
        %v3676 = vpack.c.b16 %v3020, %v3016
        %v3677 = vpack.c.b16 %v3025, %v3021
        %v3678 = vpack.c.b16 %v3026, %v3022
        %v3679 = vpack.c.b16 %v3027, %v3023
        %v3680 = vpack.c.b16 %v3028, %v3024
        %v3681 = vpack.c.b16 %v3033, %v3029
        %v3682 = vpack.c.b16 %v3034, %v3030
        %v3683 = vpack.c.b16 %v3035, %v3031
        %v3684 = vpack.c.b16 %v3036, %v3032
        %v3685 = vpack.c.b16 %v3041, %v3037
        %v3686 = vpack.c.b16 %v3042, %v3038
        %v3687 = vpack.c.b16 %v3043, %v3039
        %v3688 = vpack.c.b16 %v3044, %v3040
        %v3689 = vpack.c.b16 %v3049, %v3045
        %v3690 = vpack.c.b16 %v3050, %v3046
        %v3691 = vpack.c.b16 %v3051, %v3047
        %v3692 = vpack.c.b16 %v3052, %v3048
        %v3693 = vpack.c.b16 %v3057, %v3053
        %v3694 = vpack.c.b16 %v3058, %v3054
        %v3695 = vpack.c.b16 %v3059, %v3055
        %v3696 = vpack.c.b16 %v3060, %v3056
        %v3697 = vpack.c.b16 %v3065, %v3061
        %v3698 = vpack.c.b16 %v3066, %v3062
        %v3699 = vpack.c.b16 %v3067, %v3063
        %v3700 = vpack.c.b16 %v3068, %v3064
        %v3701 = vpack.c.b16 %v3073, %v3069
        %v3702 = vpack.c.b16 %v3074, %v3070
        %v3703 = vpack.c.b16 %v3075, %v3071
        %v3704 = vpack.c.b16 %v3076, %v3072
        %v3705 = vpack.c.b16 %v3081, %v3077
        %v3706 = vpack.c.b16 %v3082, %v3078
        %v3707 = vpack.c.b16 %v3083, %v3079
        %v3708 = vpack.c.b16 %v3084, %v3080
        %v3709 = vpack.c.b16 %v3089, %v3085
        %v3710 = vpack.c.b16 %v3090, %v3086
        %v3711 = vpack.c.b16 %v3091, %v3087
        %v3712 = vpack.c.b16 %v3092, %v3088
        %v3713 = vpack.c.b16 %v3097, %v3093
        %v3714 = vpack.c.b16 %v3098, %v3094
        %v3715 = vpack.c.b16 %v3099, %v3095
        %v3716 = vpack.c.b16 %v3100, %v3096
        %v3717 = vpack.c.b16 %v3105, %v3101
        %v3718 = vpack.c.b16 %v3106, %v3102
        %v3719 = vpack.c.b16 %v3107, %v3103
        %v3720 = vpack.c.b16 %v3108, %v3104
        %v3721 = vpack.c.b16 %v3113, %v3109
        %v3722 = vpack.c.b16 %v3114, %v3110
        %v3723 = vpack.c.b16 %v3115, %v3111
        %v3724 = vpack.c.b16 %v3116, %v3112
        %v3725 = vpack.c.b16 %v3121, %v3117
        %v3726 = vpack.c.b16 %v3122, %v3118
        %v3727 = vpack.c.b16 %v3123, %v3119
        %v3728 = vpack.c.b16 %v3124, %v3120
        %v3729 = vpack.c.b16 %v3129, %v3125
        %v3730 = vpack.c.b16 %v3130, %v3126
        %v3731 = vpack.c.b16 %v3131, %v3127
        %v3732 = vpack.c.b16 %v3132, %v3128
        %v3733 = vpack.c.b16 %v3137, %v3133
        %v3734 = vpack.c.b16 %v3138, %v3134
        %v3735 = vpack.c.b16 %v3139, %v3135
        %v3736 = vpack.c.b16 %v3140, %v3136
        %v3737 = vpack.c.b16 %v3145, %v3141
        %v3738 = vpack.c.b16 %v3146, %v3142
        %v3739 = vpack.c.b16 %v3147, %v3143
        %v3740 = vpack.c.b16 %v3148, %v3144
        %v3741 = vpack.c.b16 %v3153, %v3149
        %v3742 = vpack.c.b16 %v3154, %v3150
        %v3743 = vpack.c.b16 %v3155, %v3151
        %v3744 = vpack.c.b16 %v3156, %v3152
        %v3745 = vpack.c.b16 %v3161, %v3157
        %v3746 = vpack.c.b16 %v3162, %v3158
        %v3747 = vpack.c.b16 %v3163, %v3159
        %v3748 = vpack.c.b16 %v3164, %v3160
        %v3749 = vpack.c.b16 %v3169, %v3165
        %v3750 = vpack.c.b16 %v3170, %v3166
        %v3751 = vpack.c.b16 %v3171, %v3167
        %v3752 = vpack.c.b16 %v3172, %v3168
        %v3753 = vpack.c.b16 %v3177, %v3173
        %v3754 = vpack.c.b16 %v3178, %v3174
        %v3755 = vpack.c.b16 %v3179, %v3175
        %v3756 = vpack.c.b16 %v3180, %v3176
        %4333 = vmatprep.subr.bf16.mxu0 %v3182
        %4334 = vmatpush1.bf16.msra.mxu0 %v3181
        %4335 = vmatprep.subr.bf16.mxu0 %v3186
        %4336 = vmatpush1.bf16.msra.mxu0 %v3185
        %4337 = vmatprep.subr.bf16.mxu0 %v3190
        %4338 = vmatpush1.bf16.msra.mxu0 %v3189
        %4339 = vmatprep.subr.bf16.mxu0 %v3194
        %4340 = vmatpush1.bf16.msra.mxu0 %v3193
        %4341 = vmatprep.subr.bf16.mxu0 %v3198
        %4342 = vmatpush1.bf16.msra.mxu0 %v3197
        %4343 = vmatprep.subr.bf16.mxu0 %v3202
        %4344 = vmatpush1.bf16.msra.mxu0 %v3201
        %4345 = vmatprep.subr.bf16.mxu0 %v3206
        %4346 = vmatpush1.bf16.msra.mxu0 %v3205
        %4347 = vmatprep.subr.bf16.mxu0 %v3210
        %4348 = vmatpush1.bf16.msra.mxu0 %v3209
        %4349 = vmatprep.subr.bf16.mxu0 %v3214
        %4350 = vmatpush1.bf16.msra.mxu0 %v3213
        %4351 = vmatprep.subr.bf16.mxu0 %v3218
        %4352 = vmatpush1.bf16.msra.mxu0 %v3217
        %4353 = vmatprep.subr.bf16.mxu0 %v3222
        %4354 = vmatpush1.bf16.msra.mxu0 %v3221
        %4355 = vmatprep.subr.bf16.mxu0 %v3226
        %4356 = vmatpush1.bf16.msra.mxu0 %v3225
        %4357 = vmatprep.subr.bf16.mxu0 %v3230
        %4358 = vmatpush1.bf16.msra.mxu0 %v3229
        %4359 = vmatprep.subr.bf16.mxu0 %v3234
        %4360 = vmatpush1.bf16.msra.mxu0 %v3233
        %4361 = vmatprep.subr.bf16.mxu0 %v3238
        %4362 = vmatpush1.bf16.msra.mxu0 %v3237
        %4363 = vmatprep.subr.bf16.mxu0 %v3242
        %4364 = vmatpush1.bf16.msra.mxu0 %v3241
        %4365 = vmatprep.mubr.bf16.mxu0 %v1310
        %4366 = vmatmul.mubr.bf16.gmra.mrb[0].mxu0 %v1309
        %v4367 = vpop.f32.mrb[0].mxu0
        %v4368 = vadd.f32 0.0, %v4367
        %v4369 = vpop.f32.mrb[0].mxu0
        %v4370 = vadd.f32 0.0, %v4369
        %v4371 = vpop.f32.mrb[0].mxu0
        %v4372 = vadd.f32 0.0, %v4371
        %v4373 = vpop.f32.mrb[0].mxu0
        %v4374 = vadd.f32 0.0, %v4373
        %4375 = vmatprep.mubr.bf16.mxu0 %v1328
        %4376 = vmatmul.mubr.bf16.gmra.mrb[0].mxu0 %v1327
        %v4377 = vpop.f32.mrb[0].mxu0
        %v4378 = vadd.f32 0.0, %v4377
        %v4379 = vpop.f32.mrb[0].mxu0
        %v4380 = vadd.f32 0.0, %v4379
        %v4381 = vpop.f32.mrb[0].mxu0
        %v4382 = vadd.f32 0.0, %v4381
        %v4383 = vpop.f32.mrb[0].mxu0
        %v4384 = vadd.f32 0.0, %v4383
        %4385 = vmatprep.mubr.bf16.mxu0 %v1346
        %4386 = vmatmul.mubr.bf16.gmra.mrb[0].mxu0 %v1345
        %v4387 = vpop.f32.mrb[0].mxu0
        %v4388 = vadd.f32 0.0, %v4387
        %v4389 = vpop.f32.mrb[0].mxu0
        %v4390 = vadd.f32 0.0, %v4389
        %v4391 = vpop.f32.mrb[0].mxu0
        %v4392 = vadd.f32 0.0, %v4391
        %v4393 = vpop.f32.mrb[0].mxu0
        %v4394 = vadd.f32 0.0, %v4393
        %4395 = vmatprep.mubr.bf16.mxu0 %v1364
        %4396 = vmatmul.mubr.bf16.gmra.mrb[0].mxu0 %v1363
        %v4397 = vpop.f32.mrb[0].mxu0
        %v4398 = vadd.f32 0.0, %v4397
        %v4399 = vpop.f32.mrb[0].mxu0
        %v4400 = vadd.f32 0.0, %v4399
        %v4401 = vpop.f32.mrb[0].mxu0
        %v4402 = vadd.f32 0.0, %v4401
        %v4403 = vpop.f32.mrb[0].mxu0
        %v4404 = vadd.f32 0.0, %v4403
        %4405 = vdwg.mxu0
        %4406 = vmatprep.subr.bf16.mxu0 %v3246
        %4407 = vmatpush1.bf16.msra.mxu0 %v3245
        %4408 = vmatprep.subr.bf16.mxu0 %v3250
        %4409 = vmatpush1.bf16.msra.mxu0 %v3249
        %4410 = vmatprep.subr.bf16.mxu0 %v3254
        %4411 = vmatpush1.bf16.msra.mxu0 %v3253
        %4412 = vmatprep.subr.bf16.mxu0 %v3258
        %4413 = vmatpush1.bf16.msra.mxu0 %v3257
        %4414 = vmatprep.subr.bf16.mxu0 %v3262
        %4415 = vmatpush1.bf16.msra.mxu0 %v3261
        %4416 = vmatprep.subr.bf16.mxu0 %v3266
        %4417 = vmatpush1.bf16.msra.mxu0 %v3265
        %4418 = vmatprep.subr.bf16.mxu0 %v3270
        %4419 = vmatpush1.bf16.msra.mxu0 %v3269
        %4420 = vmatprep.subr.bf16.mxu0 %v3274
        %4421 = vmatpush1.bf16.msra.mxu0 %v3273
        %4422 = vmatprep.subr.bf16.mxu0 %v3278
        %4423 = vmatpush1.bf16.msra.mxu0 %v3277
        %4424 = vmatprep.subr.bf16.mxu0 %v3282
        %4425 = vmatpush1.bf16.msra.mxu0 %v3281
        %4426 = vmatprep.subr.bf16.mxu0 %v3286
        %4427 = vmatpush1.bf16.msra.mxu0 %v3285
        %4428 = vmatprep.subr.bf16.mxu0 %v3290
        %4429 = vmatpush1.bf16.msra.mxu0 %v3289
        %4430 = vmatprep.subr.bf16.mxu0 %v3294
        %4431 = vmatpush1.bf16.msra.mxu0 %v3293
        %4432 = vmatprep.subr.bf16.mxu0 %v3298
        %4433 = vmatpush1.bf16.msra.mxu0 %v3297
        %4434 = vmatprep.subr.bf16.mxu0 %v3302
        %4435 = vmatpush1.bf16.msra.mxu0 %v3301
        %4436 = vmatprep.subr.bf16.mxu0 %v3306
        %4437 = vmatpush1.bf16.msra.mxu0 %v3305
        %4438 = vmatprep.mubr.bf16.mxu0 %v1312
        %4439 = vmatmul.mubr.bf16.gmra.mrb[0].mxu0 %v1311
        %v4440 = vpop.f32.mrb[0].mxu0
        %v4441 = vadd.f32 %v4368, %v4440
        %v4442 = vpop.f32.mrb[0].mxu0
        %v4443 = vadd.f32 %v4370, %v4442
        %v4444 = vpop.f32.mrb[0].mxu0
        %v4445 = vadd.f32 %v4372, %v4444
        %v4446 = vpop.f32.mrb[0].mxu0
        %v4447 = vadd.f32 %v4374, %v4446
        %4448 = vmatprep.mubr.bf16.mxu0 %v1330
        %4449 = vmatmul.mubr.bf16.gmra.mrb[0].mxu0 %v1329
        %v4450 = vpop.f32.mrb[0].mxu0
        %v4451 = vadd.f32 %v4378, %v4450
        %v4452 = vpop.f32.mrb[0].mxu0
        %v4453 = vadd.f32 %v4380, %v4452
        %v4454 = vpop.f32.mrb[0].mxu0
        %v4455 = vadd.f32 %v4382, %v4454
        %v4456 = vpop.f32.mrb[0].mxu0
        %v4457 = vadd.f32 %v4384, %v4456
        %4458 = vmatprep.mubr.bf16.mxu0 %v1348
        %4459 = vmatmul.mubr.bf16.gmra.mrb[0].mxu0 %v1347
        %v4460 = vpop.f32.mrb[0].mxu0
        %v4461 = vadd.f32 %v4388, %v4460
        %v4462 = vpop.f32.mrb[0].mxu0
        %v4463 = vadd.f32 %v4390, %v4462
        %v4464 = vpop.f32.mrb[0].mxu0
        %v4465 = vadd.f32 %v4392, %v4464
        %v4466 = vpop.f32.mrb[0].mxu0
        %v4467 = vadd.f32 %v4394, %v4466
        %4468 = vmatprep.mubr.bf16.mxu0 %v1366
        %4469 = vmatmul.mubr.bf16.gmra.mrb[0].mxu0 %v1365
        %v4470 = vpop.f32.mrb[0].mxu0
        %v4471 = vadd.f32 %v4398, %v4470
        %v4472 = vpop.f32.mrb[0].mxu0
        %v4473 = vadd.f32 %v4400, %v4472
        %v4474 = vpop.f32.mrb[0].mxu0
        %v4475 = vadd.f32 %v4402, %v4474
        %v4476 = vpop.f32.mrb[0].mxu0
        %v4477 = vadd.f32 %v4404, %v4476
        %4478 = vdwg.mxu0
        %4479 = vmatprep.subr.bf16.mxu0 %v3310
        %4480 = vmatpush1.bf16.msra.mxu0 %v3309
        %4481 = vmatprep.subr.bf16.mxu0 %v3314
        %4482 = vmatpush1.bf16.msra.mxu0 %v3313
        %4483 = vmatprep.subr.bf16.mxu0 %v3318
        %4484 = vmatpush1.bf16.msra.mxu0 %v3317
        %4485 = vmatprep.subr.bf16.mxu0 %v3322
        %4486 = vmatpush1.bf16.msra.mxu0 %v3321
        %4487 = vmatprep.subr.bf16.mxu0 %v3326
        %4488 = vmatpush1.bf16.msra.mxu0 %v3325
        %4489 = vmatprep.subr.bf16.mxu0 %v3330
        %4490 = vmatpush1.bf16.msra.mxu0 %v3329
        %4491 = vmatprep.subr.bf16.mxu0 %v3334
        %4492 = vmatpush1.bf16.msra.mxu0 %v3333
        %4493 = vmatprep.subr.bf16.mxu0 %v3338
        %4494 = vmatpush1.bf16.msra.mxu0 %v3337
        %4495 = vmatprep.subr.bf16.mxu0 %v3342
        %4496 = vmatpush1.bf16.msra.mxu0 %v3341
        %4497 = vmatprep.subr.bf16.mxu0 %v3346
        %4498 = vmatpush1.bf16.msra.mxu0 %v3345
        %4499 = vmatprep.subr.bf16.mxu0 %v3350
        %4500 = vmatpush1.bf16.msra.mxu0 %v3349
        %4501 = vmatprep.subr.bf16.mxu0 %v3354
        %4502 = vmatpush1.bf16.msra.mxu0 %v3353
        %4503 = vmatprep.subr.bf16.mxu0 %v3358
        %4504 = vmatpush1.bf16.msra.mxu0 %v3357
        %4505 = vmatprep.subr.bf16.mxu0 %v3362
        %4506 = vmatpush1.bf16.msra.mxu0 %v3361
        %4507 = vmatprep.subr.bf16.mxu0 %v3366
        %4508 = vmatpush1.bf16.msra.mxu0 %v3365
        %4509 = vmatprep.subr.bf16.mxu0 %v3370
        %4510 = vmatpush1.bf16.msra.mxu0 %v3369
        %4511 = vmatprep.mubr.bf16.mxu0 %v1314
        %4512 = vmatmul.mubr.bf16.gmra.mrb[0].mxu0 %v1313
        %v4513 = vpop.f32.mrb[0].mxu0
        %v4514 = vadd.f32 %v4441, %v4513
        %v4515 = vpop.f32.mrb[0].mxu0
        %v4516 = vadd.f32 %v4443, %v4515
        %v4517 = vpop.f32.mrb[0].mxu0
        %v4518 = vadd.f32 %v4445, %v4517
        %v4519 = vpop.f32.mrb[0].mxu0
        %v4520 = vadd.f32 %v4447, %v4519
        %4521 = vmatprep.mubr.bf16.mxu0 %v1332
        %4522 = vmatmul.mubr.bf16.gmra.mrb[0].mxu0 %v1331
        %v4523 = vpop.f32.mrb[0].mxu0
        %v4524 = vadd.f32 %v4451, %v4523
        %v4525 = vpop.f32.mrb[0].mxu0
        %v4526 = vadd.f32 %v4453, %v4525
        %v4527 = vpop.f32.mrb[0].mxu0
        %v4528 = vadd.f32 %v4455, %v4527
        %v4529 = vpop.f32.mrb[0].mxu0
        %v4530 = vadd.f32 %v4457, %v4529
        %4531 = vmatprep.mubr.bf16.mxu0 %v1350
        %4532 = vmatmul.mubr.bf16.gmra.mrb[0].mxu0 %v1349
        %v4533 = vpop.f32.mrb[0].mxu0
        %v4534 = vadd.f32 %v4461, %v4533
        %v4535 = vpop.f32.mrb[0].mxu0
        %v4536 = vadd.f32 %v4463, %v4535
        %v4537 = vpop.f32.mrb[0].mxu0
        %v4538 = vadd.f32 %v4465, %v4537
        %v4539 = vpop.f32.mrb[0].mxu0
        %v4540 = vadd.f32 %v4467, %v4539
        %4541 = vmatprep.mubr.bf16.mxu0 %v1368
        %4542 = vmatmul.mubr.bf16.gmra.mrb[0].mxu0 %v1367
        %v4543 = vpop.f32.mrb[0].mxu0
        %v4544 = vadd.f32 %v4471, %v4543
        %v4545 = vpop.f32.mrb[0].mxu0
        %v4546 = vadd.f32 %v4473, %v4545
        %v4547 = vpop.f32.mrb[0].mxu0
        %v4548 = vadd.f32 %v4475, %v4547
        %v4549 = vpop.f32.mrb[0].mxu0
        %v4550 = vadd.f32 %v4477, %v4549
        %4551 = vdwg.mxu0
        %4552 = vmatprep.subr.bf16.mxu0 %v3374
        %4553 = vmatpush1.bf16.msra.mxu0 %v3373
        %4554 = vmatprep.subr.bf16.mxu0 %v3378
        %4555 = vmatpush1.bf16.msra.mxu0 %v3377
        %4556 = vmatprep.subr.bf16.mxu0 %v3382
        %4557 = vmatpush1.bf16.msra.mxu0 %v3381
        %4558 = vmatprep.subr.bf16.mxu0 %v3386
        %4559 = vmatpush1.bf16.msra.mxu0 %v3385
        %4560 = vmatprep.subr.bf16.mxu0 %v3390
        %4561 = vmatpush1.bf16.msra.mxu0 %v3389
        %4562 = vmatprep.subr.bf16.mxu0 %v3394
        %4563 = vmatpush1.bf16.msra.mxu0 %v3393
        %4564 = vmatprep.subr.bf16.mxu0 %v3398
        %4565 = vmatpush1.bf16.msra.mxu0 %v3397
        %4566 = vmatprep.subr.bf16.mxu0 %v3402
        %4567 = vmatpush1.bf16.msra.mxu0 %v3401
        %4568 = vmatprep.subr.bf16.mxu0 %v3406
        %4569 = vmatpush1.bf16.msra.mxu0 %v3405
        %4570 = vmatprep.subr.bf16.mxu0 %v3410
        %4571 = vmatpush1.bf16.msra.mxu0 %v3409
        %4572 = vmatprep.subr.bf16.mxu0 %v3414
        %4573 = vmatpush1.bf16.msra.mxu0 %v3413
        %4574 = vmatprep.subr.bf16.mxu0 %v3418
        %4575 = vmatpush1.bf16.msra.mxu0 %v3417
        %4576 = vmatprep.subr.bf16.mxu0 %v3422
        %4577 = vmatpush1.bf16.msra.mxu0 %v3421
        %4578 = vmatprep.subr.bf16.mxu0 %v3426
        %4579 = vmatpush1.bf16.msra.mxu0 %v3425
        %4580 = vmatprep.subr.bf16.mxu0 %v3430
        %4581 = vmatpush1.bf16.msra.mxu0 %v3429
        %4582 = vmatprep.subr.bf16.mxu0 %v3434
        %4583 = vmatpush1.bf16.msra.mxu0 %v3433
        %4584 = vmatprep.mubr.bf16.mxu0 %v1316
        %4585 = vmatmul.mubr.bf16.gmra.mrb[0].mxu0 %v1315
        %v4586 = vpop.f32.mrb[0].mxu0
        %v4587 = vadd.f32 %v4514, %v4586
        %v4588 = vpop.f32.mrb[0].mxu0
        %v4589 = vadd.f32 %v4516, %v4588
        %v4590 = vpop.f32.mrb[0].mxu0
        %v4591 = vadd.f32 %v4518, %v4590
        %v4592 = vpop.f32.mrb[0].mxu0
        %v4593 = vadd.f32 %v4520, %v4592
        %4594 = vmatprep.mubr.bf16.mxu0 %v1334
        %4595 = vmatmul.mubr.bf16.gmra.mrb[0].mxu0 %v1333
        %v4596 = vpop.f32.mrb[0].mxu0
        %v4597 = vadd.f32 %v4524, %v4596
        %v4598 = vpop.f32.mrb[0].mxu0
        %v4599 = vadd.f32 %v4526, %v4598
        %v4600 = vpop.f32.mrb[0].mxu0
        %v4601 = vadd.f32 %v4528, %v4600
        %v4602 = vpop.f32.mrb[0].mxu0
        %v4603 = vadd.f32 %v4530, %v4602
        %4604 = vmatprep.mubr.bf16.mxu0 %v1352
        %4605 = vmatmul.mubr.bf16.gmra.mrb[0].mxu0 %v1351
        %v4606 = vpop.f32.mrb[0].mxu0
        %v4607 = vadd.f32 %v4534, %v4606
        %v4608 = vpop.f32.mrb[0].mxu0
        %v4609 = vadd.f32 %v4536, %v4608
        %v4610 = vpop.f32.mrb[0].mxu0
        %v4611 = vadd.f32 %v4538, %v4610
        %v4612 = vpop.f32.mrb[0].mxu0
        %v4613 = vadd.f32 %v4540, %v4612
        %4614 = vmatprep.mubr.bf16.mxu0 %v1370
        %4615 = vmatmul.mubr.bf16.gmra.mrb[0].mxu0 %v1369
        %v4616 = vpop.f32.mrb[0].mxu0
        %v4617 = vadd.f32 %v4544, %v4616
        %v4618 = vpop.f32.mrb[0].mxu0
        %v4619 = vadd.f32 %v4546, %v4618
        %v4620 = vpop.f32.mrb[0].mxu0
        %v4621 = vadd.f32 %v4548, %v4620
        %v4622 = vpop.f32.mrb[0].mxu0
        %v4623 = vadd.f32 %v4550, %v4622
        %4624 = vdwg.mxu0
        %4625 = vmatprep.subr.bf16.mxu0 %v3438
        %4626 = vmatpush1.bf16.msra.mxu0 %v3437
        %4627 = vmatprep.subr.bf16.mxu0 %v3442
        %4628 = vmatpush1.bf16.msra.mxu0 %v3441
        %4629 = vmatprep.subr.bf16.mxu0 %v3446
        %4630 = vmatpush1.bf16.msra.mxu0 %v3445
        %4631 = vmatprep.subr.bf16.mxu0 %v3450
        %4632 = vmatpush1.bf16.msra.mxu0 %v3449
        %4633 = vmatprep.subr.bf16.mxu0 %v3454
        %4634 = vmatpush1.bf16.msra.mxu0 %v3453
        %4635 = vmatprep.subr.bf16.mxu0 %v3458
        %4636 = vmatpush1.bf16.msra.mxu0 %v3457
        %4637 = vmatprep.subr.bf16.mxu0 %v3462
        %4638 = vmatpush1.bf16.msra.mxu0 %v3461
        %4639 = vmatprep.subr.bf16.mxu0 %v3466
        %4640 = vmatpush1.bf16.msra.mxu0 %v3465
        %4641 = vmatprep.subr.bf16.mxu0 %v3470
        %4642 = vmatpush1.bf16.msra.mxu0 %v3469
        %4643 = vmatprep.subr.bf16.mxu0 %v3474
        %4644 = vmatpush1.bf16.msra.mxu0 %v3473
        %4645 = vmatprep.subr.bf16.mxu0 %v3478
        %4646 = vmatpush1.bf16.msra.mxu0 %v3477
        %4647 = vmatprep.subr.bf16.mxu0 %v3482
        %4648 = vmatpush1.bf16.msra.mxu0 %v3481
        %4649 = vmatprep.subr.bf16.mxu0 %v3486
        %4650 = vmatpush1.bf16.msra.mxu0 %v3485
        %4651 = vmatprep.subr.bf16.mxu0 %v3490
        %4652 = vmatpush1.bf16.msra.mxu0 %v3489
        %4653 = vmatprep.subr.bf16.mxu0 %v3494
        %4654 = vmatpush1.bf16.msra.mxu0 %v3493
        %4655 = vmatprep.subr.bf16.mxu0 %v3498
        %4656 = vmatpush1.bf16.msra.mxu0 %v3497
        %4657 = vmatprep.mubr.bf16.mxu0 %v1318
        %4658 = vmatmul.mubr.bf16.gmra.mrb[0].mxu0 %v1317
        %v4659 = vpop.f32.mrb[0].mxu0
        %v4660 = vadd.f32 %v4587, %v4659
        %v4661 = vpop.f32.mrb[0].mxu0
        %v4662 = vadd.f32 %v4589, %v4661
        %v4663 = vpop.f32.mrb[0].mxu0
        %v4664 = vadd.f32 %v4591, %v4663
        %v4665 = vpop.f32.mrb[0].mxu0
        %v4666 = vadd.f32 %v4593, %v4665
        %4667 = vmatprep.mubr.bf16.mxu0 %v1336
        %4668 = vmatmul.mubr.bf16.gmra.mrb[0].mxu0 %v1335
        %v4669 = vpop.f32.mrb[0].mxu0
        %v4670 = vadd.f32 %v4597, %v4669
        %v4671 = vpop.f32.mrb[0].mxu0
        %v4672 = vadd.f32 %v4599, %v4671
        %v4673 = vpop.f32.mrb[0].mxu0
        %v4674 = vadd.f32 %v4601, %v4673
        %v4675 = vpop.f32.mrb[0].mxu0
        %v4676 = vadd.f32 %v4603, %v4675
        %4677 = vmatprep.mubr.bf16.mxu0 %v1354
        %4678 = vmatmul.mubr.bf16.gmra.mrb[0].mxu0 %v1353
        %v4679 = vpop.f32.mrb[0].mxu0
        %v4680 = vadd.f32 %v4607, %v4679
        %v4681 = vpop.f32.mrb[0].mxu0
        %v4682 = vadd.f32 %v4609, %v4681
        %v4683 = vpop.f32.mrb[0].mxu0
        %v4684 = vadd.f32 %v4611, %v4683
        %v4685 = vpop.f32.mrb[0].mxu0
        %v4686 = vadd.f32 %v4613, %v4685
        %4687 = vmatprep.mubr.bf16.mxu0 %v1372
        %4688 = vmatmul.mubr.bf16.gmra.mrb[0].mxu0 %v1371
        %v4689 = vpop.f32.mrb[0].mxu0
        %v4690 = vadd.f32 %v4617, %v4689
        %v4691 = vpop.f32.mrb[0].mxu0
        %v4692 = vadd.f32 %v4619, %v4691
        %v4693 = vpop.f32.mrb[0].mxu0
        %v4694 = vadd.f32 %v4621, %v4693
        %v4695 = vpop.f32.mrb[0].mxu0
        %v4696 = vadd.f32 %v4623, %v4695
        %4697 = vdwg.mxu0
        %4698 = vmatprep.subr.bf16.mxu0 %v3502
        %4699 = vmatpush1.bf16.msra.mxu0 %v3501
        %4700 = vmatprep.subr.bf16.mxu0 %v3506
        %4701 = vmatpush1.bf16.msra.mxu0 %v3505
        %4702 = vmatprep.subr.bf16.mxu0 %v3510
        %4703 = vmatpush1.bf16.msra.mxu0 %v3509
        %4704 = vmatprep.subr.bf16.mxu0 %v3514
        %4705 = vmatpush1.bf16.msra.mxu0 %v3513
        %4706 = vmatprep.subr.bf16.mxu0 %v3518
        %4707 = vmatpush1.bf16.msra.mxu0 %v3517
        %4708 = vmatprep.subr.bf16.mxu0 %v3522
        %4709 = vmatpush1.bf16.msra.mxu0 %v3521
        %4710 = vmatprep.subr.bf16.mxu0 %v3526
        %4711 = vmatpush1.bf16.msra.mxu0 %v3525
        %4712 = vmatprep.subr.bf16.mxu0 %v3530
        %4713 = vmatpush1.bf16.msra.mxu0 %v3529
        %4714 = vmatprep.subr.bf16.mxu0 %v3534
        %4715 = vmatpush1.bf16.msra.mxu0 %v3533
        %4716 = vmatprep.subr.bf16.mxu0 %v3538
        %4717 = vmatpush1.bf16.msra.mxu0 %v3537
        %4718 = vmatprep.subr.bf16.mxu0 %v3542
        %4719 = vmatpush1.bf16.msra.mxu0 %v3541
        %4720 = vmatprep.subr.bf16.mxu0 %v3546
        %4721 = vmatpush1.bf16.msra.mxu0 %v3545
        %4722 = vmatprep.subr.bf16.mxu0 %v3550
        %4723 = vmatpush1.bf16.msra.mxu0 %v3549
        %4724 = vmatprep.subr.bf16.mxu0 %v3554
        %4725 = vmatpush1.bf16.msra.mxu0 %v3553
        %4726 = vmatprep.subr.bf16.mxu0 %v3558
        %4727 = vmatpush1.bf16.msra.mxu0 %v3557
        %4728 = vmatprep.subr.bf16.mxu0 %v3562
        %4729 = vmatpush1.bf16.msra.mxu0 %v3561
        %4730 = vmatprep.mubr.bf16.mxu0 %v1320
        %4731 = vmatmul.mubr.bf16.gmra.mrb[0].mxu0 %v1319
        %v4732 = vpop.f32.mrb[0].mxu0
        %v4733 = vadd.f32 %v4660, %v4732
        %v4734 = vpop.f32.mrb[0].mxu0
        %v4735 = vadd.f32 %v4662, %v4734
        %v4736 = vpop.f32.mrb[0].mxu0
        %v4737 = vadd.f32 %v4664, %v4736
        %v4738 = vpop.f32.mrb[0].mxu0
        %v4739 = vadd.f32 %v4666, %v4738
        %4740 = vmatprep.mubr.bf16.mxu0 %v1338
        %4741 = vmatmul.mubr.bf16.gmra.mrb[0].mxu0 %v1337
        %v4742 = vpop.f32.mrb[0].mxu0
        %v4743 = vadd.f32 %v4670, %v4742
        %v4744 = vpop.f32.mrb[0].mxu0
        %v4745 = vadd.f32 %v4672, %v4744
        %v4746 = vpop.f32.mrb[0].mxu0
        %v4747 = vadd.f32 %v4674, %v4746
        %v4748 = vpop.f32.mrb[0].mxu0
        %v4749 = vadd.f32 %v4676, %v4748
        %4750 = vmatprep.mubr.bf16.mxu0 %v1356
        %4751 = vmatmul.mubr.bf16.gmra.mrb[0].mxu0 %v1355
        %v4752 = vpop.f32.mrb[0].mxu0
        %v4753 = vadd.f32 %v4680, %v4752
        %v4754 = vpop.f32.mrb[0].mxu0
        %v4755 = vadd.f32 %v4682, %v4754
        %v4756 = vpop.f32.mrb[0].mxu0
        %v4757 = vadd.f32 %v4684, %v4756
        %v4758 = vpop.f32.mrb[0].mxu0
        %v4759 = vadd.f32 %v4686, %v4758
        %4760 = vmatprep.mubr.bf16.mxu0 %v1374
        %4761 = vmatmul.mubr.bf16.gmra.mrb[0].mxu0 %v1373
        %v4762 = vpop.f32.mrb[0].mxu0
        %v4763 = vadd.f32 %v4690, %v4762
        %v4764 = vpop.f32.mrb[0].mxu0
        %v4765 = vadd.f32 %v4692, %v4764
        %v4766 = vpop.f32.mrb[0].mxu0
        %v4767 = vadd.f32 %v4694, %v4766
        %v4768 = vpop.f32.mrb[0].mxu0
        %v4769 = vadd.f32 %v4696, %v4768
        %4770 = vdwg.mxu0
        %4771 = vmatprep.subr.bf16.mxu0 %v3566
        %4772 = vmatpush1.bf16.msra.mxu0 %v3565
        %4773 = vmatprep.subr.bf16.mxu0 %v3570
        %4774 = vmatpush1.bf16.msra.mxu0 %v3569
        %4775 = vmatprep.subr.bf16.mxu0 %v3574
        %4776 = vmatpush1.bf16.msra.mxu0 %v3573
        %4777 = vmatprep.subr.bf16.mxu0 %v3578
        %4778 = vmatpush1.bf16.msra.mxu0 %v3577
        %4779 = vmatprep.subr.bf16.mxu0 %v3582
        %4780 = vmatpush1.bf16.msra.mxu0 %v3581
        %4781 = vmatprep.subr.bf16.mxu0 %v3586
        %4782 = vmatpush1.bf16.msra.mxu0 %v3585
        %4783 = vmatprep.subr.bf16.mxu0 %v3590
        %4784 = vmatpush1.bf16.msra.mxu0 %v3589
        %4785 = vmatprep.subr.bf16.mxu0 %v3594
        %4786 = vmatpush1.bf16.msra.mxu0 %v3593
        %4787 = vmatprep.subr.bf16.mxu0 %v3598
        %4788 = vmatpush1.bf16.msra.mxu0 %v3597
        %4789 = vmatprep.subr.bf16.mxu0 %v3602
        %4790 = vmatpush1.bf16.msra.mxu0 %v3601
        %4791 = vmatprep.subr.bf16.mxu0 %v3606
        %4792 = vmatpush1.bf16.msra.mxu0 %v3605
        %4793 = vmatprep.subr.bf16.mxu0 %v3610
        %4794 = vmatpush1.bf16.msra.mxu0 %v3609
        %4795 = vmatprep.subr.bf16.mxu0 %v3614
        %4796 = vmatpush1.bf16.msra.mxu0 %v3613
        %4797 = vmatprep.subr.bf16.mxu0 %v3618
        %4798 = vmatpush1.bf16.msra.mxu0 %v3617
        %4799 = vmatprep.subr.bf16.mxu0 %v3622
        %4800 = vmatpush1.bf16.msra.mxu0 %v3621
        %4801 = vmatprep.subr.bf16.mxu0 %v3626
        %4802 = vmatpush1.bf16.msra.mxu0 %v3625
        %4803 = vmatprep.mubr.bf16.mxu0 %v1322
        %4804 = vmatmul.mubr.bf16.gmra.mrb[0].mxu0 %v1321
        %v4805 = vpop.f32.mrb[0].mxu0
        %v4806 = vadd.f32 %v4733, %v4805
        %v4807 = vpop.f32.mrb[0].mxu0
        %v4808 = vadd.f32 %v4735, %v4807
        %v4809 = vpop.f32.mrb[0].mxu0
        %v4810 = vadd.f32 %v4737, %v4809
        %v4811 = vpop.f32.mrb[0].mxu0
        %v4812 = vadd.f32 %v4739, %v4811
        %4813 = vmatprep.mubr.bf16.mxu0 %v1340
        %4814 = vmatmul.mubr.bf16.gmra.mrb[0].mxu0 %v1339
        %v4815 = vpop.f32.mrb[0].mxu0
        %v4816 = vadd.f32 %v4743, %v4815
        %v4817 = vpop.f32.mrb[0].mxu0
        %v4818 = vadd.f32 %v4745, %v4817
        %v4819 = vpop.f32.mrb[0].mxu0
        %v4820 = vadd.f32 %v4747, %v4819
        %v4821 = vpop.f32.mrb[0].mxu0
        %v4822 = vadd.f32 %v4749, %v4821
        %4823 = vmatprep.mubr.bf16.mxu0 %v1358
        %4824 = vmatmul.mubr.bf16.gmra.mrb[0].mxu0 %v1357
        %v4825 = vpop.f32.mrb[0].mxu0
        %v4826 = vadd.f32 %v4753, %v4825
        %v4827 = vpop.f32.mrb[0].mxu0
        %v4828 = vadd.f32 %v4755, %v4827
        %v4829 = vpop.f32.mrb[0].mxu0
        %v4830 = vadd.f32 %v4757, %v4829
        %v4831 = vpop.f32.mrb[0].mxu0
        %v4832 = vadd.f32 %v4759, %v4831
        %4833 = vmatprep.mubr.bf16.mxu0 %v1376
        %4834 = vmatmul.mubr.bf16.gmra.mrb[0].mxu0 %v1375
        %v4835 = vpop.f32.mrb[0].mxu0
        %v4836 = vadd.f32 %v4763, %v4835
        %v4837 = vpop.f32.mrb[0].mxu0
        %v4838 = vadd.f32 %v4765, %v4837
        %v4839 = vpop.f32.mrb[0].mxu0
        %v4840 = vadd.f32 %v4767, %v4839
        %v4841 = vpop.f32.mrb[0].mxu0
        %v4842 = vadd.f32 %v4769, %v4841
        %4843 = vdwg.mxu0
        %4844 = vmatprep.subr.bf16.mxu0 %v3630
        %4845 = vmatpush1.bf16.msra.mxu0 %v3629
        %4846 = vmatprep.subr.bf16.mxu0 %v3634
        %4847 = vmatpush1.bf16.msra.mxu0 %v3633
        %4848 = vmatprep.subr.bf16.mxu0 %v3638
        %4849 = vmatpush1.bf16.msra.mxu0 %v3637
        %4850 = vmatprep.subr.bf16.mxu0 %v3642
        %4851 = vmatpush1.bf16.msra.mxu0 %v3641
        %4852 = vmatprep.subr.bf16.mxu0 %v3646
        %4853 = vmatpush1.bf16.msra.mxu0 %v3645
        %4854 = vmatprep.subr.bf16.mxu0 %v3650
        %4855 = vmatpush1.bf16.msra.mxu0 %v3649
        %4856 = vmatprep.subr.bf16.mxu0 %v3654
        %4857 = vmatpush1.bf16.msra.mxu0 %v3653
        %4858 = vmatprep.subr.bf16.mxu0 %v3658
        %4859 = vmatpush1.bf16.msra.mxu0 %v3657
        %4860 = vmatprep.subr.bf16.mxu0 %v3662
        %4861 = vmatpush1.bf16.msra.mxu0 %v3661
        %4862 = vmatprep.subr.bf16.mxu0 %v3666
        %4863 = vmatpush1.bf16.msra.mxu0 %v3665
        %4864 = vmatprep.subr.bf16.mxu0 %v3670
        %4865 = vmatpush1.bf16.msra.mxu0 %v3669
        %4866 = vmatprep.subr.bf16.mxu0 %v3674
        %4867 = vmatpush1.bf16.msra.mxu0 %v3673
        %4868 = vmatprep.subr.bf16.mxu0 %v3678
        %4869 = vmatpush1.bf16.msra.mxu0 %v3677
        %4870 = vmatprep.subr.bf16.mxu0 %v3682
        %4871 = vmatpush1.bf16.msra.mxu0 %v3681
        %4872 = vmatprep.subr.bf16.mxu0 %v3686
        %4873 = vmatpush1.bf16.msra.mxu0 %v3685
        %4874 = vmatprep.subr.bf16.mxu0 %v3690
        %4875 = vmatpush1.bf16.msra.mxu0 %v3689
        %4876 = vmatprep.mubr.bf16.mxu0 %v1324
        %4877 = vmatmul.mubr.bf16.gmra.mrb[0].mxu0 %v1323
        %v4878 = vpop.f32.mrb[0].mxu0
        %v4879 = vadd.f32 %v4806, %v4878
        %v4880 = vpop.f32.mrb[0].mxu0
        %v4881 = vadd.f32 %v4808, %v4880
        %v4882 = vpop.f32.mrb[0].mxu0
        %v4883 = vadd.f32 %v4810, %v4882
        %v4884 = vpop.f32.mrb[0].mxu0
        %v4885 = vadd.f32 %v4812, %v4884
        %4886 = vmatprep.mubr.bf16.mxu0 %v1342
        %4887 = vmatmul.mubr.bf16.gmra.mrb[0].mxu0 %v1341
        %v4888 = vpop.f32.mrb[0].mxu0
        %v4889 = vadd.f32 %v4816, %v4888
        %v4890 = vpop.f32.mrb[0].mxu0
        %v4891 = vadd.f32 %v4818, %v4890
        %v4892 = vpop.f32.mrb[0].mxu0
        %v4893 = vadd.f32 %v4820, %v4892
        %v4894 = vpop.f32.mrb[0].mxu0
        %v4895 = vadd.f32 %v4822, %v4894
        %4896 = vmatprep.mubr.bf16.mxu0 %v1360
        %4897 = vmatmul.mubr.bf16.gmra.mrb[0].mxu0 %v1359
        %v4898 = vpop.f32.mrb[0].mxu0
        %v4899 = vadd.f32 %v4826, %v4898
        %v4900 = vpop.f32.mrb[0].mxu0
        %v4901 = vadd.f32 %v4828, %v4900
        %v4902 = vpop.f32.mrb[0].mxu0
        %v4903 = vadd.f32 %v4830, %v4902
        %v4904 = vpop.f32.mrb[0].mxu0
        %v4905 = vadd.f32 %v4832, %v4904
        %4906 = vmatprep.mubr.bf16.mxu0 %v1378
        %4907 = vmatmul.mubr.bf16.gmra.mrb[0].mxu0 %v1377
        %v4908 = vpop.f32.mrb[0].mxu0
        %v4909 = vadd.f32 %v4836, %v4908
        %v4910 = vpop.f32.mrb[0].mxu0
        %v4911 = vadd.f32 %v4838, %v4910
        %v4912 = vpop.f32.mrb[0].mxu0
        %v4913 = vadd.f32 %v4840, %v4912
        %v4914 = vpop.f32.mrb[0].mxu0
        %v4915 = vadd.f32 %v4842, %v4914
        %4916 = vdwg.mxu0
        %4917 = vmatprep.subr.bf16.mxu0 %v3694
        %4918 = vmatpush1.bf16.msra.mxu0 %v3693
        %4919 = vmatprep.subr.bf16.mxu0 %v3698
        %4920 = vmatpush1.bf16.msra.mxu0 %v3697
        %4921 = vmatprep.subr.bf16.mxu0 %v3702
        %4922 = vmatpush1.bf16.msra.mxu0 %v3701
        %4923 = vmatprep.subr.bf16.mxu0 %v3706
        %4924 = vmatpush1.bf16.msra.mxu0 %v3705
        %4925 = vmatprep.subr.bf16.mxu0 %v3710
        %4926 = vmatpush1.bf16.msra.mxu0 %v3709
        %4927 = vmatprep.subr.bf16.mxu0 %v3714
        %4928 = vmatpush1.bf16.msra.mxu0 %v3713
        %4929 = vmatprep.subr.bf16.mxu0 %v3718
        %4930 = vmatpush1.bf16.msra.mxu0 %v3717
        %4931 = vmatprep.subr.bf16.mxu0 %v3722
        %4932 = vmatpush1.bf16.msra.mxu0 %v3721
        %4933 = vmatprep.subr.bf16.mxu0 %v3726
        %4934 = vmatpush1.bf16.msra.mxu0 %v3725
        %4935 = vmatprep.subr.bf16.mxu0 %v3730
        %4936 = vmatpush1.bf16.msra.mxu0 %v3729
        %4937 = vmatprep.subr.bf16.mxu0 %v3734
        %4938 = vmatpush1.bf16.msra.mxu0 %v3733
        %4939 = vmatprep.subr.bf16.mxu0 %v3738
        %4940 = vmatpush1.bf16.msra.mxu0 %v3737
        %4941 = vmatprep.subr.bf16.mxu0 %v3742
        %4942 = vmatpush1.bf16.msra.mxu0 %v3741
        %4943 = vmatprep.subr.bf16.mxu0 %v3746
        %4944 = vmatpush1.bf16.msra.mxu0 %v3745
        %4945 = vmatprep.subr.bf16.mxu0 %v3750
        %4946 = vmatpush1.bf16.msra.mxu0 %v3749
        %4947 = vmatprep.subr.bf16.mxu0 %v3754
        %4948 = vmatpush1.bf16.msra.mxu0 %v3753
        %4949 = vmatprep.mubr.bf16.mxu0 %v1326
        %4950 = vmatmul.mubr.bf16.gmra.mrb[0].mxu0 %v1325
        %v4951 = vpop.f32.mrb[0].mxu0
        %v4952 = vadd.f32 %v4879, %v4951
        %v4953 = vpop.f32.mrb[0].mxu0
        %v4954 = vadd.f32 %v4881, %v4953
        %v4955 = vpop.f32.mrb[0].mxu0
        %v4956 = vadd.f32 %v4883, %v4955
        %v4957 = vpop.f32.mrb[0].mxu0
        %v4958 = vadd.f32 %v4885, %v4957
        %4959 = vmatprep.mubr.bf16.mxu0 %v1344
        %4960 = vmatmul.mubr.bf16.gmra.mrb[0].mxu0 %v1343
        %v4961 = vpop.f32.mrb[0].mxu0
        %v4962 = vadd.f32 %v4889, %v4961
        %v4963 = vpop.f32.mrb[0].mxu0
        %v4964 = vadd.f32 %v4891, %v4963
        %v4965 = vpop.f32.mrb[0].mxu0
        %v4966 = vadd.f32 %v4893, %v4965
        %v4967 = vpop.f32.mrb[0].mxu0
        %v4968 = vadd.f32 %v4895, %v4967
        %4969 = vmatprep.mubr.bf16.mxu0 %v1362
        %4970 = vmatmul.mubr.bf16.gmra.mrb[0].mxu0 %v1361
        %v4971 = vpop.f32.mrb[0].mxu0
        %v4972 = vadd.f32 %v4899, %v4971
        %v4973 = vpop.f32.mrb[0].mxu0
        %v4974 = vadd.f32 %v4901, %v4973
        %v4975 = vpop.f32.mrb[0].mxu0
        %v4976 = vadd.f32 %v4903, %v4975
        %v4977 = vpop.f32.mrb[0].mxu0
        %v4978 = vadd.f32 %v4905, %v4977
        %4979 = vmatprep.mubr.bf16.mxu0 %v1380
        %4980 = vmatmul.mubr.bf16.gmra.mrb[0].mxu0 %v1379
        %v4981 = vpop.f32.mrb[0].mxu0
        %v4982 = vadd.f32 %v4909, %v4981
        %v4983 = vpop.f32.mrb[0].mxu0
        %v4984 = vadd.f32 %v4911, %v4983
        %v4985 = vpop.f32.mrb[0].mxu0
        %v4986 = vadd.f32 %v4913, %v4985
        %v4987 = vpop.f32.mrb[0].mxu0
        %v4988 = vadd.f32 %v4915, %v4987
        %4989 = vdwg.mxu0
        %4990 = vmatprep.subr.bf16.mxu0 %v3184
        %4991 = vmatpush1.bf16.msra.mxu0 %v3183
        %4992 = vmatprep.subr.bf16.mxu0 %v3188
        %4993 = vmatpush1.bf16.msra.mxu0 %v3187
        %4994 = vmatprep.subr.bf16.mxu0 %v3192
        %4995 = vmatpush1.bf16.msra.mxu0 %v3191
        %4996 = vmatprep.subr.bf16.mxu0 %v3196
        %4997 = vmatpush1.bf16.msra.mxu0 %v3195
        %4998 = vmatprep.subr.bf16.mxu0 %v3200
        %4999 = vmatpush1.bf16.msra.mxu0 %v3199
        %5000 = vmatprep.subr.bf16.mxu0 %v3204
        %5001 = vmatpush1.bf16.msra.mxu0 %v3203
        %5002 = vmatprep.subr.bf16.mxu0 %v3208
        %5003 = vmatpush1.bf16.msra.mxu0 %v3207
        %5004 = vmatprep.subr.bf16.mxu0 %v3212
        %5005 = vmatpush1.bf16.msra.mxu0 %v3211
        %5006 = vmatprep.subr.bf16.mxu0 %v3216
        %5007 = vmatpush1.bf16.msra.mxu0 %v3215
        %5008 = vmatprep.subr.bf16.mxu0 %v3220
        %5009 = vmatpush1.bf16.msra.mxu0 %v3219
        %5010 = vmatprep.subr.bf16.mxu0 %v3224
        %5011 = vmatpush1.bf16.msra.mxu0 %v3223
        %5012 = vmatprep.subr.bf16.mxu0 %v3228
        %5013 = vmatpush1.bf16.msra.mxu0 %v3227
        %5014 = vmatprep.subr.bf16.mxu0 %v3232
        %5015 = vmatpush1.bf16.msra.mxu0 %v3231
        %5016 = vmatprep.subr.bf16.mxu0 %v3236
        %5017 = vmatpush1.bf16.msra.mxu0 %v3235
        %5018 = vmatprep.subr.bf16.mxu0 %v3240
        %5019 = vmatpush1.bf16.msra.mxu0 %v3239
        %5020 = vmatprep.subr.bf16.mxu0 %v3244
        %5021 = vmatpush1.bf16.msra.mxu0 %v3243
        %5022 = vmatprep.mubr.bf16.mxu0 %v1310
        %5023 = vmatmul.mubr.bf16.gmra.mrb[0].mxu0 %v1309
        %v5024 = vpop.f32.mrb[0].mxu0
        %v5025 = vadd.f32 0.0, %v5024
        %v5026 = vpop.f32.mrb[0].mxu0
        %v5027 = vadd.f32 0.0, %v5026
        %v5028 = vpop.f32.mrb[0].mxu0
        %v5029 = vadd.f32 0.0, %v5028
        %v5030 = vpop.f32.mrb[0].mxu0
        %v5031 = vadd.f32 0.0, %v5030
        %5032 = vmatprep.mubr.bf16.mxu0 %v1328
        %5033 = vmatmul.mubr.bf16.gmra.mrb[0].mxu0 %v1327
        %v5034 = vpop.f32.mrb[0].mxu0
        %v5035 = vadd.f32 0.0, %v5034
        %v5036 = vpop.f32.mrb[0].mxu0
        %v5037 = vadd.f32 0.0, %v5036
        %v5038 = vpop.f32.mrb[0].mxu0
        %v5039 = vadd.f32 0.0, %v5038
        %v5040 = vpop.f32.mrb[0].mxu0
        %v5041 = vadd.f32 0.0, %v5040
        %5042 = vmatprep.mubr.bf16.mxu0 %v1346
        %5043 = vmatmul.mubr.bf16.gmra.mrb[0].mxu0 %v1345
        %v5044 = vpop.f32.mrb[0].mxu0
        %v5045 = vadd.f32 0.0, %v5044
        %v5046 = vpop.f32.mrb[0].mxu0
        %v5047 = vadd.f32 0.0, %v5046
        %v5048 = vpop.f32.mrb[0].mxu0
        %v5049 = vadd.f32 0.0, %v5048
        %v5050 = vpop.f32.mrb[0].mxu0
        %v5051 = vadd.f32 0.0, %v5050
        %5052 = vmatprep.mubr.bf16.mxu0 %v1364
        %5053 = vmatmul.mubr.bf16.gmra.mrb[0].mxu0 %v1363
        %v5054 = vpop.f32.mrb[0].mxu0
        %v5055 = vadd.f32 0.0, %v5054
        %v5056 = vpop.f32.mrb[0].mxu0
        %v5057 = vadd.f32 0.0, %v5056
        %v5058 = vpop.f32.mrb[0].mxu0
        %v5059 = vadd.f32 0.0, %v5058
        %v5060 = vpop.f32.mrb[0].mxu0
        %v5061 = vadd.f32 0.0, %v5060
        %5062 = vdwg.mxu0
        %5063 = vmatprep.subr.bf16.mxu0 %v3248
        %5064 = vmatpush1.bf16.msra.mxu0 %v3247
        %5065 = vmatprep.subr.bf16.mxu0 %v3252
        %5066 = vmatpush1.bf16.msra.mxu0 %v3251
        %5067 = vmatprep.subr.bf16.mxu0 %v3256
        %5068 = vmatpush1.bf16.msra.mxu0 %v3255
        %5069 = vmatprep.subr.bf16.mxu0 %v3260
        %5070 = vmatpush1.bf16.msra.mxu0 %v3259
        %5071 = vmatprep.subr.bf16.mxu0 %v3264
        %5072 = vmatpush1.bf16.msra.mxu0 %v3263
        %5073 = vmatprep.subr.bf16.mxu0 %v3268
        %5074 = vmatpush1.bf16.msra.mxu0 %v3267
        %5075 = vmatprep.subr.bf16.mxu0 %v3272
        %5076 = vmatpush1.bf16.msra.mxu0 %v3271
        %5077 = vmatprep.subr.bf16.mxu0 %v3276
        %5078 = vmatpush1.bf16.msra.mxu0 %v3275
        %5079 = vmatprep.subr.bf16.mxu0 %v3280
        %5080 = vmatpush1.bf16.msra.mxu0 %v3279
        %5081 = vmatprep.subr.bf16.mxu0 %v3284
        %5082 = vmatpush1.bf16.msra.mxu0 %v3283
        %5083 = vmatprep.subr.bf16.mxu0 %v3288
        %5084 = vmatpush1.bf16.msra.mxu0 %v3287
        %5085 = vmatprep.subr.bf16.mxu0 %v3292
        %5086 = vmatpush1.bf16.msra.mxu0 %v3291
        %5087 = vmatprep.subr.bf16.mxu0 %v3296
        %5088 = vmatpush1.bf16.msra.mxu0 %v3295
        %5089 = vmatprep.subr.bf16.mxu0 %v3300
        %5090 = vmatpush1.bf16.msra.mxu0 %v3299
        %5091 = vmatprep.subr.bf16.mxu0 %v3304
        %5092 = vmatpush1.bf16.msra.mxu0 %v3303
        %5093 = vmatprep.subr.bf16.mxu0 %v3308
        %5094 = vmatpush1.bf16.msra.mxu0 %v3307
        %5095 = vmatprep.mubr.bf16.mxu0 %v1312
        %5096 = vmatmul.mubr.bf16.gmra.mrb[0].mxu0 %v1311
        %v5097 = vpop.f32.mrb[0].mxu0
        %v5098 = vadd.f32 %v5025, %v5097
        %v5099 = vpop.f32.mrb[0].mxu0
        %v5100 = vadd.f32 %v5027, %v5099
        %v5101 = vpop.f32.mrb[0].mxu0
        %v5102 = vadd.f32 %v5029, %v5101
        %v5103 = vpop.f32.mrb[0].mxu0
        %v5104 = vadd.f32 %v5031, %v5103
        %5105 = vmatprep.mubr.bf16.mxu0 %v1330
        %5106 = vmatmul.mubr.bf16.gmra.mrb[0].mxu0 %v1329
        %v5107 = vpop.f32.mrb[0].mxu0
        %v5108 = vadd.f32 %v5035, %v5107
        %v5109 = vpop.f32.mrb[0].mxu0
        %v5110 = vadd.f32 %v5037, %v5109
        %v5111 = vpop.f32.mrb[0].mxu0
        %v5112 = vadd.f32 %v5039, %v5111
        %v5113 = vpop.f32.mrb[0].mxu0
        %v5114 = vadd.f32 %v5041, %v5113
        %5115 = vmatprep.mubr.bf16.mxu0 %v1348
        %5116 = vmatmul.mubr.bf16.gmra.mrb[0].mxu0 %v1347
        %v5117 = vpop.f32.mrb[0].mxu0
        %v5118 = vadd.f32 %v5045, %v5117
        %v5119 = vpop.f32.mrb[0].mxu0
        %v5120 = vadd.f32 %v5047, %v5119
        %v5121 = vpop.f32.mrb[0].mxu0
        %v5122 = vadd.f32 %v5049, %v5121
        %v5123 = vpop.f32.mrb[0].mxu0
        %v5124 = vadd.f32 %v5051, %v5123
        %5125 = vmatprep.mubr.bf16.mxu0 %v1366
        %5126 = vmatmul.mubr.bf16.gmra.mrb[0].mxu0 %v1365
        %v5127 = vpop.f32.mrb[0].mxu0
        %v5128 = vadd.f32 %v5055, %v5127
        %v5129 = vpop.f32.mrb[0].mxu0
        %v5130 = vadd.f32 %v5057, %v5129
        %v5131 = vpop.f32.mrb[0].mxu0
        %v5132 = vadd.f32 %v5059, %v5131
        %v5133 = vpop.f32.mrb[0].mxu0
        %v5134 = vadd.f32 %v5061, %v5133
        %5135 = vdwg.mxu0
        %5136 = vmatprep.subr.bf16.mxu0 %v3312
        %5137 = vmatpush1.bf16.msra.mxu0 %v3311
        %5138 = vmatprep.subr.bf16.mxu0 %v3316
        %5139 = vmatpush1.bf16.msra.mxu0 %v3315
        %5140 = vmatprep.subr.bf16.mxu0 %v3320
        %5141 = vmatpush1.bf16.msra.mxu0 %v3319
        %5142 = vmatprep.subr.bf16.mxu0 %v3324
        %5143 = vmatpush1.bf16.msra.mxu0 %v3323
        %5144 = vmatprep.subr.bf16.mxu0 %v3328
        %5145 = vmatpush1.bf16.msra.mxu0 %v3327
        %5146 = vmatprep.subr.bf16.mxu0 %v3332
        %5147 = vmatpush1.bf16.msra.mxu0 %v3331
        %5148 = vmatprep.subr.bf16.mxu0 %v3336
        %5149 = vmatpush1.bf16.msra.mxu0 %v3335
        %5150 = vmatprep.subr.bf16.mxu0 %v3340
        %5151 = vmatpush1.bf16.msra.mxu0 %v3339
        %5152 = vmatprep.subr.bf16.mxu0 %v3344
        %5153 = vmatpush1.bf16.msra.mxu0 %v3343
        %5154 = vmatprep.subr.bf16.mxu0 %v3348
        %5155 = vmatpush1.bf16.msra.mxu0 %v3347
        %5156 = vmatprep.subr.bf16.mxu0 %v3352
        %5157 = vmatpush1.bf16.msra.mxu0 %v3351
        %5158 = vmatprep.subr.bf16.mxu0 %v3356
        %5159 = vmatpush1.bf16.msra.mxu0 %v3355
        %5160 = vmatprep.subr.bf16.mxu0 %v3360
        %5161 = vmatpush1.bf16.msra.mxu0 %v3359
        %5162 = vmatprep.subr.bf16.mxu0 %v3364
        %5163 = vmatpush1.bf16.msra.mxu0 %v3363
        %5164 = vmatprep.subr.bf16.mxu0 %v3368
        %5165 = vmatpush1.bf16.msra.mxu0 %v3367
        %5166 = vmatprep.subr.bf16.mxu0 %v3372
        %5167 = vmatpush1.bf16.msra.mxu0 %v3371
        %5168 = vmatprep.mubr.bf16.mxu0 %v1314
        %5169 = vmatmul.mubr.bf16.gmra.mrb[0].mxu0 %v1313
        %v5170 = vpop.f32.mrb[0].mxu0
        %v5171 = vadd.f32 %v5098, %v5170
        %v5172 = vpop.f32.mrb[0].mxu0
        %v5173 = vadd.f32 %v5100, %v5172
        %v5174 = vpop.f32.mrb[0].mxu0
        %v5175 = vadd.f32 %v5102, %v5174
        %v5176 = vpop.f32.mrb[0].mxu0
        %v5177 = vadd.f32 %v5104, %v5176
        %5178 = vmatprep.mubr.bf16.mxu0 %v1332
        %5179 = vmatmul.mubr.bf16.gmra.mrb[0].mxu0 %v1331
        %v5180 = vpop.f32.mrb[0].mxu0
        %v5181 = vadd.f32 %v5108, %v5180
        %v5182 = vpop.f32.mrb[0].mxu0
        %v5183 = vadd.f32 %v5110, %v5182
        %v5184 = vpop.f32.mrb[0].mxu0
        %v5185 = vadd.f32 %v5112, %v5184
        %v5186 = vpop.f32.mrb[0].mxu0
        %v5187 = vadd.f32 %v5114, %v5186
        %5188 = vmatprep.mubr.bf16.mxu0 %v1350
        %5189 = vmatmul.mubr.bf16.gmra.mrb[0].mxu0 %v1349
        %v5190 = vpop.f32.mrb[0].mxu0
        %v5191 = vadd.f32 %v5118, %v5190
        %v5192 = vpop.f32.mrb[0].mxu0
        %v5193 = vadd.f32 %v5120, %v5192
        %v5194 = vpop.f32.mrb[0].mxu0
        %v5195 = vadd.f32 %v5122, %v5194
        %v5196 = vpop.f32.mrb[0].mxu0
        %v5197 = vadd.f32 %v5124, %v5196
        %5198 = vmatprep.mubr.bf16.mxu0 %v1368
        %5199 = vmatmul.mubr.bf16.gmra.mrb[0].mxu0 %v1367
        %v5200 = vpop.f32.mrb[0].mxu0
        %v5201 = vadd.f32 %v5128, %v5200
        %v5202 = vpop.f32.mrb[0].mxu0
        %v5203 = vadd.f32 %v5130, %v5202
        %v5204 = vpop.f32.mrb[0].mxu0
        %v5205 = vadd.f32 %v5132, %v5204
        %v5206 = vpop.f32.mrb[0].mxu0
        %v5207 = vadd.f32 %v5134, %v5206
        %5208 = vdwg.mxu0
        %5209 = vmatprep.subr.bf16.mxu0 %v3376
        %5210 = vmatpush1.bf16.msra.mxu0 %v3375
        %5211 = vmatprep.subr.bf16.mxu0 %v3380
        %5212 = vmatpush1.bf16.msra.mxu0 %v3379
        %5213 = vmatprep.subr.bf16.mxu0 %v3384
        %5214 = vmatpush1.bf16.msra.mxu0 %v3383
        %5215 = vmatprep.subr.bf16.mxu0 %v3388
        %5216 = vmatpush1.bf16.msra.mxu0 %v3387
        %5217 = vmatprep.subr.bf16.mxu0 %v3392
        %5218 = vmatpush1.bf16.msra.mxu0 %v3391
        %5219 = vmatprep.subr.bf16.mxu0 %v3396
        %5220 = vmatpush1.bf16.msra.mxu0 %v3395
        %5221 = vmatprep.subr.bf16.mxu0 %v3400
        %5222 = vmatpush1.bf16.msra.mxu0 %v3399
        %5223 = vmatprep.subr.bf16.mxu0 %v3404
        %5224 = vmatpush1.bf16.msra.mxu0 %v3403
        %5225 = vmatprep.subr.bf16.mxu0 %v3408
        %5226 = vmatpush1.bf16.msra.mxu0 %v3407
        %5227 = vmatprep.subr.bf16.mxu0 %v3412
        %5228 = vmatpush1.bf16.msra.mxu0 %v3411
        %5229 = vmatprep.subr.bf16.mxu0 %v3416
        %5230 = vmatpush1.bf16.msra.mxu0 %v3415
        %5231 = vmatprep.subr.bf16.mxu0 %v3420
        %5232 = vmatpush1.bf16.msra.mxu0 %v3419
        %5233 = vmatprep.subr.bf16.mxu0 %v3424
        %5234 = vmatpush1.bf16.msra.mxu0 %v3423
        %5235 = vmatprep.subr.bf16.mxu0 %v3428
        %5236 = vmatpush1.bf16.msra.mxu0 %v3427
        %5237 = vmatprep.subr.bf16.mxu0 %v3432
        %5238 = vmatpush1.bf16.msra.mxu0 %v3431
        %5239 = vmatprep.subr.bf16.mxu0 %v3436
        %5240 = vmatpush1.bf16.msra.mxu0 %v3435
        %5241 = vmatprep.mubr.bf16.mxu0 %v1316
        %5242 = vmatmul.mubr.bf16.gmra.mrb[0].mxu0 %v1315
        %v5243 = vpop.f32.mrb[0].mxu0
        %v5244 = vadd.f32 %v5171, %v5243
        %v5245 = vpop.f32.mrb[0].mxu0
        %v5246 = vadd.f32 %v5173, %v5245
        %v5247 = vpop.f32.mrb[0].mxu0
        %v5248 = vadd.f32 %v5175, %v5247
        %v5249 = vpop.f32.mrb[0].mxu0
        %v5250 = vadd.f32 %v5177, %v5249
        %5251 = vmatprep.mubr.bf16.mxu0 %v1334
        %5252 = vmatmul.mubr.bf16.gmra.mrb[0].mxu0 %v1333
        %v5253 = vpop.f32.mrb[0].mxu0
        %v5254 = vadd.f32 %v5181, %v5253
        %v5255 = vpop.f32.mrb[0].mxu0
        %v5256 = vadd.f32 %v5183, %v5255
        %v5257 = vpop.f32.mrb[0].mxu0
        %v5258 = vadd.f32 %v5185, %v5257
        %v5259 = vpop.f32.mrb[0].mxu0
        %v5260 = vadd.f32 %v5187, %v5259
        %5261 = vmatprep.mubr.bf16.mxu0 %v1352
        %5262 = vmatmul.mubr.bf16.gmra.mrb[0].mxu0 %v1351
        %v5263 = vpop.f32.mrb[0].mxu0
        %v5264 = vadd.f32 %v5191, %v5263
        %v5265 = vpop.f32.mrb[0].mxu0
        %v5266 = vadd.f32 %v5193, %v5265
        %v5267 = vpop.f32.mrb[0].mxu0
        %v5268 = vadd.f32 %v5195, %v5267
        %v5269 = vpop.f32.mrb[0].mxu0
        %v5270 = vadd.f32 %v5197, %v5269
        %5271 = vmatprep.mubr.bf16.mxu0 %v1370
        %5272 = vmatmul.mubr.bf16.gmra.mrb[0].mxu0 %v1369
        %v5273 = vpop.f32.mrb[0].mxu0
        %v5274 = vadd.f32 %v5201, %v5273
        %v5275 = vpop.f32.mrb[0].mxu0
        %v5276 = vadd.f32 %v5203, %v5275
        %v5277 = vpop.f32.mrb[0].mxu0
        %v5278 = vadd.f32 %v5205, %v5277
        %v5279 = vpop.f32.mrb[0].mxu0
        %v5280 = vadd.f32 %v5207, %v5279
        %5281 = vdwg.mxu0
        %5282 = vmatprep.subr.bf16.mxu0 %v3440
        %5283 = vmatpush1.bf16.msra.mxu0 %v3439
        %5284 = vmatprep.subr.bf16.mxu0 %v3444
        %5285 = vmatpush1.bf16.msra.mxu0 %v3443
        %5286 = vmatprep.subr.bf16.mxu0 %v3448
        %5287 = vmatpush1.bf16.msra.mxu0 %v3447
        %5288 = vmatprep.subr.bf16.mxu0 %v3452
        %5289 = vmatpush1.bf16.msra.mxu0 %v3451
        %5290 = vmatprep.subr.bf16.mxu0 %v3456
        %5291 = vmatpush1.bf16.msra.mxu0 %v3455
        %5292 = vmatprep.subr.bf16.mxu0 %v3460
        %5293 = vmatpush1.bf16.msra.mxu0 %v3459
        %5294 = vmatprep.subr.bf16.mxu0 %v3464
        %5295 = vmatpush1.bf16.msra.mxu0 %v3463
        %5296 = vmatprep.subr.bf16.mxu0 %v3468
        %5297 = vmatpush1.bf16.msra.mxu0 %v3467
        %5298 = vmatprep.subr.bf16.mxu0 %v3472
        %5299 = vmatpush1.bf16.msra.mxu0 %v3471
        %5300 = vmatprep.subr.bf16.mxu0 %v3476
        %5301 = vmatpush1.bf16.msra.mxu0 %v3475
        %5302 = vmatprep.subr.bf16.mxu0 %v3480
        %5303 = vmatpush1.bf16.msra.mxu0 %v3479
        %5304 = vmatprep.subr.bf16.mxu0 %v3484
        %5305 = vmatpush1.bf16.msra.mxu0 %v3483
        %5306 = vmatprep.subr.bf16.mxu0 %v3488
        %5307 = vmatpush1.bf16.msra.mxu0 %v3487
        %5308 = vmatprep.subr.bf16.mxu0 %v3492
        %5309 = vmatpush1.bf16.msra.mxu0 %v3491
        %5310 = vmatprep.subr.bf16.mxu0 %v3496
        %5311 = vmatpush1.bf16.msra.mxu0 %v3495
        %5312 = vmatprep.subr.bf16.mxu0 %v3500
        %5313 = vmatpush1.bf16.msra.mxu0 %v3499
        %5314 = vmatprep.mubr.bf16.mxu0 %v1318
        %5315 = vmatmul.mubr.bf16.gmra.mrb[0].mxu0 %v1317
        %v5316 = vpop.f32.mrb[0].mxu0
        %v5317 = vadd.f32 %v5244, %v5316
        %v5318 = vpop.f32.mrb[0].mxu0
        %v5319 = vadd.f32 %v5246, %v5318
        %v5320 = vpop.f32.mrb[0].mxu0
        %v5321 = vadd.f32 %v5248, %v5320
        %v5322 = vpop.f32.mrb[0].mxu0
        %v5323 = vadd.f32 %v5250, %v5322
        %5324 = vmatprep.mubr.bf16.mxu0 %v1336
        %5325 = vmatmul.mubr.bf16.gmra.mrb[0].mxu0 %v1335
        %v5326 = vpop.f32.mrb[0].mxu0
        %v5327 = vadd.f32 %v5254, %v5326
        %v5328 = vpop.f32.mrb[0].mxu0
        %v5329 = vadd.f32 %v5256, %v5328
        %v5330 = vpop.f32.mrb[0].mxu0
        %v5331 = vadd.f32 %v5258, %v5330
        %v5332 = vpop.f32.mrb[0].mxu0
        %v5333 = vadd.f32 %v5260, %v5332
        %5334 = vmatprep.mubr.bf16.mxu0 %v1354
        %5335 = vmatmul.mubr.bf16.gmra.mrb[0].mxu0 %v1353
        %v5336 = vpop.f32.mrb[0].mxu0
        %v5337 = vadd.f32 %v5264, %v5336
        %v5338 = vpop.f32.mrb[0].mxu0
        %v5339 = vadd.f32 %v5266, %v5338
        %v5340 = vpop.f32.mrb[0].mxu0
        %v5341 = vadd.f32 %v5268, %v5340
        %v5342 = vpop.f32.mrb[0].mxu0
        %v5343 = vadd.f32 %v5270, %v5342
        %5344 = vmatprep.mubr.bf16.mxu0 %v1372
        %5345 = vmatmul.mubr.bf16.gmra.mrb[0].mxu0 %v1371
        %v5346 = vpop.f32.mrb[0].mxu0
        %v5347 = vadd.f32 %v5274, %v5346
        %v5348 = vpop.f32.mrb[0].mxu0
        %v5349 = vadd.f32 %v5276, %v5348
        %v5350 = vpop.f32.mrb[0].mxu0
        %v5351 = vadd.f32 %v5278, %v5350
        %v5352 = vpop.f32.mrb[0].mxu0
        %v5353 = vadd.f32 %v5280, %v5352
        %5354 = vdwg.mxu0
        %5355 = vmatprep.subr.bf16.mxu0 %v3504
        %5356 = vmatpush1.bf16.msra.mxu0 %v3503
        %5357 = vmatprep.subr.bf16.mxu0 %v3508
        %5358 = vmatpush1.bf16.msra.mxu0 %v3507
        %5359 = vmatprep.subr.bf16.mxu0 %v3512
        %5360 = vmatpush1.bf16.msra.mxu0 %v3511
        %5361 = vmatprep.subr.bf16.mxu0 %v3516
        %5362 = vmatpush1.bf16.msra.mxu0 %v3515
        %5363 = vmatprep.subr.bf16.mxu0 %v3520
        %5364 = vmatpush1.bf16.msra.mxu0 %v3519
        %5365 = vmatprep.subr.bf16.mxu0 %v3524
        %5366 = vmatpush1.bf16.msra.mxu0 %v3523
        %5367 = vmatprep.subr.bf16.mxu0 %v3528
        %5368 = vmatpush1.bf16.msra.mxu0 %v3527
        %5369 = vmatprep.subr.bf16.mxu0 %v3532
        %5370 = vmatpush1.bf16.msra.mxu0 %v3531
        %5371 = vmatprep.subr.bf16.mxu0 %v3536
        %5372 = vmatpush1.bf16.msra.mxu0 %v3535
        %5373 = vmatprep.subr.bf16.mxu0 %v3540
        %5374 = vmatpush1.bf16.msra.mxu0 %v3539
        %5375 = vmatprep.subr.bf16.mxu0 %v3544
        %5376 = vmatpush1.bf16.msra.mxu0 %v3543
        %5377 = vmatprep.subr.bf16.mxu0 %v3548
        %5378 = vmatpush1.bf16.msra.mxu0 %v3547
        %5379 = vmatprep.subr.bf16.mxu0 %v3552
        %5380 = vmatpush1.bf16.msra.mxu0 %v3551
        %5381 = vmatprep.subr.bf16.mxu0 %v3556
        %5382 = vmatpush1.bf16.msra.mxu0 %v3555
        %5383 = vmatprep.subr.bf16.mxu0 %v3560
        %5384 = vmatpush1.bf16.msra.mxu0 %v3559
        %5385 = vmatprep.subr.bf16.mxu0 %v3564
        %5386 = vmatpush1.bf16.msra.mxu0 %v3563
        %5387 = vmatprep.mubr.bf16.mxu0 %v1320
        %5388 = vmatmul.mubr.bf16.gmra.mrb[0].mxu0 %v1319
        %v5389 = vpop.f32.mrb[0].mxu0
        %v5390 = vadd.f32 %v5317, %v5389
        %v5391 = vpop.f32.mrb[0].mxu0
        %v5392 = vadd.f32 %v5319, %v5391
        %v5393 = vpop.f32.mrb[0].mxu0
        %v5394 = vadd.f32 %v5321, %v5393
        %v5395 = vpop.f32.mrb[0].mxu0
        %v5396 = vadd.f32 %v5323, %v5395
        %5397 = vmatprep.mubr.bf16.mxu0 %v1338
        %5398 = vmatmul.mubr.bf16.gmra.mrb[0].mxu0 %v1337
        %v5399 = vpop.f32.mrb[0].mxu0
        %v5400 = vadd.f32 %v5327, %v5399
        %v5401 = vpop.f32.mrb[0].mxu0
        %v5402 = vadd.f32 %v5329, %v5401
        %v5403 = vpop.f32.mrb[0].mxu0
        %v5404 = vadd.f32 %v5331, %v5403
        %v5405 = vpop.f32.mrb[0].mxu0
        %v5406 = vadd.f32 %v5333, %v5405
        %5407 = vmatprep.mubr.bf16.mxu0 %v1356
        %5408 = vmatmul.mubr.bf16.gmra.mrb[0].mxu0 %v1355
        %v5409 = vpop.f32.mrb[0].mxu0
        %v5410 = vadd.f32 %v5337, %v5409
        %v5411 = vpop.f32.mrb[0].mxu0
        %v5412 = vadd.f32 %v5339, %v5411
        %v5413 = vpop.f32.mrb[0].mxu0
        %v5414 = vadd.f32 %v5341, %v5413
        %v5415 = vpop.f32.mrb[0].mxu0
        %v5416 = vadd.f32 %v5343, %v5415
        %5417 = vmatprep.mubr.bf16.mxu0 %v1374
        %5418 = vmatmul.mubr.bf16.gmra.mrb[0].mxu0 %v1373
        %v5419 = vpop.f32.mrb[0].mxu0
        %v5420 = vadd.f32 %v5347, %v5419
        %v5421 = vpop.f32.mrb[0].mxu0
        %v5422 = vadd.f32 %v5349, %v5421
        %v5423 = vpop.f32.mrb[0].mxu0
        %v5424 = vadd.f32 %v5351, %v5423
        %v5425 = vpop.f32.mrb[0].mxu0
        %v5426 = vadd.f32 %v5353, %v5425
        %5427 = vdwg.mxu0
        %5428 = vmatprep.subr.bf16.mxu0 %v3568
        %5429 = vmatpush1.bf16.msra.mxu0 %v3567
        %5430 = vmatprep.subr.bf16.mxu0 %v3572
        %5431 = vmatpush1.bf16.msra.mxu0 %v3571
        %5432 = vmatprep.subr.bf16.mxu0 %v3576
        %5433 = vmatpush1.bf16.msra.mxu0 %v3575
        %5434 = vmatprep.subr.bf16.mxu0 %v3580
        %5435 = vmatpush1.bf16.msra.mxu0 %v3579
        %5436 = vmatprep.subr.bf16.mxu0 %v3584
        %5437 = vmatpush1.bf16.msra.mxu0 %v3583
        %5438 = vmatprep.subr.bf16.mxu0 %v3588
        %5439 = vmatpush1.bf16.msra.mxu0 %v3587
        %5440 = vmatprep.subr.bf16.mxu0 %v3592
        %5441 = vmatpush1.bf16.msra.mxu0 %v3591
        %5442 = vmatprep.subr.bf16.mxu0 %v3596
        %5443 = vmatpush1.bf16.msra.mxu0 %v3595
        %5444 = vmatprep.subr.bf16.mxu0 %v3600
        %5445 = vmatpush1.bf16.msra.mxu0 %v3599
        %5446 = vmatprep.subr.bf16.mxu0 %v3604
        %5447 = vmatpush1.bf16.msra.mxu0 %v3603
        %5448 = vmatprep.subr.bf16.mxu0 %v3608
        %5449 = vmatpush1.bf16.msra.mxu0 %v3607
        %5450 = vmatprep.subr.bf16.mxu0 %v3612
        %5451 = vmatpush1.bf16.msra.mxu0 %v3611
        %5452 = vmatprep.subr.bf16.mxu0 %v3616
        %5453 = vmatpush1.bf16.msra.mxu0 %v3615
        %5454 = vmatprep.subr.bf16.mxu0 %v3620
        %5455 = vmatpush1.bf16.msra.mxu0 %v3619
        %5456 = vmatprep.subr.bf16.mxu0 %v3624
        %5457 = vmatpush1.bf16.msra.mxu0 %v3623
        %5458 = vmatprep.subr.bf16.mxu0 %v3628
        %5459 = vmatpush1.bf16.msra.mxu0 %v3627
        %5460 = vmatprep.mubr.bf16.mxu0 %v1322
        %5461 = vmatmul.mubr.bf16.gmra.mrb[0].mxu0 %v1321
        %v5462 = vpop.f32.mrb[0].mxu0
        %v5463 = vadd.f32 %v5390, %v5462
        %v5464 = vpop.f32.mrb[0].mxu0
        %v5465 = vadd.f32 %v5392, %v5464
        %v5466 = vpop.f32.mrb[0].mxu0
        %v5467 = vadd.f32 %v5394, %v5466
        %v5468 = vpop.f32.mrb[0].mxu0
        %v5469 = vadd.f32 %v5396, %v5468
        %5470 = vmatprep.mubr.bf16.mxu0 %v1340
        %5471 = vmatmul.mubr.bf16.gmra.mrb[0].mxu0 %v1339
        %v5472 = vpop.f32.mrb[0].mxu0
        %v5473 = vadd.f32 %v5400, %v5472
        %v5474 = vpop.f32.mrb[0].mxu0
        %v5475 = vadd.f32 %v5402, %v5474
        %v5476 = vpop.f32.mrb[0].mxu0
        %v5477 = vadd.f32 %v5404, %v5476
        %v5478 = vpop.f32.mrb[0].mxu0
        %v5479 = vadd.f32 %v5406, %v5478
        %5480 = vmatprep.mubr.bf16.mxu0 %v1358
        %5481 = vmatmul.mubr.bf16.gmra.mrb[0].mxu0 %v1357
        %v5482 = vpop.f32.mrb[0].mxu0
        %v5483 = vadd.f32 %v5410, %v5482
        %v5484 = vpop.f32.mrb[0].mxu0
        %v5485 = vadd.f32 %v5412, %v5484
        %v5486 = vpop.f32.mrb[0].mxu0
        %v5487 = vadd.f32 %v5414, %v5486
        %v5488 = vpop.f32.mrb[0].mxu0
        %v5489 = vadd.f32 %v5416, %v5488
        %5490 = vmatprep.mubr.bf16.mxu0 %v1376
        %5491 = vmatmul.mubr.bf16.gmra.mrb[0].mxu0 %v1375
        %v5492 = vpop.f32.mrb[0].mxu0
        %v5493 = vadd.f32 %v5420, %v5492
        %v5494 = vpop.f32.mrb[0].mxu0
        %v5495 = vadd.f32 %v5422, %v5494
        %v5496 = vpop.f32.mrb[0].mxu0
        %v5497 = vadd.f32 %v5424, %v5496
        %v5498 = vpop.f32.mrb[0].mxu0
        %v5499 = vadd.f32 %v5426, %v5498
        %5500 = vdwg.mxu0
        %5501 = vmatprep.subr.bf16.mxu0 %v3632
        %5502 = vmatpush1.bf16.msra.mxu0 %v3631
        %5503 = vmatprep.subr.bf16.mxu0 %v3636
        %5504 = vmatpush1.bf16.msra.mxu0 %v3635
        %5505 = vmatprep.subr.bf16.mxu0 %v3640
        %5506 = vmatpush1.bf16.msra.mxu0 %v3639
        %5507 = vmatprep.subr.bf16.mxu0 %v3644
        %5508 = vmatpush1.bf16.msra.mxu0 %v3643
        %5509 = vmatprep.subr.bf16.mxu0 %v3648
        %5510 = vmatpush1.bf16.msra.mxu0 %v3647
        %5511 = vmatprep.subr.bf16.mxu0 %v3652
        %5512 = vmatpush1.bf16.msra.mxu0 %v3651
        %5513 = vmatprep.subr.bf16.mxu0 %v3656
        %5514 = vmatpush1.bf16.msra.mxu0 %v3655
        %5515 = vmatprep.subr.bf16.mxu0 %v3660
        %5516 = vmatpush1.bf16.msra.mxu0 %v3659
        %5517 = vmatprep.subr.bf16.mxu0 %v3664
        %5518 = vmatpush1.bf16.msra.mxu0 %v3663
        %5519 = vmatprep.subr.bf16.mxu0 %v3668
        %5520 = vmatpush1.bf16.msra.mxu0 %v3667
        %5521 = vmatprep.subr.bf16.mxu0 %v3672
        %5522 = vmatpush1.bf16.msra.mxu0 %v3671
        %5523 = vmatprep.subr.bf16.mxu0 %v3676
        %5524 = vmatpush1.bf16.msra.mxu0 %v3675
        %5525 = vmatprep.subr.bf16.mxu0 %v3680
        %5526 = vmatpush1.bf16.msra.mxu0 %v3679
        %5527 = vmatprep.subr.bf16.mxu0 %v3684
        %5528 = vmatpush1.bf16.msra.mxu0 %v3683
        %5529 = vmatprep.subr.bf16.mxu0 %v3688
        %5530 = vmatpush1.bf16.msra.mxu0 %v3687
        %5531 = vmatprep.subr.bf16.mxu0 %v3692
        %5532 = vmatpush1.bf16.msra.mxu0 %v3691
        %5533 = vmatprep.mubr.bf16.mxu0 %v1324
        %5534 = vmatmul.mubr.bf16.gmra.mrb[0].mxu0 %v1323
        %v5535 = vpop.f32.mrb[0].mxu0
        %v5536 = vadd.f32 %v5463, %v5535
        %v5537 = vpop.f32.mrb[0].mxu0
        %v5538 = vadd.f32 %v5465, %v5537
        %v5539 = vpop.f32.mrb[0].mxu0
        %v5540 = vadd.f32 %v5467, %v5539
        %v5541 = vpop.f32.mrb[0].mxu0
        %v5542 = vadd.f32 %v5469, %v5541
        %5543 = vmatprep.mubr.bf16.mxu0 %v1342
        %5544 = vmatmul.mubr.bf16.gmra.mrb[0].mxu0 %v1341
        %v5545 = vpop.f32.mrb[0].mxu0
        %v5546 = vadd.f32 %v5473, %v5545
        %v5547 = vpop.f32.mrb[0].mxu0
        %v5548 = vadd.f32 %v5475, %v5547
        %v5549 = vpop.f32.mrb[0].mxu0
        %v5550 = vadd.f32 %v5477, %v5549
        %v5551 = vpop.f32.mrb[0].mxu0
        %v5552 = vadd.f32 %v5479, %v5551
        %5553 = vmatprep.mubr.bf16.mxu0 %v1360
        %5554 = vmatmul.mubr.bf16.gmra.mrb[0].mxu0 %v1359
        %v5555 = vpop.f32.mrb[0].mxu0
        %v5556 = vadd.f32 %v5483, %v5555
        %v5557 = vpop.f32.mrb[0].mxu0
        %v5558 = vadd.f32 %v5485, %v5557
        %v5559 = vpop.f32.mrb[0].mxu0
        %v5560 = vadd.f32 %v5487, %v5559
        %v5561 = vpop.f32.mrb[0].mxu0
        %v5562 = vadd.f32 %v5489, %v5561
        %5563 = vmatprep.mubr.bf16.mxu0 %v1378
        %5564 = vmatmul.mubr.bf16.gmra.mrb[0].mxu0 %v1377
        %v5565 = vpop.f32.mrb[0].mxu0
        %v5566 = vadd.f32 %v5493, %v5565
        %v5567 = vpop.f32.mrb[0].mxu0
        %v5568 = vadd.f32 %v5495, %v5567
        %v5569 = vpop.f32.mrb[0].mxu0
        %v5570 = vadd.f32 %v5497, %v5569
        %v5571 = vpop.f32.mrb[0].mxu0
        %v5572 = vadd.f32 %v5499, %v5571
        %5573 = vdwg.mxu0
        %5574 = vmatprep.subr.bf16.mxu0 %v3696
        %5575 = vmatpush1.bf16.msra.mxu0 %v3695
        %5576 = vmatprep.subr.bf16.mxu0 %v3700
        %5577 = vmatpush1.bf16.msra.mxu0 %v3699
        %5578 = vmatprep.subr.bf16.mxu0 %v3704
        %5579 = vmatpush1.bf16.msra.mxu0 %v3703
        %5580 = vmatprep.subr.bf16.mxu0 %v3708
        %5581 = vmatpush1.bf16.msra.mxu0 %v3707
        %5582 = vmatprep.subr.bf16.mxu0 %v3712
        %5583 = vmatpush1.bf16.msra.mxu0 %v3711
        %5584 = vmatprep.subr.bf16.mxu0 %v3716
        %5585 = vmatpush1.bf16.msra.mxu0 %v3715
        %5586 = vmatprep.subr.bf16.mxu0 %v3720
        %5587 = vmatpush1.bf16.msra.mxu0 %v3719
        %5588 = vmatprep.subr.bf16.mxu0 %v3724
        %5589 = vmatpush1.bf16.msra.mxu0 %v3723
        %5590 = vmatprep.subr.bf16.mxu0 %v3728
        %5591 = vmatpush1.bf16.msra.mxu0 %v3727
        %5592 = vmatprep.subr.bf16.mxu0 %v3732
        %5593 = vmatpush1.bf16.msra.mxu0 %v3731
        %5594 = vmatprep.subr.bf16.mxu0 %v3736
        %5595 = vmatpush1.bf16.msra.mxu0 %v3735
        %5596 = vmatprep.subr.bf16.mxu0 %v3740
        %5597 = vmatpush1.bf16.msra.mxu0 %v3739
        %5598 = vmatprep.subr.bf16.mxu0 %v3744
        %5599 = vmatpush1.bf16.msra.mxu0 %v3743
        %5600 = vmatprep.subr.bf16.mxu0 %v3748
        %5601 = vmatpush1.bf16.msra.mxu0 %v3747
        %5602 = vmatprep.subr.bf16.mxu0 %v3752
        %5603 = vmatpush1.bf16.msra.mxu0 %v3751
        %5604 = vmatprep.subr.bf16.mxu0 %v3756
        %5605 = vmatpush1.bf16.msra.mxu0 %v3755
        %5606 = vmatprep.mubr.bf16.mxu0 %v1326
        %5607 = vmatmul.mubr.bf16.gmra.mrb[0].mxu0 %v1325
        %v5608 = vpop.f32.mrb[0].mxu0
        %v5609 = vadd.f32 %v5536, %v5608
        %v5610 = vpop.f32.mrb[0].mxu0
        %v5611 = vadd.f32 %v5538, %v5610
        %v5612 = vpop.f32.mrb[0].mxu0
        %v5613 = vadd.f32 %v5540, %v5612
        %v5614 = vpop.f32.mrb[0].mxu0
        %v5615 = vadd.f32 %v5542, %v5614
        %5616 = vmatprep.mubr.bf16.mxu0 %v1344
        %5617 = vmatmul.mubr.bf16.gmra.mrb[0].mxu0 %v1343
        %v5618 = vpop.f32.mrb[0].mxu0
        %v5619 = vadd.f32 %v5546, %v5618
        %v5620 = vpop.f32.mrb[0].mxu0
        %v5621 = vadd.f32 %v5548, %v5620
        %v5622 = vpop.f32.mrb[0].mxu0
        %v5623 = vadd.f32 %v5550, %v5622
        %v5624 = vpop.f32.mrb[0].mxu0
        %v5625 = vadd.f32 %v5552, %v5624
        %5626 = vmatprep.mubr.bf16.mxu0 %v1362
        %5627 = vmatmul.mubr.bf16.gmra.mrb[0].mxu0 %v1361
        %v5628 = vpop.f32.mrb[0].mxu0
        %v5629 = vadd.f32 %v5556, %v5628
        %v5630 = vpop.f32.mrb[0].mxu0
        %v5631 = vadd.f32 %v5558, %v5630
        %v5632 = vpop.f32.mrb[0].mxu0
        %v5633 = vadd.f32 %v5560, %v5632
        %v5634 = vpop.f32.mrb[0].mxu0
        %v5635 = vadd.f32 %v5562, %v5634
        %5636 = vmatprep.mubr.bf16.mxu0 %v1380
        %5637 = vmatmul.mubr.bf16.gmra.mrb[0].mxu0 %v1379
        %v5638 = vpop.f32.mrb[0].mxu0
        %v5639 = vadd.f32 %v5566, %v5638
        %v5640 = vpop.f32.mrb[0].mxu0
        %v5641 = vadd.f32 %v5568, %v5640
        %v5642 = vpop.f32.mrb[0].mxu0
        %v5643 = vadd.f32 %v5570, %v5642
        %v5644 = vpop.f32.mrb[0].mxu0
        %v5645 = vadd.f32 %v5572, %v5644
        %5646 = vdwg.mxu0
        %v5647 = vmax.f32 %v4952, %v4962
        %v5648 = vmax.f32 %v4954, %v4964
        %v5649 = vmax.f32 %v5609, %v5619
        %v5650 = vmax.f32 %v5611, %v5621
        %v5651 = vmax.f32 %v4956, %v4966
        %v5652 = vmax.f32 %v4958, %v4968
        %v5653 = vmax.f32 %v5613, %v5623
        %v5654 = vmax.f32 %v5615, %v5625
        %v5655 = vmax.f32 %v4972, %v4982
        %v5656 = vmax.f32 %v4974, %v4984
        %v5657 = vmax.f32 %v5629, %v5639
        %v5658 = vmax.f32 %v5631, %v5641
        %v5659 = vmax.f32 %v4976, %v4986
        %v5660 = vmax.f32 %v4978, %v4988
        %v5661 = vmax.f32 %v5633, %v5643
        %v5662 = vmax.f32 %v5635, %v5645
        %v5663 = vmax.f32 %v5647, %v5655
        %v5664 = vmax.f32 %v5648, %v5656
        %v5665 = vmax.f32 %v5649, %v5657
        %v5666 = vmax.f32 %v5650, %v5658
        %v5667 = vmax.f32 %v5651, %v5659
        %v5668 = vmax.f32 %v5652, %v5660
        %v5669 = vmax.f32 %v5653, %v5661
        %v5670 = vmax.f32 %v5654, %v5662
        %v5671 = vld [vmem:[%s2] sm:$0xf]
        %v5673 = vlaneseq
        %v5674 = vshrl.u32 %v5673, 7
        %v5675 = vsub.s32 0, %v5674
        %v5676 = vrot.slane %v5671, %v5675
        %v5677 = vlaneseq
        %v5678 = vshrl.u32 %v5677, 7
        %v5679 = vsub.s32 1, %v5678
        %v5680 = vrot.slane %v5671, %v5679
        %v5681 = vlaneseq
        %v5682 = vshrl.u32 %v5681, 7
        %v5683 = vsub.s32 2, %v5682
        %v5684 = vrot.slane %v5671, %v5683
        %v5685 = vlaneseq
        %v5686 = vshrl.u32 %v5685, 7
        %v5687 = vsub.s32 3, %v5686
        %v5688 = vrot.slane %v5671, %v5687
        %v5693 = vadd.f32 %v5663, %v5676
        %v5694 = vadd.f32 %v5664, %v5680
        %v5695 = vadd.f32 %v5665, %v5684
        %v5696 = vadd.f32 %v5666, %v5688
        %v5697 = vadd.f32 %v5667, %v5676
        %v5698 = vadd.f32 %v5668, %v5680
        %v5699 = vadd.f32 %v5669, %v5684
        %v5700 = vadd.f32 %v5670, %v5688
        %v5701 = vmax.f32 %v5693, 0.0
        %v5702 = vmax.f32 %v5694, 0.0
        %v5703 = vmax.f32 %v5695, 0.0
        %v5704 = vmax.f32 %v5696, 0.0
        %v5705 = vmax.f32 %v5697, 0.0
        %v5706 = vmax.f32 %v5698, 0.0
        %v5707 = vmax.f32 %v5699, 0.0
        %v5708 = vmax.f32 %v5700, 0.0
        %v5709 = vpack.c.bf16 %v5705, %v5701
        %v5710 = vpack.c.bf16 %v5706, %v5702
        %v5711 = vpack.c.bf16 %v5707, %v5703
        %v5712 = vpack.c.bf16 %v5708, %v5704
        %v5713 = vld [vmem:[%s3] sm:$0xff]
        %v5714 = vld [vmem:[%s3 + $0x8] sm:$0xff]
        %v5715 = vld [vmem:[%s3 + $0x10] sm:$0xff]
        %v5716 = vld [vmem:[%s3 + $0x18] sm:$0xff]
        %v5717 = vld [vmem:[%s3 + $0x20] sm:$0xff]
        %v5718 = vld [vmem:[%s3 + $0x28] sm:$0xff]
        %v5719 = vld [vmem:[%s3 + $0x30] sm:$0xff]
        %v5720 = vld [vmem:[%s3 + $0x38] sm:$0xff]
        %v5721 = vld [vmem:[%s3 + $0x40] sm:$0xff]
        %v5722 = vld [vmem:[%s3 + $0x48] sm:$0xff]
        %v5723 = vld [vmem:[%s3 + $0x50] sm:$0xff]
        %v5724 = vld [vmem:[%s3 + $0x58] sm:$0xff]
        %v5725 = vld [vmem:[%s3 + $0x60] sm:$0xff]
        %v5726 = vld [vmem:[%s3 + $0x68] sm:$0xff]
        %v5727 = vld [vmem:[%s3 + $0x70] sm:$0xff]
        %v5728 = vld [vmem:[%s3 + $0x78] sm:$0xff]
        %v5729 = vld [vmem:[%s3 + $0x80] sm:$0xff]
        %v5730 = vld [vmem:[%s3 + $0x88] sm:$0xff]
        %v5731 = vld [vmem:[%s3 + $0x90] sm:$0xff]
        %v5732 = vld [vmem:[%s3 + $0x98] sm:$0xff]
        %v5733 = vld [vmem:[%s3 + $0xa0] sm:$0xff]
        %v5734 = vld [vmem:[%s3 + $0xa8] sm:$0xff]
        %v5735 = vld [vmem:[%s3 + $0xb0] sm:$0xff]
        %v5736 = vld [vmem:[%s3 + $0xb8] sm:$0xff]
        %v5737 = vld [vmem:[%s3 + $0xc0] sm:$0xff]
        %v5738 = vld [vmem:[%s3 + $0xc8] sm:$0xff]
        %v5739 = vld [vmem:[%s3 + $0xd0] sm:$0xff]
        %v5740 = vld [vmem:[%s3 + $0xd8] sm:$0xff]
        %v5741 = vld [vmem:[%s3 + $0xe0] sm:$0xff]
        %v5742 = vld [vmem:[%s3 + $0xe8] sm:$0xff]
        %v5743 = vld [vmem:[%s3 + $0xf0] sm:$0xff]
        %v5744 = vld [vmem:[%s3 + $0xf8] sm:$0xff]
        %v5745 = vld [vmem:[%s3 + $0x100] sm:$0xff]
        %v5746 = vld [vmem:[%s3 + $0x108] sm:$0xff]
        %v5747 = vld [vmem:[%s3 + $0x110] sm:$0xff]
        %v5748 = vld [vmem:[%s3 + $0x118] sm:$0xff]
        %v5749 = vld [vmem:[%s3 + $0x120] sm:$0xff]
        %v5750 = vld [vmem:[%s3 + $0x128] sm:$0xff]
        %v5751 = vld [vmem:[%s3 + $0x130] sm:$0xff]
        %v5752 = vld [vmem:[%s3 + $0x138] sm:$0xff]
        %v5753 = vld [vmem:[%s3 + $0x140] sm:$0xff]
        %v5754 = vld [vmem:[%s3 + $0x148] sm:$0xff]
        %v5755 = vld [vmem:[%s3 + $0x150] sm:$0xff]
        %v5756 = vld [vmem:[%s3 + $0x158] sm:$0xff]
        %v5757 = vld [vmem:[%s3 + $0x160] sm:$0xff]
        %v5758 = vld [vmem:[%s3 + $0x168] sm:$0xff]
        %v5759 = vld [vmem:[%s3 + $0x170] sm:$0xff]
        %v5760 = vld [vmem:[%s3 + $0x178] sm:$0xff]
        %v5761 = vld [vmem:[%s3 + $0x180] sm:$0xff]
        %v5762 = vld [vmem:[%s3 + $0x188] sm:$0xff]
        %v5763 = vld [vmem:[%s3 + $0x190] sm:$0xff]
        %v5764 = vld [vmem:[%s3 + $0x198] sm:$0xff]
        %v5765 = vld [vmem:[%s3 + $0x1a0] sm:$0xff]
        %v5766 = vld [vmem:[%s3 + $0x1a8] sm:$0xff]
        %v5767 = vld [vmem:[%s3 + $0x1b0] sm:$0xff]
        %v5768 = vld [vmem:[%s3 + $0x1b8] sm:$0xff]
        %v5769 = vld [vmem:[%s3 + $0x1c0] sm:$0xff]
        %v5770 = vld [vmem:[%s3 + $0x1c8] sm:$0xff]
        %v5771 = vld [vmem:[%s3 + $0x1d0] sm:$0xff]
        %v5772 = vld [vmem:[%s3 + $0x1d8] sm:$0xff]
        %v5773 = vld [vmem:[%s3 + $0x1e0] sm:$0xff]
        %v5774 = vld [vmem:[%s3 + $0x1e8] sm:$0xff]
        %v5775 = vld [vmem:[%s3 + $0x1f0] sm:$0xff]
        %v5776 = vld [vmem:[%s3 + $0x1f8] sm:$0xff]
        %v5777 = vld [vmem:[%s4] sm:$0x3]
        %v5779 = vlaneseq
        %v5780 = vshrl.u32 %v5779, 7
        %v5781 = vsub.s32 0, %v5780
        %v5782 = vrot.slane %v5777, %v5781
        %v5783 = vlaneseq
        %v5784 = vshrl.u32 %v5783, 7
        %v5785 = vsub.s32 1, %v5784
        %v5786 = vrot.slane %v5777, %v5785
        %v5853 = vunpack.c.l.b16 %v5713
        %v5854 = vunpack.c.h.b16 %v5713
        %v5855 = vunpack.c.l.b16 %v5714
        %v5856 = vunpack.c.h.b16 %v5714
        %v5857 = vunpack.c.l.b16 %v5715
        %v5858 = vunpack.c.h.b16 %v5715
        %v5859 = vunpack.c.l.b16 %v5716
        %v5860 = vunpack.c.h.b16 %v5716
        %v5861 = vunpack.c.l.b16 %v5717
        %v5862 = vunpack.c.h.b16 %v5717
        %v5863 = vunpack.c.l.b16 %v5718
        %v5864 = vunpack.c.h.b16 %v5718
        %v5865 = vunpack.c.l.b16 %v5719
        %v5866 = vunpack.c.h.b16 %v5719
        %v5867 = vunpack.c.l.b16 %v5720
        %v5868 = vunpack.c.h.b16 %v5720
        %v5869 = vunpack.c.l.b16 %v5721
        %v5870 = vunpack.c.h.b16 %v5721
        %v5871 = vunpack.c.l.b16 %v5722
        %v5872 = vunpack.c.h.b16 %v5722
        %v5873 = vunpack.c.l.b16 %v5723
        %v5874 = vunpack.c.h.b16 %v5723
        %v5875 = vunpack.c.l.b16 %v5724
        %v5876 = vunpack.c.h.b16 %v5724
        %v5877 = vunpack.c.l.b16 %v5725
        %v5878 = vunpack.c.h.b16 %v5725
        %v5879 = vunpack.c.l.b16 %v5726
        %v5880 = vunpack.c.h.b16 %v5726
        %v5881 = vunpack.c.l.b16 %v5727
        %v5882 = vunpack.c.h.b16 %v5727
        %v5883 = vunpack.c.l.b16 %v5728
        %v5884 = vunpack.c.h.b16 %v5728
        %v5885 = vunpack.c.l.b16 %v5729
        %v5886 = vunpack.c.h.b16 %v5729
        %v5887 = vunpack.c.l.b16 %v5730
        %v5888 = vunpack.c.h.b16 %v5730
        %v5889 = vunpack.c.l.b16 %v5731
        %v5890 = vunpack.c.h.b16 %v5731
        %v5891 = vunpack.c.l.b16 %v5732
        %v5892 = vunpack.c.h.b16 %v5732
        %v5893 = vunpack.c.l.b16 %v5733
        %v5894 = vunpack.c.h.b16 %v5733
        %v5895 = vunpack.c.l.b16 %v5734
        %v5896 = vunpack.c.h.b16 %v5734
        %v5897 = vunpack.c.l.b16 %v5735
        %v5898 = vunpack.c.h.b16 %v5735
        %v5899 = vunpack.c.l.b16 %v5736
        %v5900 = vunpack.c.h.b16 %v5736
        %v5901 = vunpack.c.l.b16 %v5737
        %v5902 = vunpack.c.h.b16 %v5737
        %v5903 = vunpack.c.l.b16 %v5738
        %v5904 = vunpack.c.h.b16 %v5738
        %v5905 = vunpack.c.l.b16 %v5739
        %v5906 = vunpack.c.h.b16 %v5739
        %v5907 = vunpack.c.l.b16 %v5740
        %v5908 = vunpack.c.h.b16 %v5740
        %v5909 = vunpack.c.l.b16 %v5741
        %v5910 = vunpack.c.h.b16 %v5741
        %v5911 = vunpack.c.l.b16 %v5742
        %v5912 = vunpack.c.h.b16 %v5742
        %v5913 = vunpack.c.l.b16 %v5743
        %v5914 = vunpack.c.h.b16 %v5743
        %v5915 = vunpack.c.l.b16 %v5744
        %v5916 = vunpack.c.h.b16 %v5744
        %v5917 = vunpack.c.l.b16 %v5745
        %v5918 = vunpack.c.h.b16 %v5745
        %v5919 = vunpack.c.l.b16 %v5746
        %v5920 = vunpack.c.h.b16 %v5746
        %v5921 = vunpack.c.l.b16 %v5747
        %v5922 = vunpack.c.h.b16 %v5747
        %v5923 = vunpack.c.l.b16 %v5748
        %v5924 = vunpack.c.h.b16 %v5748
        %v5925 = vunpack.c.l.b16 %v5749
        %v5926 = vunpack.c.h.b16 %v5749
        %v5927 = vunpack.c.l.b16 %v5750
        %v5928 = vunpack.c.h.b16 %v5750
        %v5929 = vunpack.c.l.b16 %v5751
        %v5930 = vunpack.c.h.b16 %v5751
        %v5931 = vunpack.c.l.b16 %v5752
        %v5932 = vunpack.c.h.b16 %v5752
        %v5933 = vunpack.c.l.b16 %v5753
        %v5934 = vunpack.c.h.b16 %v5753
        %v5935 = vunpack.c.l.b16 %v5754
        %v5936 = vunpack.c.h.b16 %v5754
        %v5937 = vunpack.c.l.b16 %v5755
        %v5938 = vunpack.c.h.b16 %v5755
        %v5939 = vunpack.c.l.b16 %v5756
        %v5940 = vunpack.c.h.b16 %v5756
        %v5941 = vunpack.c.l.b16 %v5757
        %v5942 = vunpack.c.h.b16 %v5757
        %v5943 = vunpack.c.l.b16 %v5758
        %v5944 = vunpack.c.h.b16 %v5758
        %v5945 = vunpack.c.l.b16 %v5759
        %v5946 = vunpack.c.h.b16 %v5759
        %v5947 = vunpack.c.l.b16 %v5760
        %v5948 = vunpack.c.h.b16 %v5760
        %v5949 = vunpack.c.l.b16 %v5761
        %v5950 = vunpack.c.h.b16 %v5761
        %v5951 = vunpack.c.l.b16 %v5762
        %v5952 = vunpack.c.h.b16 %v5762
        %v5953 = vunpack.c.l.b16 %v5763
        %v5954 = vunpack.c.h.b16 %v5763
        %v5955 = vunpack.c.l.b16 %v5764
        %v5956 = vunpack.c.h.b16 %v5764
        %v5957 = vunpack.c.l.b16 %v5765
        %v5958 = vunpack.c.h.b16 %v5765
        %v5959 = vunpack.c.l.b16 %v5766
        %v5960 = vunpack.c.h.b16 %v5766
        %v5961 = vunpack.c.l.b16 %v5767
        %v5962 = vunpack.c.h.b16 %v5767
        %v5963 = vunpack.c.l.b16 %v5768
        %v5964 = vunpack.c.h.b16 %v5768
        %v5965 = vunpack.c.l.b16 %v5769
        %v5966 = vunpack.c.h.b16 %v5769
        %v5967 = vunpack.c.l.b16 %v5770
        %v5968 = vunpack.c.h.b16 %v5770
        %v5969 = vunpack.c.l.b16 %v5771
        %v5970 = vunpack.c.h.b16 %v5771
        %v5971 = vunpack.c.l.b16 %v5772
        %v5972 = vunpack.c.h.b16 %v5772
        %v5973 = vunpack.c.l.b16 %v5773
        %v5974 = vunpack.c.h.b16 %v5773
        %v5975 = vunpack.c.l.b16 %v5774
        %v5976 = vunpack.c.h.b16 %v5774
        %v5977 = vunpack.c.l.b16 %v5775
        %v5978 = vunpack.c.h.b16 %v5775
        %v5979 = vunpack.c.l.b16 %v5776
        %v5980 = vunpack.c.h.b16 %v5776
        %v5981 = vpack.c.b16 %v5855, %v5853
        %v5982 = vpack.c.b16 %v5856, %v5854
        %v5983 = vpack.c.b16 %v5859, %v5857
        %v5984 = vpack.c.b16 %v5860, %v5858
        %v5985 = vpack.c.b16 %v5863, %v5861
        %v5986 = vpack.c.b16 %v5864, %v5862
        %v5987 = vpack.c.b16 %v5867, %v5865
        %v5988 = vpack.c.b16 %v5868, %v5866
        %v5989 = vpack.c.b16 %v5871, %v5869
        %v5990 = vpack.c.b16 %v5872, %v5870
        %v5991 = vpack.c.b16 %v5875, %v5873
        %v5992 = vpack.c.b16 %v5876, %v5874
        %v5993 = vpack.c.b16 %v5879, %v5877
        %v5994 = vpack.c.b16 %v5880, %v5878
        %v5995 = vpack.c.b16 %v5883, %v5881
        %v5996 = vpack.c.b16 %v5884, %v5882
        %v5997 = vpack.c.b16 %v5887, %v5885
        %v5998 = vpack.c.b16 %v5888, %v5886
        %v5999 = vpack.c.b16 %v5891, %v5889
        %v6000 = vpack.c.b16 %v5892, %v5890
        %v6001 = vpack.c.b16 %v5895, %v5893
        %v6002 = vpack.c.b16 %v5896, %v5894
        %v6003 = vpack.c.b16 %v5899, %v5897
        %v6004 = vpack.c.b16 %v5900, %v5898
        %v6005 = vpack.c.b16 %v5903, %v5901
        %v6006 = vpack.c.b16 %v5904, %v5902
        %v6007 = vpack.c.b16 %v5907, %v5905
        %v6008 = vpack.c.b16 %v5908, %v5906
        %v6009 = vpack.c.b16 %v5911, %v5909
        %v6010 = vpack.c.b16 %v5912, %v5910
        %v6011 = vpack.c.b16 %v5915, %v5913
        %v6012 = vpack.c.b16 %v5916, %v5914
        %v6013 = vpack.c.b16 %v5919, %v5917
        %v6014 = vpack.c.b16 %v5920, %v5918
        %v6015 = vpack.c.b16 %v5923, %v5921
        %v6016 = vpack.c.b16 %v5924, %v5922
        %v6017 = vpack.c.b16 %v5927, %v5925
        %v6018 = vpack.c.b16 %v5928, %v5926
        %v6019 = vpack.c.b16 %v5931, %v5929
        %v6020 = vpack.c.b16 %v5932, %v5930
        %v6021 = vpack.c.b16 %v5935, %v5933
        %v6022 = vpack.c.b16 %v5936, %v5934
        %v6023 = vpack.c.b16 %v5939, %v5937
        %v6024 = vpack.c.b16 %v5940, %v5938
        %v6025 = vpack.c.b16 %v5943, %v5941
        %v6026 = vpack.c.b16 %v5944, %v5942
        %v6027 = vpack.c.b16 %v5947, %v5945
        %v6028 = vpack.c.b16 %v5948, %v5946
        %v6029 = vpack.c.b16 %v5951, %v5949
        %v6030 = vpack.c.b16 %v5952, %v5950
        %v6031 = vpack.c.b16 %v5955, %v5953
        %v6032 = vpack.c.b16 %v5956, %v5954
        %v6033 = vpack.c.b16 %v5959, %v5957
        %v6034 = vpack.c.b16 %v5960, %v5958
        %v6035 = vpack.c.b16 %v5963, %v5961
        %v6036 = vpack.c.b16 %v5964, %v5962
        %v6037 = vpack.c.b16 %v5967, %v5965
        %v6038 = vpack.c.b16 %v5968, %v5966
        %v6039 = vpack.c.b16 %v5971, %v5969
        %v6040 = vpack.c.b16 %v5972, %v5970
        %v6041 = vpack.c.b16 %v5975, %v5973
        %v6042 = vpack.c.b16 %v5976, %v5974
        %v6043 = vpack.c.b16 %v5979, %v5977
        %v6044 = vpack.c.b16 %v5980, %v5978
        %6109 = vmatprep.subr.bf16.mxu0 %v5982
        %6110 = vmatpush1.bf16.msra.mxu0 %v5981
        %6111 = vmatprep.subr.bf16.mxu0 %v5984
        %6112 = vmatpush1.bf16.msra.mxu0 %v5983
        %6113 = vmatprep.subr.bf16.mxu0 %v5986
        %6114 = vmatpush1.bf16.msra.mxu0 %v5985
        %6115 = vmatprep.subr.bf16.mxu0 %v5988
        %6116 = vmatpush1.bf16.msra.mxu0 %v5987
        %6117 = vmatprep.subr.bf16.mxu0 %v5990
        %6118 = vmatpush1.bf16.msra.mxu0 %v5989
        %6119 = vmatprep.subr.bf16.mxu0 %v5992
        %6120 = vmatpush1.bf16.msra.mxu0 %v5991
        %6121 = vmatprep.subr.bf16.mxu0 %v5994
        %6122 = vmatpush1.bf16.msra.mxu0 %v5993
        %6123 = vmatprep.subr.bf16.mxu0 %v5996
        %6124 = vmatpush1.bf16.msra.mxu0 %v5995
        %6125 = vmatprep.subr.bf16.mxu0 %v5998
        %6126 = vmatpush1.bf16.msra.mxu0 %v5997
        %6127 = vmatprep.subr.bf16.mxu0 %v6000
        %6128 = vmatpush1.bf16.msra.mxu0 %v5999
        %6129 = vmatprep.subr.bf16.mxu0 %v6002
        %6130 = vmatpush1.bf16.msra.mxu0 %v6001
        %6131 = vmatprep.subr.bf16.mxu0 %v6004
        %6132 = vmatpush1.bf16.msra.mxu0 %v6003
        %6133 = vmatprep.subr.bf16.mxu0 %v6006
        %6134 = vmatpush1.bf16.msra.mxu0 %v6005
        %6135 = vmatprep.subr.bf16.mxu0 %v6008
        %6136 = vmatpush1.bf16.msra.mxu0 %v6007
        %6137 = vmatprep.subr.bf16.mxu0 %v6010
        %6138 = vmatpush1.bf16.msra.mxu0 %v6009
        %6139 = vmatprep.subr.bf16.mxu0 %v6012
        %6140 = vmatpush1.bf16.msra.mxu0 %v6011
        %6141 = vmatprep.mubr.bf16.mxu0 %v5710
        %6142 = vmatmul.mubr.bf16.gmra.mrb[0].mxu0 %v5709
        %v6143 = vpop.f32.mrb[0].mxu0
        %v6144 = vadd.f32 %v5782, %v6143
        %v6145 = vpop.f32.mrb[0].mxu0
        %v6146 = vadd.f32 %v5786, %v6145
        %v6147 = vpop.f32.mrb[0].mxu0
        %v6148 = vadd.f32 %v5782, %v6147
        %v6149 = vpop.f32.mrb[0].mxu0
        %v6150 = vadd.f32 %v5786, %v6149
        %6151 = vdwg.mxu0
        %6152 = vmatprep.subr.bf16.mxu0 %v6014
        %6153 = vmatpush1.bf16.msra.mxu0 %v6013
        %6154 = vmatprep.subr.bf16.mxu0 %v6016
        %6155 = vmatpush1.bf16.msra.mxu0 %v6015
        %6156 = vmatprep.subr.bf16.mxu0 %v6018
        %6157 = vmatpush1.bf16.msra.mxu0 %v6017
        %6158 = vmatprep.subr.bf16.mxu0 %v6020
        %6159 = vmatpush1.bf16.msra.mxu0 %v6019
        %6160 = vmatprep.subr.bf16.mxu0 %v6022
        %6161 = vmatpush1.bf16.msra.mxu0 %v6021
        %6162 = vmatprep.subr.bf16.mxu0 %v6024
        %6163 = vmatpush1.bf16.msra.mxu0 %v6023
        %6164 = vmatprep.subr.bf16.mxu0 %v6026
        %6165 = vmatpush1.bf16.msra.mxu0 %v6025
        %6166 = vmatprep.subr.bf16.mxu0 %v6028
        %6167 = vmatpush1.bf16.msra.mxu0 %v6027
        %6168 = vmatprep.subr.bf16.mxu0 %v6030
        %6169 = vmatpush1.bf16.msra.mxu0 %v6029
        %6170 = vmatprep.subr.bf16.mxu0 %v6032
        %6171 = vmatpush1.bf16.msra.mxu0 %v6031
        %6172 = vmatprep.subr.bf16.mxu0 %v6034
        %6173 = vmatpush1.bf16.msra.mxu0 %v6033
        %6174 = vmatprep.subr.bf16.mxu0 %v6036
        %6175 = vmatpush1.bf16.msra.mxu0 %v6035
        %6176 = vmatprep.subr.bf16.mxu0 %v6038
        %6177 = vmatpush1.bf16.msra.mxu0 %v6037
        %6178 = vmatprep.subr.bf16.mxu0 %v6040
        %6179 = vmatpush1.bf16.msra.mxu0 %v6039
        %6180 = vmatprep.subr.bf16.mxu0 %v6042
        %6181 = vmatpush1.bf16.msra.mxu0 %v6041
        %6182 = vmatprep.subr.bf16.mxu0 %v6044
        %6183 = vmatpush1.bf16.msra.mxu0 %v6043
        %6184 = vmatprep.mubr.bf16.mxu0 %v5712
        %6185 = vmatmul.mubr.bf16.gmra.mrb[0].mxu0 %v5711
        %v6186 = vpop.f32.mrb[0].mxu0
        %v6187 = vadd.f32 %v6144, %v6186
        %v6188 = vpop.f32.mrb[0].mxu0
        %v6189 = vadd.f32 %v6146, %v6188
        %v6190 = vpop.f32.mrb[0].mxu0
        %v6191 = vadd.f32 %v6148, %v6190
        %v6192 = vpop.f32.mrb[0].mxu0
        %v6193 = vadd.f32 %v6150, %v6192
        %6194 = vdwg.mxu0
        %v6195 = vmax.f32 %v6187, 0.0
        %v6196 = vmax.f32 %v6189, 0.0
        %v6197 = vmax.f32 %v6191, 0.0
        %v6198 = vmax.f32 %v6193, 0.0
        %v6199 = vpack.c.bf16 %v6197, %v6195
        %v6200 = vpack.c.bf16 %v6198, %v6196
        %v6201 = vld [vmem:[%s5] sm:$0xf]
        %v6202 = vld [vmem:[%s5 + $0x4] sm:$0xf]
        %v6203 = vld [vmem:[%s5 + $0x8] sm:$0xf]
        %v6204 = vld [vmem:[%s5 + $0xc] sm:$0xf]
        %v6205 = vld [vmem:[%s5 + $0x10] sm:$0xf]
        %v6206 = vld [vmem:[%s5 + $0x14] sm:$0xf]
        %v6207 = vld [vmem:[%s5 + $0x18] sm:$0xf]
        %v6208 = vld [vmem:[%s5 + $0x1c] sm:$0xf]
        %v6209 = vld [vmem:[%s5 + $0x20] sm:$0xf]
        %v6210 = vld [vmem:[%s5 + $0x24] sm:$0xf]
        %v6211 = vld [vmem:[%s5 + $0x28] sm:$0xf]
        %v6212 = vld [vmem:[%s5 + $0x2c] sm:$0xf]
        %v6213 = vld [vmem:[%s5 + $0x30] sm:$0xf]
        %v6214 = vld [vmem:[%s5 + $0x34] sm:$0xf]
        %v6215 = vld [vmem:[%s5 + $0x38] sm:$0xf]
        %v6216 = vld [vmem:[%s5 + $0x3c] sm:$0xf]
        %v6217 = vld [vmem:[%s5 + $0x40] sm:$0xf]
        %v6218 = vld [vmem:[%s5 + $0x44] sm:$0xf]
        %v6219 = vld [vmem:[%s5 + $0x48] sm:$0xf]
        %v6220 = vld [vmem:[%s5 + $0x4c] sm:$0xf]
        %v6221 = vld [vmem:[%s5 + $0x50] sm:$0xf]
        %v6222 = vld [vmem:[%s5 + $0x54] sm:$0xf]
        %v6223 = vld [vmem:[%s5 + $0x58] sm:$0xf]
        %v6224 = vld [vmem:[%s5 + $0x5c] sm:$0xf]
        %v6225 = vld [vmem:[%s5 + $0x60] sm:$0xf]
        %v6226 = vld [vmem:[%s5 + $0x64] sm:$0xf]
        %v6227 = vld [vmem:[%s5 + $0x68] sm:$0xf]
        %v6228 = vld [vmem:[%s5 + $0x6c] sm:$0xf]
        %v6229 = vld [vmem:[%s5 + $0x70] sm:$0xf]
        %v6230 = vld [vmem:[%s5 + $0x74] sm:$0xf]
        %v6231 = vld [vmem:[%s5 + $0x78] sm:$0xf]
        %v6232 = vld [vmem:[%s5 + $0x7c] sm:$0xf]
        %v6233 = vld [vmem:[%s6] sm:$0x1]
        %v6235 = vlaneseq
        %v6236 = vshrl.u32 %v6235, 7
        %v6237 = vsub.s32 0, %v6236
        %v6238 = vrot.slane %v6233, %v6237
        %v6272 = vunpack.c.l.b16 %v6201
        %v6273 = vunpack.c.l.b16 %v6202
        %v6274 = vunpack.c.l.b16 %v6203
        %v6275 = vunpack.c.l.b16 %v6204
        %v6276 = vunpack.c.l.b16 %v6205
        %v6277 = vunpack.c.l.b16 %v6206
        %v6278 = vunpack.c.l.b16 %v6207
        %v6279 = vunpack.c.l.b16 %v6208
        %v6280 = vunpack.c.l.b16 %v6209
        %v6281 = vunpack.c.l.b16 %v6210
        %v6282 = vunpack.c.l.b16 %v6211
        %v6283 = vunpack.c.l.b16 %v6212
        %v6284 = vunpack.c.l.b16 %v6213
        %v6285 = vunpack.c.l.b16 %v6214
        %v6286 = vunpack.c.l.b16 %v6215
        %v6287 = vunpack.c.l.b16 %v6216
        %v6288 = vunpack.c.l.b16 %v6217
        %v6289 = vunpack.c.l.b16 %v6218
        %v6290 = vunpack.c.l.b16 %v6219
        %v6291 = vunpack.c.l.b16 %v6220
        %v6292 = vunpack.c.l.b16 %v6221
        %v6293 = vunpack.c.l.b16 %v6222
        %v6294 = vunpack.c.l.b16 %v6223
        %v6295 = vunpack.c.l.b16 %v6224
        %v6296 = vunpack.c.l.b16 %v6225
        %v6297 = vunpack.c.l.b16 %v6226
        %v6298 = vunpack.c.l.b16 %v6227
        %v6299 = vunpack.c.l.b16 %v6228
        %v6300 = vunpack.c.l.b16 %v6229
        %v6301 = vunpack.c.l.b16 %v6230
        %v6302 = vunpack.c.l.b16 %v6231
        %v6303 = vunpack.c.l.b16 %v6232
        %v6304 = vpack.c.b16 %v6273, %v6272
        %v6305 = vpack.c.b16 %v6275, %v6274
        %v6306 = vpack.c.b16 %v6277, %v6276
        %v6307 = vpack.c.b16 %v6279, %v6278
        %v6308 = vpack.c.b16 %v6281, %v6280
        %v6309 = vpack.c.b16 %v6283, %v6282
        %v6310 = vpack.c.b16 %v6285, %v6284
        %v6311 = vpack.c.b16 %v6287, %v6286
        %v6312 = vpack.c.b16 %v6289, %v6288
        %v6313 = vpack.c.b16 %v6291, %v6290
        %v6314 = vpack.c.b16 %v6293, %v6292
        %v6315 = vpack.c.b16 %v6295, %v6294
        %v6316 = vpack.c.b16 %v6297, %v6296
        %v6317 = vpack.c.b16 %v6299, %v6298
        %v6318 = vpack.c.b16 %v6301, %v6300
        %v6319 = vpack.c.b16 %v6303, %v6302
        %6336 = vmatprep.subr.bf16.mxu0 0
        %6337 = vmatpush1.bf16.msra.mxu0 %v6304
        %6338 = vmatprep.subr.bf16.mxu0 0
        %6339 = vmatpush1.bf16.msra.mxu0 %v6305
        %6340 = vmatprep.subr.bf16.mxu0 0
        %6341 = vmatpush1.bf16.msra.mxu0 %v6306
        %6342 = vmatprep.subr.bf16.mxu0 0
        %6343 = vmatpush1.bf16.msra.mxu0 %v6307
        %6344 = vmatprep.subr.bf16.mxu0 0
        %6345 = vmatpush1.bf16.msra.mxu0 %v6308
        %6346 = vmatprep.subr.bf16.mxu0 0
        %6347 = vmatpush1.bf16.msra.mxu0 %v6309
        %6348 = vmatprep.subr.bf16.mxu0 0
        %6349 = vmatpush1.bf16.msra.mxu0 %v6310
        %6350 = vmatprep.subr.bf16.mxu0 0
        %6351 = vmatpush1.bf16.msra.mxu0 %v6311
        %6352 = vmatprep.subr.bf16.mxu0 0
        %6353 = vmatpush1.bf16.msra.mxu0 %v6312
        %6354 = vmatprep.subr.bf16.mxu0 0
        %6355 = vmatpush1.bf16.msra.mxu0 %v6313
        %6356 = vmatprep.subr.bf16.mxu0 0
        %6357 = vmatpush1.bf16.msra.mxu0 %v6314
        %6358 = vmatprep.subr.bf16.mxu0 0
        %6359 = vmatpush1.bf16.msra.mxu0 %v6315
        %6360 = vmatprep.subr.bf16.mxu0 0
        %6361 = vmatpush1.bf16.msra.mxu0 %v6316
        %6362 = vmatprep.subr.bf16.mxu0 0
        %6363 = vmatpush1.bf16.msra.mxu0 %v6317
        %6364 = vmatprep.subr.bf16.mxu0 0
        %6365 = vmatpush1.bf16.msra.mxu0 %v6318
        %6366 = vmatprep.subr.bf16.mxu0 0
        %6367 = vmatpush1.bf16.msra.mxu0 %v6319
        %6368 = vmatprep.mubr.bf16.mxu0 %v6200
        %6369 = vmatmul.mubr.bf16.gmra.mrb[0].mxu0 %v6199
        %v6370 = vpop.f32.mrb[0].mxu0
        %v6371 = vadd.f32 %v6238, %v6370
        %v6372 = vpop.f32.mrb[0].mxu0
        %v6373 = vpop.f32.mrb[0].mxu0
        %v6374 = vadd.f32 %v6238, %v6373
        %v6375 = vpop.f32.mrb[0].mxu0
        %6376 = vdwg.mxu0
        %6377 = vst [vmem:[%s442] sm:$0xff] %v6371
        %6378 = vst [vmem:[%s442 + $0x8] sm:$0xff] %v6374
        %s6379 = smul.u32 2, %s18
        %p6380 = scmp.lt.s32.totalorder %s6379, 3
        %s6381 = scalar_select %p6380, %s6379, 3
        %s6382 = smul.addr %s6381, 8
        %s6383 = scalar_lea.vmem %s7, %s6382
        // Predicated region
        $region72: #{forward.5} parent=66 // pred_check
          %p6384 = pneg %p188
        $region73: #{forward.5} parent=66 // pred_check_branch
          %6386 = sbr.rel (%p6384) target = $region75
        $region74: #{forward.5} parent=66 // pred_region
          %s6387 = smul.u32 2, %s18
        $region75: #{forward.5} parent=66 // pred_fallthru
          _
      $region67: #{forward.5} parent=5 // pred_fallthru
        _
      %p6388 = scmp.le.s32.totalorder 2, %s13
      // Predicated region
      $region76: #{forward.5} parent=5 // pred_check
        %p6389 = pneg %p6388
      $region77: #{forward.5} parent=5 // pred_check_branch
        %6391 = sbr.rel (%p6389) target = $region79
      $region78: #{forward.5} parent=5 // pred_region
        %s6392 = ssub.s32 %s13, 2
        // Predicated region
        $region80: #{forward.5} parent=78 // pred_check
          %p6393 = pneg %p194
        $region81: #{forward.5} parent=78 // pred_check_branch
          %6395 = sbr.rel (%p6393) target = $region83
        $region82: #{forward.5} parent=78 // pred_region
          %s6396 = smul.u32 2, %s19
          %p6397 = scmp.lt.s32.totalorder %s6396, 3
          %s6398 = scalar_select %p6397, %s6396, 3
          %s6399 = smul.addr %s6398, 8
          %s6400 = scalar_lea.vmem %s7, %s6399
        $region83: #{forward.5} parent=78 // pred_fallthru
          _
      $region79: #{forward.5} parent=5 // pred_fallthru
        _
    $region6: #{forward.5} parent=1 // loop_footer
      %s17 = sadd.s32 1, %s13
    $region7: #{forward.5} parent=1 // loop_footer_branch
      %12 = sbr.rel target = $region3
    $region8: #{forward.5} parent=1 // loop_exit
      _

</llo_original>
